<compile_context>
chip_gen: v5e
topology: v5e:2x2
jax: 0.10.0
libtpu: 0.0.40
codegen_flags: <defaults>
</compile_context>

<pallas_src>
import functools
import math

import jax
import jax.numpy as jnp
from jax import lax
from jax.experimental import pallas as pl
from jax.experimental.pallas import tpu as pltpu

F32 = jnp.float32
BF16 = jnp.bfloat16
NEG_INF = jnp.float32(-1e20)


def _make_compiler_params():
    cls = getattr(pltpu, "CompilerParams", None) or getattr(pltpu, "TPUCompilerParams", None)
    if cls is None:
        return None
    try:
        return cls(dimension_semantics=("parallel",))
    except Exception:
        return None


_COMPILER_PARAMS = _make_compiler_params()


# ----------------------------------------------------------------------------
# In-kernel helpers
# ----------------------------------------------------------------------------

def _layernorm(x, g, b, eps=1e-5):
    """Row-wise LayerNorm over last dim (f32 math, PyTorch eps=1e-5, affine)."""
    mean = jnp.mean(x, axis=-1, keepdims=True)
    xc = x - mean
    var = jnp.mean(xc * xc, axis=-1, keepdims=True)
    return xc * lax.rsqrt(var + eps) * g + b


def _mha_proj(q2d, k2d, v2d, add_mask, w_fc_hde, b_fc, *, heads):
    """Multi-head attention for ONE batch element + fused output projection.

    q2d (Lq, E), k2d/v2d (Lk, E) f32 (Q already scaled by 1/sqrt(E) via its weights).
    add_mask broadcasts against (Lq, Lk): (1, Lk) pad-row mask or (Lq, Lk) causal mask.
    w_fc_hde (heads, D, E) bf16: every head's (Lq, D) output is projected through its
    own (D, E) slice of W_fc and accumulated, so no lane-offset concatenation is
    ever materialized.  Returns (Lq, E) f32 (projection + bias applied).
    """
    Lq, E = q2d.shape
    D = E // heads
    q_bf = q2d.astype(BF16)      # single bf16 cast per tensor (review item)
    k_bf = k2d.astype(BF16)
    v_bf = v2d.astype(BF16)
    out = None
    for h in range(heads):
        lo, hi = h * D, (h + 1) * D
        qh = q_bf[:, lo:hi]
        kh = k_bf[:, lo:hi]
        vh = v_bf[:, lo:hi]
        # energy = q @ k^T, contracting last dims (no explicit transpose)
        e = lax.dot_general(qh, kh, (((1,), (1,)), ((), ())),
                            preferred_element_type=F32)                    # (Lq, Lk)
        e = e + add_mask                                                    # additive mask
        e = e - jnp.max(e, axis=-1, keepdims=True)
        p = jnp.exp(e)
        inv = pl.reciprocal(jnp.sum(p, axis=-1, keepdims=True), approx=True)
        attn = (p * inv).astype(BF16)
        oh = jnp.dot(attn, vh, preferred_element_type=F32)                  # (Lq, D)
        ph = jnp.dot(oh.astype(BF16), w_fc_hde[h], preferred_element_type=F32)  # (Lq, E)
        out = ph if out is None else out + ph
    return out + b_fc


def _block_tail(attn_out, query, l,
                ln1g_ref, ln1b_ref, ffw1_ref, ffb1_ref, ffw2_ref, ffb2_ref,
                ln2g_ref, ln2b_ref):
    """Residual + LN1 -> FFN (W1, ReLU, W2) -> residual + LN2 (dropout == identity)."""
    x1 = _layernorm(attn_out + query, ln1g_ref[l], ln1b_ref[l])
    ff = jnp.dot(x1.astype(BF16), ffw1_ref[l], preferred_element_type=F32) + ffb1_ref[l]
    ff = jnp.maximum(ff, 0.0)
    ff = jnp.dot(ff.astype(BF16), ffw2_ref[l], preferred_element_type=F32) + ffb2_ref[l]
    return _layernorm(ff + x1, ln2g_ref[l], ln2b_ref[l])


# ----------------------------------------------------------------------------
# Fused Pallas kernels (one grid program == one batch element)
# ----------------------------------------------------------------------------

def _encoder_kernel(x_ref, mask_ref,
                    wqkv_ref, wfc_ref, bfc_ref, ln1g_ref, ln1b_ref,
                    ffw1_ref, ffb1_ref, ffw2_ref, ffb2_ref, ln2g_ref, ln2b_ref,
                    o_ref, *, n_layers, heads):
    """Whole encoder stack for one batch element; activations stay in VMEM."""
    E = x_ref.shape[-1]
    x = x_ref[0]                 # (Ls, E) f32
    m = mask_ref[0]              # (1, Ls)  additive pad mask (broadcasts over query rows)
    for l in range(n_layers):
        qkv = jnp.dot(x.astype(BF16), wqkv_ref[l], preferred_element_type=F32)   # (Ls, 3E)
        attn = _mha_proj(qkv[:, :E], qkv[:, E:2 * E], qkv[:, 2 * E:], m,
                         wfc_ref[l], bfc_ref[l], heads=heads)
        x = _block_tail(attn, x, l, ln1g_ref, ln1b_ref,
                        ffw1_ref, ffb1_ref, ffw2_ref, ffb2_ref, ln2g_ref, ln2b_ref)
    o_ref[0] = x.astype(o_ref.dtype)


def _decoder_kernel(y_ref, enc_ref, cmask_ref, emask_ref,
                    sa_wqkv_ref, sa_wfc_ref, sa_bfc_ref, sa_lng_ref, sa_lnb_ref,
                    cb_wq_ref, cb_wkv_ref, cb_wfc_ref, cb_bfc_ref,
                    cb_ln1g_ref, cb_ln1b_ref,
                    cb_ffw1_ref, cb_ffb1_ref, cb_ffw2_ref, cb_ffb2_ref,
                    cb_ln2g_ref, cb_ln2b_ref,
                    fcw_ref, fcb_ref, o_ref, *, n_layers, heads):
    """Whole decoder stack + final vocab projection for one batch element."""
    E = y_ref.shape[-1]
    y = y_ref[0]                       # (Lt, E) f32
    enc_bf = enc_ref[0].astype(BF16)   # (Ls, E) bf16 (only ever a matmul input)
    cmask = cmask_ref[...]             # (Lt, Lt) additive causal mask
    emask = emask_ref[0]               # (1, Ls)  additive pad-row mask
    for l in range(n_layers):
        # stage 1: masked self-attention + output projection + residual + LN
        qkv = jnp.dot(y.astype(BF16), sa_wqkv_ref[l], preferred_element_type=F32)  # (Lt, 3E)
        attn = _mha_proj(qkv[:, :E], qkv[:, E:2 * E], qkv[:, 2 * E:], cmask,
                         sa_wfc_ref[l], sa_bfc_ref[l], heads=heads)
        q = _layernorm(attn + y, sa_lng_ref[l], sa_lnb_ref[l])
        # stage 2: cross-attention transformer block (K/V from encoder output)
        qq = jnp.dot(q.astype(BF16), cb_wq_ref[l], preferred_element_type=F32)     # (Lt, E)
        kv = jnp.dot(enc_bf, cb_wkv_ref[l], preferred_element_type=F32)            # (Ls, 2E)
        attn2 = _mha_proj(qq, kv[:, :E], kv[:, E:], emask,
                          cb_wfc_ref[l], cb_bfc_ref[l], heads=heads)
        y = _block_tail(attn2, q, l, cb_ln1g_ref, cb_ln1b_ref,
                        cb_ffw1_ref, cb_ffb1_ref, cb_ffw2_ref, cb_ffb2_ref,
                        cb_ln2g_ref, cb_ln2b_ref)
    o_ref[0] = (jnp.dot(y.astype(BF16), fcw_ref[...], preferred_element_type=F32)
                + fcb_ref[...]).astype(o_ref.dtype)


# ----------------------------------------------------------------------------
# pallas_call wrappers (grid over batch; weights as constant-index full blocks)
# ----------------------------------------------------------------------------

def _batch_spec(shape):
    """Leading dim indexed by the batch grid axis; rest full-block (VMEM default)."""
    n_trail = len(shape) - 1
    return pl.BlockSpec(shape, lambda b, _t=n_trail: (b,) + (0,) * _t)


def _const_spec(shape):
    """Full array as a single block, same block for every grid step (DMA'd once)."""
    idx = (0,) * len(shape)
    return pl.BlockSpec(shape, lambda b, _i=idx: _i)


def encoder_call(x, enc_add, ep, *, n_layers, heads):
    N, Ls, E = x.shape
    kernel = functools.partial(_encoder_kernel, n_layers=n_layers, heads=heads)
    weight_order = ("w_qkv", "w_fc", "b_fc", "ln1_g", "ln1_b",
                    "ff_w1", "ff_b1", "ff_w2", "ff_b2", "ln2_g", "ln2_b")
    weights = [ep[k] for k in weight_order]
    in_specs = ([_batch_spec((1, Ls, E)), _batch_spec((1, 1, Ls))]
                + [_const_spec(w.shape) for w in weights])
    return pl.pallas_call(
        kernel,
        grid=(N,),
        in_specs=in_specs,
        out_specs=_batch_spec((1, Ls, E)),
        out_shape=jax.ShapeDtypeStruct((N, Ls, E), F32),
        compiler_params=_COMPILER_PARAMS,
    )(x, enc_add, *weights)


def decoder_call(y, enc_out, causal_add, enc_add, dp, *, n_layers, heads):
    N, Lt, E = y.shape
    Ls = enc_out.shape[1]
    V = dp["fc_w"].shape[-1]
    kernel = functools.partial(_decoder_kernel, n_layers=n_layers, heads=heads)
    sa, cb = dp["sa"], dp["cb"]
    weights = [sa["w_qkv"], sa["w_fc"], sa["b_fc"], sa["ln_g"], sa["ln_b"],
               cb["w_q"], cb["w_kv"], cb["w_fc"], cb["b_fc"],
               cb["ln1_g"], cb["ln1_b"],
               cb["ff_w1"], cb["ff_b1"], cb["ff_w2"], cb["ff_b2"],
               cb["ln2_g"], cb["ln2_b"],
               dp["fc_w"], dp["fc_b"]]
    in_specs = ([_batch_spec((1, Lt, E)), _batch_spec((1, Ls, E)),
                 _const_spec((Lt, Lt)), _batch_spec((1, 1, Ls))]
                + [_const_spec(w.shape) for w in weights])
    return pl.pallas_call(
        kernel,
        grid=(N,),
        in_specs=in_specs,
        out_specs=_batch_spec((1, Lt, V)),
        out_shape=jax.ShapeDtypeStruct((N, Lt, V), F32),
        compiler_params=_COMPILER_PARAMS,
    )(y, enc_out, causal_add, enc_add, *weights)


# ----------------------------------------------------------------------------
# Parameter init (matches the tutorial module structure) + kernel-ready prep
# ----------------------------------------------------------------------------

def _normal(key, shape, std=0.02):
    return std * jax.random.normal(key, shape, dtype=F32)


def init_self_attention(key, embed, heads):
    D = embed // heads
    k = jax.random.split(key, 4)
    return dict(
        w_v=_normal(k[0], (D, D)), w_k=_normal(k[1], (D, D)), w_q=_normal(k[2], (D, D)),
        w_fc=_normal(k[3], (embed, embed)), b_fc=jnp.zeros((embed,), F32),
    )


def init_transformer_block(key, embed, heads, expansion):
    k = jax.random.split(key, 3)
    return dict(
        attn=init_self_attention(k[0], embed, heads),
        ln1_g=jnp.ones((embed,), F32), ln1_b=jnp.zeros((embed,), F32),
        ln2_g=jnp.ones((embed,), F32), ln2_b=jnp.zeros((embed,), F32),
        ff_w1=_normal(k[1], (embed, expansion * embed)),
        ff_b1=jnp.zeros((expansion * embed,), F32),
        ff_w2=_normal(k[2], (expansion * embed, embed)),
        ff_b2=jnp.zeros((embed,), F32),
    )


def init_params(key, src_vocab, trg_vocab, embed, vocab_max, n_layers, heads, expansion):
    ke, kd = jax.random.split(key)
    ke = jax.random.split(ke, n_layers + 2)
    kd = jax.random.split(kd, 2 * n_layers + 3)
    enc = dict(
        word_emb=_normal(ke[0], (src_vocab, embed)),
        pos_emb=_normal(ke[1], (vocab_max, embed)),
        layers=[init_transformer_block(ke[2 + i], embed, heads, expansion)
                for i in range(n_layers)],
    )
    dec_layers = []
    for i in range(n_layers):
        dec_layers.append(dict(
            attn=init_self_attention(kd[2 + 2 * i], embed, heads),
            ln_g=jnp.ones((embed,), F32), ln_b=jnp.zeros((embed,), F32),
            tb=init_transformer_block(kd[3 + 2 * i], embed, heads, expansion),
        ))
    dec = dict(
        word_emb=_normal(kd[0], (trg_vocab, embed)),
        pos_emb=_normal(kd[1], (vocab_max, embed)),
        layers=dec_layers,
        fc_w=_normal(kd[2 + 2 * n_layers], (embed, trg_vocab)),
        fc_b=jnp.zeros((trg_vocab,), F32),
    )
    return dict(encoder=enc, decoder=dec)


def _stack_dicts(dicts):
    return {k: jnp.stack([d[k] for d in dicts], axis=0) for k in dicts[0]}


def prepare_params(params, heads, embed):
    """One-time conversion into kernel-ready, per-layer-stacked bf16 fused weights."""
    scale = 1.0 / math.sqrt(embed)   # folded into the Q weights (review item)
    D = embed // heads

    def blockdiag(w):  # same (D,D) weight applied to every head's slice
        return jnp.kron(jnp.eye(heads, dtype=F32), w)

    def attn_fused(a):  # self-attention paths: one (E, 3E) QKV matmul
        w_qkv = jnp.concatenate([blockdiag(a["w_q"]) * scale,
                                 blockdiag(a["w_k"]),
                                 blockdiag(a["w_v"])], axis=1).astype(BF16)
        return dict(w_qkv=w_qkv,
                    w_fc=a["w_fc"].reshape(heads, D, embed).astype(BF16),
                    b_fc=a["b_fc"].reshape(1, -1).astype(F32))

    def attn_split(a):  # cross-attention: Q from decoder state, fused K/V from enc_out
        w_q = (blockdiag(a["w_q"]) * scale).astype(BF16)
        w_kv = jnp.concatenate([blockdiag(a["w_k"]), blockdiag(a["w_v"])],
                               axis=1).astype(BF16)
        return dict(w_q=w_q, w_kv=w_kv,
                    w_fc=a["w_fc"].reshape(heads, D, embed).astype(BF16),
                    b_fc=a["b_fc"].reshape(1, -1).astype(F32))

    def block_rest(raw):
        return dict(ln1_g=raw["ln1_g"].reshape(1, -1), ln1_b=raw["ln1_b"].reshape(1, -1),
                    ff_w1=raw["ff_w1"].astype(BF16), ff_b1=raw["ff_b1"].reshape(1, -1),
                    ff_w2=raw["ff_w2"].astype(BF16), ff_b2=raw["ff_b2"].reshape(1, -1),
                    ln2_g=raw["ln2_g"].reshape(1, -1), ln2_b=raw["ln2_b"].reshape(1, -1))

    enc = params["encoder"]
    enc_layers = [{**attn_fused(lp["attn"]), **block_rest(lp)} for lp in enc["layers"]]
    kenc = dict(word_emb=enc["word_emb"], pos_emb=enc["pos_emb"],
                layers=_stack_dicts(enc_layers))

    dec = params["decoder"]
    sa_layers = [{**attn_fused(lp["attn"]),
                  "ln_g": lp["ln_g"].reshape(1, -1), "ln_b": lp["ln_b"].reshape(1, -1)}
                 for lp in dec["layers"]]
    cb_layers = [{**attn_split(lp["tb"]["attn"]), **block_rest(lp["tb"])}
                 for lp in dec["layers"]]
    kdec = dict(word_emb=dec["word_emb"], pos_emb=dec["pos_emb"],
                sa=_stack_dicts(sa_layers), cb=_stack_dicts(cb_layers),
                fc_w=dec["fc_w"].astype(BF16), fc_b=dec["fc_b"].reshape(1, -1))
    return dict(encoder=kenc, decoder=kdec)


# ----------------------------------------------------------------------------
# Forward pass
# ----------------------------------------------------------------------------

@functools.partial(jax.jit, static_argnames=("pad_idx", "heads", "n_layers"))
def bumblebee_forward(kparams, source_inputs, target_inputs, pad_idx, heads, n_layers):
    N, Ls = source_inputs.shape
    _, Lt = target_inputs.shape

    # Raw masks only (0 = keep, -1e20 = masked); broadcasting happens inside the kernels.
    causal_add = jnp.where(jnp.tril(jnp.ones((Lt, Lt), dtype=F32)) == 0.0,
                           NEG_INF, jnp.float32(0.0))                       # (Lt, Lt)
    enc_add = jnp.where(source_inputs != pad_idx, jnp.float32(0.0),
                        NEG_INF)[:, None, :]                                # (N, 1, Ls)

    enc = kparams["encoder"]
    # TODO(synk): token/positional embedding gather (and eval-mode dropout) stay in XLA;
    # a DMA-gather Pallas kernel is not worthwhile at these shapes.
    x = jnp.take(enc["word_emb"], source_inputs, axis=0) + enc["pos_emb"][:Ls][None]
    enc_out = encoder_call(x, enc_add, enc["layers"], n_layers=n_layers, heads=heads)

    dec = kparams["decoder"]
    y = jnp.take(dec["word_emb"], target_inputs, axis=0) + dec["pos_emb"][:Lt][None]
    logits = decoder_call(y, enc_out, causal_add, enc_add, dec,
                          n_layers=n_layers, heads=heads)
    return logits                                                           # (N, Lt, V)


# ----------------------------------------------------------------------------
# Main
# ----------------------------------------------------------------------------

if __name__ == "__main__":
    # Hyperparameters consistent with Bumblebee.__init__
    src_vocab, trg_vocab = 16, 16
    size_embed = 32
    vocab_max = 16
    n_layers = 2
    n_heads = 4
    expansion = 2
    pad_idx = 0
    # dropout_p ignored: forward evaluated in eval mode (dropout == identity)

    batch, src_len, trg_len = 2, 8, 8

    root = jax.random.PRNGKey(0)
    kp, ks, kt = jax.random.split(root, 3)
    raw_params = init_params(kp, src_vocab, trg_vocab, size_embed, vocab_max,
                             n_layers, n_heads, expansion)
    kparams = prepare_params(raw_params, n_heads, size_embed)
    source_inputs = jax.random.randint(ks, (batch, src_len), 0, src_vocab, dtype=jnp.int32)
    target_inputs = jax.random.randint(kt, (batch, trg_len), 0, trg_vocab, dtype=jnp.int32)

    out = bumblebee_forward(kparams, source_inputs, target_inputs,
                            pad_idx=pad_idx, heads=n_heads, n_layers=n_layers)
    out = jax.block_until_ready(out)
    assert out.shape == (batch, trg_len, trg_vocab), out.shape
    assert bool(jnp.all(jnp.isfinite(out)))
    print("KERNEL_OK")
</pallas_src>

<mosaic_0001>
module attributes {stable_mosaic.version = 11 : i64} {
  func.func @_encoder_kernel(%arg0: i32, %arg1: memref<1x8x32xf32, #tpu.memory_space<vmem>>, %arg2: memref<1x1x8xf32, #tpu.memory_space<vmem>>, %arg3: memref<2x32x96xbf16, #tpu.memory_space<vmem>>, %arg4: memref<2x4x8x32xbf16, #tpu.memory_space<vmem>>, %arg5: memref<2x1x32xf32, #tpu.memory_space<vmem>>, %arg6: memref<2x1x32xf32, #tpu.memory_space<vmem>>, %arg7: memref<2x1x32xf32, #tpu.memory_space<vmem>>, %arg8: memref<2x32x64xbf16, #tpu.memory_space<vmem>>, %arg9: memref<2x1x64xf32, #tpu.memory_space<vmem>>, %arg10: memref<2x64x32xbf16, #tpu.memory_space<vmem>>, %arg11: memref<2x1x32xf32, #tpu.memory_space<vmem>>, %arg12: memref<2x1x32xf32, #tpu.memory_space<vmem>>, %arg13: memref<2x1x32xf32, #tpu.memory_space<vmem>>, %arg14: memref<1x8x32xf32, #tpu.memory_space<vmem>>) attributes {dimension_semantics = [#tpu.dimension_semantics<parallel>], iteration_bounds = array<i64: 2>, scalar_prefetch = 0 : i64, scratch_operands = 0 : i64, tpu.core_type = #tpu.core_type<tc>, window_params = [{transform_indices = @transform_0, window_bounds = array<i64: 1, 8, 32>}, {transform_indices = @transform_1, window_bounds = array<i64: 1, 1, 8>}, {pipeline_mode = #tpu.pipeline_mode<synchronous>, transform_indices = @transform_2, window_bounds = array<i64: 2, 32, 96>}, {pipeline_mode = #tpu.pipeline_mode<synchronous>, transform_indices = @transform_3, window_bounds = array<i64: 2, 4, 8, 32>}, {pipeline_mode = #tpu.pipeline_mode<synchronous>, transform_indices = @transform_4, window_bounds = array<i64: 2, 1, 32>}, {pipeline_mode = #tpu.pipeline_mode<synchronous>, transform_indices = @transform_5, window_bounds = array<i64: 2, 1, 32>}, {pipeline_mode = #tpu.pipeline_mode<synchronous>, transform_indices = @transform_6, window_bounds = array<i64: 2, 1, 32>}, {pipeline_mode = #tpu.pipeline_mode<synchronous>, transform_indices = @transform_7, window_bounds = array<i64: 2, 32, 64>}, {pipeline_mode = #tpu.pipeline_mode<synchronous>, transform_indices = @transform_8, window_bounds = array<i64: 2, 1, 64>}, {pipeline_mode = #tpu.pipeline_mode<synchronous>, transform_indices = @transform_9, window_bounds = array<i64: 2, 64, 32>}, {pipeline_mode = #tpu.pipeline_mode<synchronous>, transform_indices = @transform_10, window_bounds = array<i64: 2, 1, 32>}, {pipeline_mode = #tpu.pipeline_mode<synchronous>, transform_indices = @transform_11, window_bounds = array<i64: 2, 1, 32>}, {pipeline_mode = #tpu.pipeline_mode<synchronous>, transform_indices = @transform_12, window_bounds = array<i64: 2, 1, 32>}, {transform_indices = @transform_13, window_bounds = array<i64: 1, 8, 32>}]} {
    %c0 = arith.constant 0 : index
    %c0_0 = arith.constant 0 : index
    %c0_1 = arith.constant 0 : index
    %0 = vector.load %arg1[%c0, %c0_0, %c0_1] : memref<1x8x32xf32, #tpu.memory_space<vmem>>, vector<1x8x32xf32>
    %1 = vector.shape_cast %0 : vector<1x8x32xf32> to vector<8x32xf32>
    %c0_2 = arith.constant 0 : index
    %c0_3 = arith.constant 0 : index
    %c0_4 = arith.constant 0 : index
    %2 = vector.load %arg2[%c0_2, %c0_3, %c0_4] : memref<1x1x8xf32, #tpu.memory_space<vmem>>, vector<1x1x8xf32>
    %3 = vector.shape_cast %2 : vector<1x1x8xf32> to vector<1x8xf32>
    %4 = arith.truncf %1 : vector<8x32xf32> to vector<8x32xbf16>
    %c0_5 = arith.constant 0 : index
    %c0_6 = arith.constant 0 : index
    %c0_7 = arith.constant 0 : index
    %5 = vector.load %arg3[%c0_5, %c0_6, %c0_7] : memref<2x32x96xbf16, #tpu.memory_space<vmem>>, vector<1x32x96xbf16>
    %6 = vector.shape_cast %5 : vector<1x32x96xbf16> to vector<32x96xbf16>
    %cst = arith.constant dense<0.000000e+00> : vector<8x96xf32>
    %7 = tpu.matmul %4, %6, %cst {dimension_numbers = #tpu.dot_dimension_numbers<[1], [0], [0], [1], [0, 0, 1, 1], [], []>} : vector<8x32xbf16>, vector<32x96xbf16>, vector<8x96xf32> -> vector<8x96xf32>
    %8 = vector.extract_strided_slice %7 {offsets = [0, 0], sizes = [8, 32], strides = [1, 1]} : vector<8x96xf32> to vector<8x32xf32>
    %9 = vector.extract_strided_slice %7 {offsets = [0, 32], sizes = [8, 32], strides = [1, 1]} : vector<8x96xf32> to vector<8x32xf32>
    %10 = vector.extract_strided_slice %7 {offsets = [0, 64], sizes = [8, 32], strides = [1, 1]} : vector<8x96xf32> to vector<8x32xf32>
    %c0_8 = arith.constant 0 : index
    %c0_9 = arith.constant 0 : index
    %c0_10 = arith.constant 0 : index
    %c0_11 = arith.constant 0 : index
    %11 = vector.load %arg4[%c0_8, %c0_9, %c0_10, %c0_11] : memref<2x4x8x32xbf16, #tpu.memory_space<vmem>>, vector<1x4x8x32xbf16>
    %12 = vector.shape_cast %11 : vector<1x4x8x32xbf16> to vector<4x8x32xbf16>
    %c0_12 = arith.constant 0 : index
    %c0_13 = arith.constant 0 : index
    %c0_14 = arith.constant 0 : index
    %13 = vector.load %arg5[%c0_12, %c0_13, %c0_14] : memref<2x1x32xf32, #tpu.memory_space<vmem>>, vector<1x1x32xf32>
    %14 = vector.shape_cast %13 : vector<1x1x32xf32> to vector<1x32xf32>
    %15 = arith.truncf %8 : vector<8x32xf32> to vector<8x32xbf16>
    %16 = arith.truncf %9 : vector<8x32xf32> to vector<8x32xbf16>
    %17 = arith.truncf %10 : vector<8x32xf32> to vector<8x32xbf16>
    %18 = vector.extract_strided_slice %15 {offsets = [0, 0], sizes = [8, 8], strides = [1, 1]} : vector<8x32xbf16> to vector<8x8xbf16>
    %19 = vector.extract_strided_slice %16 {offsets = [0, 0], sizes = [8, 8], strides = [1, 1]} : vector<8x32xbf16> to vector<8x8xbf16>
    %20 = vector.extract_strided_slice %17 {offsets = [0, 0], sizes = [8, 8], strides = [1, 1]} : vector<8x32xbf16> to vector<8x8xbf16>
    %cst_15 = arith.constant dense<0.000000e+00> : vector<8x8xf32>
    %21 = tpu.matmul %18, %19, %cst_15 {dimension_numbers = #tpu.dot_dimension_numbers<[1], [1], [0], [0], [0, 0, 1, 0], [], []>} : vector<8x8xbf16>, vector<8x8xbf16>, vector<8x8xf32> -> vector<8x8xf32>
    %22 = vector.broadcast %3 : vector<1x8xf32> to vector<8x8xf32>
    %23 = arith.addf %21, %22 : vector<8x8xf32>
    %cst_16 = arith.constant dense<0xFF800000> : vector<8xf32>
    %24 = vector.multi_reduction <maximumf>, %23, %cst_16 [1] : vector<8x8xf32> to vector<8xf32>
    %25 = vector.shape_cast %24 : vector<8xf32> to vector<8x1xf32>
    %26 = vector.broadcast %25 : vector<8x1xf32> to vector<8x8xf32>
    %27 = arith.subf %23, %26 : vector<8x8xf32>
    %28 = math.exp %27 : vector<8x8xf32>
    %cst_17 = arith.constant dense<0.000000e+00> : vector<8xf32>
    %29 = vector.multi_reduction <add>, %28, %cst_17 [1] : vector<8x8xf32> to vector<8xf32>
    %30 = vector.shape_cast %29 : vector<8xf32> to vector<8x1xf32>
    %31 = tpu.reciprocal %30 {approx = true} : vector<8x1xf32> -> vector<8x1xf32>
    %32 = vector.broadcast %31 : vector<8x1xf32> to vector<8x8xf32>
    %33 = arith.mulf %28, %32 : vector<8x8xf32>
    %34 = arith.truncf %33 : vector<8x8xf32> to vector<8x8xbf16>
    %cst_18 = arith.constant dense<0.000000e+00> : vector<8x8xf32>
    %35 = tpu.matmul %34, %20, %cst_18 {dimension_numbers = #tpu.dot_dimension_numbers<[1], [0], [0], [1], [0, 0, 1, 1], [], []>} : vector<8x8xbf16>, vector<8x8xbf16>, vector<8x8xf32> -> vector<8x8xf32>
    %36 = arith.truncf %35 : vector<8x8xf32> to vector<8x8xbf16>
    %37 = vector.extract_strided_slice %12 {offsets = [0, 0, 0], sizes = [1, 8, 32], strides = [1, 1, 1]} : vector<4x8x32xbf16> to vector<1x8x32xbf16>
    %38 = vector.shape_cast %37 : vector<1x8x32xbf16> to vector<8x32xbf16>
    %cst_19 = arith.constant dense<0.000000e+00> : vector<8x32xf32>
    %39 = tpu.matmul %36, %38, %cst_19 {dimension_numbers = #tpu.dot_dimension_numbers<[1], [0], [0], [1], [0, 0, 1, 1], [], []>} : vector<8x8xbf16>, vector<8x32xbf16>, vector<8x32xf32> -> vector<8x32xf32>
    %40 = vector.extract_strided_slice %15 {offsets = [0, 8], sizes = [8, 8], strides = [1, 1]} : vector<8x32xbf16> to vector<8x8xbf16>
    %41 = vector.extract_strided_slice %16 {offsets = [0, 8], sizes = [8, 8], strides = [1, 1]} : vector<8x32xbf16> to vector<8x8xbf16>
    %42 = vector.extract_strided_slice %17 {offsets = [0, 8], sizes = [8, 8], strides = [1, 1]} : vector<8x32xbf16> to vector<8x8xbf16>
    %cst_20 = arith.constant dense<0.000000e+00> : vector<8x8xf32>
    %43 = tpu.matmul %40, %41, %cst_20 {dimension_numbers = #tpu.dot_dimension_numbers<[1], [1], [0], [0], [0, 0, 1, 0], [], []>} : vector<8x8xbf16>, vector<8x8xbf16>, vector<8x8xf32> -> vector<8x8xf32>
    %44 = vector.broadcast %3 : vector<1x8xf32> to vector<8x8xf32>
    %45 = arith.addf %43, %44 : vector<8x8xf32>
    %cst_21 = arith.constant dense<0xFF800000> : vector<8xf32>
    %46 = vector.multi_reduction <maximumf>, %45, %cst_21 [1] : vector<8x8xf32> to vector<8xf32>
    %47 = vector.shape_cast %46 : vector<8xf32> to vector<8x1xf32>
    %48 = vector.broadcast %47 : vector<8x1xf32> to vector<8x8xf32>
    %49 = arith.subf %45, %48 : vector<8x8xf32>
    %50 = math.exp %49 : vector<8x8xf32>
    %cst_22 = arith.constant dense<0.000000e+00> : vector<8xf32>
    %51 = vector.multi_reduction <add>, %50, %cst_22 [1] : vector<8x8xf32> to vector<8xf32>
    %52 = vector.shape_cast %51 : vector<8xf32> to vector<8x1xf32>
    %53 = tpu.reciprocal %52 {approx = true} : vector<8x1xf32> -> vector<8x1xf32>
    %54 = vector.broadcast %53 : vector<8x1xf32> to vector<8x8xf32>
    %55 = arith.mulf %50, %54 : vector<8x8xf32>
    %56 = arith.truncf %55 : vector<8x8xf32> to vector<8x8xbf16>
    %cst_23 = arith.constant dense<0.000000e+00> : vector<8x8xf32>
    %57 = tpu.matmul %56, %42, %cst_23 {dimension_numbers = #tpu.dot_dimension_numbers<[1], [0], [0], [1], [0, 0, 1, 1], [], []>} : vector<8x8xbf16>, vector<8x8xbf16>, vector<8x8xf32> -> vector<8x8xf32>
    %58 = arith.truncf %57 : vector<8x8xf32> to vector<8x8xbf16>
    %59 = vector.extract_strided_slice %12 {offsets = [1, 0, 0], sizes = [1, 8, 32], strides = [1, 1, 1]} : vector<4x8x32xbf16> to vector<1x8x32xbf16>
    %60 = vector.shape_cast %59 : vector<1x8x32xbf16> to vector<8x32xbf16>
    %cst_24 = arith.constant dense<0.000000e+00> : vector<8x32xf32>
    %61 = tpu.matmul %58, %60, %cst_24 {dimension_numbers = #tpu.dot_dimension_numbers<[1], [0], [0], [1], [0, 0, 1, 1], [], []>} : vector<8x8xbf16>, vector<8x32xbf16>, vector<8x32xf32> -> vector<8x32xf32>
    %62 = arith.addf %39, %61 : vector<8x32xf32>
    %63 = vector.extract_strided_slice %15 {offsets = [0, 16], sizes = [8, 8], strides = [1, 1]} : vector<8x32xbf16> to vector<8x8xbf16>
    %64 = vector.extract_strided_slice %16 {offsets = [0, 16], sizes = [8, 8], strides = [1, 1]} : vector<8x32xbf16> to vector<8x8xbf16>
    %65 = vector.extract_strided_slice %17 {offsets = [0, 16], sizes = [8, 8], strides = [1, 1]} : vector<8x32xbf16> to vector<8x8xbf16>
    %cst_25 = arith.constant dense<0.000000e+00> : vector<8x8xf32>
    %66 = tpu.matmul %63, %64, %cst_25 {dimension_numbers = #tpu.dot_dimension_numbers<[1], [1], [0], [0], [0, 0, 1, 0], [], []>} : vector<8x8xbf16>, vector<8x8xbf16>, vector<8x8xf32> -> vector<8x8xf32>
    %67 = vector.broadcast %3 : vector<1x8xf32> to vector<8x8xf32>
    %68 = arith.addf %66, %67 : vector<8x8xf32>
    %cst_26 = arith.constant dense<0xFF800000> : vector<8xf32>
    %69 = vector.multi_reduction <maximumf>, %68, %cst_26 [1] : vector<8x8xf32> to vector<8xf32>
    %70 = vector.shape_cast %69 : vector<8xf32> to vector<8x1xf32>
    %71 = vector.broadcast %70 : vector<8x1xf32> to vector<8x8xf32>
    %72 = arith.subf %68, %71 : vector<8x8xf32>
    %73 = math.exp %72 : vector<8x8xf32>
    %cst_27 = arith.constant dense<0.000000e+00> : vector<8xf32>
    %74 = vector.multi_reduction <add>, %73, %cst_27 [1] : vector<8x8xf32> to vector<8xf32>
    %75 = vector.shape_cast %74 : vector<8xf32> to vector<8x1xf32>
    %76 = tpu.reciprocal %75 {approx = true} : vector<8x1xf32> -> vector<8x1xf32>
    %77 = vector.broadcast %76 : vector<8x1xf32> to vector<8x8xf32>
    %78 = arith.mulf %73, %77 : vector<8x8xf32>
    %79 = arith.truncf %78 : vector<8x8xf32> to vector<8x8xbf16>
    %cst_28 = arith.constant dense<0.000000e+00> : vector<8x8xf32>
    %80 = tpu.matmul %79, %65, %cst_28 {dimension_numbers = #tpu.dot_dimension_numbers<[1], [0], [0], [1], [0, 0, 1, 1], [], []>} : vector<8x8xbf16>, vector<8x8xbf16>, vector<8x8xf32> -> vector<8x8xf32>
    %81 = arith.truncf %80 : vector<8x8xf32> to vector<8x8xbf16>
    %82 = vector.extract_strided_slice %12 {offsets = [2, 0, 0], sizes = [1, 8, 32], strides = [1, 1, 1]} : vector<4x8x32xbf16> to vector<1x8x32xbf16>
    %83 = vector.shape_cast %82 : vector<1x8x32xbf16> to vector<8x32xbf16>
    %cst_29 = arith.constant dense<0.000000e+00> : vector<8x32xf32>
    %84 = tpu.matmul %81, %83, %cst_29 {dimension_numbers = #tpu.dot_dimension_numbers<[1], [0], [0], [1], [0, 0, 1, 1], [], []>} : vector<8x8xbf16>, vector<8x32xbf16>, vector<8x32xf32> -> vector<8x32xf32>
    %85 = arith.addf %62, %84 : vector<8x32xf32>
    %86 = vector.extract_strided_slice %15 {offsets = [0, 24], sizes = [8, 8], strides = [1, 1]} : vector<8x32xbf16> to vector<8x8xbf16>
    %87 = vector.extract_strided_slice %16 {offsets = [0, 24], sizes = [8, 8], strides = [1, 1]} : vector<8x32xbf16> to vector<8x8xbf16>
    %88 = vector.extract_strided_slice %17 {offsets = [0, 24], sizes = [8, 8], strides = [1, 1]} : vector<8x32xbf16> to vector<8x8xbf16>
    %cst_30 = arith.constant dense<0.000000e+00> : vector<8x8xf32>
    %89 = tpu.matmul %86, %87, %cst_30 {dimension_numbers = #tpu.dot_dimension_numbers<[1], [1], [0], [0], [0, 0, 1, 0], [], []>} : vector<8x8xbf16>, vector<8x8xbf16>, vector<8x8xf32> -> vector<8x8xf32>
    %90 = vector.broadcast %3 : vector<1x8xf32> to vector<8x8xf32>
    %91 = arith.addf %89, %90 : vector<8x8xf32>
    %cst_31 = arith.constant dense<0xFF800000> : vector<8xf32>
    %92 = vector.multi_reduction <maximumf>, %91, %cst_31 [1] : vector<8x8xf32> to vector<8xf32>
    %93 = vector.shape_cast %92 : vector<8xf32> to vector<8x1xf32>
    %94 = vector.broadcast %93 : vector<8x1xf32> to vector<8x8xf32>
    %95 = arith.subf %91, %94 : vector<8x8xf32>
    %96 = math.exp %95 : vector<8x8xf32>
    %cst_32 = arith.constant dense<0.000000e+00> : vector<8xf32>
    %97 = vector.multi_reduction <add>, %96, %cst_32 [1] : vector<8x8xf32> to vector<8xf32>
    %98 = vector.shape_cast %97 : vector<8xf32> to vector<8x1xf32>
    %99 = tpu.reciprocal %98 {approx = true} : vector<8x1xf32> -> vector<8x1xf32>
    %100 = vector.broadcast %99 : vector<8x1xf32> to vector<8x8xf32>
    %101 = arith.mulf %96, %100 : vector<8x8xf32>
    %102 = arith.truncf %101 : vector<8x8xf32> to vector<8x8xbf16>
    %cst_33 = arith.constant dense<0.000000e+00> : vector<8x8xf32>
    %103 = tpu.matmul %102, %88, %cst_33 {dimension_numbers = #tpu.dot_dimension_numbers<[1], [0], [0], [1], [0, 0, 1, 1], [], []>} : vector<8x8xbf16>, vector<8x8xbf16>, vector<8x8xf32> -> vector<8x8xf32>
    %104 = arith.truncf %103 : vector<8x8xf32> to vector<8x8xbf16>
    %105 = vector.extract_strided_slice %12 {offsets = [3, 0, 0], sizes = [1, 8, 32], strides = [1, 1, 1]} : vector<4x8x32xbf16> to vector<1x8x32xbf16>
    %106 = vector.shape_cast %105 : vector<1x8x32xbf16> to vector<8x32xbf16>
    %cst_34 = arith.constant dense<0.000000e+00> : vector<8x32xf32>
    %107 = tpu.matmul %104, %106, %cst_34 {dimension_numbers = #tpu.dot_dimension_numbers<[1], [0], [0], [1], [0, 0, 1, 1], [], []>} : vector<8x8xbf16>, vector<8x32xbf16>, vector<8x32xf32> -> vector<8x32xf32>
    %108 = arith.addf %85, %107 : vector<8x32xf32>
    %109 = vector.broadcast %14 : vector<1x32xf32> to vector<8x32xf32>
    %110 = arith.addf %108, %109 : vector<8x32xf32>
    %111 = arith.addf %110, %1 : vector<8x32xf32>
    %c0_35 = arith.constant 0 : index
    %c0_36 = arith.constant 0 : index
    %c0_37 = arith.constant 0 : index
    %112 = vector.load %arg6[%c0_35, %c0_36, %c0_37] : memref<2x1x32xf32, #tpu.memory_space<vmem>>, vector<1x1x32xf32>
    %113 = vector.shape_cast %112 : vector<1x1x32xf32> to vector<1x32xf32>
    %c0_38 = arith.constant 0 : index
    %c0_39 = arith.constant 0 : index
    %c0_40 = arith.constant 0 : index
    %114 = vector.load %arg7[%c0_38, %c0_39, %c0_40] : memref<2x1x32xf32, #tpu.memory_space<vmem>>, vector<1x1x32xf32>
    %115 = vector.shape_cast %114 : vector<1x1x32xf32> to vector<1x32xf32>
    %cst_41 = arith.constant dense<0.000000e+00> : vector<8xf32>
    %116 = vector.multi_reduction <add>, %111, %cst_41 [1] : vector<8x32xf32> to vector<8xf32>
    %117 = vector.shape_cast %116 : vector<8xf32> to vector<8x1xf32>
    %cst_42 = arith.constant 3.200000e+01 : f32
    %118 = vector.broadcast %cst_42 : f32 to vector<8x1xf32>
    %119 = arith.divf %117, %118 : vector<8x1xf32>
    %120 = vector.broadcast %119 : vector<8x1xf32> to vector<8x32xf32>
    %121 = arith.subf %111, %120 : vector<8x32xf32>
    %122 = arith.mulf %121, %121 : vector<8x32xf32>
    %cst_43 = arith.constant dense<0.000000e+00> : vector<8xf32>
    %123 = vector.multi_reduction <add>, %122, %cst_43 [1] : vector<8x32xf32> to vector<8xf32>
    %124 = vector.shape_cast %123 : vector<8xf32> to vector<8x1xf32>
    %cst_44 = arith.constant 3.200000e+01 : f32
    %125 = vector.broadcast %cst_44 : f32 to vector<8x1xf32>
    %126 = arith.divf %124, %125 : vector<8x1xf32>
    %cst_45 = arith.constant 9.99999974E-6 : f32
    %127 = vector.broadcast %cst_45 : f32 to vector<8x1xf32>
    %128 = arith.addf %126, %127 : vector<8x1xf32>
    %129 = math.rsqrt %128 : vector<8x1xf32>
    %130 = vector.broadcast %129 : vector<8x1xf32> to vector<8x32xf32>
    %131 = arith.mulf %121, %130 : vector<8x32xf32>
    %132 = vector.broadcast %113 : vector<1x32xf32> to vector<8x32xf32>
    %133 = arith.mulf %131, %132 : vector<8x32xf32>
    %134 = vector.broadcast %115 : vector<1x32xf32> to vector<8x32xf32>
    %135 = arith.addf %133, %134 : vector<8x32xf32>
    %136 = arith.truncf %135 : vector<8x32xf32> to vector<8x32xbf16>
    %c0_46 = arith.constant 0 : index
    %c0_47 = arith.constant 0 : index
    %c0_48 = arith.constant 0 : index
    %137 = vector.load %arg8[%c0_46, %c0_47, %c0_48] : memref<2x32x64xbf16, #tpu.memory_space<vmem>>, vector<1x32x64xbf16>
    %138 = vector.shape_cast %137 : vector<1x32x64xbf16> to vector<32x64xbf16>
    %cst_49 = arith.constant dense<0.000000e+00> : vector<8x64xf32>
    %139 = tpu.matmul %136, %138, %cst_49 {dimension_numbers = #tpu.dot_dimension_numbers<[1], [0], [0], [1], [0, 0, 1, 1], [], []>} : vector<8x32xbf16>, vector<32x64xbf16>, vector<8x64xf32> -> vector<8x64xf32>
    %c0_50 = arith.constant 0 : index
    %c0_51 = arith.constant 0 : index
    %c0_52 = arith.constant 0 : index
    %140 = vector.load %arg9[%c0_50, %c0_51, %c0_52] : memref<2x1x64xf32, #tpu.memory_space<vmem>>, vector<1x1x64xf32>
    %141 = vector.shape_cast %140 : vector<1x1x64xf32> to vector<1x64xf32>
    %142 = vector.broadcast %141 : vector<1x64xf32> to vector<8x64xf32>
    %143 = arith.addf %139, %142 : vector<8x64xf32>
    %cst_53 = arith.constant 0.000000e+00 : f32
    %144 = vector.broadcast %cst_53 : f32 to vector<8x64xf32>
    %145 = arith.maximumf %143, %144 : vector<8x64xf32>
    %146 = arith.truncf %145 : vector<8x64xf32> to vector<8x64xbf16>
    %c0_54 = arith.constant 0 : index
    %c0_55 = arith.constant 0 : index
    %c0_56 = arith.constant 0 : index
    %147 = vector.load %arg10[%c0_54, %c0_55, %c0_56] : memref<2x64x32xbf16, #tpu.memory_space<vmem>>, vector<1x64x32xbf16>
    %148 = vector.shape_cast %147 : vector<1x64x32xbf16> to vector<64x32xbf16>
    %cst_57 = arith.constant dense<0.000000e+00> : vector<8x32xf32>
    %149 = tpu.matmul %146, %148, %cst_57 {dimension_numbers = #tpu.dot_dimension_numbers<[1], [0], [0], [1], [0, 0, 1, 1], [], []>} : vector<8x64xbf16>, vector<64x32xbf16>, vector<8x32xf32> -> vector<8x32xf32>
    %c0_58 = arith.constant 0 : index
    %c0_59 = arith.constant 0 : index
    %c0_60 = arith.constant 0 : index
    %150 = vector.load %arg11[%c0_58, %c0_59, %c0_60] : memref<2x1x32xf32, #tpu.memory_space<vmem>>, vector<1x1x32xf32>
    %151 = vector.shape_cast %150 : vector<1x1x32xf32> to vector<1x32xf32>
    %152 = vector.broadcast %151 : vector<1x32xf32> to vector<8x32xf32>
    %153 = arith.addf %149, %152 : vector<8x32xf32>
    %154 = arith.addf %153, %135 : vector<8x32xf32>
    %c0_61 = arith.constant 0 : index
    %c0_62 = arith.constant 0 : index
    %c0_63 = arith.constant 0 : index
    %155 = vector.load %arg12[%c0_61, %c0_62, %c0_63] : memref<2x1x32xf32, #tpu.memory_space<vmem>>, vector<1x1x32xf32>
    %156 = vector.shape_cast %155 : vector<1x1x32xf32> to vector<1x32xf32>
    %c0_64 = arith.constant 0 : index
    %c0_65 = arith.constant 0 : index
    %c0_66 = arith.constant 0 : index
    %157 = vector.load %arg13[%c0_64, %c0_65, %c0_66] : memref<2x1x32xf32, #tpu.memory_space<vmem>>, vector<1x1x32xf32>
    %158 = vector.shape_cast %157 : vector<1x1x32xf32> to vector<1x32xf32>
    %cst_67 = arith.constant dense<0.000000e+00> : vector<8xf32>
    %159 = vector.multi_reduction <add>, %154, %cst_67 [1] : vector<8x32xf32> to vector<8xf32>
    %160 = vector.shape_cast %159 : vector<8xf32> to vector<8x1xf32>
    %cst_68 = arith.constant 3.200000e+01 : f32
    %161 = vector.broadcast %cst_68 : f32 to vector<8x1xf32>
    %162 = arith.divf %160, %161 : vector<8x1xf32>
    %163 = vector.broadcast %162 : vector<8x1xf32> to vector<8x32xf32>
    %164 = arith.subf %154, %163 : vector<8x32xf32>
    %165 = arith.mulf %164, %164 : vector<8x32xf32>
    %cst_69 = arith.constant dense<0.000000e+00> : vector<8xf32>
    %166 = vector.multi_reduction <add>, %165, %cst_69 [1] : vector<8x32xf32> to vector<8xf32>
    %167 = vector.shape_cast %166 : vector<8xf32> to vector<8x1xf32>
    %cst_70 = arith.constant 3.200000e+01 : f32
    %168 = vector.broadcast %cst_70 : f32 to vector<8x1xf32>
    %169 = arith.divf %167, %168 : vector<8x1xf32>
    %cst_71 = arith.constant 9.99999974E-6 : f32
    %170 = vector.broadcast %cst_71 : f32 to vector<8x1xf32>
    %171 = arith.addf %169, %170 : vector<8x1xf32>
    %172 = math.rsqrt %171 : vector<8x1xf32>
    %173 = vector.broadcast %172 : vector<8x1xf32> to vector<8x32xf32>
    %174 = arith.mulf %164, %173 : vector<8x32xf32>
    %175 = vector.broadcast %156 : vector<1x32xf32> to vector<8x32xf32>
    %176 = arith.mulf %174, %175 : vector<8x32xf32>
    %177 = vector.broadcast %158 : vector<1x32xf32> to vector<8x32xf32>
    %178 = arith.addf %176, %177 : vector<8x32xf32>
    %179 = arith.truncf %178 : vector<8x32xf32> to vector<8x32xbf16>
    %c1 = arith.constant 1 : index
    %c0_72 = arith.constant 0 : index
    %c0_73 = arith.constant 0 : index
    %180 = vector.load %arg3[%c1, %c0_72, %c0_73] : memref<2x32x96xbf16, #tpu.memory_space<vmem>>, vector<1x32x96xbf16>
    %181 = vector.shape_cast %180 : vector<1x32x96xbf16> to vector<32x96xbf16>
    %cst_74 = arith.constant dense<0.000000e+00> : vector<8x96xf32>
    %182 = tpu.matmul %179, %181, %cst_74 {dimension_numbers = #tpu.dot_dimension_numbers<[1], [0], [0], [1], [0, 0, 1, 1], [], []>} : vector<8x32xbf16>, vector<32x96xbf16>, vector<8x96xf32> -> vector<8x96xf32>
    %183 = vector.extract_strided_slice %182 {offsets = [0, 0], sizes = [8, 32], strides = [1, 1]} : vector<8x96xf32> to vector<8x32xf32>
    %184 = vector.extract_strided_slice %182 {offsets = [0, 32], sizes = [8, 32], strides = [1, 1]} : vector<8x96xf32> to vector<8x32xf32>
    %185 = vector.extract_strided_slice %182 {offsets = [0, 64], sizes = [8, 32], strides = [1, 1]} : vector<8x96xf32> to vector<8x32xf32>
    %c1_75 = arith.constant 1 : index
    %c0_76 = arith.constant 0 : index
    %c0_77 = arith.constant 0 : index
    %c0_78 = arith.constant 0 : index
    %186 = vector.load %arg4[%c1_75, %c0_76, %c0_77, %c0_78] : memref<2x4x8x32xbf16, #tpu.memory_space<vmem>>, vector<1x4x8x32xbf16>
    %187 = vector.shape_cast %186 : vector<1x4x8x32xbf16> to vector<4x8x32xbf16>
    %c1_79 = arith.constant 1 : index
    %c0_80 = arith.constant 0 : index
    %c0_81 = arith.constant 0 : index
    %188 = vector.load %arg5[%c1_79, %c0_80, %c0_81] : memref<2x1x32xf32, #tpu.memory_space<vmem>>, vector<1x1x32xf32>
    %189 = vector.shape_cast %188 : vector<1x1x32xf32> to vector<1x32xf32>
    %190 = arith.truncf %183 : vector<8x32xf32> to vector<8x32xbf16>
    %191 = arith.truncf %184 : vector<8x32xf32> to vector<8x32xbf16>
    %192 = arith.truncf %185 : vector<8x32xf32> to vector<8x32xbf16>
    %193 = vector.extract_strided_slice %190 {offsets = [0, 0], sizes = [8, 8], strides = [1, 1]} : vector<8x32xbf16> to vector<8x8xbf16>
    %194 = vector.extract_strided_slice %191 {offsets = [0, 0], sizes = [8, 8], strides = [1, 1]} : vector<8x32xbf16> to vector<8x8xbf16>
    %195 = vector.extract_strided_slice %192 {offsets = [0, 0], sizes = [8, 8], strides = [1, 1]} : vector<8x32xbf16> to vector<8x8xbf16>
    %cst_82 = arith.constant dense<0.000000e+00> : vector<8x8xf32>
    %196 = tpu.matmul %193, %194, %cst_82 {dimension_numbers = #tpu.dot_dimension_numbers<[1], [1], [0], [0], [0, 0, 1, 0], [], []>} : vector<8x8xbf16>, vector<8x8xbf16>, vector<8x8xf32> -> vector<8x8xf32>
    %197 = vector.broadcast %3 : vector<1x8xf32> to vector<8x8xf32>
    %198 = arith.addf %196, %197 : vector<8x8xf32>
    %cst_83 = arith.constant dense<0xFF800000> : vector<8xf32>
    %199 = vector.multi_reduction <maximumf>, %198, %cst_83 [1] : vector<8x8xf32> to vector<8xf32>
    %200 = vector.shape_cast %199 : vector<8xf32> to vector<8x1xf32>
    %201 = vector.broadcast %200 : vector<8x1xf32> to vector<8x8xf32>
    %202 = arith.subf %198, %201 : vector<8x8xf32>
    %203 = math.exp %202 : vector<8x8xf32>
    %cst_84 = arith.constant dense<0.000000e+00> : vector<8xf32>
    %204 = vector.multi_reduction <add>, %203, %cst_84 [1] : vector<8x8xf32> to vector<8xf32>
    %205 = vector.shape_cast %204 : vector<8xf32> to vector<8x1xf32>
    %206 = tpu.reciprocal %205 {approx = true} : vector<8x1xf32> -> vector<8x1xf32>
    %207 = vector.broadcast %206 : vector<8x1xf32> to vector<8x8xf32>
    %208 = arith.mulf %203, %207 : vector<8x8xf32>
    %209 = arith.truncf %208 : vector<8x8xf32> to vector<8x8xbf16>
    %cst_85 = arith.constant dense<0.000000e+00> : vector<8x8xf32>
    %210 = tpu.matmul %209, %195, %cst_85 {dimension_numbers = #tpu.dot_dimension_numbers<[1], [0], [0], [1], [0, 0, 1, 1], [], []>} : vector<8x8xbf16>, vector<8x8xbf16>, vector<8x8xf32> -> vector<8x8xf32>
    %211 = arith.truncf %210 : vector<8x8xf32> to vector<8x8xbf16>
    %212 = vector.extract_strided_slice %187 {offsets = [0, 0, 0], sizes = [1, 8, 32], strides = [1, 1, 1]} : vector<4x8x32xbf16> to vector<1x8x32xbf16>
    %213 = vector.shape_cast %212 : vector<1x8x32xbf16> to vector<8x32xbf16>
    %cst_86 = arith.constant dense<0.000000e+00> : vector<8x32xf32>
    %214 = tpu.matmul %211, %213, %cst_86 {dimension_numbers = #tpu.dot_dimension_numbers<[1], [0], [0], [1], [0, 0, 1, 1], [], []>} : vector<8x8xbf16>, vector<8x32xbf16>, vector<8x32xf32> -> vector<8x32xf32>
    %215 = vector.extract_strided_slice %190 {offsets = [0, 8], sizes = [8, 8], strides = [1, 1]} : vector<8x32xbf16> to vector<8x8xbf16>
    %216 = vector.extract_strided_slice %191 {offsets = [0, 8], sizes = [8, 8], strides = [1, 1]} : vector<8x32xbf16> to vector<8x8xbf16>
    %217 = vector.extract_strided_slice %192 {offsets = [0, 8], sizes = [8, 8], strides = [1, 1]} : vector<8x32xbf16> to vector<8x8xbf16>
    %cst_87 = arith.constant dense<0.000000e+00> : vector<8x8xf32>
    %218 = tpu.matmul %215, %216, %cst_87 {dimension_numbers = #tpu.dot_dimension_numbers<[1], [1], [0], [0], [0, 0, 1, 0], [], []>} : vector<8x8xbf16>, vector<8x8xbf16>, vector<8x8xf32> -> vector<8x8xf32>
    %219 = vector.broadcast %3 : vector<1x8xf32> to vector<8x8xf32>
    %220 = arith.addf %218, %219 : vector<8x8xf32>
    %cst_88 = arith.constant dense<0xFF800000> : vector<8xf32>
    %221 = vector.multi_reduction <maximumf>, %220, %cst_88 [1] : vector<8x8xf32> to vector<8xf32>
    %222 = vector.shape_cast %221 : vector<8xf32> to vector<8x1xf32>
    %223 = vector.broadcast %222 : vector<8x1xf32> to vector<8x8xf32>
    %224 = arith.subf %220, %223 : vector<8x8xf32>
    %225 = math.exp %224 : vector<8x8xf32>
    %cst_89 = arith.constant dense<0.000000e+00> : vector<8xf32>
    %226 = vector.multi_reduction <add>, %225, %cst_89 [1] : vector<8x8xf32> to vector<8xf32>
    %227 = vector.shape_cast %226 : vector<8xf32> to vector<8x1xf32>
    %228 = tpu.reciprocal %227 {approx = true} : vector<8x1xf32> -> vector<8x1xf32>
    %229 = vector.broadcast %228 : vector<8x1xf32> to vector<8x8xf32>
    %230 = arith.mulf %225, %229 : vector<8x8xf32>
    %231 = arith.truncf %230 : vector<8x8xf32> to vector<8x8xbf16>
    %cst_90 = arith.constant dense<0.000000e+00> : vector<8x8xf32>
    %232 = tpu.matmul %231, %217, %cst_90 {dimension_numbers = #tpu.dot_dimension_numbers<[1], [0], [0], [1], [0, 0, 1, 1], [], []>} : vector<8x8xbf16>, vector<8x8xbf16>, vector<8x8xf32> -> vector<8x8xf32>
    %233 = arith.truncf %232 : vector<8x8xf32> to vector<8x8xbf16>
    %234 = vector.extract_strided_slice %187 {offsets = [1, 0, 0], sizes = [1, 8, 32], strides = [1, 1, 1]} : vector<4x8x32xbf16> to vector<1x8x32xbf16>
    %235 = vector.shape_cast %234 : vector<1x8x32xbf16> to vector<8x32xbf16>
    %cst_91 = arith.constant dense<0.000000e+00> : vector<8x32xf32>
    %236 = tpu.matmul %233, %235, %cst_91 {dimension_numbers = #tpu.dot_dimension_numbers<[1], [0], [0], [1], [0, 0, 1, 1], [], []>} : vector<8x8xbf16>, vector<8x32xbf16>, vector<8x32xf32> -> vector<8x32xf32>
    %237 = arith.addf %214, %236 : vector<8x32xf32>
    %238 = vector.extract_strided_slice %190 {offsets = [0, 16], sizes = [8, 8], strides = [1, 1]} : vector<8x32xbf16> to vector<8x8xbf16>
    %239 = vector.extract_strided_slice %191 {offsets = [0, 16], sizes = [8, 8], strides = [1, 1]} : vector<8x32xbf16> to vector<8x8xbf16>
    %240 = vector.extract_strided_slice %192 {offsets = [0, 16], sizes = [8, 8], strides = [1, 1]} : vector<8x32xbf16> to vector<8x8xbf16>
    %cst_92 = arith.constant dense<0.000000e+00> : vector<8x8xf32>
    %241 = tpu.matmul %238, %239, %cst_92 {dimension_numbers = #tpu.dot_dimension_numbers<[1], [1], [0], [0], [0, 0, 1, 0], [], []>} : vector<8x8xbf16>, vector<8x8xbf16>, vector<8x8xf32> -> vector<8x8xf32>
    %242 = vector.broadcast %3 : vector<1x8xf32> to vector<8x8xf32>
    %243 = arith.addf %241, %242 : vector<8x8xf32>
    %cst_93 = arith.constant dense<0xFF800000> : vector<8xf32>
    %244 = vector.multi_reduction <maximumf>, %243, %cst_93 [1] : vector<8x8xf32> to vector<8xf32>
    %245 = vector.shape_cast %244 : vector<8xf32> to vector<8x1xf32>
    %246 = vector.broadcast %245 : vector<8x1xf32> to vector<8x8xf32>
    %247 = arith.subf %243, %246 : vector<8x8xf32>
    %248 = math.exp %247 : vector<8x8xf32>
    %cst_94 = arith.constant dense<0.000000e+00> : vector<8xf32>
    %249 = vector.multi_reduction <add>, %248, %cst_94 [1] : vector<8x8xf32> to vector<8xf32>
    %250 = vector.shape_cast %249 : vector<8xf32> to vector<8x1xf32>
    %251 = tpu.reciprocal %250 {approx = true} : vector<8x1xf32> -> vector<8x1xf32>
    %252 = vector.broadcast %251 : vector<8x1xf32> to vector<8x8xf32>
    %253 = arith.mulf %248, %252 : vector<8x8xf32>
    %254 = arith.truncf %253 : vector<8x8xf32> to vector<8x8xbf16>
    %cst_95 = arith.constant dense<0.000000e+00> : vector<8x8xf32>
    %255 = tpu.matmul %254, %240, %cst_95 {dimension_numbers = #tpu.dot_dimension_numbers<[1], [0], [0], [1], [0, 0, 1, 1], [], []>} : vector<8x8xbf16>, vector<8x8xbf16>, vector<8x8xf32> -> vector<8x8xf32>
    %256 = arith.truncf %255 : vector<8x8xf32> to vector<8x8xbf16>
    %257 = vector.extract_strided_slice %187 {offsets = [2, 0, 0], sizes = [1, 8, 32], strides = [1, 1, 1]} : vector<4x8x32xbf16> to vector<1x8x32xbf16>
    %258 = vector.shape_cast %257 : vector<1x8x32xbf16> to vector<8x32xbf16>
    %cst_96 = arith.constant dense<0.000000e+00> : vector<8x32xf32>
    %259 = tpu.matmul %256, %258, %cst_96 {dimension_numbers = #tpu.dot_dimension_numbers<[1], [0], [0], [1], [0, 0, 1, 1], [], []>} : vector<8x8xbf16>, vector<8x32xbf16>, vector<8x32xf32> -> vector<8x32xf32>
    %260 = arith.addf %237, %259 : vector<8x32xf32>
    %261 = vector.extract_strided_slice %190 {offsets = [0, 24], sizes = [8, 8], strides = [1, 1]} : vector<8x32xbf16> to vector<8x8xbf16>
    %262 = vector.extract_strided_slice %191 {offsets = [0, 24], sizes = [8, 8], strides = [1, 1]} : vector<8x32xbf16> to vector<8x8xbf16>
    %263 = vector.extract_strided_slice %192 {offsets = [0, 24], sizes = [8, 8], strides = [1, 1]} : vector<8x32xbf16> to vector<8x8xbf16>
    %cst_97 = arith.constant dense<0.000000e+00> : vector<8x8xf32>
    %264 = tpu.matmul %261, %262, %cst_97 {dimension_numbers = #tpu.dot_dimension_numbers<[1], [1], [0], [0], [0, 0, 1, 0], [], []>} : vector<8x8xbf16>, vector<8x8xbf16>, vector<8x8xf32> -> vector<8x8xf32>
    %265 = vector.broadcast %3 : vector<1x8xf32> to vector<8x8xf32>
    %266 = arith.addf %264, %265 : vector<8x8xf32>
    %cst_98 = arith.constant dense<0xFF800000> : vector<8xf32>
    %267 = vector.multi_reduction <maximumf>, %266, %cst_98 [1] : vector<8x8xf32> to vector<8xf32>
    %268 = vector.shape_cast %267 : vector<8xf32> to vector<8x1xf32>
    %269 = vector.broadcast %268 : vector<8x1xf32> to vector<8x8xf32>
    %270 = arith.subf %266, %269 : vector<8x8xf32>
    %271 = math.exp %270 : vector<8x8xf32>
    %cst_99 = arith.constant dense<0.000000e+00> : vector<8xf32>
    %272 = vector.multi_reduction <add>, %271, %cst_99 [1] : vector<8x8xf32> to vector<8xf32>
    %273 = vector.shape_cast %272 : vector<8xf32> to vector<8x1xf32>
    %274 = tpu.reciprocal %273 {approx = true} : vector<8x1xf32> -> vector<8x1xf32>
    %275 = vector.broadcast %274 : vector<8x1xf32> to vector<8x8xf32>
    %276 = arith.mulf %271, %275 : vector<8x8xf32>
    %277 = arith.truncf %276 : vector<8x8xf32> to vector<8x8xbf16>
    %cst_100 = arith.constant dense<0.000000e+00> : vector<8x8xf32>
    %278 = tpu.matmul %277, %263, %cst_100 {dimension_numbers = #tpu.dot_dimension_numbers<[1], [0], [0], [1], [0, 0, 1, 1], [], []>} : vector<8x8xbf16>, vector<8x8xbf16>, vector<8x8xf32> -> vector<8x8xf32>
    %279 = arith.truncf %278 : vector<8x8xf32> to vector<8x8xbf16>
    %280 = vector.extract_strided_slice %187 {offsets = [3, 0, 0], sizes = [1, 8, 32], strides = [1, 1, 1]} : vector<4x8x32xbf16> to vector<1x8x32xbf16>
    %281 = vector.shape_cast %280 : vector<1x8x32xbf16> to vector<8x32xbf16>
    %cst_101 = arith.constant dense<0.000000e+00> : vector<8x32xf32>
    %282 = tpu.matmul %279, %281, %cst_101 {dimension_numbers = #tpu.dot_dimension_numbers<[1], [0], [0], [1], [0, 0, 1, 1], [], []>} : vector<8x8xbf16>, vector<8x32xbf16>, vector<8x32xf32> -> vector<8x32xf32>
    %283 = arith.addf %260, %282 : vector<8x32xf32>
    %284 = vector.broadcast %189 : vector<1x32xf32> to vector<8x32xf32>
    %285 = arith.addf %283, %284 : vector<8x32xf32>
    %286 = arith.addf %285, %178 : vector<8x32xf32>
    %c1_102 = arith.constant 1 : index
    %c0_103 = arith.constant 0 : index
    %c0_104 = arith.constant 0 : index
    %287 = vector.load %arg6[%c1_102, %c0_103, %c0_104] : memref<2x1x32xf32, #tpu.memory_space<vmem>>, vector<1x1x32xf32>
    %288 = vector.shape_cast %287 : vector<1x1x32xf32> to vector<1x32xf32>
    %c1_105 = arith.constant 1 : index
    %c0_106 = arith.constant 0 : index
    %c0_107 = arith.constant 0 : index
    %289 = vector.load %arg7[%c1_105, %c0_106, %c0_107] : memref<2x1x32xf32, #tpu.memory_space<vmem>>, vector<1x1x32xf32>
    %290 = vector.shape_cast %289 : vector<1x1x32xf32> to vector<1x32xf32>
    %cst_108 = arith.constant dense<0.000000e+00> : vector<8xf32>
    %291 = vector.multi_reduction <add>, %286, %cst_108 [1] : vector<8x32xf32> to vector<8xf32>
    %292 = vector.shape_cast %291 : vector<8xf32> to vector<8x1xf32>
    %cst_109 = arith.constant 3.200000e+01 : f32
    %293 = vector.broadcast %cst_109 : f32 to vector<8x1xf32>
    %294 = arith.divf %292, %293 : vector<8x1xf32>
    %295 = vector.broadcast %294 : vector<8x1xf32> to vector<8x32xf32>
    %296 = arith.subf %286, %295 : vector<8x32xf32>
    %297 = arith.mulf %296, %296 : vector<8x32xf32>
    %cst_110 = arith.constant dense<0.000000e+00> : vector<8xf32>
    %298 = vector.multi_reduction <add>, %297, %cst_110 [1] : vector<8x32xf32> to vector<8xf32>
    %299 = vector.shape_cast %298 : vector<8xf32> to vector<8x1xf32>
    %cst_111 = arith.constant 3.200000e+01 : f32
    %300 = vector.broadcast %cst_111 : f32 to vector<8x1xf32>
    %301 = arith.divf %299, %300 : vector<8x1xf32>
    %cst_112 = arith.constant 9.99999974E-6 : f32
    %302 = vector.broadcast %cst_112 : f32 to vector<8x1xf32>
    %303 = arith.addf %301, %302 : vector<8x1xf32>
    %304 = math.rsqrt %303 : vector<8x1xf32>
    %305 = vector.broadcast %304 : vector<8x1xf32> to vector<8x32xf32>
    %306 = arith.mulf %296, %305 : vector<8x32xf32>
    %307 = vector.broadcast %288 : vector<1x32xf32> to vector<8x32xf32>
    %308 = arith.mulf %306, %307 : vector<8x32xf32>
    %309 = vector.broadcast %290 : vector<1x32xf32> to vector<8x32xf32>
    %310 = arith.addf %308, %309 : vector<8x32xf32>
    %311 = arith.truncf %310 : vector<8x32xf32> to vector<8x32xbf16>
    %c1_113 = arith.constant 1 : index
    %c0_114 = arith.constant 0 : index
    %c0_115 = arith.constant 0 : index
    %312 = vector.load %arg8[%c1_113, %c0_114, %c0_115] : memref<2x32x64xbf16, #tpu.memory_space<vmem>>, vector<1x32x64xbf16>
    %313 = vector.shape_cast %312 : vector<1x32x64xbf16> to vector<32x64xbf16>
    %cst_116 = arith.constant dense<0.000000e+00> : vector<8x64xf32>
    %314 = tpu.matmul %311, %313, %cst_116 {dimension_numbers = #tpu.dot_dimension_numbers<[1], [0], [0], [1], [0, 0, 1, 1], [], []>} : vector<8x32xbf16>, vector<32x64xbf16>, vector<8x64xf32> -> vector<8x64xf32>
    %c1_117 = arith.constant 1 : index
    %c0_118 = arith.constant 0 : index
    %c0_119 = arith.constant 0 : index
    %315 = vector.load %arg9[%c1_117, %c0_118, %c0_119] : memref<2x1x64xf32, #tpu.memory_space<vmem>>, vector<1x1x64xf32>
    %316 = vector.shape_cast %315 : vector<1x1x64xf32> to vector<1x64xf32>
    %317 = vector.broadcast %316 : vector<1x64xf32> to vector<8x64xf32>
    %318 = arith.addf %314, %317 : vector<8x64xf32>
    %cst_120 = arith.constant 0.000000e+00 : f32
    %319 = vector.broadcast %cst_120 : f32 to vector<8x64xf32>
    %320 = arith.maximumf %318, %319 : vector<8x64xf32>
    %321 = arith.truncf %320 : vector<8x64xf32> to vector<8x64xbf16>
    %c1_121 = arith.constant 1 : index
    %c0_122 = arith.constant 0 : index
    %c0_123 = arith.constant 0 : index
    %322 = vector.load %arg10[%c1_121, %c0_122, %c0_123] : memref<2x64x32xbf16, #tpu.memory_space<vmem>>, vector<1x64x32xbf16>
    %323 = vector.shape_cast %322 : vector<1x64x32xbf16> to vector<64x32xbf16>
    %cst_124 = arith.constant dense<0.000000e+00> : vector<8x32xf32>
    %324 = tpu.matmul %321, %323, %cst_124 {dimension_numbers = #tpu.dot_dimension_numbers<[1], [0], [0], [1], [0, 0, 1, 1], [], []>} : vector<8x64xbf16>, vector<64x32xbf16>, vector<8x32xf32> -> vector<8x32xf32>
    %c1_125 = arith.constant 1 : index
    %c0_126 = arith.constant 0 : index
    %c0_127 = arith.constant 0 : index
    %325 = vector.load %arg11[%c1_125, %c0_126, %c0_127] : memref<2x1x32xf32, #tpu.memory_space<vmem>>, vector<1x1x32xf32>
    %326 = vector.shape_cast %325 : vector<1x1x32xf32> to vector<1x32xf32>
    %327 = vector.broadcast %326 : vector<1x32xf32> to vector<8x32xf32>
    %328 = arith.addf %324, %327 : vector<8x32xf32>
    %329 = arith.addf %328, %310 : vector<8x32xf32>
    %c1_128 = arith.constant 1 : index
    %c0_129 = arith.constant 0 : index
    %c0_130 = arith.constant 0 : index
    %330 = vector.load %arg12[%c1_128, %c0_129, %c0_130] : memref<2x1x32xf32, #tpu.memory_space<vmem>>, vector<1x1x32xf32>
    %331 = vector.shape_cast %330 : vector<1x1x32xf32> to vector<1x32xf32>
    %c1_131 = arith.constant 1 : index
    %c0_132 = arith.constant 0 : index
    %c0_133 = arith.constant 0 : index
    %332 = vector.load %arg13[%c1_131, %c0_132, %c0_133] : memref<2x1x32xf32, #tpu.memory_space<vmem>>, vector<1x1x32xf32>
    %333 = vector.shape_cast %332 : vector<1x1x32xf32> to vector<1x32xf32>
    %cst_134 = arith.constant dense<0.000000e+00> : vector<8xf32>
    %334 = vector.multi_reduction <add>, %329, %cst_134 [1] : vector<8x32xf32> to vector<8xf32>
    %335 = vector.shape_cast %334 : vector<8xf32> to vector<8x1xf32>
    %cst_135 = arith.constant 3.200000e+01 : f32
    %336 = vector.broadcast %cst_135 : f32 to vector<8x1xf32>
    %337 = arith.divf %335, %336 : vector<8x1xf32>
    %338 = vector.broadcast %337 : vector<8x1xf32> to vector<8x32xf32>
    %339 = arith.subf %329, %338 : vector<8x32xf32>
    %340 = arith.mulf %339, %339 : vector<8x32xf32>
    %cst_136 = arith.constant dense<0.000000e+00> : vector<8xf32>
    %341 = vector.multi_reduction <add>, %340, %cst_136 [1] : vector<8x32xf32> to vector<8xf32>
    %342 = vector.shape_cast %341 : vector<8xf32> to vector<8x1xf32>
    %cst_137 = arith.constant 3.200000e+01 : f32
    %343 = vector.broadcast %cst_137 : f32 to vector<8x1xf32>
    %344 = arith.divf %342, %343 : vector<8x1xf32>
    %cst_138 = arith.constant 9.99999974E-6 : f32
    %345 = vector.broadcast %cst_138 : f32 to vector<8x1xf32>
    %346 = arith.addf %344, %345 : vector<8x1xf32>
    %347 = math.rsqrt %346 : vector<8x1xf32>
    %348 = vector.broadcast %347 : vector<8x1xf32> to vector<8x32xf32>
    %349 = arith.mulf %339, %348 : vector<8x32xf32>
    %350 = vector.broadcast %331 : vector<1x32xf32> to vector<8x32xf32>
    %351 = arith.mulf %349, %350 : vector<8x32xf32>
    %352 = vector.broadcast %333 : vector<1x32xf32> to vector<8x32xf32>
    %353 = arith.addf %351, %352 : vector<8x32xf32>
    %c0_139 = arith.constant 0 : index
    %c0_140 = arith.constant 0 : index
    %c0_141 = arith.constant 0 : index
    %354 = vector.load %arg14[%c0_139, %c0_140, %c0_141] : memref<1x8x32xf32, #tpu.memory_space<vmem>>, vector<1x8x32xf32>
    %355 = vector.shape_cast %354 : vector<1x8x32xf32> to vector<8x32xf32>
    %356 = vector.shape_cast %353 : vector<8x32xf32> to vector<1x8x32xf32>
    tpu.vector_store %arg14[%c0_139, %c0_140, %c0_141], %356 {strides = array<i32>} : memref<1x8x32xf32, #tpu.memory_space<vmem>>, vector<1x8x32xf32>,
    return
  }
  func.func @transform_0(%arg0: i32) -> (i32, i32, i32) {
    %c0_i32 = arith.constant 0 : i32
    %c0_i32_0 = arith.constant 0 : i32
    %c0_i32_1 = arith.constant 0 : i32
    return %arg0, %c0_i32, %c0_i32_0 : i32, i32, i32
  }
  func.func @transform_1(%arg0: i32) -> (i32, i32, i32) {
    %c0_i32 = arith.constant 0 : i32
    %c0_i32_0 = arith.constant 0 : i32
    %c0_i32_1 = arith.constant 0 : i32
    return %arg0, %c0_i32, %c0_i32_0 : i32, i32, i32
  }
  func.func @transform_2(%arg0: i32) -> (i32, i32, i32) {
    %c0_i32 = arith.constant 0 : i32
    %c0_i32_0 = arith.constant 0 : i32
    %c0_i32_1 = arith.constant 0 : i32
    %c0_i32_2 = arith.constant 0 : i32
    return %c0_i32, %c0_i32_0, %c0_i32_1 : i32, i32, i32
  }
  func.func @transform_3(%arg0: i32) -> (i32, i32, i32, i32) {
    %c0_i32 = arith.constant 0 : i32
    %c0_i32_0 = arith.constant 0 : i32
    %c0_i32_1 = arith.constant 0 : i32
    %c0_i32_2 = arith.constant 0 : i32
    %c0_i32_3 = arith.constant 0 : i32
    return %c0_i32, %c0_i32_0, %c0_i32_1, %c0_i32_2 : i32, i32, i32, i32
  }
  func.func @transform_4(%arg0: i32) -> (i32, i32, i32) {
    %c0_i32 = arith.constant 0 : i32
    %c0_i32_0 = arith.constant 0 : i32
    %c0_i32_1 = arith.constant 0 : i32
    %c0_i32_2 = arith.constant 0 : i32
    return %c0_i32, %c0_i32_0, %c0_i32_1 : i32, i32, i32
  }
  func.func @transform_5(%arg0: i32) -> (i32, i32, i32) {
    %c0_i32 = arith.constant 0 : i32
    %c0_i32_0 = arith.constant 0 : i32
    %c0_i32_1 = arith.constant 0 : i32
    %c0_i32_2 = arith.constant 0 : i32
    return %c0_i32, %c0_i32_0, %c0_i32_1 : i32, i32, i32
  }
  func.func @transform_6(%arg0: i32) -> (i32, i32, i32) {
    %c0_i32 = arith.constant 0 : i32
    %c0_i32_0 = arith.constant 0 : i32
    %c0_i32_1 = arith.constant 0 : i32
    %c0_i32_2 = arith.constant 0 : i32
    return %c0_i32, %c0_i32_0, %c0_i32_1 : i32, i32, i32
  }
  func.func @transform_7(%arg0: i32) -> (i32, i32, i32) {
    %c0_i32 = arith.constant 0 : i32
    %c0_i32_0 = arith.constant 0 : i32
    %c0_i32_1 = arith.constant 0 : i32
    %c0_i32_2 = arith.constant 0 : i32
    return %c0_i32, %c0_i32_0, %c0_i32_1 : i32, i32, i32
  }
  func.func @transform_8(%arg0: i32) -> (i32, i32, i32) {
    %c0_i32 = arith.constant 0 : i32
    %c0_i32_0 = arith.constant 0 : i32
    %c0_i32_1 = arith.constant 0 : i32
    %c0_i32_2 = arith.constant 0 : i32
    return %c0_i32, %c0_i32_0, %c0_i32_1 : i32, i32, i32
  }
  func.func @transform_9(%arg0: i32) -> (i32, i32, i32) {
    %c0_i32 = arith.constant 0 : i32
    %c0_i32_0 = arith.constant 0 : i32
    %c0_i32_1 = arith.constant 0 : i32
    %c0_i32_2 = arith.constant 0 : i32
    return %c0_i32, %c0_i32_0, %c0_i32_1 : i32, i32, i32
  }
  func.func @transform_10(%arg0: i32) -> (i32, i32, i32) {
    %c0_i32 = arith.constant 0 : i32
    %c0_i32_0 = arith.constant 0 : i32
    %c0_i32_1 = arith.constant 0 : i32
    %c0_i32_2 = arith.constant 0 : i32
    return %c0_i32, %c0_i32_0, %c0_i32_1 : i32, i32, i32
  }
  func.func @transform_11(%arg0: i32) -> (i32, i32, i32) {
    %c0_i32 = arith.constant 0 : i32
    %c0_i32_0 = arith.constant 0 : i32
    %c0_i32_1 = arith.constant 0 : i32
    %c0_i32_2 = arith.constant 0 : i32
    return %c0_i32, %c0_i32_0, %c0_i32_1 : i32, i32, i32
  }
  func.func @transform_12(%arg0: i32) -> (i32, i32, i32) {
    %c0_i32 = arith.constant 0 : i32
    %c0_i32_0 = arith.constant 0 : i32
    %c0_i32_1 = arith.constant 0 : i32
    %c0_i32_2 = arith.constant 0 : i32
    return %c0_i32, %c0_i32_0, %c0_i32_1 : i32, i32, i32
  }
  func.func @transform_13(%arg0: i32) -> (i32, i32, i32) {
    %c0_i32 = arith.constant 0 : i32
    %c0_i32_0 = arith.constant 0 : i32
    %c0_i32_1 = arith.constant 0 : i32
    return %arg0, %c0_i32, %c0_i32_0 : i32, i32, i32
  }
}

module attributes {stable_mosaic.version = 11 : i64} {
  func.func @_decoder_kernel(%arg0: i32, %arg1: memref<1x8x32xf32, #tpu.memory_space<vmem>>, %arg2: memref<1x8x32xf32, #tpu.memory_space<vmem>>, %arg3: memref<8x8xf32, #tpu.memory_space<vmem>>, %arg4: memref<1x1x8xf32, #tpu.memory_space<vmem>>, %arg5: memref<2x32x96xbf16, #tpu.memory_space<vmem>>, %arg6: memref<2x4x8x32xbf16, #tpu.memory_space<vmem>>, %arg7: memref<2x1x32xf32, #tpu.memory_space<vmem>>, %arg8: memref<2x1x32xf32, #tpu.memory_space<vmem>>, %arg9: memref<2x1x32xf32, #tpu.memory_space<vmem>>, %arg10: memref<2x32x32xbf16, #tpu.memory_space<vmem>>, %arg11: memref<2x32x64xbf16, #tpu.memory_space<vmem>>, %arg12: memref<2x4x8x32xbf16, #tpu.memory_space<vmem>>, %arg13: memref<2x1x32xf32, #tpu.memory_space<vmem>>, %arg14: memref<2x1x32xf32, #tpu.memory_space<vmem>>, %arg15: memref<2x1x32xf32, #tpu.memory_space<vmem>>, %arg16: memref<2x32x64xbf16, #tpu.memory_space<vmem>>, %arg17: memref<2x1x64xf32, #tpu.memory_space<vmem>>, %arg18: memref<2x64x32xbf16, #tpu.memory_space<vmem>>, %arg19: memref<2x1x32xf32, #tpu.memory_space<vmem>>, %arg20: memref<2x1x32xf32, #tpu.memory_space<vmem>>, %arg21: memref<2x1x32xf32, #tpu.memory_space<vmem>>, %arg22: memref<32x16xbf16, #tpu.memory_space<vmem>>, %arg23: memref<1x16xf32, #tpu.memory_space<vmem>>, %arg24: memref<1x8x16xf32, #tpu.memory_space<vmem>>) attributes {dimension_semantics = [#tpu.dimension_semantics<parallel>], iteration_bounds = array<i64: 2>, scalar_prefetch = 0 : i64, scratch_operands = 0 : i64, tpu.core_type = #tpu.core_type<tc>, window_params = [{transform_indices = @transform_0, window_bounds = array<i64: 1, 8, 32>}, {transform_indices = @transform_1, window_bounds = array<i64: 1, 8, 32>}, {pipeline_mode = #tpu.pipeline_mode<synchronous>, transform_indices = @transform_2, window_bounds = array<i64: 8, 8>}, {transform_indices = @transform_3, window_bounds = array<i64: 1, 1, 8>}, {pipeline_mode = #tpu.pipeline_mode<synchronous>, transform_indices = @transform_4, window_bounds = array<i64: 2, 32, 96>}, {pipeline_mode = #tpu.pipeline_mode<synchronous>, transform_indices = @transform_5, window_bounds = array<i64: 2, 4, 8, 32>}, {pipeline_mode = #tpu.pipeline_mode<synchronous>, transform_indices = @transform_6, window_bounds = array<i64: 2, 1, 32>}, {pipeline_mode = #tpu.pipeline_mode<synchronous>, transform_indices = @transform_7, window_bounds = array<i64: 2, 1, 32>}, {pipeline_mode = #tpu.pipeline_mode<synchronous>, transform_indices = @transform_8, window_bounds = array<i64: 2, 1, 32>}, {pipeline_mode = #tpu.pipeline_mode<synchronous>, transform_indices = @transform_9, window_bounds = array<i64: 2, 32, 32>}, {pipeline_mode = #tpu.pipeline_mode<synchronous>, transform_indices = @transform_10, window_bounds = array<i64: 2, 32, 64>}, {pipeline_mode = #tpu.pipeline_mode<synchronous>, transform_indices = @transform_11, window_bounds = array<i64: 2, 4, 8, 32>}, {pipeline_mode = #tpu.pipeline_mode<synchronous>, transform_indices = @transform_12, window_bounds = array<i64: 2, 1, 32>}, {pipeline_mode = #tpu.pipeline_mode<synchronous>, transform_indices = @transform_13, window_bounds = array<i64: 2, 1, 32>}, {pipeline_mode = #tpu.pipeline_mode<synchronous>, transform_indices = @transform_14, window_bounds = array<i64: 2, 1, 32>}, {pipeline_mode = #tpu.pipeline_mode<synchronous>, transform_indices = @transform_15, window_bounds = array<i64: 2, 32, 64>}, {pipeline_mode = #tpu.pipeline_mode<synchronous>, transform_indices = @transform_16, window_bounds = array<i64: 2, 1, 64>}, {pipeline_mode = #tpu.pipeline_mode<synchronous>, transform_indices = @transform_17, window_bounds = array<i64: 2, 64, 32>}, {pipeline_mode = #tpu.pipeline_mode<synchronous>, transform_indices = @transform_18, window_bounds = array<i64: 2, 1, 32>}, {pipeline_mode = #tpu.pipeline_mode<synchronous>, transform_indices = @transform_19, window_bounds = array<i64: 2, 1, 32>}, {pipeline_mode = #tpu.pipeline_mode<synchronous>, transform_indices = @transform_20, window_bounds = array<i64: 2, 1, 32>}, {pipeline_mode = #tpu.pipeline_mode<synchronous>, transform_indices = @transform_21, window_bounds = array<i64: 32, 16>}, {pipeline_mode = #tpu.pipeline_mode<synchronous>, transform_indices = @transform_22, window_bounds = array<i64: 1, 16>}, {transform_indices = @transform_23, window_bounds = array<i64: 1, 8, 16>}]} {
    %c0 = arith.constant 0 : index
    %c0_0 = arith.constant 0 : index
    %c0_1 = arith.constant 0 : index
    %0 = vector.load %arg1[%c0, %c0_0, %c0_1] : memref<1x8x32xf32, #tpu.memory_space<vmem>>, vector<1x8x32xf32>
    %1 = vector.shape_cast %0 : vector<1x8x32xf32> to vector<8x32xf32>
    %c0_2 = arith.constant 0 : index
    %c0_3 = arith.constant 0 : index
    %c0_4 = arith.constant 0 : index
    %2 = vector.load %arg2[%c0_2, %c0_3, %c0_4] : memref<1x8x32xf32, #tpu.memory_space<vmem>>, vector<1x8x32xf32>
    %3 = vector.shape_cast %2 : vector<1x8x32xf32> to vector<8x32xf32>
    %4 = arith.truncf %3 : vector<8x32xf32> to vector<8x32xbf16>
    %c0_5 = arith.constant 0 : index
    %c0_6 = arith.constant 0 : index
    %5 = vector.load %arg3[%c0_5, %c0_6] : memref<8x8xf32, #tpu.memory_space<vmem>>, vector<8x8xf32>
    %c0_7 = arith.constant 0 : index
    %c0_8 = arith.constant 0 : index
    %c0_9 = arith.constant 0 : index
    %6 = vector.load %arg4[%c0_7, %c0_8, %c0_9] : memref<1x1x8xf32, #tpu.memory_space<vmem>>, vector<1x1x8xf32>
    %7 = vector.shape_cast %6 : vector<1x1x8xf32> to vector<1x8xf32>
    %8 = arith.truncf %1 : vector<8x32xf32> to vector<8x32xbf16>
    %c0_10 = arith.constant 0 : index
    %c0_11 = arith.constant 0 : index
    %c0_12 = arith.constant 0 : index
    %9 = vector.load %arg5[%c0_10, %c0_11, %c0_12] : memref<2x32x96xbf16, #tpu.memory_space<vmem>>, vector<1x32x96xbf16>
    %10 = vector.shape_cast %9 : vector<1x32x96xbf16> to vector<32x96xbf16>
    %cst = arith.constant dense<0.000000e+00> : vector<8x96xf32>
    %11 = tpu.matmul %8, %10, %cst {dimension_numbers = #tpu.dot_dimension_numbers<[1], [0], [0], [1], [0, 0, 1, 1], [], []>} : vector<8x32xbf16>, vector<32x96xbf16>, vector<8x96xf32> -> vector<8x96xf32>
    %12 = vector.extract_strided_slice %11 {offsets = [0, 0], sizes = [8, 32], strides = [1, 1]} : vector<8x96xf32> to vector<8x32xf32>
    %13 = vector.extract_strided_slice %11 {offsets = [0, 32], sizes = [8, 32], strides = [1, 1]} : vector<8x96xf32> to vector<8x32xf32>
    %14 = vector.extract_strided_slice %11 {offsets = [0, 64], sizes = [8, 32], strides = [1, 1]} : vector<8x96xf32> to vector<8x32xf32>
    %c0_13 = arith.constant 0 : index
    %c0_14 = arith.constant 0 : index
    %c0_15 = arith.constant 0 : index
    %c0_16 = arith.constant 0 : index
    %15 = vector.load %arg6[%c0_13, %c0_14, %c0_15, %c0_16] : memref<2x4x8x32xbf16, #tpu.memory_space<vmem>>, vector<1x4x8x32xbf16>
    %16 = vector.shape_cast %15 : vector<1x4x8x32xbf16> to vector<4x8x32xbf16>
    %c0_17 = arith.constant 0 : index
    %c0_18 = arith.constant 0 : index
    %c0_19 = arith.constant 0 : index
    %17 = vector.load %arg7[%c0_17, %c0_18, %c0_19] : memref<2x1x32xf32, #tpu.memory_space<vmem>>, vector<1x1x32xf32>
    %18 = vector.shape_cast %17 : vector<1x1x32xf32> to vector<1x32xf32>
    %19 = arith.truncf %12 : vector<8x32xf32> to vector<8x32xbf16>
    %20 = arith.truncf %13 : vector<8x32xf32> to vector<8x32xbf16>
    %21 = arith.truncf %14 : vector<8x32xf32> to vector<8x32xbf16>
    %22 = vector.extract_strided_slice %19 {offsets = [0, 0], sizes = [8, 8], strides = [1, 1]} : vector<8x32xbf16> to vector<8x8xbf16>
    %23 = vector.extract_strided_slice %20 {offsets = [0, 0], sizes = [8, 8], strides = [1, 1]} : vector<8x32xbf16> to vector<8x8xbf16>
    %24 = vector.extract_strided_slice %21 {offsets = [0, 0], sizes = [8, 8], strides = [1, 1]} : vector<8x32xbf16> to vector<8x8xbf16>
    %cst_20 = arith.constant dense<0.000000e+00> : vector<8x8xf32>
    %25 = tpu.matmul %22, %23, %cst_20 {dimension_numbers = #tpu.dot_dimension_numbers<[1], [1], [0], [0], [0, 0, 1, 0], [], []>} : vector<8x8xbf16>, vector<8x8xbf16>, vector<8x8xf32> -> vector<8x8xf32>
    %26 = arith.addf %25, %5 : vector<8x8xf32>
    %cst_21 = arith.constant dense<0xFF800000> : vector<8xf32>
    %27 = vector.multi_reduction <maximumf>, %26, %cst_21 [1] : vector<8x8xf32> to vector<8xf32>
    %28 = vector.shape_cast %27 : vector<8xf32> to vector<8x1xf32>
    %29 = vector.broadcast %28 : vector<8x1xf32> to vector<8x8xf32>
    %30 = arith.subf %26, %29 : vector<8x8xf32>
    %31 = math.exp %30 : vector<8x8xf32>
    %cst_22 = arith.constant dense<0.000000e+00> : vector<8xf32>
    %32 = vector.multi_reduction <add>, %31, %cst_22 [1] : vector<8x8xf32> to vector<8xf32>
    %33 = vector.shape_cast %32 : vector<8xf32> to vector<8x1xf32>
    %34 = tpu.reciprocal %33 {approx = true} : vector<8x1xf32> -> vector<8x1xf32>
    %35 = vector.broadcast %34 : vector<8x1xf32> to vector<8x8xf32>
    %36 = arith.mulf %31, %35 : vector<8x8xf32>
    %37 = arith.truncf %36 : vector<8x8xf32> to vector<8x8xbf16>
    %cst_23 = arith.constant dense<0.000000e+00> : vector<8x8xf32>
    %38 = tpu.matmul %37, %24, %cst_23 {dimension_numbers = #tpu.dot_dimension_numbers<[1], [0], [0], [1], [0, 0, 1, 1], [], []>} : vector<8x8xbf16>, vector<8x8xbf16>, vector<8x8xf32> -> vector<8x8xf32>
    %39 = arith.truncf %38 : vector<8x8xf32> to vector<8x8xbf16>
    %40 = vector.extract_strided_slice %16 {offsets = [0, 0, 0], sizes = [1, 8, 32], strides = [1, 1, 1]} : vector<4x8x32xbf16> to vector<1x8x32xbf16>
    %41 = vector.shape_cast %40 : vector<1x8x32xbf16> to vector<8x32xbf16>
    %cst_24 = arith.constant dense<0.000000e+00> : vector<8x32xf32>
    %42 = tpu.matmul %39, %41, %cst_24 {dimension_numbers = #tpu.dot_dimension_numbers<[1], [0], [0], [1], [0, 0, 1, 1], [], []>} : vector<8x8xbf16>, vector<8x32xbf16>, vector<8x32xf32> -> vector<8x32xf32>
    %43 = vector.extract_strided_slice %19 {offsets = [0, 8], sizes = [8, 8], strides = [1, 1]} : vector<8x32xbf16> to vector<8x8xbf16>
    %44 = vector.extract_strided_slice %20 {offsets = [0, 8], sizes = [8, 8], strides = [1, 1]} : vector<8x32xbf16> to vector<8x8xbf16>
    %45 = vector.extract_strided_slice %21 {offsets = [0, 8], sizes = [8, 8], strides = [1, 1]} : vector<8x32xbf16> to vector<8x8xbf16>
    %cst_25 = arith.constant dense<0.000000e+00> : vector<8x8xf32>
    %46 = tpu.matmul %43, %44, %cst_25 {dimension_numbers = #tpu.dot_dimension_numbers<[1], [1], [0], [0], [0, 0, 1, 0], [], []>} : vector<8x8xbf16>, vector<8x8xbf16>, vector<8x8xf32> -> vector<8x8xf32>
    %47 = arith.addf %46, %5 : vector<8x8xf32>
    %cst_26 = arith.constant dense<0xFF800000> : vector<8xf32>
    %48 = vector.multi_reduction <maximumf>, %47, %cst_26 [1] : vector<8x8xf32> to vector<8xf32>
    %49 = vector.shape_cast %48 : vector<8xf32> to vector<8x1xf32>
    %50 = vector.broadcast %49 : vector<8x1xf32> to vector<8x8xf32>
    %51 = arith.subf %47, %50 : vector<8x8xf32>
    %52 = math.exp %51 : vector<8x8xf32>
    %cst_27 = arith.constant dense<0.000000e+00> : vector<8xf32>
    %53 = vector.multi_reduction <add>, %52, %cst_27 [1] : vector<8x8xf32> to vector<8xf32>
    %54 = vector.shape_cast %53 : vector<8xf32> to vector<8x1xf32>
    %55 = tpu.reciprocal %54 {approx = true} : vector<8x1xf32> -> vector<8x1xf32>
    %56 = vector.broadcast %55 : vector<8x1xf32> to vector<8x8xf32>
    %57 = arith.mulf %52, %56 : vector<8x8xf32>
    %58 = arith.truncf %57 : vector<8x8xf32> to vector<8x8xbf16>
    %cst_28 = arith.constant dense<0.000000e+00> : vector<8x8xf32>
    %59 = tpu.matmul %58, %45, %cst_28 {dimension_numbers = #tpu.dot_dimension_numbers<[1], [0], [0], [1], [0, 0, 1, 1], [], []>} : vector<8x8xbf16>, vector<8x8xbf16>, vector<8x8xf32> -> vector<8x8xf32>
    %60 = arith.truncf %59 : vector<8x8xf32> to vector<8x8xbf16>
    %61 = vector.extract_strided_slice %16 {offsets = [1, 0, 0], sizes = [1, 8, 32], strides = [1, 1, 1]} : vector<4x8x32xbf16> to vector<1x8x32xbf16>
    %62 = vector.shape_cast %61 : vector<1x8x32xbf16> to vector<8x32xbf16>
    %cst_29 = arith.constant dense<0.000000e+00> : vector<8x32xf32>
    %63 = tpu.matmul %60, %62, %cst_29 {dimension_numbers = #tpu.dot_dimension_numbers<[1], [0], [0], [1], [0, 0, 1, 1], [], []>} : vector<8x8xbf16>, vector<8x32xbf16>, vector<8x32xf32> -> vector<8x32xf32>
    %64 = arith.addf %42, %63 : vector<8x32xf32>
    %65 = vector.extract_strided_slice %19 {offsets = [0, 16], sizes = [8, 8], strides = [1, 1]} : vector<8x32xbf16> to vector<8x8xbf16>
    %66 = vector.extract_strided_slice %20 {offsets = [0, 16], sizes = [8, 8], strides = [1, 1]} : vector<8x32xbf16> to vector<8x8xbf16>
    %67 = vector.extract_strided_slice %21 {offsets = [0, 16], sizes = [8, 8], strides = [1, 1]} : vector<8x32xbf16> to vector<8x8xbf16>
    %cst_30 = arith.constant dense<0.000000e+00> : vector<8x8xf32>
    %68 = tpu.matmul %65, %66, %cst_30 {dimension_numbers = #tpu.dot_dimension_numbers<[1], [1], [0], [0], [0, 0, 1, 0], [], []>} : vector<8x8xbf16>, vector<8x8xbf16>, vector<8x8xf32> -> vector<8x8xf32>
    %69 = arith.addf %68, %5 : vector<8x8xf32>
    %cst_31 = arith.constant dense<0xFF800000> : vector<8xf32>
    %70 = vector.multi_reduction <maximumf>, %69, %cst_31 [1] : vector<8x8xf32> to vector<8xf32>
    %71 = vector.shape_cast %70 : vector<8xf32> to vector<8x1xf32>
    %72 = vector.broadcast %71 : vector<8x1xf32> to vector<8x8xf32>
    %73 = arith.subf %69, %72 : vector<8x8xf32>
    %74 = math.exp %73 : vector<8x8xf32>
    %cst_32 = arith.constant dense<0.000000e+00> : vector<8xf32>
    %75 = vector.multi_reduction <add>, %74, %cst_32 [1] : vector<8x8xf32> to vector<8xf32>
    %76 = vector.shape_cast %75 : vector<8xf32> to vector<8x1xf32>
    %77 = tpu.reciprocal %76 {approx = true} : vector<8x1xf32> -> vector<8x1xf32>
    %78 = vector.broadcast %77 : vector<8x1xf32> to vector<8x8xf32>
    %79 = arith.mulf %74, %78 : vector<8x8xf32>
    %80 = arith.truncf %79 : vector<8x8xf32> to vector<8x8xbf16>
    %cst_33 = arith.constant dense<0.000000e+00> : vector<8x8xf32>
    %81 = tpu.matmul %80, %67, %cst_33 {dimension_numbers = #tpu.dot_dimension_numbers<[1], [0], [0], [1], [0, 0, 1, 1], [], []>} : vector<8x8xbf16>, vector<8x8xbf16>, vector<8x8xf32> -> vector<8x8xf32>
    %82 = arith.truncf %81 : vector<8x8xf32> to vector<8x8xbf16>
    %83 = vector.extract_strided_slice %16 {offsets = [2, 0, 0], sizes = [1, 8, 32], strides = [1, 1, 1]} : vector<4x8x32xbf16> to vector<1x8x32xbf16>
    %84 = vector.shape_cast %83 : vector<1x8x32xbf16> to vector<8x32xbf16>
    %cst_34 = arith.constant dense<0.000000e+00> : vector<8x32xf32>
    %85 = tpu.matmul %82, %84, %cst_34 {dimension_numbers = #tpu.dot_dimension_numbers<[1], [0], [0], [1], [0, 0, 1, 1], [], []>} : vector<8x8xbf16>, vector<8x32xbf16>, vector<8x32xf32> -> vector<8x32xf32>
    %86 = arith.addf %64, %85 : vector<8x32xf32>
    %87 = vector.extract_strided_slice %19 {offsets = [0, 24], sizes = [8, 8], strides = [1, 1]} : vector<8x32xbf16> to vector<8x8xbf16>
    %88 = vector.extract_strided_slice %20 {offsets = [0, 24], sizes = [8, 8], strides = [1, 1]} : vector<8x32xbf16> to vector<8x8xbf16>
    %89 = vector.extract_strided_slice %21 {offsets = [0, 24], sizes = [8, 8], strides = [1, 1]} : vector<8x32xbf16> to vector<8x8xbf16>
    %cst_35 = arith.constant dense<0.000000e+00> : vector<8x8xf32>
    %90 = tpu.matmul %87, %88, %cst_35 {dimension_numbers = #tpu.dot_dimension_numbers<[1], [1], [0], [0], [0, 0, 1, 0], [], []>} : vector<8x8xbf16>, vector<8x8xbf16>, vector<8x8xf32> -> vector<8x8xf32>
    %91 = arith.addf %90, %5 : vector<8x8xf32>
    %cst_36 = arith.constant dense<0xFF800000> : vector<8xf32>
    %92 = vector.multi_reduction <maximumf>, %91, %cst_36 [1] : vector<8x8xf32> to vector<8xf32>
    %93 = vector.shape_cast %92 : vector<8xf32> to vector<8x1xf32>
    %94 = vector.broadcast %93 : vector<8x1xf32> to vector<8x8xf32>
    %95 = arith.subf %91, %94 : vector<8x8xf32>
    %96 = math.exp %95 : vector<8x8xf32>
    %cst_37 = arith.constant dense<0.000000e+00> : vector<8xf32>
    %97 = vector.multi_reduction <add>, %96, %cst_37 [1] : vector<8x8xf32> to vector<8xf32>
    %98 = vector.shape_cast %97 : vector<8xf32> to vector<8x1xf32>
    %99 = tpu.reciprocal %98 {approx = true} : vector<8x1xf32> -> vector<8x1xf32>
    %100 = vector.broadcast %99 : vector<8x1xf32> to vector<8x8xf32>
    %101 = arith.mulf %96, %100 : vector<8x8xf32>
    %102 = arith.truncf %101 : vector<8x8xf32> to vector<8x8xbf16>
    %cst_38 = arith.constant dense<0.000000e+00> : vector<8x8xf32>
    %103 = tpu.matmul %102, %89, %cst_38 {dimension_numbers = #tpu.dot_dimension_numbers<[1], [0], [0], [1], [0, 0, 1, 1], [], []>} : vector<8x8xbf16>, vector<8x8xbf16>, vector<8x8xf32> -> vector<8x8xf32>
    %104 = arith.truncf %103 : vector<8x8xf32> to vector<8x8xbf16>
    %105 = vector.extract_strided_slice %16 {offsets = [3, 0, 0], sizes = [1, 8, 32], strides = [1, 1, 1]} : vector<4x8x32xbf16> to vector<1x8x32xbf16>
    %106 = vector.shape_cast %105 : vector<1x8x32xbf16> to vector<8x32xbf16>
    %cst_39 = arith.constant dense<0.000000e+00> : vector<8x32xf32>
    %107 = tpu.matmul %104, %106, %cst_39 {dimension_numbers = #tpu.dot_dimension_numbers<[1], [0], [0], [1], [0, 0, 1, 1], [], []>} : vector<8x8xbf16>, vector<8x32xbf16>, vector<8x32xf32> -> vector<8x32xf32>
    %108 = arith.addf %86, %107 : vector<8x32xf32>
    %109 = vector.broadcast %18 : vector<1x32xf32> to vector<8x32xf32>
    %110 = arith.addf %108, %109 : vector<8x32xf32>
    %111 = arith.addf %110, %1 : vector<8x32xf32>
    %c0_40 = arith.constant 0 : index
    %c0_41 = arith.constant 0 : index
    %c0_42 = arith.constant 0 : index
    %112 = vector.load %arg8[%c0_40, %c0_41, %c0_42] : memref<2x1x32xf32, #tpu.memory_space<vmem>>, vector<1x1x32xf32>
    %113 = vector.shape_cast %112 : vector<1x1x32xf32> to vector<1x32xf32>
    %c0_43 = arith.constant 0 : index
    %c0_44 = arith.constant 0 : index
    %c0_45 = arith.constant 0 : index
    %114 = vector.load %arg9[%c0_43, %c0_44, %c0_45] : memref<2x1x32xf32, #tpu.memory_space<vmem>>, vector<1x1x32xf32>
    %115 = vector.shape_cast %114 : vector<1x1x32xf32> to vector<1x32xf32>
    %cst_46 = arith.constant dense<0.000000e+00> : vector<8xf32>
    %116 = vector.multi_reduction <add>, %111, %cst_46 [1] : vector<8x32xf32> to vector<8xf32>
    %117 = vector.shape_cast %116 : vector<8xf32> to vector<8x1xf32>
    %cst_47 = arith.constant 3.200000e+01 : f32
    %118 = vector.broadcast %cst_47 : f32 to vector<8x1xf32>
    %119 = arith.divf %117, %118 : vector<8x1xf32>
    %120 = vector.broadcast %119 : vector<8x1xf32> to vector<8x32xf32>
    %121 = arith.subf %111, %120 : vector<8x32xf32>
    %122 = arith.mulf %121, %121 : vector<8x32xf32>
    %cst_48 = arith.constant dense<0.000000e+00> : vector<8xf32>
    %123 = vector.multi_reduction <add>, %122, %cst_48 [1] : vector<8x32xf32> to vector<8xf32>
    %124 = vector.shape_cast %123 : vector<8xf32> to vector<8x1xf32>
    %cst_49 = arith.constant 3.200000e+01 : f32
    %125 = vector.broadcast %cst_49 : f32 to vector<8x1xf32>
    %126 = arith.divf %124, %125 : vector<8x1xf32>
    %cst_50 = arith.constant 9.99999974E-6 : f32
    %127 = vector.broadcast %cst_50 : f32 to vector<8x1xf32>
    %128 = arith.addf %126, %127 : vector<8x1xf32>
    %129 = math.rsqrt %128 : vector<8x1xf32>
    %130 = vector.broadcast %129 : vector<8x1xf32> to vector<8x32xf32>
    %131 = arith.mulf %121, %130 : vector<8x32xf32>
    %132 = vector.broadcast %113 : vector<1x32xf32> to vector<8x32xf32>
    %133 = arith.mulf %131, %132 : vector<8x32xf32>
    %134 = vector.broadcast %115 : vector<1x32xf32> to vector<8x32xf32>
    %135 = arith.addf %133, %134 : vector<8x32xf32>
    %136 = arith.truncf %135 : vector<8x32xf32> to vector<8x32xbf16>
    %c0_51 = arith.constant 0 : index
    %c0_52 = arith.constant 0 : index
    %c0_53 = arith.constant 0 : index
    %137 = vector.load %arg10[%c0_51, %c0_52, %c0_53] : memref<2x32x32xbf16, #tpu.memory_space<vmem>>, vector<1x32x32xbf16>
    %138 = vector.shape_cast %137 : vector<1x32x32xbf16> to vector<32x32xbf16>
    %cst_54 = arith.constant dense<0.000000e+00> : vector<8x32xf32>
    %139 = tpu.matmul %136, %138, %cst_54 {dimension_numbers = #tpu.dot_dimension_numbers<[1], [0], [0], [1], [0, 0, 1, 1], [], []>} : vector<8x32xbf16>, vector<32x32xbf16>, vector<8x32xf32> -> vector<8x32xf32>
    %c0_55 = arith.constant 0 : index
    %c0_56 = arith.constant 0 : index
    %c0_57 = arith.constant 0 : index
    %140 = vector.load %arg11[%c0_55, %c0_56, %c0_57] : memref<2x32x64xbf16, #tpu.memory_space<vmem>>, vector<1x32x64xbf16>
    %141 = vector.shape_cast %140 : vector<1x32x64xbf16> to vector<32x64xbf16>
    %cst_58 = arith.constant dense<0.000000e+00> : vector<8x64xf32>
    %142 = tpu.matmul %4, %141, %cst_58 {dimension_numbers = #tpu.dot_dimension_numbers<[1], [0], [0], [1], [0, 0, 1, 1], [], []>} : vector<8x32xbf16>, vector<32x64xbf16>, vector<8x64xf32> -> vector<8x64xf32>
    %143 = vector.extract_strided_slice %142 {offsets = [0, 0], sizes = [8, 32], strides = [1, 1]} : vector<8x64xf32> to vector<8x32xf32>
    %144 = vector.extract_strided_slice %142 {offsets = [0, 32], sizes = [8, 32], strides = [1, 1]} : vector<8x64xf32> to vector<8x32xf32>
    %c0_59 = arith.constant 0 : index
    %c0_60 = arith.constant 0 : index
    %c0_61 = arith.constant 0 : index
    %c0_62 = arith.constant 0 : index
    %145 = vector.load %arg12[%c0_59, %c0_60, %c0_61, %c0_62] : memref<2x4x8x32xbf16, #tpu.memory_space<vmem>>, vector<1x4x8x32xbf16>
    %146 = vector.shape_cast %145 : vector<1x4x8x32xbf16> to vector<4x8x32xbf16>
    %c0_63 = arith.constant 0 : index
    %c0_64 = arith.constant 0 : index
    %c0_65 = arith.constant 0 : index
    %147 = vector.load %arg13[%c0_63, %c0_64, %c0_65] : memref<2x1x32xf32, #tpu.memory_space<vmem>>, vector<1x1x32xf32>
    %148 = vector.shape_cast %147 : vector<1x1x32xf32> to vector<1x32xf32>
    %149 = arith.truncf %139 : vector<8x32xf32> to vector<8x32xbf16>
    %150 = arith.truncf %143 : vector<8x32xf32> to vector<8x32xbf16>
    %151 = arith.truncf %144 : vector<8x32xf32> to vector<8x32xbf16>
    %152 = vector.extract_strided_slice %149 {offsets = [0, 0], sizes = [8, 8], strides = [1, 1]} : vector<8x32xbf16> to vector<8x8xbf16>
    %153 = vector.extract_strided_slice %150 {offsets = [0, 0], sizes = [8, 8], strides = [1, 1]} : vector<8x32xbf16> to vector<8x8xbf16>
    %154 = vector.extract_strided_slice %151 {offsets = [0, 0], sizes = [8, 8], strides = [1, 1]} : vector<8x32xbf16> to vector<8x8xbf16>
    %cst_66 = arith.constant dense<0.000000e+00> : vector<8x8xf32>
    %155 = tpu.matmul %152, %153, %cst_66 {dimension_numbers = #tpu.dot_dimension_numbers<[1], [1], [0], [0], [0, 0, 1, 0], [], []>} : vector<8x8xbf16>, vector<8x8xbf16>, vector<8x8xf32> -> vector<8x8xf32>
    %156 = vector.broadcast %7 : vector<1x8xf32> to vector<8x8xf32>
    %157 = arith.addf %155, %156 : vector<8x8xf32>
    %cst_67 = arith.constant dense<0xFF800000> : vector<8xf32>
    %158 = vector.multi_reduction <maximumf>, %157, %cst_67 [1] : vector<8x8xf32> to vector<8xf32>
    %159 = vector.shape_cast %158 : vector<8xf32> to vector<8x1xf32>
    %160 = vector.broadcast %159 : vector<8x1xf32> to vector<8x8xf32>
    %161 = arith.subf %157, %160 : vector<8x8xf32>
    %162 = math.exp %161 : vector<8x8xf32>
    %cst_68 = arith.constant dense<0.000000e+00> : vector<8xf32>
    %163 = vector.multi_reduction <add>, %162, %cst_68 [1] : vector<8x8xf32> to vector<8xf32>
    %164 = vector.shape_cast %163 : vector<8xf32> to vector<8x1xf32>
    %165 = tpu.reciprocal %164 {approx = true} : vector<8x1xf32> -> vector<8x1xf32>
    %166 = vector.broadcast %165 : vector<8x1xf32> to vector<8x8xf32>
    %167 = arith.mulf %162, %166 : vector<8x8xf32>
    %168 = arith.truncf %167 : vector<8x8xf32> to vector<8x8xbf16>
    %cst_69 = arith.constant dense<0.000000e+00> : vector<8x8xf32>
    %169 = tpu.matmul %168, %154, %cst_69 {dimension_numbers = #tpu.dot_dimension_numbers<[1], [0], [0], [1], [0, 0, 1, 1], [], []>} : vector<8x8xbf16>, vector<8x8xbf16>, vector<8x8xf32> -> vector<8x8xf32>
    %170 = arith.truncf %169 : vector<8x8xf32> to vector<8x8xbf16>
    %171 = vector.extract_strided_slice %146 {offsets = [0, 0, 0], sizes = [1, 8, 32], strides = [1, 1, 1]} : vector<4x8x32xbf16> to vector<1x8x32xbf16>
    %172 = vector.shape_cast %171 : vector<1x8x32xbf16> to vector<8x32xbf16>
    %cst_70 = arith.constant dense<0.000000e+00> : vector<8x32xf32>
    %173 = tpu.matmul %170, %172, %cst_70 {dimension_numbers = #tpu.dot_dimension_numbers<[1], [0], [0], [1], [0, 0, 1, 1], [], []>} : vector<8x8xbf16>, vector<8x32xbf16>, vector<8x32xf32> -> vector<8x32xf32>
    %174 = vector.extract_strided_slice %149 {offsets = [0, 8], sizes = [8, 8], strides = [1, 1]} : vector<8x32xbf16> to vector<8x8xbf16>
    %175 = vector.extract_strided_slice %150 {offsets = [0, 8], sizes = [8, 8], strides = [1, 1]} : vector<8x32xbf16> to vector<8x8xbf16>
    %176 = vector.extract_strided_slice %151 {offsets = [0, 8], sizes = [8, 8], strides = [1, 1]} : vector<8x32xbf16> to vector<8x8xbf16>
    %cst_71 = arith.constant dense<0.000000e+00> : vector<8x8xf32>
    %177 = tpu.matmul %174, %175, %cst_71 {dimension_numbers = #tpu.dot_dimension_numbers<[1], [1], [0], [0], [0, 0, 1, 0], [], []>} : vector<8x8xbf16>, vector<8x8xbf16>, vector<8x8xf32> -> vector<8x8xf32>
    %178 = vector.broadcast %7 : vector<1x8xf32> to vector<8x8xf32>
    %179 = arith.addf %177, %178 : vector<8x8xf32>
    %cst_72 = arith.constant dense<0xFF800000> : vector<8xf32>
    %180 = vector.multi_reduction <maximumf>, %179, %cst_72 [1] : vector<8x8xf32> to vector<8xf32>
    %181 = vector.shape_cast %180 : vector<8xf32> to vector<8x1xf32>
    %182 = vector.broadcast %181 : vector<8x1xf32> to vector<8x8xf32>
    %183 = arith.subf %179, %182 : vector<8x8xf32>
    %184 = math.exp %183 : vector<8x8xf32>
    %cst_73 = arith.constant dense<0.000000e+00> : vector<8xf32>
    %185 = vector.multi_reduction <add>, %184, %cst_73 [1] : vector<8x8xf32> to vector<8xf32>
    %186 = vector.shape_cast %185 : vector<8xf32> to vector<8x1xf32>
    %187 = tpu.reciprocal %186 {approx = true} : vector<8x1xf32> -> vector<8x1xf32>
    %188 = vector.broadcast %187 : vector<8x1xf32> to vector<8x8xf32>
    %189 = arith.mulf %184, %188 : vector<8x8xf32>
    %190 = arith.truncf %189 : vector<8x8xf32> to vector<8x8xbf16>
    %cst_74 = arith.constant dense<0.000000e+00> : vector<8x8xf32>
    %191 = tpu.matmul %190, %176, %cst_74 {dimension_numbers = #tpu.dot_dimension_numbers<[1], [0], [0], [1], [0, 0, 1, 1], [], []>} : vector<8x8xbf16>, vector<8x8xbf16>, vector<8x8xf32> -> vector<8x8xf32>
    %192 = arith.truncf %191 : vector<8x8xf32> to vector<8x8xbf16>
    %193 = vector.extract_strided_slice %146 {offsets = [1, 0, 0], sizes = [1, 8, 32], strides = [1, 1, 1]} : vector<4x8x32xbf16> to vector<1x8x32xbf16>
    %194 = vector.shape_cast %193 : vector<1x8x32xbf16> to vector<8x32xbf16>
    %cst_75 = arith.constant dense<0.000000e+00> : vector<8x32xf32>
    %195 = tpu.matmul %192, %194, %cst_75 {dimension_numbers = #tpu.dot_dimension_numbers<[1], [0], [0], [1], [0, 0, 1, 1], [], []>} : vector<8x8xbf16>, vector<8x32xbf16>, vector<8x32xf32> -> vector<8x32xf32>
    %196 = arith.addf %173, %195 : vector<8x32xf32>
    %197 = vector.extract_strided_slice %149 {offsets = [0, 16], sizes = [8, 8], strides = [1, 1]} : vector<8x32xbf16> to vector<8x8xbf16>
    %198 = vector.extract_strided_slice %150 {offsets = [0, 16], sizes = [8, 8], strides = [1, 1]} : vector<8x32xbf16> to vector<8x8xbf16>
    %199 = vector.extract_strided_slice %151 {offsets = [0, 16], sizes = [8, 8], strides = [1, 1]} : vector<8x32xbf16> to vector<8x8xbf16>
    %cst_76 = arith.constant dense<0.000000e+00> : vector<8x8xf32>
    %200 = tpu.matmul %197, %198, %cst_76 {dimension_numbers = #tpu.dot_dimension_numbers<[1], [1], [0], [0], [0, 0, 1, 0], [], []>} : vector<8x8xbf16>, vector<8x8xbf16>, vector<8x8xf32> -> vector<8x8xf32>
    %201 = vector.broadcast %7 : vector<1x8xf32> to vector<8x8xf32>
    %202 = arith.addf %200, %201 : vector<8x8xf32>
    %cst_77 = arith.constant dense<0xFF800000> : vector<8xf32>
    %203 = vector.multi_reduction <maximumf>, %202, %cst_77 [1] : vector<8x8xf32> to vector<8xf32>
    %204 = vector.shape_cast %203 : vector<8xf32> to vector<8x1xf32>
    %205 = vector.broadcast %204 : vector<8x1xf32> to vector<8x8xf32>
    %206 = arith.subf %202, %205 : vector<8x8xf32>
    %207 = math.exp %206 : vector<8x8xf32>
    %cst_78 = arith.constant dense<0.000000e+00> : vector<8xf32>
    %208 = vector.multi_reduction <add>, %207, %cst_78 [1] : vector<8x8xf32> to vector<8xf32>
    %209 = vector.shape_cast %208 : vector<8xf32> to vector<8x1xf32>
    %210 = tpu.reciprocal %209 {approx = true} : vector<8x1xf32> -> vector<8x1xf32>
    %211 = vector.broadcast %210 : vector<8x1xf32> to vector<8x8xf32>
    %212 = arith.mulf %207, %211 : vector<8x8xf32>
    %213 = arith.truncf %212 : vector<8x8xf32> to vector<8x8xbf16>
    %cst_79 = arith.constant dense<0.000000e+00> : vector<8x8xf32>
    %214 = tpu.matmul %213, %199, %cst_79 {dimension_numbers = #tpu.dot_dimension_numbers<[1], [0], [0], [1], [0, 0, 1, 1], [], []>} : vector<8x8xbf16>, vector<8x8xbf16>, vector<8x8xf32> -> vector<8x8xf32>
    %215 = arith.truncf %214 : vector<8x8xf32> to vector<8x8xbf16>
    %216 = vector.extract_strided_slice %146 {offsets = [2, 0, 0], sizes = [1, 8, 32], strides = [1, 1, 1]} : vector<4x8x32xbf16> to vector<1x8x32xbf16>
    %217 = vector.shape_cast %216 : vector<1x8x32xbf16> to vector<8x32xbf16>
    %cst_80 = arith.constant dense<0.000000e+00> : vector<8x32xf32>
    %218 = tpu.matmul %215, %217, %cst_80 {dimension_numbers = #tpu.dot_dimension_numbers<[1], [0], [0], [1], [0, 0, 1, 1], [], []>} : vector<8x8xbf16>, vector<8x32xbf16>, vector<8x32xf32> -> vector<8x32xf32>
    %219 = arith.addf %196, %218 : vector<8x32xf32>
    %220 = vector.extract_strided_slice %149 {offsets = [0, 24], sizes = [8, 8], strides = [1, 1]} : vector<8x32xbf16> to vector<8x8xbf16>
    %221 = vector.extract_strided_slice %150 {offsets = [0, 24], sizes = [8, 8], strides = [1, 1]} : vector<8x32xbf16> to vector<8x8xbf16>
    %222 = vector.extract_strided_slice %151 {offsets = [0, 24], sizes = [8, 8], strides = [1, 1]} : vector<8x32xbf16> to vector<8x8xbf16>
    %cst_81 = arith.constant dense<0.000000e+00> : vector<8x8xf32>
    %223 = tpu.matmul %220, %221, %cst_81 {dimension_numbers = #tpu.dot_dimension_numbers<[1], [1], [0], [0], [0, 0, 1, 0], [], []>} : vector<8x8xbf16>, vector<8x8xbf16>, vector<8x8xf32> -> vector<8x8xf32>
    %224 = vector.broadcast %7 : vector<1x8xf32> to vector<8x8xf32>
    %225 = arith.addf %223, %224 : vector<8x8xf32>
    %cst_82 = arith.constant dense<0xFF800000> : vector<8xf32>
    %226 = vector.multi_reduction <maximumf>, %225, %cst_82 [1] : vector<8x8xf32> to vector<8xf32>
    %227 = vector.shape_cast %226 : vector<8xf32> to vector<8x1xf32>
    %228 = vector.broadcast %227 : vector<8x1xf32> to vector<8x8xf32>
    %229 = arith.subf %225, %228 : vector<8x8xf32>
    %230 = math.exp %229 : vector<8x8xf32>
    %cst_83 = arith.constant dense<0.000000e+00> : vector<8xf32>
    %231 = vector.multi_reduction <add>, %230, %cst_83 [1] : vector<8x8xf32> to vector<8xf32>
    %232 = vector.shape_cast %231 : vector<8xf32> to vector<8x1xf32>
    %233 = tpu.reciprocal %232 {approx = true} : vector<8x1xf32> -> vector<8x1xf32>
    %234 = vector.broadcast %233 : vector<8x1xf32> to vector<8x8xf32>
    %235 = arith.mulf %230, %234 : vector<8x8xf32>
    %236 = arith.truncf %235 : vector<8x8xf32> to vector<8x8xbf16>
    %cst_84 = arith.constant dense<0.000000e+00> : vector<8x8xf32>
    %237 = tpu.matmul %236, %222, %cst_84 {dimension_numbers = #tpu.dot_dimension_numbers<[1], [0], [0], [1], [0, 0, 1, 1], [], []>} : vector<8x8xbf16>, vector<8x8xbf16>, vector<8x8xf32> -> vector<8x8xf32>
    %238 = arith.truncf %237 : vector<8x8xf32> to vector<8x8xbf16>
    %239 = vector.extract_strided_slice %146 {offsets = [3, 0, 0], sizes = [1, 8, 32], strides = [1, 1, 1]} : vector<4x8x32xbf16> to vector<1x8x32xbf16>
    %240 = vector.shape_cast %239 : vector<1x8x32xbf16> to vector<8x32xbf16>
    %cst_85 = arith.constant dense<0.000000e+00> : vector<8x32xf32>
    %241 = tpu.matmul %238, %240, %cst_85 {dimension_numbers = #tpu.dot_dimension_numbers<[1], [0], [0], [1], [0, 0, 1, 1], [], []>} : vector<8x8xbf16>, vector<8x32xbf16>, vector<8x32xf32> -> vector<8x32xf32>
    %242 = arith.addf %219, %241 : vector<8x32xf32>
    %243 = vector.broadcast %148 : vector<1x32xf32> to vector<8x32xf32>
    %244 = arith.addf %242, %243 : vector<8x32xf32>
    %245 = arith.addf %244, %135 : vector<8x32xf32>
    %c0_86 = arith.constant 0 : index
    %c0_87 = arith.constant 0 : index
    %c0_88 = arith.constant 0 : index
    %246 = vector.load %arg14[%c0_86, %c0_87, %c0_88] : memref<2x1x32xf32, #tpu.memory_space<vmem>>, vector<1x1x32xf32>
    %247 = vector.shape_cast %246 : vector<1x1x32xf32> to vector<1x32xf32>
    %c0_89 = arith.constant 0 : index
    %c0_90 = arith.constant 0 : index
    %c0_91 = arith.constant 0 : index
    %248 = vector.load %arg15[%c0_89, %c0_90, %c0_91] : memref<2x1x32xf32, #tpu.memory_space<vmem>>, vector<1x1x32xf32>
    %249 = vector.shape_cast %248 : vector<1x1x32xf32> to vector<1x32xf32>
    %cst_92 = arith.constant dense<0.000000e+00> : vector<8xf32>
    %250 = vector.multi_reduction <add>, %245, %cst_92 [1] : vector<8x32xf32> to vector<8xf32>
    %251 = vector.shape_cast %250 : vector<8xf32> to vector<8x1xf32>
    %cst_93 = arith.constant 3.200000e+01 : f32
    %252 = vector.broadcast %cst_93 : f32 to vector<8x1xf32>
    %253 = arith.divf %251, %252 : vector<8x1xf32>
    %254 = vector.broadcast %253 : vector<8x1xf32> to vector<8x32xf32>
    %255 = arith.subf %245, %254 : vector<8x32xf32>
    %256 = arith.mulf %255, %255 : vector<8x32xf32>
    %cst_94 = arith.constant dense<0.000000e+00> : vector<8xf32>
    %257 = vector.multi_reduction <add>, %256, %cst_94 [1] : vector<8x32xf32> to vector<8xf32>
    %258 = vector.shape_cast %257 : vector<8xf32> to vector<8x1xf32>
    %cst_95 = arith.constant 3.200000e+01 : f32
    %259 = vector.broadcast %cst_95 : f32 to vector<8x1xf32>
    %260 = arith.divf %258, %259 : vector<8x1xf32>
    %cst_96 = arith.constant 9.99999974E-6 : f32
    %261 = vector.broadcast %cst_96 : f32 to vector<8x1xf32>
    %262 = arith.addf %260, %261 : vector<8x1xf32>
    %263 = math.rsqrt %262 : vector<8x1xf32>
    %264 = vector.broadcast %263 : vector<8x1xf32> to vector<8x32xf32>
    %265 = arith.mulf %255, %264 : vector<8x32xf32>
    %266 = vector.broadcast %247 : vector<1x32xf32> to vector<8x32xf32>
    %267 = arith.mulf %265, %266 : vector<8x32xf32>
    %268 = vector.broadcast %249 : vector<1x32xf32> to vector<8x32xf32>
    %269 = arith.addf %267, %268 : vector<8x32xf32>
    %270 = arith.truncf %269 : vector<8x32xf32> to vector<8x32xbf16>
    %c0_97 = arith.constant 0 : index
    %c0_98 = arith.constant 0 : index
    %c0_99 = arith.constant 0 : index
    %271 = vector.load %arg16[%c0_97, %c0_98, %c0_99] : memref<2x32x64xbf16, #tpu.memory_space<vmem>>, vector<1x32x64xbf16>
    %272 = vector.shape_cast %271 : vector<1x32x64xbf16> to vector<32x64xbf16>
    %cst_100 = arith.constant dense<0.000000e+00> : vector<8x64xf32>
    %273 = tpu.matmul %270, %272, %cst_100 {dimension_numbers = #tpu.dot_dimension_numbers<[1], [0], [0], [1], [0, 0, 1, 1], [], []>} : vector<8x32xbf16>, vector<32x64xbf16>, vector<8x64xf32> -> vector<8x64xf32>
    %c0_101 = arith.constant 0 : index
    %c0_102 = arith.constant 0 : index
    %c0_103 = arith.constant 0 : index
    %274 = vector.load %arg17[%c0_101, %c0_102, %c0_103] : memref<2x1x64xf32, #tpu.memory_space<vmem>>, vector<1x1x64xf32>
    %275 = vector.shape_cast %274 : vector<1x1x64xf32> to vector<1x64xf32>
    %276 = vector.broadcast %275 : vector<1x64xf32> to vector<8x64xf32>
    %277 = arith.addf %273, %276 : vector<8x64xf32>
    %cst_104 = arith.constant 0.000000e+00 : f32
    %278 = vector.broadcast %cst_104 : f32 to vector<8x64xf32>
    %279 = arith.maximumf %277, %278 : vector<8x64xf32>
    %280 = arith.truncf %279 : vector<8x64xf32> to vector<8x64xbf16>
    %c0_105 = arith.constant 0 : index
    %c0_106 = arith.constant 0 : index
    %c0_107 = arith.constant 0 : index
    %281 = vector.load %arg18[%c0_105, %c0_106, %c0_107] : memref<2x64x32xbf16, #tpu.memory_space<vmem>>, vector<1x64x32xbf16>
    %282 = vector.shape_cast %281 : vector<1x64x32xbf16> to vector<64x32xbf16>
    %cst_108 = arith.constant dense<0.000000e+00> : vector<8x32xf32>
    %283 = tpu.matmul %280, %282, %cst_108 {dimension_numbers = #tpu.dot_dimension_numbers<[1], [0], [0], [1], [0, 0, 1, 1], [], []>} : vector<8x64xbf16>, vector<64x32xbf16>, vector<8x32xf32> -> vector<8x32xf32>
    %c0_109 = arith.constant 0 : index
    %c0_110 = arith.constant 0 : index
    %c0_111 = arith.constant 0 : index
    %284 = vector.load %arg19[%c0_109, %c0_110, %c0_111] : memref<2x1x32xf32, #tpu.memory_space<vmem>>, vector<1x1x32xf32>
    %285 = vector.shape_cast %284 : vector<1x1x32xf32> to vector<1x32xf32>
    %286 = vector.broadcast %285 : vector<1x32xf32> to vector<8x32xf32>
    %287 = arith.addf %283, %286 : vector<8x32xf32>
    %288 = arith.addf %287, %269 : vector<8x32xf32>
    %c0_112 = arith.constant 0 : index
    %c0_113 = arith.constant 0 : index
    %c0_114 = arith.constant 0 : index
    %289 = vector.load %arg20[%c0_112, %c0_113, %c0_114] : memref<2x1x32xf32, #tpu.memory_space<vmem>>, vector<1x1x32xf32>
    %290 = vector.shape_cast %289 : vector<1x1x32xf32> to vector<1x32xf32>
    %c0_115 = arith.constant 0 : index
    %c0_116 = arith.constant 0 : index
    %c0_117 = arith.constant 0 : index
    %291 = vector.load %arg21[%c0_115, %c0_116, %c0_117] : memref<2x1x32xf32, #tpu.memory_space<vmem>>, vector<1x1x32xf32>
    %292 = vector.shape_cast %291 : vector<1x1x32xf32> to vector<1x32xf32>
    %cst_118 = arith.constant dense<0.000000e+00> : vector<8xf32>
    %293 = vector.multi_reduction <add>, %288, %cst_118 [1] : vector<8x32xf32> to vector<8xf32>
    %294 = vector.shape_cast %293 : vector<8xf32> to vector<8x1xf32>
    %cst_119 = arith.constant 3.200000e+01 : f32
    %295 = vector.broadcast %cst_119 : f32 to vector<8x1xf32>
    %296 = arith.divf %294, %295 : vector<8x1xf32>
    %297 = vector.broadcast %296 : vector<8x1xf32> to vector<8x32xf32>
    %298 = arith.subf %288, %297 : vector<8x32xf32>
    %299 = arith.mulf %298, %298 : vector<8x32xf32>
    %cst_120 = arith.constant dense<0.000000e+00> : vector<8xf32>
    %300 = vector.multi_reduction <add>, %299, %cst_120 [1] : vector<8x32xf32> to vector<8xf32>
    %301 = vector.shape_cast %300 : vector<8xf32> to vector<8x1xf32>
    %cst_121 = arith.constant 3.200000e+01 : f32
    %302 = vector.broadcast %cst_121 : f32 to vector<8x1xf32>
    %303 = arith.divf %301, %302 : vector<8x1xf32>
    %cst_122 = arith.constant 9.99999974E-6 : f32
    %304 = vector.broadcast %cst_122 : f32 to vector<8x1xf32>
    %305 = arith.addf %303, %304 : vector<8x1xf32>
    %306 = math.rsqrt %305 : vector<8x1xf32>
    %307 = vector.broadcast %306 : vector<8x1xf32> to vector<8x32xf32>
    %308 = arith.mulf %298, %307 : vector<8x32xf32>
    %309 = vector.broadcast %290 : vector<1x32xf32> to vector<8x32xf32>
    %310 = arith.mulf %308, %309 : vector<8x32xf32>
    %311 = vector.broadcast %292 : vector<1x32xf32> to vector<8x32xf32>
    %312 = arith.addf %310, %311 : vector<8x32xf32>
    %313 = arith.truncf %312 : vector<8x32xf32> to vector<8x32xbf16>
    %c1 = arith.constant 1 : index
    %c0_123 = arith.constant 0 : index
    %c0_124 = arith.constant 0 : index
    %314 = vector.load %arg5[%c1, %c0_123, %c0_124] : memref<2x32x96xbf16, #tpu.memory_space<vmem>>, vector<1x32x96xbf16>
    %315 = vector.shape_cast %314 : vector<1x32x96xbf16> to vector<32x96xbf16>
    %cst_125 = arith.constant dense<0.000000e+00> : vector<8x96xf32>
    %316 = tpu.matmul %313, %315, %cst_125 {dimension_numbers = #tpu.dot_dimension_numbers<[1], [0], [0], [1], [0, 0, 1, 1], [], []>} : vector<8x32xbf16>, vector<32x96xbf16>, vector<8x96xf32> -> vector<8x96xf32>
    %317 = vector.extract_strided_slice %316 {offsets = [0, 0], sizes = [8, 32], strides = [1, 1]} : vector<8x96xf32> to vector<8x32xf32>
    %318 = vector.extract_strided_slice %316 {offsets = [0, 32], sizes = [8, 32], strides = [1, 1]} : vector<8x96xf32> to vector<8x32xf32>
    %319 = vector.extract_strided_slice %316 {offsets = [0, 64], sizes = [8, 32], strides = [1, 1]} : vector<8x96xf32> to vector<8x32xf32>
    %c1_126 = arith.constant 1 : index
    %c0_127 = arith.constant 0 : index
    %c0_128 = arith.constant 0 : index
    %c0_129 = arith.constant 0 : index
    %320 = vector.load %arg6[%c1_126, %c0_127, %c0_128, %c0_129] : memref<2x4x8x32xbf16, #tpu.memory_space<vmem>>, vector<1x4x8x32xbf16>
    %321 = vector.shape_cast %320 : vector<1x4x8x32xbf16> to vector<4x8x32xbf16>
    %c1_130 = arith.constant 1 : index
    %c0_131 = arith.constant 0 : index
    %c0_132 = arith.constant 0 : index
    %322 = vector.load %arg7[%c1_130, %c0_131, %c0_132] : memref<2x1x32xf32, #tpu.memory_space<vmem>>, vector<1x1x32xf32>
    %323 = vector.shape_cast %322 : vector<1x1x32xf32> to vector<1x32xf32>
    %324 = arith.truncf %317 : vector<8x32xf32> to vector<8x32xbf16>
    %325 = arith.truncf %318 : vector<8x32xf32> to vector<8x32xbf16>
    %326 = arith.truncf %319 : vector<8x32xf32> to vector<8x32xbf16>
    %327 = vector.extract_strided_slice %324 {offsets = [0, 0], sizes = [8, 8], strides = [1, 1]} : vector<8x32xbf16> to vector<8x8xbf16>
    %328 = vector.extract_strided_slice %325 {offsets = [0, 0], sizes = [8, 8], strides = [1, 1]} : vector<8x32xbf16> to vector<8x8xbf16>
    %329 = vector.extract_strided_slice %326 {offsets = [0, 0], sizes = [8, 8], strides = [1, 1]} : vector<8x32xbf16> to vector<8x8xbf16>
    %cst_133 = arith.constant dense<0.000000e+00> : vector<8x8xf32>
    %330 = tpu.matmul %327, %328, %cst_133 {dimension_numbers = #tpu.dot_dimension_numbers<[1], [1], [0], [0], [0, 0, 1, 0], [], []>} : vector<8x8xbf16>, vector<8x8xbf16>, vector<8x8xf32> -> vector<8x8xf32>
    %331 = arith.addf %330, %5 : vector<8x8xf32>
    %cst_134 = arith.constant dense<0xFF800000> : vector<8xf32>
    %332 = vector.multi_reduction <maximumf>, %331, %cst_134 [1] : vector<8x8xf32> to vector<8xf32>
    %333 = vector.shape_cast %332 : vector<8xf32> to vector<8x1xf32>
    %334 = vector.broadcast %333 : vector<8x1xf32> to vector<8x8xf32>
    %335 = arith.subf %331, %334 : vector<8x8xf32>
    %336 = math.exp %335 : vector<8x8xf32>
    %cst_135 = arith.constant dense<0.000000e+00> : vector<8xf32>
    %337 = vector.multi_reduction <add>, %336, %cst_135 [1] : vector<8x8xf32> to vector<8xf32>
    %338 = vector.shape_cast %337 : vector<8xf32> to vector<8x1xf32>
    %339 = tpu.reciprocal %338 {approx = true} : vector<8x1xf32> -> vector<8x1xf32>
    %340 = vector.broadcast %339 : vector<8x1xf32> to vector<8x8xf32>
    %341 = arith.mulf %336, %340 : vector<8x8xf32>
    %342 = arith.truncf %341 : vector<8x8xf32> to vector<8x8xbf16>
    %cst_136 = arith.constant dense<0.000000e+00> : vector<8x8xf32>
    %343 = tpu.matmul %342, %329, %cst_136 {dimension_numbers = #tpu.dot_dimension_numbers<[1], [0], [0], [1], [0, 0, 1, 1], [], []>} : vector<8x8xbf16>, vector<8x8xbf16>, vector<8x8xf32> -> vector<8x8xf32>
    %344 = arith.truncf %343 : vector<8x8xf32> to vector<8x8xbf16>
    %345 = vector.extract_strided_slice %321 {offsets = [0, 0, 0], sizes = [1, 8, 32], strides = [1, 1, 1]} : vector<4x8x32xbf16> to vector<1x8x32xbf16>
    %346 = vector.shape_cast %345 : vector<1x8x32xbf16> to vector<8x32xbf16>
    %cst_137 = arith.constant dense<0.000000e+00> : vector<8x32xf32>
    %347 = tpu.matmul %344, %346, %cst_137 {dimension_numbers = #tpu.dot_dimension_numbers<[1], [0], [0], [1], [0, 0, 1, 1], [], []>} : vector<8x8xbf16>, vector<8x32xbf16>, vector<8x32xf32> -> vector<8x32xf32>
    %348 = vector.extract_strided_slice %324 {offsets = [0, 8], sizes = [8, 8], strides = [1, 1]} : vector<8x32xbf16> to vector<8x8xbf16>
    %349 = vector.extract_strided_slice %325 {offsets = [0, 8], sizes = [8, 8], strides = [1, 1]} : vector<8x32xbf16> to vector<8x8xbf16>
    %350 = vector.extract_strided_slice %326 {offsets = [0, 8], sizes = [8, 8], strides = [1, 1]} : vector<8x32xbf16> to vector<8x8xbf16>
    %cst_138 = arith.constant dense<0.000000e+00> : vector<8x8xf32>
    %351 = tpu.matmul %348, %349, %cst_138 {dimension_numbers = #tpu.dot_dimension_numbers<[1], [1], [0], [0], [0, 0, 1, 0], [], []>} : vector<8x8xbf16>, vector<8x8xbf16>, vector<8x8xf32> -> vector<8x8xf32>
    %352 = arith.addf %351, %5 : vector<8x8xf32>
    %cst_139 = arith.constant dense<0xFF800000> : vector<8xf32>
    %353 = vector.multi_reduction <maximumf>, %352, %cst_139 [1] : vector<8x8xf32> to vector<8xf32>
    %354 = vector.shape_cast %353 : vector<8xf32> to vector<8x1xf32>
    %355 = vector.broadcast %354 : vector<8x1xf32> to vector<8x8xf32>
    %356 = arith.subf %352, %355 : vector<8x8xf32>
    %357 = math.exp %356 : vector<8x8xf32>
    %cst_140 = arith.constant dense<0.000000e+00> : vector<8xf32>
    %358 = vector.multi_reduction <add>, %357, %cst_140 [1] : vector<8x8xf32> to vector<8xf32>
    %359 = vector.shape_cast %358 : vector<8xf32> to vector<8x1xf32>
    %360 = tpu.reciprocal %359 {approx = true} : vector<8x1xf32> -> vector<8x1xf32>
    %361 = vector.broadcast %360 : vector<8x1xf32> to vector<8x8xf32>
    %362 = arith.mulf %357, %361 : vector<8x8xf32>
    %363 = arith.truncf %362 : vector<8x8xf32> to vector<8x8xbf16>
    %cst_141 = arith.constant dense<0.000000e+00> : vector<8x8xf32>
    %364 = tpu.matmul %363, %350, %cst_141 {dimension_numbers = #tpu.dot_dimension_numbers<[1], [0], [0], [1], [0, 0, 1, 1], [], []>} : vector<8x8xbf16>, vector<8x8xbf16>, vector<8x8xf32> -> vector<8x8xf32>
    %365 = arith.truncf %364 : vector<8x8xf32> to vector<8x8xbf16>
    %366 = vector.extract_strided_slice %321 {offsets = [1, 0, 0], sizes = [1, 8, 32], strides = [1, 1, 1]} : vector<4x8x32xbf16> to vector<1x8x32xbf16>
    %367 = vector.shape_cast %366 : vector<1x8x32xbf16> to vector<8x32xbf16>
    %cst_142 = arith.constant dense<0.000000e+00> : vector<8x32xf32>
    %368 = tpu.matmul %365, %367, %cst_142 {dimension_numbers = #tpu.dot_dimension_numbers<[1], [0], [0], [1], [0, 0, 1, 1], [], []>} : vector<8x8xbf16>, vector<8x32xbf16>, vector<8x32xf32> -> vector<8x32xf32>
    %369 = arith.addf %347, %368 : vector<8x32xf32>
    %370 = vector.extract_strided_slice %324 {offsets = [0, 16], sizes = [8, 8], strides = [1, 1]} : vector<8x32xbf16> to vector<8x8xbf16>
    %371 = vector.extract_strided_slice %325 {offsets = [0, 16], sizes = [8, 8], strides = [1, 1]} : vector<8x32xbf16> to vector<8x8xbf16>
    %372 = vector.extract_strided_slice %326 {offsets = [0, 16], sizes = [8, 8], strides = [1, 1]} : vector<8x32xbf16> to vector<8x8xbf16>
    %cst_143 = arith.constant dense<0.000000e+00> : vector<8x8xf32>
    %373 = tpu.matmul %370, %371, %cst_143 {dimension_numbers = #tpu.dot_dimension_numbers<[1], [1], [0], [0], [0, 0, 1, 0], [], []>} : vector<8x8xbf16>, vector<8x8xbf16>, vector<8x8xf32> -> vector<8x8xf32>
    %374 = arith.addf %373, %5 : vector<8x8xf32>
    %cst_144 = arith.constant dense<0xFF800000> : vector<8xf32>
    %375 = vector.multi_reduction <maximumf>, %374, %cst_144 [1] : vector<8x8xf32> to vector<8xf32>
    %376 = vector.shape_cast %375 : vector<8xf32> to vector<8x1xf32>
    %377 = vector.broadcast %376 : vector<8x1xf32> to vector<8x8xf32>
    %378 = arith.subf %374, %377 : vector<8x8xf32>
    %379 = math.exp %378 : vector<8x8xf32>
    %cst_145 = arith.constant dense<0.000000e+00> : vector<8xf32>
    %380 = vector.multi_reduction <add>, %379, %cst_145 [1] : vector<8x8xf32> to vector<8xf32>
    %381 = vector.shape_cast %380 : vector<8xf32> to vector<8x1xf32>
    %382 = tpu.reciprocal %381 {approx = true} : vector<8x1xf32> -> vector<8x1xf32>
    %383 = vector.broadcast %382 : vector<8x1xf32> to vector<8x8xf32>
    %384 = arith.mulf %379, %383 : vector<8x8xf32>
    %385 = arith.truncf %384 : vector<8x8xf32> to vector<8x8xbf16>
    %cst_146 = arith.constant dense<0.000000e+00> : vector<8x8xf32>
    %386 = tpu.matmul %385, %372, %cst_146 {dimension_numbers = #tpu.dot_dimension_numbers<[1], [0], [0], [1], [0, 0, 1, 1], [], []>} : vector<8x8xbf16>, vector<8x8xbf16>, vector<8x8xf32> -> vector<8x8xf32>
    %387 = arith.truncf %386 : vector<8x8xf32> to vector<8x8xbf16>
    %388 = vector.extract_strided_slice %321 {offsets = [2, 0, 0], sizes = [1, 8, 32], strides = [1, 1, 1]} : vector<4x8x32xbf16> to vector<1x8x32xbf16>
    %389 = vector.shape_cast %388 : vector<1x8x32xbf16> to vector<8x32xbf16>
    %cst_147 = arith.constant dense<0.000000e+00> : vector<8x32xf32>
    %390 = tpu.matmul %387, %389, %cst_147 {dimension_numbers = #tpu.dot_dimension_numbers<[1], [0], [0], [1], [0, 0, 1, 1], [], []>} : vector<8x8xbf16>, vector<8x32xbf16>, vector<8x32xf32> -> vector<8x32xf32>
    %391 = arith.addf %369, %390 : vector<8x32xf32>
    %392 = vector.extract_strided_slice %324 {offsets = [0, 24], sizes = [8, 8], strides = [1, 1]} : vector<8x32xbf16> to vector<8x8xbf16>
    %393 = vector.extract_strided_slice %325 {offsets = [0, 24], sizes = [8, 8], strides = [1, 1]} : vector<8x32xbf16> to vector<8x8xbf16>
    %394 = vector.extract_strided_slice %326 {offsets = [0, 24], sizes = [8, 8], strides = [1, 1]} : vector<8x32xbf16> to vector<8x8xbf16>
    %cst_148 = arith.constant dense<0.000000e+00> : vector<8x8xf32>
    %395 = tpu.matmul %392, %393, %cst_148 {dimension_numbers = #tpu.dot_dimension_numbers<[1], [1], [0], [0], [0, 0, 1, 0], [], []>} : vector<8x8xbf16>, vector<8x8xbf16>, vector<8x8xf32> -> vector<8x8xf32>
    %396 = arith.addf %395, %5 : vector<8x8xf32>
    %cst_149 = arith.constant dense<0xFF800000> : vector<8xf32>
    %397 = vector.multi_reduction <maximumf>, %396, %cst_149 [1] : vector<8x8xf32> to vector<8xf32>
    %398 = vector.shape_cast %397 : vector<8xf32> to vector<8x1xf32>
    %399 = vector.broadcast %398 : vector<8x1xf32> to vector<8x8xf32>
    %400 = arith.subf %396, %399 : vector<8x8xf32>
    %401 = math.exp %400 : vector<8x8xf32>
    %cst_150 = arith.constant dense<0.000000e+00> : vector<8xf32>
    %402 = vector.multi_reduction <add>, %401, %cst_150 [1] : vector<8x8xf32> to vector<8xf32>
    %403 = vector.shape_cast %402 : vector<8xf32> to vector<8x1xf32>
    %404 = tpu.reciprocal %403 {approx = true} : vector<8x1xf32> -> vector<8x1xf32>
    %405 = vector.broadcast %404 : vector<8x1xf32> to vector<8x8xf32>
    %406 = arith.mulf %401, %405 : vector<8x8xf32>
    %407 = arith.truncf %406 : vector<8x8xf32> to vector<8x8xbf16>
    %cst_151 = arith.constant dense<0.000000e+00> : vector<8x8xf32>
    %408 = tpu.matmul %407, %394, %cst_151 {dimension_numbers = #tpu.dot_dimension_numbers<[1], [0], [0], [1], [0, 0, 1, 1], [], []>} : vector<8x8xbf16>, vector<8x8xbf16>, vector<8x8xf32> -> vector<8x8xf32>
    %409 = arith.truncf %408 : vector<8x8xf32> to vector<8x8xbf16>
    %410 = vector.extract_strided_slice %321 {offsets = [3, 0, 0], sizes = [1, 8, 32], strides = [1, 1, 1]} : vector<4x8x32xbf16> to vector<1x8x32xbf16>
    %411 = vector.shape_cast %410 : vector<1x8x32xbf16> to vector<8x32xbf16>
    %cst_152 = arith.constant dense<0.000000e+00> : vector<8x32xf32>
    %412 = tpu.matmul %409, %411, %cst_152 {dimension_numbers = #tpu.dot_dimension_numbers<[1], [0], [0], [1], [0, 0, 1, 1], [], []>} : vector<8x8xbf16>, vector<8x32xbf16>, vector<8x32xf32> -> vector<8x32xf32>
    %413 = arith.addf %391, %412 : vector<8x32xf32>
    %414 = vector.broadcast %323 : vector<1x32xf32> to vector<8x32xf32>
    %415 = arith.addf %413, %414 : vector<8x32xf32>
    %416 = arith.addf %415, %312 : vector<8x32xf32>
    %c1_153 = arith.constant 1 : index
    %c0_154 = arith.constant 0 : index
    %c0_155 = arith.constant 0 : index
    %417 = vector.load %arg8[%c1_153, %c0_154, %c0_155] : memref<2x1x32xf32, #tpu.memory_space<vmem>>, vector<1x1x32xf32>
    %418 = vector.shape_cast %417 : vector<1x1x32xf32> to vector<1x32xf32>
    %c1_156 = arith.constant 1 : index
    %c0_157 = arith.constant 0 : index
    %c0_158 = arith.constant 0 : index
    %419 = vector.load %arg9[%c1_156, %c0_157, %c0_158] : memref<2x1x32xf32, #tpu.memory_space<vmem>>, vector<1x1x32xf32>
    %420 = vector.shape_cast %419 : vector<1x1x32xf32> to vector<1x32xf32>
    %cst_159 = arith.constant dense<0.000000e+00> : vector<8xf32>
    %421 = vector.multi_reduction <add>, %416, %cst_159 [1] : vector<8x32xf32> to vector<8xf32>
    %422 = vector.shape_cast %421 : vector<8xf32> to vector<8x1xf32>
    %cst_160 = arith.constant 3.200000e+01 : f32
    %423 = vector.broadcast %cst_160 : f32 to vector<8x1xf32>
    %424 = arith.divf %422, %423 : vector<8x1xf32>
    %425 = vector.broadcast %424 : vector<8x1xf32> to vector<8x32xf32>
    %426 = arith.subf %416, %425 : vector<8x32xf32>
    %427 = arith.mulf %426, %426 : vector<8x32xf32>
    %cst_161 = arith.constant dense<0.000000e+00> : vector<8xf32>
    %428 = vector.multi_reduction <add>, %427, %cst_161 [1] : vector<8x32xf32> to vector<8xf32>
    %429 = vector.shape_cast %428 : vector<8xf32> to vector<8x1xf32>
    %cst_162 = arith.constant 3.200000e+01 : f32
    %430 = vector.broadcast %cst_162 : f32 to vector<8x1xf32>
    %431 = arith.divf %429, %430 : vector<8x1xf32>
    %cst_163 = arith.constant 9.99999974E-6 : f32
    %432 = vector.broadcast %cst_163 : f32 to vector<8x1xf32>
    %433 = arith.addf %431, %432 : vector<8x1xf32>
    %434 = math.rsqrt %433 : vector<8x1xf32>
    %435 = vector.broadcast %434 : vector<8x1xf32> to vector<8x32xf32>
    %436 = arith.mulf %426, %435 : vector<8x32xf32>
    %437 = vector.broadcast %418 : vector<1x32xf32> to vector<8x32xf32>
    %438 = arith.mulf %436, %437 : vector<8x32xf32>
    %439 = vector.broadcast %420 : vector<1x32xf32> to vector<8x32xf32>
    %440 = arith.addf %438, %439 : vector<8x32xf32>
    %441 = arith.truncf %440 : vector<8x32xf32> to vector<8x32xbf16>
    %c1_164 = arith.constant 1 : index
    %c0_165 = arith.constant 0 : index
    %c0_166 = arith.constant 0 : index
    %442 = vector.load %arg10[%c1_164, %c0_165, %c0_166] : memref<2x32x32xbf16, #tpu.memory_space<vmem>>, vector<1x32x32xbf16>
    %443 = vector.shape_cast %442 : vector<1x32x32xbf16> to vector<32x32xbf16>
    %cst_167 = arith.constant dense<0.000000e+00> : vector<8x32xf32>
    %444 = tpu.matmul %441, %443, %cst_167 {dimension_numbers = #tpu.dot_dimension_numbers<[1], [0], [0], [1], [0, 0, 1, 1], [], []>} : vector<8x32xbf16>, vector<32x32xbf16>, vector<8x32xf32> -> vector<8x32xf32>
    %c1_168 = arith.constant 1 : index
    %c0_169 = arith.constant 0 : index
    %c0_170 = arith.constant 0 : index
    %445 = vector.load %arg11[%c1_168, %c0_169, %c0_170] : memref<2x32x64xbf16, #tpu.memory_space<vmem>>, vector<1x32x64xbf16>
    %446 = vector.shape_cast %445 : vector<1x32x64xbf16> to vector<32x64xbf16>
    %cst_171 = arith.constant dense<0.000000e+00> : vector<8x64xf32>
    %447 = tpu.matmul %4, %446, %cst_171 {dimension_numbers = #tpu.dot_dimension_numbers<[1], [0], [0], [1], [0, 0, 1, 1], [], []>} : vector<8x32xbf16>, vector<32x64xbf16>, vector<8x64xf32> -> vector<8x64xf32>
    %448 = vector.extract_strided_slice %447 {offsets = [0, 0], sizes = [8, 32], strides = [1, 1]} : vector<8x64xf32> to vector<8x32xf32>
    %449 = vector.extract_strided_slice %447 {offsets = [0, 32], sizes = [8, 32], strides = [1, 1]} : vector<8x64xf32> to vector<8x32xf32>
    %c1_172 = arith.constant 1 : index
    %c0_173 = arith.constant 0 : index
    %c0_174 = arith.constant 0 : index
    %c0_175 = arith.constant 0 : index
    %450 = vector.load %arg12[%c1_172, %c0_173, %c0_174, %c0_175] : memref<2x4x8x32xbf16, #tpu.memory_space<vmem>>, vector<1x4x8x32xbf16>
    %451 = vector.shape_cast %450 : vector<1x4x8x32xbf16> to vector<4x8x32xbf16>
    %c1_176 = arith.constant 1 : index
    %c0_177 = arith.constant 0 : index
    %c0_178 = arith.constant 0 : index
    %452 = vector.load %arg13[%c1_176, %c0_177, %c0_178] : memref<2x1x32xf32, #tpu.memory_space<vmem>>, vector<1x1x32xf32>
    %453 = vector.shape_cast %452 : vector<1x1x32xf32> to vector<1x32xf32>
    %454 = arith.truncf %444 : vector<8x32xf32> to vector<8x32xbf16>
    %455 = arith.truncf %448 : vector<8x32xf32> to vector<8x32xbf16>
    %456 = arith.truncf %449 : vector<8x32xf32> to vector<8x32xbf16>
    %457 = vector.extract_strided_slice %454 {offsets = [0, 0], sizes = [8, 8], strides = [1, 1]} : vector<8x32xbf16> to vector<8x8xbf16>
    %458 = vector.extract_strided_slice %455 {offsets = [0, 0], sizes = [8, 8], strides = [1, 1]} : vector<8x32xbf16> to vector<8x8xbf16>
    %459 = vector.extract_strided_slice %456 {offsets = [0, 0], sizes = [8, 8], strides = [1, 1]} : vector<8x32xbf16> to vector<8x8xbf16>
    %cst_179 = arith.constant dense<0.000000e+00> : vector<8x8xf32>
    %460 = tpu.matmul %457, %458, %cst_179 {dimension_numbers = #tpu.dot_dimension_numbers<[1], [1], [0], [0], [0, 0, 1, 0], [], []>} : vector<8x8xbf16>, vector<8x8xbf16>, vector<8x8xf32> -> vector<8x8xf32>
    %461 = vector.broadcast %7 : vector<1x8xf32> to vector<8x8xf32>
    %462 = arith.addf %460, %461 : vector<8x8xf32>
    %cst_180 = arith.constant dense<0xFF800000> : vector<8xf32>
    %463 = vector.multi_reduction <maximumf>, %462, %cst_180 [1] : vector<8x8xf32> to vector<8xf32>
    %464 = vector.shape_cast %463 : vector<8xf32> to vector<8x1xf32>
    %465 = vector.broadcast %464 : vector<8x1xf32> to vector<8x8xf32>
    %466 = arith.subf %462, %465 : vector<8x8xf32>
    %467 = math.exp %466 : vector<8x8xf32>
    %cst_181 = arith.constant dense<0.000000e+00> : vector<8xf32>
    %468 = vector.multi_reduction <add>, %467, %cst_181 [1] : vector<8x8xf32> to vector<8xf32>
    %469 = vector.shape_cast %468 : vector<8xf32> to vector<8x1xf32>
    %470 = tpu.reciprocal %469 {approx = true} : vector<8x1xf32> -> vector<8x1xf32>
    %471 = vector.broadcast %470 : vector<8x1xf32> to vector<8x8xf32>
    %472 = arith.mulf %467, %471 : vector<8x8xf32>
    %473 = arith.truncf %472 : vector<8x8xf32> to vector<8x8xbf16>
    %cst_182 = arith.constant dense<0.000000e+00> : vector<8x8xf32>
    %474 = tpu.matmul %473, %459, %cst_182 {dimension_numbers = #tpu.dot_dimension_numbers<[1], [0], [0], [1], [0, 0, 1, 1], [], []>} : vector<8x8xbf16>, vector<8x8xbf16>, vector<8x8xf32> -> vector<8x8xf32>
    %475 = arith.truncf %474 : vector<8x8xf32> to vector<8x8xbf16>
    %476 = vector.extract_strided_slice %451 {offsets = [0, 0, 0], sizes = [1, 8, 32], strides = [1, 1, 1]} : vector<4x8x32xbf16> to vector<1x8x32xbf16>
    %477 = vector.shape_cast %476 : vector<1x8x32xbf16> to vector<8x32xbf16>
    %cst_183 = arith.constant dense<0.000000e+00> : vector<8x32xf32>
    %478 = tpu.matmul %475, %477, %cst_183 {dimension_numbers = #tpu.dot_dimension_numbers<[1], [0], [0], [1], [0, 0, 1, 1], [], []>} : vector<8x8xbf16>, vector<8x32xbf16>, vector<8x32xf32> -> vector<8x32xf32>
    %479 = vector.extract_strided_slice %454 {offsets = [0, 8], sizes = [8, 8], strides = [1, 1]} : vector<8x32xbf16> to vector<8x8xbf16>
    %480 = vector.extract_strided_slice %455 {offsets = [0, 8], sizes = [8, 8], strides = [1, 1]} : vector<8x32xbf16> to vector<8x8xbf16>
    %481 = vector.extract_strided_slice %456 {offsets = [0, 8], sizes = [8, 8], strides = [1, 1]} : vector<8x32xbf16> to vector<8x8xbf16>
    %cst_184 = arith.constant dense<0.000000e+00> : vector<8x8xf32>
    %482 = tpu.matmul %479, %480, %cst_184 {dimension_numbers = #tpu.dot_dimension_numbers<[1], [1], [0], [0], [0, 0, 1, 0], [], []>} : vector<8x8xbf16>, vector<8x8xbf16>, vector<8x8xf32> -> vector<8x8xf32>
    %483 = vector.broadcast %7 : vector<1x8xf32> to vector<8x8xf32>
    %484 = arith.addf %482, %483 : vector<8x8xf32>
    %cst_185 = arith.constant dense<0xFF800000> : vector<8xf32>
    %485 = vector.multi_reduction <maximumf>, %484, %cst_185 [1] : vector<8x8xf32> to vector<8xf32>
    %486 = vector.shape_cast %485 : vector<8xf32> to vector<8x1xf32>
    %487 = vector.broadcast %486 : vector<8x1xf32> to vector<8x8xf32>
    %488 = arith.subf %484, %487 : vector<8x8xf32>
    %489 = math.exp %488 : vector<8x8xf32>
    %cst_186 = arith.constant dense<0.000000e+00> : vector<8xf32>
    %490 = vector.multi_reduction <add>, %489, %cst_186 [1] : vector<8x8xf32> to vector<8xf32>
    %491 = vector.shape_cast %490 : vector<8xf32> to vector<8x1xf32>
    %492 = tpu.reciprocal %491 {approx = true} : vector<8x1xf32> -> vector<8x1xf32>
    %493 = vector.broadcast %492 : vector<8x1xf32> to vector<8x8xf32>
    %494 = arith.mulf %489, %493 : vector<8x8xf32>
    %495 = arith.truncf %494 : vector<8x8xf32> to vector<8x8xbf16>
    %cst_187 = arith.constant dense<0.000000e+00> : vector<8x8xf32>
    %496 = tpu.matmul %495, %481, %cst_187 {dimension_numbers = #tpu.dot_dimension_numbers<[1], [0], [0], [1], [0, 0, 1, 1], [], []>} : vector<8x8xbf16>, vector<8x8xbf16>, vector<8x8xf32> -> vector<8x8xf32>
    %497 = arith.truncf %496 : vector<8x8xf32> to vector<8x8xbf16>
    %498 = vector.extract_strided_slice %451 {offsets = [1, 0, 0], sizes = [1, 8, 32], strides = [1, 1, 1]} : vector<4x8x32xbf16> to vector<1x8x32xbf16>
    %499 = vector.shape_cast %498 : vector<1x8x32xbf16> to vector<8x32xbf16>
    %cst_188 = arith.constant dense<0.000000e+00> : vector<8x32xf32>
    %500 = tpu.matmul %497, %499, %cst_188 {dimension_numbers = #tpu.dot_dimension_numbers<[1], [0], [0], [1], [0, 0, 1, 1], [], []>} : vector<8x8xbf16>, vector<8x32xbf16>, vector<8x32xf32> -> vector<8x32xf32>
    %501 = arith.addf %478, %500 : vector<8x32xf32>
    %502 = vector.extract_strided_slice %454 {offsets = [0, 16], sizes = [8, 8], strides = [1, 1]} : vector<8x32xbf16> to vector<8x8xbf16>
    %503 = vector.extract_strided_slice %455 {offsets = [0, 16], sizes = [8, 8], strides = [1, 1]} : vector<8x32xbf16> to vector<8x8xbf16>
    %504 = vector.extract_strided_slice %456 {offsets = [0, 16], sizes = [8, 8], strides = [1, 1]} : vector<8x32xbf16> to vector<8x8xbf16>
    %cst_189 = arith.constant dense<0.000000e+00> : vector<8x8xf32>
    %505 = tpu.matmul %502, %503, %cst_189 {dimension_numbers = #tpu.dot_dimension_numbers<[1], [1], [0], [0], [0, 0, 1, 0], [], []>} : vector<8x8xbf16>, vector<8x8xbf16>, vector<8x8xf32> -> vector<8x8xf32>
    %506 = vector.broadcast %7 : vector<1x8xf32> to vector<8x8xf32>
    %507 = arith.addf %505, %506 : vector<8x8xf32>
    %cst_190 = arith.constant dense<0xFF800000> : vector<8xf32>
    %508 = vector.multi_reduction <maximumf>, %507, %cst_190 [1] : vector<8x8xf32> to vector<8xf32>
    %509 = vector.shape_cast %508 : vector<8xf32> to vector<8x1xf32>
    %510 = vector.broadcast %509 : vector<8x1xf32> to vector<8x8xf32>
    %511 = arith.subf %507, %510 : vector<8x8xf32>
    %512 = math.exp %511 : vector<8x8xf32>
    %cst_191 = arith.constant dense<0.000000e+00> : vector<8xf32>
    %513 = vector.multi_reduction <add>, %512, %cst_191 [1] : vector<8x8xf32> to vector<8xf32>
    %514 = vector.shape_cast %513 : vector<8xf32> to vector<8x1xf32>
    %515 = tpu.reciprocal %514 {approx = true} : vector<8x1xf32> -> vector<8x1xf32>
    %516 = vector.broadcast %515 : vector<8x1xf32> to vector<8x8xf32>
    %517 = arith.mulf %512, %516 : vector<8x8xf32>
    %518 = arith.truncf %517 : vector<8x8xf32> to vector<8x8xbf16>
    %cst_192 = arith.constant dense<0.000000e+00> : vector<8x8xf32>
    %519 = tpu.matmul %518, %504, %cst_192 {dimension_numbers = #tpu.dot_dimension_numbers<[1], [0], [0], [1], [0, 0, 1, 1], [], []>} : vector<8x8xbf16>, vector<8x8xbf16>, vector<8x8xf32> -> vector<8x8xf32>
    %520 = arith.truncf %519 : vector<8x8xf32> to vector<8x8xbf16>
    %521 = vector.extract_strided_slice %451 {offsets = [2, 0, 0], sizes = [1, 8, 32], strides = [1, 1, 1]} : vector<4x8x32xbf16> to vector<1x8x32xbf16>
    %522 = vector.shape_cast %521 : vector<1x8x32xbf16> to vector<8x32xbf16>
    %cst_193 = arith.constant dense<0.000000e+00> : vector<8x32xf32>
    %523 = tpu.matmul %520, %522, %cst_193 {dimension_numbers = #tpu.dot_dimension_numbers<[1], [0], [0], [1], [0, 0, 1, 1], [], []>} : vector<8x8xbf16>, vector<8x32xbf16>, vector<8x32xf32> -> vector<8x32xf32>
    %524 = arith.addf %501, %523 : vector<8x32xf32>
    %525 = vector.extract_strided_slice %454 {offsets = [0, 24], sizes = [8, 8], strides = [1, 1]} : vector<8x32xbf16> to vector<8x8xbf16>
    %526 = vector.extract_strided_slice %455 {offsets = [0, 24], sizes = [8, 8], strides = [1, 1]} : vector<8x32xbf16> to vector<8x8xbf16>
    %527 = vector.extract_strided_slice %456 {offsets = [0, 24], sizes = [8, 8], strides = [1, 1]} : vector<8x32xbf16> to vector<8x8xbf16>
    %cst_194 = arith.constant dense<0.000000e+00> : vector<8x8xf32>
    %528 = tpu.matmul %525, %526, %cst_194 {dimension_numbers = #tpu.dot_dimension_numbers<[1], [1], [0], [0], [0, 0, 1, 0], [], []>} : vector<8x8xbf16>, vector<8x8xbf16>, vector<8x8xf32> -> vector<8x8xf32>
    %529 = vector.broadcast %7 : vector<1x8xf32> to vector<8x8xf32>
    %530 = arith.addf %528, %529 : vector<8x8xf32>
    %cst_195 = arith.constant dense<0xFF800000> : vector<8xf32>
    %531 = vector.multi_reduction <maximumf>, %530, %cst_195 [1] : vector<8x8xf32> to vector<8xf32>
    %532 = vector.shape_cast %531 : vector<8xf32> to vector<8x1xf32>
    %533 = vector.broadcast %532 : vector<8x1xf32> to vector<8x8xf32>
    %534 = arith.subf %530, %533 : vector<8x8xf32>
    %535 = math.exp %534 : vector<8x8xf32>
    %cst_196 = arith.constant dense<0.000000e+00> : vector<8xf32>
    %536 = vector.multi_reduction <add>, %535, %cst_196 [1] : vector<8x8xf32> to vector<8xf32>
    %537 = vector.shape_cast %536 : vector<8xf32> to vector<8x1xf32>
    %538 = tpu.reciprocal %537 {approx = true} : vector<8x1xf32> -> vector<8x1xf32>
    %539 = vector.broadcast %538 : vector<8x1xf32> to vector<8x8xf32>
    %540 = arith.mulf %535, %539 : vector<8x8xf32>
    %541 = arith.truncf %540 : vector<8x8xf32> to vector<8x8xbf16>
    %cst_197 = arith.constant dense<0.000000e+00> : vector<8x8xf32>
    %542 = tpu.matmul %541, %527, %cst_197 {dimension_numbers = #tpu.dot_dimension_numbers<[1], [0], [0], [1], [0, 0, 1, 1], [], []>} : vector<8x8xbf16>, vector<8x8xbf16>, vector<8x8xf32> -> vector<8x8xf32>
    %543 = arith.truncf %542 : vector<8x8xf32> to vector<8x8xbf16>
    %544 = vector.extract_strided_slice %451 {offsets = [3, 0, 0], sizes = [1, 8, 32], strides = [1, 1, 1]} : vector<4x8x32xbf16> to vector<1x8x32xbf16>
    %545 = vector.shape_cast %544 : vector<1x8x32xbf16> to vector<8x32xbf16>
    %cst_198 = arith.constant dense<0.000000e+00> : vector<8x32xf32>
    %546 = tpu.matmul %543, %545, %cst_198 {dimension_numbers = #tpu.dot_dimension_numbers<[1], [0], [0], [1], [0, 0, 1, 1], [], []>} : vector<8x8xbf16>, vector<8x32xbf16>, vector<8x32xf32> -> vector<8x32xf32>
    %547 = arith.addf %524, %546 : vector<8x32xf32>
    %548 = vector.broadcast %453 : vector<1x32xf32> to vector<8x32xf32>
    %549 = arith.addf %547, %548 : vector<8x32xf32>
    %550 = arith.addf %549, %440 : vector<8x32xf32>
    %c1_199 = arith.constant 1 : index
    %c0_200 = arith.constant 0 : index
    %c0_201 = arith.constant 0 : index
    %551 = vector.load %arg14[%c1_199, %c0_200, %c0_201] : memref<2x1x32xf32, #tpu.memory_space<vmem>>, vector<1x1x32xf32>
    %552 = vector.shape_cast %551 : vector<1x1x32xf32> to vector<1x32xf32>
    %c1_202 = arith.constant 1 : index
    %c0_203 = arith.constant 0 : index
    %c0_204 = arith.constant 0 : index
    %553 = vector.load %arg15[%c1_202, %c0_203, %c0_204] : memref<2x1x32xf32, #tpu.memory_space<vmem>>, vector<1x1x32xf32>
    %554 = vector.shape_cast %553 : vector<1x1x32xf32> to vector<1x32xf32>
    %cst_205 = arith.constant dense<0.000000e+00> : vector<8xf32>
    %555 = vector.multi_reduction <add>, %550, %cst_205 [1] : vector<8x32xf32> to vector<8xf32>
    %556 = vector.shape_cast %555 : vector<8xf32> to vector<8x1xf32>
    %cst_206 = arith.constant 3.200000e+01 : f32
    %557 = vector.broadcast %cst_206 : f32 to vector<8x1xf32>
    %558 = arith.divf %556, %557 : vector<8x1xf32>
    %559 = vector.broadcast %558 : vector<8x1xf32> to vector<8x32xf32>
    %560 = arith.subf %550, %559 : vector<8x32xf32>
    %561 = arith.mulf %560, %560 : vector<8x32xf32>
    %cst_207 = arith.constant dense<0.000000e+00> : vector<8xf32>
    %562 = vector.multi_reduction <add>, %561, %cst_207 [1] : vector<8x32xf32> to vector<8xf32>
    %563 = vector.shape_cast %562 : vector<8xf32> to vector<8x1xf32>
    %cst_208 = arith.constant 3.200000e+01 : f32
    %564 = vector.broadcast %cst_208 : f32 to vector<8x1xf32>
    %565 = arith.divf %563, %564 : vector<8x1xf32>
    %cst_209 = arith.constant 9.99999974E-6 : f32
    %566 = vector.broadcast %cst_209 : f32 to vector<8x1xf32>
    %567 = arith.addf %565, %566 : vector<8x1xf32>
    %568 = math.rsqrt %567 : vector<8x1xf32>
    %569 = vector.broadcast %568 : vector<8x1xf32> to vector<8x32xf32>
    %570 = arith.mulf %560, %569 : vector<8x32xf32>
    %571 = vector.broadcast %552 : vector<1x32xf32> to vector<8x32xf32>
    %572 = arith.mulf %570, %571 : vector<8x32xf32>
    %573 = vector.broadcast %554 : vector<1x32xf32> to vector<8x32xf32>
    %574 = arith.addf %572, %573 : vector<8x32xf32>
    %575 = arith.truncf %574 : vector<8x32xf32> to vector<8x32xbf16>
    %c1_210 = arith.constant 1 : index
    %c0_211 = arith.constant 0 : index
    %c0_212 = arith.constant 0 : index
    %576 = vector.load %arg16[%c1_210, %c0_211, %c0_212] : memref<2x32x64xbf16, #tpu.memory_space<vmem>>, vector<1x32x64xbf16>
    %577 = vector.shape_cast %576 : vector<1x32x64xbf16> to vector<32x64xbf16>
    %cst_213 = arith.constant dense<0.000000e+00> : vector<8x64xf32>
    %578 = tpu.matmul %575, %577, %cst_213 {dimension_numbers = #tpu.dot_dimension_numbers<[1], [0], [0], [1], [0, 0, 1, 1], [], []>} : vector<8x32xbf16>, vector<32x64xbf16>, vector<8x64xf32> -> vector<8x64xf32>
    %c1_214 = arith.constant 1 : index
    %c0_215 = arith.constant 0 : index
    %c0_216 = arith.constant 0 : index
    %579 = vector.load %arg17[%c1_214, %c0_215, %c0_216] : memref<2x1x64xf32, #tpu.memory_space<vmem>>, vector<1x1x64xf32>
    %580 = vector.shape_cast %579 : vector<1x1x64xf32> to vector<1x64xf32>
    %581 = vector.broadcast %580 : vector<1x64xf32> to vector<8x64xf32>
    %582 = arith.addf %578, %581 : vector<8x64xf32>
    %cst_217 = arith.constant 0.000000e+00 : f32
    %583 = vector.broadcast %cst_217 : f32 to vector<8x64xf32>
    %584 = arith.maximumf %582, %583 : vector<8x64xf32>
    %585 = arith.truncf %584 : vector<8x64xf32> to vector<8x64xbf16>
    %c1_218 = arith.constant 1 : index
    %c0_219 = arith.constant 0 : index
    %c0_220 = arith.constant 0 : index
    %586 = vector.load %arg18[%c1_218, %c0_219, %c0_220] : memref<2x64x32xbf16, #tpu.memory_space<vmem>>, vector<1x64x32xbf16>
    %587 = vector.shape_cast %586 : vector<1x64x32xbf16> to vector<64x32xbf16>
    %cst_221 = arith.constant dense<0.000000e+00> : vector<8x32xf32>
    %588 = tpu.matmul %585, %587, %cst_221 {dimension_numbers = #tpu.dot_dimension_numbers<[1], [0], [0], [1], [0, 0, 1, 1], [], []>} : vector<8x64xbf16>, vector<64x32xbf16>, vector<8x32xf32> -> vector<8x32xf32>
    %c1_222 = arith.constant 1 : index
    %c0_223 = arith.constant 0 : index
    %c0_224 = arith.constant 0 : index
    %589 = vector.load %arg19[%c1_222, %c0_223, %c0_224] : memref<2x1x32xf32, #tpu.memory_space<vmem>>, vector<1x1x32xf32>
    %590 = vector.shape_cast %589 : vector<1x1x32xf32> to vector<1x32xf32>
    %591 = vector.broadcast %590 : vector<1x32xf32> to vector<8x32xf32>
    %592 = arith.addf %588, %591 : vector<8x32xf32>
    %593 = arith.addf %592, %574 : vector<8x32xf32>
    %c1_225 = arith.constant 1 : index
    %c0_226 = arith.constant 0 : index
    %c0_227 = arith.constant 0 : index
    %594 = vector.load %arg20[%c1_225, %c0_226, %c0_227] : memref<2x1x32xf32, #tpu.memory_space<vmem>>, vector<1x1x32xf32>
    %595 = vector.shape_cast %594 : vector<1x1x32xf32> to vector<1x32xf32>
    %c1_228 = arith.constant 1 : index
    %c0_229 = arith.constant 0 : index
    %c0_230 = arith.constant 0 : index
    %596 = vector.load %arg21[%c1_228, %c0_229, %c0_230] : memref<2x1x32xf32, #tpu.memory_space<vmem>>, vector<1x1x32xf32>
    %597 = vector.shape_cast %596 : vector<1x1x32xf32> to vector<1x32xf32>
    %cst_231 = arith.constant dense<0.000000e+00> : vector<8xf32>
    %598 = vector.multi_reduction <add>, %593, %cst_231 [1] : vector<8x32xf32> to vector<8xf32>
    %599 = vector.shape_cast %598 : vector<8xf32> to vector<8x1xf32>
    %cst_232 = arith.constant 3.200000e+01 : f32
    %600 = vector.broadcast %cst_232 : f32 to vector<8x1xf32>
    %601 = arith.divf %599, %600 : vector<8x1xf32>
    %602 = vector.broadcast %601 : vector<8x1xf32> to vector<8x32xf32>
    %603 = arith.subf %593, %602 : vector<8x32xf32>
    %604 = arith.mulf %603, %603 : vector<8x32xf32>
    %cst_233 = arith.constant dense<0.000000e+00> : vector<8xf32>
    %605 = vector.multi_reduction <add>, %604, %cst_233 [1] : vector<8x32xf32> to vector<8xf32>
    %606 = vector.shape_cast %605 : vector<8xf32> to vector<8x1xf32>
    %cst_234 = arith.constant 3.200000e+01 : f32
    %607 = vector.broadcast %cst_234 : f32 to vector<8x1xf32>
    %608 = arith.divf %606, %607 : vector<8x1xf32>
    %cst_235 = arith.constant 9.99999974E-6 : f32
    %609 = vector.broadcast %cst_235 : f32 to vector<8x1xf32>
    %610 = arith.addf %608, %609 : vector<8x1xf32>
    %611 = math.rsqrt %610 : vector<8x1xf32>
    %612 = vector.broadcast %611 : vector<8x1xf32> to vector<8x32xf32>
    %613 = arith.mulf %603, %612 : vector<8x32xf32>
    %614 = vector.broadcast %595 : vector<1x32xf32> to vector<8x32xf32>
    %615 = arith.mulf %613, %614 : vector<8x32xf32>
    %616 = vector.broadcast %597 : vector<1x32xf32> to vector<8x32xf32>
    %617 = arith.addf %615, %616 : vector<8x32xf32>
    %618 = arith.truncf %617 : vector<8x32xf32> to vector<8x32xbf16>
    %c0_236 = arith.constant 0 : index
    %c0_237 = arith.constant 0 : index
    %619 = vector.load %arg22[%c0_236, %c0_237] : memref<32x16xbf16, #tpu.memory_space<vmem>>, vector<32x16xbf16>
    %cst_238 = arith.constant dense<0.000000e+00> : vector<8x16xf32>
    %620 = tpu.matmul %618, %619, %cst_238 {dimension_numbers = #tpu.dot_dimension_numbers<[1], [0], [0], [1], [0, 0, 1, 1], [], []>} : vector<8x32xbf16>, vector<32x16xbf16>, vector<8x16xf32> -> vector<8x16xf32>
    %c0_239 = arith.constant 0 : index
    %c0_240 = arith.constant 0 : index
    %621 = vector.load %arg23[%c0_239, %c0_240] : memref<1x16xf32, #tpu.memory_space<vmem>>, vector<1x16xf32>
    %622 = vector.broadcast %621 : vector<1x16xf32> to vector<8x16xf32>
    %623 = arith.addf %620, %622 : vector<8x16xf32>
    %c0_241 = arith.constant 0 : index
    %c0_242 = arith.constant 0 : index
    %c0_243 = arith.constant 0 : index
    %624 = vector.load %arg24[%c0_241, %c0_242, %c0_243] : memref<1x8x16xf32, #tpu.memory_space<vmem>>, vector<1x8x16xf32>
    %625 = vector.shape_cast %624 : vector<1x8x16xf32> to vector<8x16xf32>
    %626 = vector.shape_cast %623 : vector<8x16xf32> to vector<1x8x16xf32>
    tpu.vector_store %arg24[%c0_241, %c0_242, %c0_243], %626 {strides = array<i32>} : memref<1x8x16xf32, #tpu.memory_space<vmem>>, vector<1x8x16xf32>,
    return
  }
  func.func @transform_0(%arg0: i32) -> (i32, i32, i32) {
    %c0_i32 = arith.constant 0 : i32
    %c0_i32_0 = arith.constant 0 : i32
    %c0_i32_1 = arith.constant 0 : i32
    return %arg0, %c0_i32, %c0_i32_0 : i32, i32, i32
  }
  func.func @transform_1(%arg0: i32) -> (i32, i32, i32) {
    %c0_i32 = arith.constant 0 : i32
    %c0_i32_0 = arith.constant 0 : i32
    %c0_i32_1 = arith.constant 0 : i32
    return %arg0, %c0_i32, %c0_i32_0 : i32, i32, i32
  }
  func.func @transform_2(%arg0: i32) -> (i32, i32) {
    %c0_i32 = arith.constant 0 : i32
    %c0_i32_0 = arith.constant 0 : i32
    %c0_i32_1 = arith.constant 0 : i32
    return %c0_i32, %c0_i32_0 : i32, i32
  }
  func.func @transform_3(%arg0: i32) -> (i32, i32, i32) {
    %c0_i32 = arith.constant 0 : i32
    %c0_i32_0 = arith.constant 0 : i32
    %c0_i32_1 = arith.constant 0 : i32
    return %arg0, %c0_i32, %c0_i32_0 : i32, i32, i32
  }
  func.func @transform_4(%arg0: i32) -> (i32, i32, i32) {
    %c0_i32 = arith.constant 0 : i32
    %c0_i32_0 = arith.constant 0 : i32
    %c0_i32_1 = arith.constant 0 : i32
    %c0_i32_2 = arith.constant 0 : i32
    return %c0_i32, %c0_i32_0, %c0_i32_1 : i32, i32, i32
  }
  func.func @transform_5(%arg0: i32) -> (i32, i32, i32, i32) {
    %c0_i32 = arith.constant 0 : i32
    %c0_i32_0 = arith.constant 0 : i32
    %c0_i32_1 = arith.constant 0 : i32
    %c0_i32_2 = arith.constant 0 : i32
    %c0_i32_3 = arith.constant 0 : i32
    return %c0_i32, %c0_i32_0, %c0_i32_1, %c0_i32_2 : i32, i32, i32, i32
  }
  func.func @transform_6(%arg0: i32) -> (i32, i32, i32) {
    %c0_i32 = arith.constant 0 : i32
    %c0_i32_0 = arith.constant 0 : i32
    %c0_i32_1 = arith.constant 0 : i32
    %c0_i32_2 = arith.constant 0 : i32
    return %c0_i32, %c0_i32_0, %c0_i32_1 : i32, i32, i32
  }
  func.func @transform_7(%arg0: i32) -> (i32, i32, i32) {
    %c0_i32 = arith.constant 0 : i32
    %c0_i32_0 = arith.constant 0 : i32
    %c0_i32_1 = arith.constant 0 : i32
    %c0_i32_2 = arith.constant 0 : i32
    return %c0_i32, %c0_i32_0, %c0_i32_1 : i32, i32, i32
  }
  func.func @transform_8(%arg0: i32) -> (i32, i32, i32) {
    %c0_i32 = arith.constant 0 : i32
    %c0_i32_0 = arith.constant 0 : i32
    %c0_i32_1 = arith.constant 0 : i32
    %c0_i32_2 = arith.constant 0 : i32
    return %c0_i32, %c0_i32_0, %c0_i32_1 : i32, i32, i32
  }
  func.func @transform_9(%arg0: i32) -> (i32, i32, i32) {
    %c0_i32 = arith.constant 0 : i32
    %c0_i32_0 = arith.constant 0 : i32
    %c0_i32_1 = arith.constant 0 : i32
    %c0_i32_2 = arith.constant 0 : i32
    return %c0_i32, %c0_i32_0, %c0_i32_1 : i32, i32, i32
  }
  func.func @transform_10(%arg0: i32) -> (i32, i32, i32) {
    %c0_i32 = arith.constant 0 : i32
    %c0_i32_0 = arith.constant 0 : i32
    %c0_i32_1 = arith.constant 0 : i32
    %c0_i32_2 = arith.constant 0 : i32
    return %c0_i32, %c0_i32_0, %c0_i32_1 : i32, i32, i32
  }
  func.func @transform_11(%arg0: i32) -> (i32, i32, i32, i32) {
    %c0_i32 = arith.constant 0 : i32
    %c0_i32_0 = arith.constant 0 : i32
    %c0_i32_1 = arith.constant 0 : i32
    %c0_i32_2 = arith.constant 0 : i32
    %c0_i32_3 = arith.constant 0 : i32
    return %c0_i32, %c0_i32_0, %c0_i32_1, %c0_i32_2 : i32, i32, i32, i32
  }
  func.func @transform_12(%arg0: i32) -> (i32, i32, i32) {
    %c0_i32 = arith.constant 0 : i32
    %c0_i32_0 = arith.constant 0 : i32
    %c0_i32_1 = arith.constant 0 : i32
    %c0_i32_2 = arith.constant 0 : i32
    return %c0_i32, %c0_i32_0, %c0_i32_1 : i32, i32, i32
  }
  func.func @transform_13(%arg0: i32) -> (i32, i32, i32) {
    %c0_i32 = arith.constant 0 : i32
    %c0_i32_0 = arith.constant 0 : i32
    %c0_i32_1 = arith.constant 0 : i32
    %c0_i32_2 = arith.constant 0 : i32
    return %c0_i32, %c0_i32_0, %c0_i32_1 : i32, i32, i32
  }
  func.func @transform_14(%arg0: i32) -> (i32, i32, i32) {
    %c0_i32 = arith.constant 0 : i32
    %c0_i32_0 = arith.constant 0 : i32
    %c0_i32_1 = arith.constant 0 : i32
    %c0_i32_2 = arith.constant 0 : i32
    return %c0_i32, %c0_i32_0, %c0_i32_1 : i32, i32, i32
  }
  func.func @transform_15(%arg0: i32) -> (i32, i32, i32) {
    %c0_i32 = arith.constant 0 : i32
    %c0_i32_0 = arith.constant 0 : i32
    %c0_i32_1 = arith.constant 0 : i32
    %c0_i32_2 = arith.constant 0 : i32
    return %c0_i32, %c0_i32_0, %c0_i32_1 : i32, i32, i32
  }
  func.func @transform_16(%arg0: i32) -> (i32, i32, i32) {
    %c0_i32 = arith.constant 0 : i32
    %c0_i32_0 = arith.constant 0 : i32
    %c0_i32_1 = arith.constant 0 : i32
    %c0_i32_2 = arith.constant 0 : i32
    return %c0_i32, %c0_i32_0, %c0_i32_1 : i32, i32, i32
  }
  func.func @transform_17(%arg0: i32) -> (i32, i32, i32) {
    %c0_i32 = arith.constant 0 : i32
    %c0_i32_0 = arith.constant 0 : i32
    %c0_i32_1 = arith.constant 0 : i32
    %c0_i32_2 = arith.constant 0 : i32
    return %c0_i32, %c0_i32_0, %c0_i32_1 : i32, i32, i32
  }
  func.func @transform_18(%arg0: i32) -> (i32, i32, i32) {
    %c0_i32 = arith.constant 0 : i32
    %c0_i32_0 = arith.constant 0 : i32
    %c0_i32_1 = arith.constant 0 : i32
    %c0_i32_2 = arith.constant 0 : i32
    return %c0_i32, %c0_i32_0, %c0_i32_1 : i32, i32, i32
  }
  func.func @transform_19(%arg0: i32) -> (i32, i32, i32) {
    %c0_i32 = arith.constant 0 : i32
    %c0_i32_0 = arith.constant 0 : i32
    %c0_i32_1 = arith.constant 0 : i32
    %c0_i32_2 = arith.constant 0 : i32
    return %c0_i32, %c0_i32_0, %c0_i32_1 : i32, i32, i32
  }
  func.func @transform_20(%arg0: i32) -> (i32, i32, i32) {
    %c0_i32 = arith.constant 0 : i32
    %c0_i32_0 = arith.constant 0 : i32
    %c0_i32_1 = arith.constant 0 : i32
    %c0_i32_2 = arith.constant 0 : i32
    return %c0_i32, %c0_i32_0, %c0_i32_1 : i32, i32, i32
  }
  func.func @transform_21(%arg0: i32) -> (i32, i32) {
    %c0_i32 = arith.constant 0 : i32
    %c0_i32_0 = arith.constant 0 : i32
    %c0_i32_1 = arith.constant 0 : i32
    return %c0_i32, %c0_i32_0 : i32, i32
  }
  func.func @transform_22(%arg0: i32) -> (i32, i32) {
    %c0_i32 = arith.constant 0 : i32
    %c0_i32_0 = arith.constant 0 : i32
    %c0_i32_1 = arith.constant 0 : i32
    return %c0_i32, %c0_i32_0 : i32, i32
  }
  func.func @transform_23(%arg0: i32) -> (i32, i32, i32) {
    %c0_i32 = arith.constant 0 : i32
    %c0_i32_0 = arith.constant 0 : i32
    %c0_i32_1 = arith.constant 0 : i32
    return %arg0, %c0_i32, %c0_i32_0 : i32, i32, i32
  }
}

</mosaic_0001>

<llo_original>
// kernel: bumblebee_forward.2
$region0: #{bumblebee_forward.2}
  #allocation0 [shape = 'u32[]', space=smem, size = 0x4, offset = 0x4, fixed_abs, tag = 'smem constant byte address 0x4 - core index']
  #allocation1 [shape = 'u32[72,128]{1,0:T(1,128)}', space=vmem, size = 0x9000, scoped, tag = 'internal scratch']
  %s0 = inlined_call_operand.vmem [shape: f32[2,8,32], index: 0, kind: input, shape index: {}]
  %s1 = inlined_call_operand.vmem [shape: f32[2,1,8], index: 1, kind: input, shape index: {}]
  %s2 = inlined_call_operand.vmem [shape: bf16[2,32,96], index: 2, kind: input, shape index: {}]
  %s3 = inlined_call_operand.vmem [shape: bf16[2,4,8,32], index: 3, kind: input, shape index: {}]
  %s4 = inlined_call_operand.vmem [shape: f32[2,1,32], index: 4, kind: input, shape index: {}]
  %s5 = inlined_call_operand.vmem [shape: f32[2,1,32], index: 5, kind: input, shape index: {}]
  %s6 = inlined_call_operand.vmem [shape: f32[2,1,32], index: 6, kind: input, shape index: {}]
  %s7 = inlined_call_operand.vmem [shape: bf16[2,32,64], index: 7, kind: input, shape index: {}]
  %s8 = inlined_call_operand.vmem [shape: f32[2,1,64], index: 8, kind: input, shape index: {}]
  %s9 = inlined_call_operand.vmem [shape: bf16[2,64,32], index: 9, kind: input, shape index: {}]
  %s10 = inlined_call_operand.vmem [shape: f32[2,1,32], index: 10, kind: input, shape index: {}]
  %s11 = inlined_call_operand.vmem [shape: f32[2,1,32], index: 11, kind: input, shape index: {}]
  %s12 = inlined_call_operand.vmem [shape: f32[2,1,32], index: 12, kind: input, shape index: {}]
  %s13 = inlined_call_operand.vmem [shape: f32[2,8,32], index: 13, kind: output, shape index: {}]
  %s14 = sld [smem:[#allocation0]]
  $region85: #{bumblebee_forward.2} parent=0
    _
  %s16 = ssub.s32 1, %s14
  %s17 = scalar_select 0, %s16, %s14
  loop: start=0, step=1, limit=4
  $region2: #{bumblebee_forward.2} parent=0 // loop_pre_header
    _
  $region3: #{bumblebee_forward.2} parent=0 // loop_header
    %s19 = sphi 0, %s23
    %p20 = scmp.ge.s32.totalorder %s19, 4
    %s29 = sphi 0, %s31
    %s32 = sphi 0, %s29
    %s33 = sphi 0, %s32
    %s49 = sphi 0, %s33
    %s55 = sphi 0, %s57
    %s58 = sphi 0, %s55
    %s59 = sphi 0, %s58
    %s75 = sphi 0, %s59
    %s79 = sphi 0, %s79
    %s81 = sphi 0, %s79
    %s82 = sphi 0, %s81
    %s96 = sphi 0, %s82
    %s100 = sphi 0, %s100
    %s102 = sphi 0, %s100
    %s103 = sphi 0, %s102
    %s117 = sphi 0, %s103
    %s121 = sphi 0, %s121
    %s123 = sphi 0, %s121
    %s124 = sphi 0, %s123
    %s138 = sphi 0, %s124
    %s142 = sphi 0, %s142
    %s144 = sphi 0, %s142
    %s145 = sphi 0, %s144
    %s159 = sphi 0, %s145
    %s163 = sphi 0, %s163
    %s165 = sphi 0, %s163
    %s166 = sphi 0, %s165
    %s180 = sphi 0, %s166
    %s184 = sphi 0, %s184
    %s186 = sphi 0, %s184
    %s187 = sphi 0, %s186
    %s201 = sphi 0, %s187
    %s205 = sphi 0, %s205
    %s207 = sphi 0, %s205
    %s208 = sphi 0, %s207
    %s222 = sphi 0, %s208
    %s226 = sphi 0, %s226
    %s228 = sphi 0, %s226
    %s229 = sphi 0, %s228
    %s243 = sphi 0, %s229
    %s247 = sphi 0, %s247
    %s249 = sphi 0, %s247
    %s250 = sphi 0, %s249
    %s264 = sphi 0, %s250
    %s268 = sphi 0, %s268
    %s270 = sphi 0, %s268
    %s271 = sphi 0, %s270
    %s285 = sphi 0, %s271
    %s289 = sphi 0, %s289
    %s291 = sphi 0, %s289
    %s292 = sphi 0, %s291
    %s306 = sphi 0, %s292
    %s312 = sphi 0, %s314
    %s315 = sphi 0, %s312
    %s316 = sphi 0, %s315
    %s332 = sphi 0, %s316
  $region4: #{bumblebee_forward.2} parent=0 // loop_header_branch
    %22 = sbr.rel (%p20) target = $region8
  $region5: #{bumblebee_forward.2} parent=0 // loop_body
    %s24 = ssub.s32 %s19, 1
    %s25 = ssub.s32 %s19, 2
    %s26 = sadd.s32 %s19, 1
    %s27 = ssub.s32 %s19, %s26
    %p28 = scmp.eq.s32.totalorder %s27, 0
    %s30 = sadd.s32 %s29, 1
    %s31 = scalar_select %p28, %s29, %s30
    %p34 = pneg %p28
    %p35 = scmp.eq.s32.totalorder %s19, 1
    %p36 = por %p34, %p35
    %p37 = scmp.ne.s32.totalorder %s29, %s32
    %p38 = scmp.eq.s32.totalorder %s19, 0
    %p39 = por %p37, %p38
    %p40 = scmp.ne.s32.totalorder %s29, %s32
    %p41 = scmp.eq.s32.totalorder %s24, 1
    %p42 = por %p40, %p41
    %p43 = scmp.ne.s32.totalorder %s32, %s33
    %p44 = scmp.eq.s32.totalorder %s24, 0
    %p45 = por %p43, %p44
    %p46 = scmp.ne.s32.totalorder %s32, %s33
    %p47 = scmp.eq.s32.totalorder %s25, 1
    %p48 = por %p46, %p47
    %p50 = scmp.ne.s32.totalorder %s33, %s49
    %p51 = scmp.eq.s32.totalorder %s25, 0
    %p52 = por %p50, %p51
    %s53 = ssub.s32 %s19, %s26
    %p54 = scmp.eq.s32.totalorder %s53, 0
    %s56 = sadd.s32 %s55, 1
    %s57 = scalar_select %p54, %s55, %s56
    %p60 = pneg %p54
    %p61 = scmp.eq.s32.totalorder %s19, 1
    %p62 = por %p60, %p61
    %p63 = scmp.ne.s32.totalorder %s55, %s58
    %p64 = scmp.eq.s32.totalorder %s19, 0
    %p65 = por %p63, %p64
    %p66 = scmp.ne.s32.totalorder %s55, %s58
    %p67 = scmp.eq.s32.totalorder %s24, 1
    %p68 = por %p66, %p67
    %p69 = scmp.ne.s32.totalorder %s58, %s59
    %p70 = scmp.eq.s32.totalorder %s24, 0
    %p71 = por %p69, %p70
    %p72 = scmp.ne.s32.totalorder %s58, %s59
    %p73 = scmp.eq.s32.totalorder %s25, 1
    %p74 = por %p72, %p73
    %p76 = scmp.ne.s32.totalorder %s59, %s75
    %p77 = scmp.eq.s32.totalorder %s25, 0
    %p78 = por %p76, %p77
    %s80 = sadd.s32 %s79, 1
    %p83 = scmp.eq.s32.totalorder %s19, 1
    %p84 = scmp.ne.s32.totalorder %s79, %s81
    %p85 = scmp.eq.s32.totalorder %s19, 0
    %p86 = por %p84, %p85
    %p87 = scmp.ne.s32.totalorder %s79, %s81
    %p88 = scmp.eq.s32.totalorder %s24, 1
    %p89 = por %p87, %p88
    %p90 = scmp.ne.s32.totalorder %s81, %s82
    %p91 = scmp.eq.s32.totalorder %s24, 0
    %p92 = por %p90, %p91
    %p93 = scmp.ne.s32.totalorder %s81, %s82
    %p94 = scmp.eq.s32.totalorder %s25, 1
    %p95 = por %p93, %p94
    %p97 = scmp.ne.s32.totalorder %s82, %s96
    %p98 = scmp.eq.s32.totalorder %s25, 0
    %p99 = por %p97, %p98
    %s101 = sadd.s32 %s100, 1
    %p104 = scmp.eq.s32.totalorder %s19, 1
    %p105 = scmp.ne.s32.totalorder %s100, %s102
    %p106 = scmp.eq.s32.totalorder %s19, 0
    %p107 = por %p105, %p106
    %p108 = scmp.ne.s32.totalorder %s100, %s102
    %p109 = scmp.eq.s32.totalorder %s24, 1
    %p110 = por %p108, %p109
    %p111 = scmp.ne.s32.totalorder %s102, %s103
    %p112 = scmp.eq.s32.totalorder %s24, 0
    %p113 = por %p111, %p112
    %p114 = scmp.ne.s32.totalorder %s102, %s103
    %p115 = scmp.eq.s32.totalorder %s25, 1
    %p116 = por %p114, %p115
    %p118 = scmp.ne.s32.totalorder %s103, %s117
    %p119 = scmp.eq.s32.totalorder %s25, 0
    %p120 = por %p118, %p119
    %s122 = sadd.s32 %s121, 1
    %p125 = scmp.eq.s32.totalorder %s19, 1
    %p126 = scmp.ne.s32.totalorder %s121, %s123
    %p127 = scmp.eq.s32.totalorder %s19, 0
    %p128 = por %p126, %p127
    %p129 = scmp.ne.s32.totalorder %s121, %s123
    %p130 = scmp.eq.s32.totalorder %s24, 1
    %p131 = por %p129, %p130
    %p132 = scmp.ne.s32.totalorder %s123, %s124
    %p133 = scmp.eq.s32.totalorder %s24, 0
    %p134 = por %p132, %p133
    %p135 = scmp.ne.s32.totalorder %s123, %s124
    %p136 = scmp.eq.s32.totalorder %s25, 1
    %p137 = por %p135, %p136
    %p139 = scmp.ne.s32.totalorder %s124, %s138
    %p140 = scmp.eq.s32.totalorder %s25, 0
    %p141 = por %p139, %p140
    %s143 = sadd.s32 %s142, 1
    %p146 = scmp.eq.s32.totalorder %s19, 1
    %p147 = scmp.ne.s32.totalorder %s142, %s144
    %p148 = scmp.eq.s32.totalorder %s19, 0
    %p149 = por %p147, %p148
    %p150 = scmp.ne.s32.totalorder %s142, %s144
    %p151 = scmp.eq.s32.totalorder %s24, 1
    %p152 = por %p150, %p151
    %p153 = scmp.ne.s32.totalorder %s144, %s145
    %p154 = scmp.eq.s32.totalorder %s24, 0
    %p155 = por %p153, %p154
    %p156 = scmp.ne.s32.totalorder %s144, %s145
    %p157 = scmp.eq.s32.totalorder %s25, 1
    %p158 = por %p156, %p157
    %p160 = scmp.ne.s32.totalorder %s145, %s159
    %p161 = scmp.eq.s32.totalorder %s25, 0
    %p162 = por %p160, %p161
    %s164 = sadd.s32 %s163, 1
    %p167 = scmp.eq.s32.totalorder %s19, 1
    %p168 = scmp.ne.s32.totalorder %s163, %s165
    %p169 = scmp.eq.s32.totalorder %s19, 0
    %p170 = por %p168, %p169
    %p171 = scmp.ne.s32.totalorder %s163, %s165
    %p172 = scmp.eq.s32.totalorder %s24, 1
    %p173 = por %p171, %p172
    %p174 = scmp.ne.s32.totalorder %s165, %s166
    %p175 = scmp.eq.s32.totalorder %s24, 0
    %p176 = por %p174, %p175
    %p177 = scmp.ne.s32.totalorder %s165, %s166
    %p178 = scmp.eq.s32.totalorder %s25, 1
    %p179 = por %p177, %p178
    %p181 = scmp.ne.s32.totalorder %s166, %s180
    %p182 = scmp.eq.s32.totalorder %s25, 0
    %p183 = por %p181, %p182
    %s185 = sadd.s32 %s184, 1
    %p188 = scmp.eq.s32.totalorder %s19, 1
    %p189 = scmp.ne.s32.totalorder %s184, %s186
    %p190 = scmp.eq.s32.totalorder %s19, 0
    %p191 = por %p189, %p190
    %p192 = scmp.ne.s32.totalorder %s184, %s186
    %p193 = scmp.eq.s32.totalorder %s24, 1
    %p194 = por %p192, %p193
    %p195 = scmp.ne.s32.totalorder %s186, %s187
    %p196 = scmp.eq.s32.totalorder %s24, 0
    %p197 = por %p195, %p196
    %p198 = scmp.ne.s32.totalorder %s186, %s187
    %p199 = scmp.eq.s32.totalorder %s25, 1
    %p200 = por %p198, %p199
    %p202 = scmp.ne.s32.totalorder %s187, %s201
    %p203 = scmp.eq.s32.totalorder %s25, 0
    %p204 = por %p202, %p203
    %s206 = sadd.s32 %s205, 1
    %p209 = scmp.eq.s32.totalorder %s19, 1
    %p210 = scmp.ne.s32.totalorder %s205, %s207
    %p211 = scmp.eq.s32.totalorder %s19, 0
    %p212 = por %p210, %p211
    %p213 = scmp.ne.s32.totalorder %s205, %s207
    %p214 = scmp.eq.s32.totalorder %s24, 1
    %p215 = por %p213, %p214
    %p216 = scmp.ne.s32.totalorder %s207, %s208
    %p217 = scmp.eq.s32.totalorder %s24, 0
    %p218 = por %p216, %p217
    %p219 = scmp.ne.s32.totalorder %s207, %s208
    %p220 = scmp.eq.s32.totalorder %s25, 1
    %p221 = por %p219, %p220
    %p223 = scmp.ne.s32.totalorder %s208, %s222
    %p224 = scmp.eq.s32.totalorder %s25, 0
    %p225 = por %p223, %p224
    %s227 = sadd.s32 %s226, 1
    %p230 = scmp.eq.s32.totalorder %s19, 1
    %p231 = scmp.ne.s32.totalorder %s226, %s228
    %p232 = scmp.eq.s32.totalorder %s19, 0
    %p233 = por %p231, %p232
    %p234 = scmp.ne.s32.totalorder %s226, %s228
    %p235 = scmp.eq.s32.totalorder %s24, 1
    %p236 = por %p234, %p235
    %p237 = scmp.ne.s32.totalorder %s228, %s229
    %p238 = scmp.eq.s32.totalorder %s24, 0
    %p239 = por %p237, %p238
    %p240 = scmp.ne.s32.totalorder %s228, %s229
    %p241 = scmp.eq.s32.totalorder %s25, 1
    %p242 = por %p240, %p241
    %p244 = scmp.ne.s32.totalorder %s229, %s243
    %p245 = scmp.eq.s32.totalorder %s25, 0
    %p246 = por %p244, %p245
    %s248 = sadd.s32 %s247, 1
    %p251 = scmp.eq.s32.totalorder %s19, 1
    %p252 = scmp.ne.s32.totalorder %s247, %s249
    %p253 = scmp.eq.s32.totalorder %s19, 0
    %p254 = por %p252, %p253
    %p255 = scmp.ne.s32.totalorder %s247, %s249
    %p256 = scmp.eq.s32.totalorder %s24, 1
    %p257 = por %p255, %p256
    %p258 = scmp.ne.s32.totalorder %s249, %s250
    %p259 = scmp.eq.s32.totalorder %s24, 0
    %p260 = por %p258, %p259
    %p261 = scmp.ne.s32.totalorder %s249, %s250
    %p262 = scmp.eq.s32.totalorder %s25, 1
    %p263 = por %p261, %p262
    %p265 = scmp.ne.s32.totalorder %s250, %s264
    %p266 = scmp.eq.s32.totalorder %s25, 0
    %p267 = por %p265, %p266
    %s269 = sadd.s32 %s268, 1
    %p272 = scmp.eq.s32.totalorder %s19, 1
    %p273 = scmp.ne.s32.totalorder %s268, %s270
    %p274 = scmp.eq.s32.totalorder %s19, 0
    %p275 = por %p273, %p274
    %p276 = scmp.ne.s32.totalorder %s268, %s270
    %p277 = scmp.eq.s32.totalorder %s24, 1
    %p278 = por %p276, %p277
    %p279 = scmp.ne.s32.totalorder %s270, %s271
    %p280 = scmp.eq.s32.totalorder %s24, 0
    %p281 = por %p279, %p280
    %p282 = scmp.ne.s32.totalorder %s270, %s271
    %p283 = scmp.eq.s32.totalorder %s25, 1
    %p284 = por %p282, %p283
    %p286 = scmp.ne.s32.totalorder %s271, %s285
    %p287 = scmp.eq.s32.totalorder %s25, 0
    %p288 = por %p286, %p287
    %s290 = sadd.s32 %s289, 1
    %p293 = scmp.eq.s32.totalorder %s19, 1
    %p294 = scmp.ne.s32.totalorder %s289, %s291
    %p295 = scmp.eq.s32.totalorder %s19, 0
    %p296 = por %p294, %p295
    %p297 = scmp.ne.s32.totalorder %s289, %s291
    %p298 = scmp.eq.s32.totalorder %s24, 1
    %p299 = por %p297, %p298
    %p300 = scmp.ne.s32.totalorder %s291, %s292
    %p301 = scmp.eq.s32.totalorder %s24, 0
    %p302 = por %p300, %p301
    %p303 = scmp.ne.s32.totalorder %s291, %s292
    %p304 = scmp.eq.s32.totalorder %s25, 1
    %p305 = por %p303, %p304
    %p307 = scmp.ne.s32.totalorder %s292, %s306
    %p308 = scmp.eq.s32.totalorder %s25, 0
    %p309 = por %p307, %p308
    %s310 = ssub.s32 %s19, %s26
    %p311 = scmp.eq.s32.totalorder %s310, 0
    %s313 = sadd.s32 %s312, 1
    %s314 = scalar_select %p311, %s312, %s313
    %p317 = pneg %p311
    %p318 = scmp.eq.s32.totalorder %s19, 1
    %p319 = por %p317, %p318
    %p320 = scmp.ne.s32.totalorder %s312, %s315
    %p321 = scmp.eq.s32.totalorder %s19, 0
    %p322 = por %p320, %p321
    %p323 = scmp.ne.s32.totalorder %s312, %s315
    %p324 = scmp.eq.s32.totalorder %s24, 1
    %p325 = por %p323, %p324
    %p326 = scmp.ne.s32.totalorder %s315, %s316
    %p327 = scmp.eq.s32.totalorder %s24, 0
    %p328 = por %p326, %p327
    %p329 = scmp.ne.s32.totalorder %s315, %s316
    %p330 = scmp.eq.s32.totalorder %s25, 1
    %p331 = por %p329, %p330
    %p333 = scmp.ne.s32.totalorder %s316, %s332
    %p334 = scmp.eq.s32.totalorder %s25, 0
    %p335 = por %p333, %p334
    %p336 = scmp.le.s32.totalorder 1, %s19
    %p337 = scmp.lt.s32.totalorder %s19, 3
    %p338 = pnand %p336, %p337
    %p339 = pneg %p338
    // Predicated region
    $region9: #{bumblebee_forward.2} parent=5 // pred_check
      _
    $region10: #{bumblebee_forward.2} parent=5 // pred_check_branch
      %341 = sbr.rel (%p338) target = $region12
    $region11: #{bumblebee_forward.2} parent=5 // pred_region
      %s342 = ssub.s32 %s19, 1
      // Predicated region
      $region13: #{bumblebee_forward.2} parent=11 // pred_check
        %p343 = pneg %p92
      $region14: #{bumblebee_forward.2} parent=11 // pred_check_branch
        %345 = sbr.rel (%p343) target = $region16
      $region15: #{bumblebee_forward.2} parent=11 // pred_region
        _
      $region16: #{bumblebee_forward.2} parent=11 // pred_fallthru
        _
      // Predicated region
      $region17: #{bumblebee_forward.2} parent=11 // pred_check
        %p346 = pneg %p113
      $region18: #{bumblebee_forward.2} parent=11 // pred_check_branch
        %348 = sbr.rel (%p346) target = $region20
      $region19: #{bumblebee_forward.2} parent=11 // pred_region
        _
      $region20: #{bumblebee_forward.2} parent=11 // pred_fallthru
        _
      // Predicated region
      $region21: #{bumblebee_forward.2} parent=11 // pred_check
        %p349 = pneg %p134
      $region22: #{bumblebee_forward.2} parent=11 // pred_check_branch
        %351 = sbr.rel (%p349) target = $region24
      $region23: #{bumblebee_forward.2} parent=11 // pred_region
        _
      $region24: #{bumblebee_forward.2} parent=11 // pred_fallthru
        _
      // Predicated region
      $region25: #{bumblebee_forward.2} parent=11 // pred_check
        %p352 = pneg %p155
      $region26: #{bumblebee_forward.2} parent=11 // pred_check_branch
        %354 = sbr.rel (%p352) target = $region28
      $region27: #{bumblebee_forward.2} parent=11 // pred_region
        _
      $region28: #{bumblebee_forward.2} parent=11 // pred_fallthru
        _
      // Predicated region
      $region29: #{bumblebee_forward.2} parent=11 // pred_check
        %p355 = pneg %p176
      $region30: #{bumblebee_forward.2} parent=11 // pred_check_branch
        %357 = sbr.rel (%p355) target = $region32
      $region31: #{bumblebee_forward.2} parent=11 // pred_region
        _
      $region32: #{bumblebee_forward.2} parent=11 // pred_fallthru
        _
      // Predicated region
      $region33: #{bumblebee_forward.2} parent=11 // pred_check
        %p358 = pneg %p197
      $region34: #{bumblebee_forward.2} parent=11 // pred_check_branch
        %360 = sbr.rel (%p358) target = $region36
      $region35: #{bumblebee_forward.2} parent=11 // pred_region
        _
      $region36: #{bumblebee_forward.2} parent=11 // pred_fallthru
        _
      // Predicated region
      $region37: #{bumblebee_forward.2} parent=11 // pred_check
        %p361 = pneg %p218
      $region38: #{bumblebee_forward.2} parent=11 // pred_check_branch
        %363 = sbr.rel (%p361) target = $region40
      $region39: #{bumblebee_forward.2} parent=11 // pred_region
        _
      $region40: #{bumblebee_forward.2} parent=11 // pred_fallthru
        _
      // Predicated region
      $region41: #{bumblebee_forward.2} parent=11 // pred_check
        %p364 = pneg %p239
      $region42: #{bumblebee_forward.2} parent=11 // pred_check_branch
        %366 = sbr.rel (%p364) target = $region44
      $region43: #{bumblebee_forward.2} parent=11 // pred_region
        _
      $region44: #{bumblebee_forward.2} parent=11 // pred_fallthru
        _
      // Predicated region
      $region45: #{bumblebee_forward.2} parent=11 // pred_check
        %p367 = pneg %p260
      $region46: #{bumblebee_forward.2} parent=11 // pred_check_branch
        %369 = sbr.rel (%p367) target = $region48
      $region47: #{bumblebee_forward.2} parent=11 // pred_region
        _
      $region48: #{bumblebee_forward.2} parent=11 // pred_fallthru
        _
      // Predicated region
      $region49: #{bumblebee_forward.2} parent=11 // pred_check
        %p370 = pneg %p281
      $region50: #{bumblebee_forward.2} parent=11 // pred_check_branch
        %372 = sbr.rel (%p370) target = $region52
      $region51: #{bumblebee_forward.2} parent=11 // pred_region
        _
      $region52: #{bumblebee_forward.2} parent=11 // pred_fallthru
        _
      // Predicated region
      $region53: #{bumblebee_forward.2} parent=11 // pred_check
        %p373 = pneg %p302
      $region54: #{bumblebee_forward.2} parent=11 // pred_check_branch
        %375 = sbr.rel (%p373) target = $region56
      $region55: #{bumblebee_forward.2} parent=11 // pred_region
        _
      $region56: #{bumblebee_forward.2} parent=11 // pred_fallthru
        _
    $region12: #{bumblebee_forward.2} parent=5 // pred_fallthru
      _
    %p376 = scmp.lt.s32.totalorder %s19, 2
    // Predicated region
    $region57: #{bumblebee_forward.2} parent=5 // pred_check
      %p377 = pneg %p376
    $region58: #{bumblebee_forward.2} parent=5 // pred_check_branch
      %379 = sbr.rel (%p377) target = $region60
    $region59: #{bumblebee_forward.2} parent=5 // pred_region
      // Predicated region
      $region61: #{bumblebee_forward.2} parent=59 // pred_check
        %p380 = pneg %p39
      $region62: #{bumblebee_forward.2} parent=59 // pred_check_branch
        %382 = sbr.rel (%p380) target = $region64
      $region63: #{bumblebee_forward.2} parent=59 // pred_region
        %p383 = scmp.lt.s32.totalorder %s19, 1
        %s384 = scalar_select %p383, %s19, 1
        %s385 = smul.addr %s384, 8
        %s386 = scalar_lea.vmem %s0, %s385
      $region64: #{bumblebee_forward.2} parent=59 // pred_fallthru
        _
      // Predicated region
      $region65: #{bumblebee_forward.2} parent=59 // pred_check
        %p387 = pneg %p65
      $region66: #{bumblebee_forward.2} parent=59 // pred_check_branch
        %389 = sbr.rel (%p387) target = $region68
      $region67: #{bumblebee_forward.2} parent=59 // pred_region
        %p390 = scmp.lt.s32.totalorder %s19, 1
        %s391 = scalar_select %p390, %s19, 1
        %s392 = scalar_lea.vmem %s1, %s391
      $region68: #{bumblebee_forward.2} parent=59 // pred_fallthru
        _
    $region60: #{bumblebee_forward.2} parent=5 // pred_fallthru
      _
    %p393 = scmp.le.s32.totalorder 1, %s19
    %p394 = scmp.lt.s32.totalorder %s19, 3
    %p395 = pnand %p393, %p394
    %p396 = pneg %p395
    // Predicated region
    $region69: #{bumblebee_forward.2} parent=5 // pred_check
      _
    $region70: #{bumblebee_forward.2} parent=5 // pred_check_branch
      %398 = sbr.rel (%p395) target = $region72
    $region71: #{bumblebee_forward.2} parent=5 // pred_region
      %s399 = ssub.s32 %s19, 1
      %p400 = scmp.lt.s32.totalorder %s24, 1
      %s401 = scalar_select %p400, %s24, 1
      %s402 = smul.addr %s401, 8
      %s403 = scalar_lea.vmem %s0, %s402
      %p404 = pneg %p45
      %p405 = pneg %p42
      %p406 = scmp.lt.s32.totalorder %s24, 1
      %s407 = scalar_select %p406, %s24, 1
      %s408 = scalar_lea.vmem %s1, %s407
      %p409 = pneg %p71
      %p410 = pneg %p68
      %p411 = pneg %p92
      %p412 = pneg %p89
      %p413 = pneg %p113
      %p414 = pneg %p110
      %p415 = pneg %p134
      %p416 = pneg %p131
      %p417 = pneg %p155
      %p418 = pneg %p152
      %p419 = pneg %p176
      %p420 = pneg %p173
      %p421 = pneg %p197
      %p422 = pneg %p194
      %p423 = pneg %p218
      %p424 = pneg %p215
      %p425 = pneg %p239
      %p426 = pneg %p236
      %p427 = pneg %p260
      %p428 = pneg %p257
      %p429 = pneg %p281
      %p430 = pneg %p278
      %p431 = pneg %p302
      %p432 = pneg %p299
      %p433 = pneg %p328
      %p434 = pneg %p325
      %p435 = scmp.lt.s32.totalorder %s24, 1
      %s436 = scalar_select %p435, %s24, 1
      %s437 = smul.addr %s436, 8
      %s438 = scalar_lea.vmem %s13, %s437
      %p439 = scmp.lt.s32.totalorder %s24, 1
      %s440 = scalar_select %p439, %s24, 1
      %s441 = smul.addr %s440, 8
      %s442 = scalar_lea.vmem %s0, %s441
      %p443 = scmp.lt.s32.totalorder %s24, 1
      %s444 = scalar_select %p443, %s24, 1
      %s445 = scalar_lea.vmem %s1, %s444
      %p446 = scmp.lt.s32.totalorder %s24, 1
      %s447 = scalar_select %p446, %s24, 1
      %s448 = smul.addr %s447, 8
      %s449 = scalar_lea.vmem %s13, %s448
      %v451 = vld [vmem:[%s442] sm:$0xff]
      %v452 = vld [vmem:[%s445] sm:$0x1]
      %v453 = vpack.c.bf16 %v451, %v451
      %v454 = vld [vmem:[%s2] sm:$0xf]
      %v455 = vld [vmem:[%s2 + $0x4] sm:$0xf]
      %v456 = vld [vmem:[%s2 + $0x8] sm:$0xf]
      %v457 = vld [vmem:[%s2 + $0xc] sm:$0xf]
      %v462 = vunpack.c.l.b16 %v454
      %v463 = vunpack.c.l.b16 %v455
      %v464 = vunpack.c.l.b16 %v456
      %v465 = vunpack.c.l.b16 %v457
      %v466 = vpack.c.b16 %v463, %v462
      %v467 = vpack.c.b16 %v465, %v464
      %vm470 = vcmask 261120
      %v472 = vsel %vm470, %v453, 0
      %474 = vmatpush.bf16.msra.mxu0 0
      %475 = vmatpush.bf16.msra.mxu0 0
      %476 = vmatpush.bf16.msra.mxu0 0
      %477 = vmatpush.bf16.msra.mxu0 0
      %478 = vmatpush.bf16.msra.mxu0 0
      %479 = vmatpush.bf16.msra.mxu0 0
      %480 = vmatpush.bf16.msra.mxu0 %v467
      %481 = vmatpush.bf16.msra.mxu0 %v466
      %482 = vmatmul.bf16.gmra.mxu0 %v472
      %v483 = vpop.f32.mrf.mxu0
      %v484 = vadd.f32 0.0, %v483
      %v485 = vpop.f32.mrf.mxu0
      %486 = vdwg.mxu0
      %v487 = vld [vmem:[%s3] sm:$0xf]
      %v488 = vld [vmem:[%s3 + $0x4] sm:$0xf]
      %v489 = vld [vmem:[%s3 + $0x8] sm:$0xf]
      %v490 = vld [vmem:[%s3 + $0xc] sm:$0xf]
      %v491 = vld [vmem:[%s4] sm:$0x1]
      %v492 = vpack.c.bf16 %v484, %v484
      %v494 = vperm.slane %v452, 0
      %v497 = vunpack.c.l.b16 %v492
      %v498 = vpack.c.b16 %v497, %v497
      %499 = vrot.lane.b32.xlu0 %v498, 96
      %v500 = vpop.permute.xlu0 %499
      %vm501 = vcmask 64512
      %v503 = vsel %vm501, %v492, 0
      %v506 = vsel %vm501, %v500, 0
      %508 = vmatpush.bf16.xpose.msra.mxu0 0
      %509 = vmatpush.bf16.xpose.msra.mxu0 0
      %510 = vmatpush.bf16.xpose.msra.mxu0 0
      %511 = vmatpush.bf16.xpose.msra.mxu0 0
      %512 = vmatpush.bf16.xpose.msra.mxu0 0
      %513 = vmatpush.bf16.xpose.msra.mxu0 0
      %514 = vmatpush.bf16.xpose.msra.mxu0 0
      %515 = vmatpush.bf16.xpose.msra.mxu0 %v506
      %516 = vmatmul.bf16.gmra.mxu0 %v503
      %v517 = vpop.f32.mrf.mxu0
      %v518 = vadd.f32 %v494, %v517
      %v519 = vpop.f32.mrf.mxu0
      %520 = vdwg.mxu0
      %v521 = vsel %vm501, %v518, -inf
      %522 = vmax.xlane.f32.xlu0 %v521
      %v523 = vpop.xlane.xlu0 %522
      %v524 = vsub.f32 %v518, %v523
      %v525 = vmul.f32 %v524, 1.442695
      %v526 = vpow.pop %v525
      %v527 = vsel %vm501, %v526, 0.0
      %528 = vadd.xlane.f32.xlu0 %v527
      %v529 = vpop.xlane.xlu0 %528
      %v530 = vrcp.pop %v529
      %v531 = vmul.f32 %v526, %v530
      %v532 = vpack.c.bf16 %v531, %v531
      %533 = vrot.lane.b32.xlu0 %v498, 64
      %v534 = vpop.permute.xlu0 %533
      %v536 = vsel %vm501, %v532, 0
      %vm538 = vcmask 1043456
      %v540 = vsel %vm538, %v534, 0
      %542 = vmatpush.bf16.msra.mxu0 0
      %543 = vmatpush.bf16.msra.mxu0 0
      %544 = vmatpush.bf16.msra.mxu0 0
      %545 = vmatpush.bf16.msra.mxu0 0
      %546 = vmatpush.bf16.msra.mxu0 0
      %547 = vmatpush.bf16.msra.mxu0 0
      %548 = vmatpush.bf16.msra.mxu0 0
      %549 = vmatpush.bf16.msra.mxu0 %v540
      %550 = vmatmul.bf16.gmra.mxu0 %v536
      %v551 = vpop.f32.mrf.mxu0
      %v552 = vadd.f32 0.0, %v551
      %v553 = vpop.f32.mrf.mxu0
      %554 = vdwg.mxu0
      %v555 = vpack.c.bf16 %v552, %v552
      %556 = vrot.lane.b32.xlu0 %v498, 120
      %v557 = vpop.permute.xlu0 %556
      %558 = vrot.lane.b32.xlu0 %v498, 88
      %v559 = vpop.permute.xlu0 %558
      %v561 = vsel %vm501, %v557, 0
      %v564 = vsel %vm501, %v559, 0
      %566 = vmatpush.bf16.xpose.msra.mxu0 0
      %567 = vmatpush.bf16.xpose.msra.mxu0 0
      %568 = vmatpush.bf16.xpose.msra.mxu0 0
      %569 = vmatpush.bf16.xpose.msra.mxu0 0
      %570 = vmatpush.bf16.xpose.msra.mxu0 0
      %571 = vmatpush.bf16.xpose.msra.mxu0 0
      %572 = vmatpush.bf16.xpose.msra.mxu0 0
      %573 = vmatpush.bf16.xpose.msra.mxu0 %v564
      %574 = vmatmul.bf16.gmra.mxu0 %v561
      %v575 = vpop.f32.mrf.mxu0
      %v576 = vadd.f32 %v494, %v575
      %v577 = vpop.f32.mrf.mxu0
      %578 = vdwg.mxu0
      %v579 = vsel %vm501, %v576, -inf
      %580 = vmax.xlane.f32.xlu0 %v579
      %v581 = vpop.xlane.xlu0 %580
      %v582 = vsub.f32 %v576, %v581
      %v583 = vmul.f32 %v582, 1.442695
      %v584 = vpow.pop %v583
      %v585 = vsel %vm501, %v584, 0.0
      %586 = vadd.xlane.f32.xlu0 %v585
      %v587 = vpop.xlane.xlu0 %586
      %v588 = vrcp.pop %v587
      %v589 = vmul.f32 %v584, %v588
      %v590 = vpack.c.bf16 %v589, %v589
      %591 = vrot.lane.b32.xlu0 %v498, 56
      %v592 = vpop.permute.xlu0 %591
      %v594 = vsel %vm501, %v590, 0
      %v597 = vsel %vm538, %v592, 0
      %599 = vmatpush.bf16.msra.mxu0 0
      %600 = vmatpush.bf16.msra.mxu0 0
      %601 = vmatpush.bf16.msra.mxu0 0
      %602 = vmatpush.bf16.msra.mxu0 0
      %603 = vmatpush.bf16.msra.mxu0 0
      %604 = vmatpush.bf16.msra.mxu0 0
      %605 = vmatpush.bf16.msra.mxu0 0
      %606 = vmatpush.bf16.msra.mxu0 %v597
      %607 = vmatmul.bf16.gmra.mxu0 %v594
      %v608 = vpop.f32.mrf.mxu0
      %v609 = vadd.f32 0.0, %v608
      %v610 = vpop.f32.mrf.mxu0
      %611 = vdwg.mxu0
      %v612 = vpack.c.bf16 %v609, %v609
      %v614 = vsel %vm501, %v612, 0
      %v617 = vsel %vm538, %v488, 0
      %619 = vmatpush.bf16.msra.mxu0 0
      %620 = vmatpush.bf16.msra.mxu0 0
      %621 = vmatpush.bf16.msra.mxu0 0
      %622 = vmatpush.bf16.msra.mxu0 0
      %623 = vmatpush.bf16.msra.mxu0 0
      %624 = vmatpush.bf16.msra.mxu0 0
      %625 = vmatpush.bf16.msra.mxu0 0
      %626 = vmatpush.bf16.msra.mxu0 %v617
      %627 = vmatmul.bf16.gmra.mxu0 %v614
      %v628 = vpop.f32.mrf.mxu0
      %v629 = vadd.f32 0.0, %v628
      %v630 = vpop.f32.mrf.mxu0
      %631 = vdwg.mxu0
      %v633 = vsel %vm501, %v555, 0
      %v636 = vsel %vm538, %v487, 0
      %638 = vmatpush.bf16.msra.mxu0 0
      %639 = vmatpush.bf16.msra.mxu0 0
      %640 = vmatpush.bf16.msra.mxu0 0
      %641 = vmatpush.bf16.msra.mxu0 0
      %642 = vmatpush.bf16.msra.mxu0 0
      %643 = vmatpush.bf16.msra.mxu0 0
      %644 = vmatpush.bf16.msra.mxu0 0
      %645 = vmatpush.bf16.msra.mxu0 %v636
      %646 = vmatmul.bf16.gmra.mxu0 %v633
      %v647 = vpop.f32.mrf.mxu0
      %v648 = vadd.f32 %v629, %v647
      %v649 = vpop.f32.mrf.mxu0
      %650 = vdwg.mxu0
      %651 = vrot.lane.b32.xlu0 %v498, 112
      %v652 = vpop.permute.xlu0 %651
      %653 = vrot.lane.b32.xlu0 %v498, 80
      %v654 = vpop.permute.xlu0 %653
      %v656 = vsel %vm501, %v652, 0
      %v659 = vsel %vm501, %v654, 0
      %661 = vmatpush.bf16.xpose.msra.mxu0 0
      %662 = vmatpush.bf16.xpose.msra.mxu0 0
      %663 = vmatpush.bf16.xpose.msra.mxu0 0
      %664 = vmatpush.bf16.xpose.msra.mxu0 0
      %665 = vmatpush.bf16.xpose.msra.mxu0 0
      %666 = vmatpush.bf16.xpose.msra.mxu0 0
      %667 = vmatpush.bf16.xpose.msra.mxu0 0
      %668 = vmatpush.bf16.xpose.msra.mxu0 %v659
      %669 = vmatmul.bf16.gmra.mxu0 %v656
      %v670 = vpop.f32.mrf.mxu0
      %v671 = vadd.f32 %v494, %v670
      %v672 = vpop.f32.mrf.mxu0
      %673 = vdwg.mxu0
      %v674 = vsel %vm501, %v671, -inf
      %675 = vmax.xlane.f32.xlu0 %v674
      %v676 = vpop.xlane.xlu0 %675
      %v677 = vsub.f32 %v671, %v676
      %v678 = vmul.f32 %v677, 1.442695
      %v679 = vpow.pop %v678
      %v680 = vsel %vm501, %v679, 0.0
      %681 = vadd.xlane.f32.xlu0 %v680
      %v682 = vpop.xlane.xlu0 %681
      %v683 = vrcp.pop %v682
      %v684 = vmul.f32 %v679, %v683
      %v685 = vpack.c.bf16 %v684, %v684
      %686 = vrot.lane.b32.xlu0 %v498, 48
      %v687 = vpop.permute.xlu0 %686
      %v689 = vsel %vm501, %v685, 0
      %v692 = vsel %vm538, %v687, 0
      %694 = vmatpush.bf16.msra.mxu0 0
      %695 = vmatpush.bf16.msra.mxu0 0
      %696 = vmatpush.bf16.msra.mxu0 0
      %697 = vmatpush.bf16.msra.mxu0 0
      %698 = vmatpush.bf16.msra.mxu0 0
      %699 = vmatpush.bf16.msra.mxu0 0
      %700 = vmatpush.bf16.msra.mxu0 0
      %701 = vmatpush.bf16.msra.mxu0 %v692
      %702 = vmatmul.bf16.gmra.mxu0 %v689
      %v703 = vpop.f32.mrf.mxu0
      %v704 = vadd.f32 0.0, %v703
      %v705 = vpop.f32.mrf.mxu0
      %706 = vdwg.mxu0
      %v707 = vpack.c.bf16 %v704, %v704
      %v709 = vsel %vm501, %v707, 0
      %v712 = vsel %vm538, %v489, 0
      %714 = vmatpush.bf16.msra.mxu0 0
      %715 = vmatpush.bf16.msra.mxu0 0
      %716 = vmatpush.bf16.msra.mxu0 0
      %717 = vmatpush.bf16.msra.mxu0 0
      %718 = vmatpush.bf16.msra.mxu0 0
      %719 = vmatpush.bf16.msra.mxu0 0
      %720 = vmatpush.bf16.msra.mxu0 0
      %721 = vmatpush.bf16.msra.mxu0 %v712
      %722 = vmatmul.bf16.gmra.mxu0 %v709
      %v723 = vpop.f32.mrf.mxu0
      %v724 = vadd.f32 0.0, %v723
      %v725 = vpop.f32.mrf.mxu0
      %726 = vdwg.mxu0
      %v727 = vadd.f32 %v648, %v724
      %728 = vrot.lane.b32.xlu0 %v498, 104
      %v729 = vpop.permute.xlu0 %728
      %730 = vrot.lane.b32.xlu0 %v498, 72
      %v731 = vpop.permute.xlu0 %730
      %v733 = vsel %vm501, %v729, 0
      %v736 = vsel %vm501, %v731, 0
      %738 = vmatpush.bf16.xpose.msra.mxu0 0
      %739 = vmatpush.bf16.xpose.msra.mxu0 0
      %740 = vmatpush.bf16.xpose.msra.mxu0 0
      %741 = vmatpush.bf16.xpose.msra.mxu0 0
      %742 = vmatpush.bf16.xpose.msra.mxu0 0
      %743 = vmatpush.bf16.xpose.msra.mxu0 0
      %744 = vmatpush.bf16.xpose.msra.mxu0 0
      %745 = vmatpush.bf16.xpose.msra.mxu0 %v736
      %746 = vmatmul.bf16.gmra.mxu0 %v733
      %v747 = vpop.f32.mrf.mxu0
      %v748 = vadd.f32 %v494, %v747
      %v749 = vpop.f32.mrf.mxu0
      %750 = vdwg.mxu0
      %v751 = vsel %vm501, %v748, -inf
      %752 = vmax.xlane.f32.xlu0 %v751
      %v753 = vpop.xlane.xlu0 %752
      %v754 = vsub.f32 %v748, %v753
      %v755 = vmul.f32 %v754, 1.442695
      %v756 = vpow.pop %v755
      %v757 = vsel %vm501, %v756, 0.0
      %758 = vadd.xlane.f32.xlu0 %v757
      %v759 = vpop.xlane.xlu0 %758
      %v760 = vrcp.pop %v759
      %v761 = vmul.f32 %v756, %v760
      %v762 = vpack.c.bf16 %v761, %v761
      %763 = vrot.lane.b32.xlu0 %v498, 40
      %v764 = vpop.permute.xlu0 %763
      %v766 = vsel %vm501, %v762, 0
      %v769 = vsel %vm538, %v764, 0
      %771 = vmatpush.bf16.msra.mxu0 0
      %772 = vmatpush.bf16.msra.mxu0 0
      %773 = vmatpush.bf16.msra.mxu0 0
      %774 = vmatpush.bf16.msra.mxu0 0
      %775 = vmatpush.bf16.msra.mxu0 0
      %776 = vmatpush.bf16.msra.mxu0 0
      %777 = vmatpush.bf16.msra.mxu0 0
      %778 = vmatpush.bf16.msra.mxu0 %v769
      %779 = vmatmul.bf16.gmra.mxu0 %v766
      %v780 = vpop.f32.mrf.mxu0
      %v781 = vadd.f32 0.0, %v780
      %v782 = vpop.f32.mrf.mxu0
      %783 = vdwg.mxu0
      %v784 = vpack.c.bf16 %v781, %v781
      %v786 = vsel %vm501, %v784, 0
      %v789 = vsel %vm538, %v490, 0
      %791 = vmatpush.bf16.msra.mxu0 0
      %792 = vmatpush.bf16.msra.mxu0 0
      %793 = vmatpush.bf16.msra.mxu0 0
      %794 = vmatpush.bf16.msra.mxu0 0
      %795 = vmatpush.bf16.msra.mxu0 0
      %796 = vmatpush.bf16.msra.mxu0 0
      %797 = vmatpush.bf16.msra.mxu0 0
      %798 = vmatpush.bf16.msra.mxu0 %v789
      %799 = vmatmul.bf16.gmra.mxu0 %v786
      %v800 = vpop.f32.mrf.mxu0
      %v801 = vadd.f32 0.0, %v800
      %v802 = vpop.f32.mrf.mxu0
      %803 = vdwg.mxu0
      %v804 = vadd.f32 %v727, %v801
      %v806 = vperm.slane %v491, 0
      %v808 = vadd.f32 %v804, %v806
      %v809 = vadd.f32 %v808, %v451
      %v810 = vld [vmem:[%s5] sm:$0x1]
      %v811 = vld [vmem:[%s6] sm:$0x1]
      %v812 = vsel %vm470, %v809, 0.0
      %813 = vadd.xlane.f32.xlu0 %v812
      %v814 = vpop.xlane.xlu0 %813
      %v815 = vrcp.pop 32.0
      %v816 = vmul.f32 32.0, %v815
      %v817 = vsub.f32 1.0, %v816
      %v818 = vmul.f32 %v815, %v817
      %v819 = vadd.f32 %v815, %v818
      %vm820 = vweird.f32 %v815
      %v821 = vsel %vm820, %v815, %v819
      %v822 = vmul.f32 %v814, %v821
      %v823 = vsub.f32 %v809, %v822
      %v824 = vmul.f32 %v823, %v823
      %v825 = vsel %vm470, %v824, 0.0
      %826 = vadd.xlane.f32.xlu0 %v825
      %v827 = vpop.xlane.xlu0 %826
      %v828 = vmul.f32 %v827, %v821
      %v829 = vadd.f32 %v828, 1e-05
      %v830 = vrsqrt.pop %v829
      %v831 = vmul.f32 %v830, %v829
      %v832 = vmul.f32 %v831, %v830
      %v833 = vmul.f32 0.5, %v832
      %v834 = vsub.f32 1.5, %v833
      %v835 = vmul.f32 %v830, %v834
      %vm836 = vweird.f32 %v829
      %vm837 = vweird.f32 %v830
      %vm838 = vmor %vm836, %vm837
      %v839 = vsel %vm838, %v830, %v835
      %v840 = vmul.f32 %v823, %v839
      %v842 = vperm.slane %v810, 0
      %v844 = vmul.f32 %v840, %v842
      %v846 = vperm.slane %v811, 0
      %v848 = vadd.f32 %v844, %v846
      %v849 = vpack.c.bf16 %v848, %v848
      %v850 = vld [vmem:[%s7] sm:$0xf]
      %v851 = vld [vmem:[%s7 + $0x4] sm:$0xf]
      %v852 = vld [vmem:[%s7 + $0x8] sm:$0xf]
      %v853 = vld [vmem:[%s7 + $0xc] sm:$0xf]
      %v854 = vld [vmem:[%s8] sm:$0x1]
      %v856 = vperm.slane %v854, 0
      %v862 = vunpack.c.l.b16 %v850
      %v863 = vunpack.c.l.b16 %v851
      %v864 = vunpack.c.l.b16 %v852
      %v865 = vunpack.c.l.b16 %v853
      %v866 = vpack.c.b16 %v863, %v862
      %v867 = vpack.c.b16 %v865, %v864
      %v871 = vsel %vm470, %v849, 0
      %873 = vmatpush.bf16.msra.mxu0 0
      %874 = vmatpush.bf16.msra.mxu0 0
      %875 = vmatpush.bf16.msra.mxu0 0
      %876 = vmatpush.bf16.msra.mxu0 0
      %877 = vmatpush.bf16.msra.mxu0 0
      %878 = vmatpush.bf16.msra.mxu0 0
      %879 = vmatpush.bf16.msra.mxu0 %v867
      %880 = vmatpush.bf16.msra.mxu0 %v866
      %881 = vmatmul.bf16.gmra.mxu0 %v871
      %v882 = vpop.f32.mrf.mxu0
      %v883 = vadd.f32 %v856, %v882
      %v884 = vpop.f32.mrf.mxu0
      %885 = vdwg.mxu0
      %v886 = vmax.f32 %v883, 0.0
      %v887 = vpack.c.bf16 %v886, %v886
      %v888 = vld [vmem:[%s9] sm:$0xf]
      %v889 = vld [vmem:[%s9 + $0x4] sm:$0xf]
      %v890 = vld [vmem:[%s9 + $0x8] sm:$0xf]
      %v891 = vld [vmem:[%s9 + $0xc] sm:$0xf]
      %v892 = vld [vmem:[%s9 + $0x10] sm:$0xf]
      %v893 = vld [vmem:[%s9 + $0x14] sm:$0xf]
      %v894 = vld [vmem:[%s9 + $0x18] sm:$0xf]
      %v895 = vld [vmem:[%s9 + $0x1c] sm:$0xf]
      %v896 = vld [vmem:[%s10] sm:$0x1]
      %v898 = vperm.slane %v896, 0
      %v908 = vunpack.c.l.b16 %v888
      %v909 = vunpack.c.l.b16 %v889
      %v910 = vunpack.c.l.b16 %v890
      %v911 = vunpack.c.l.b16 %v891
      %v912 = vunpack.c.l.b16 %v892
      %v913 = vunpack.c.l.b16 %v893
      %v914 = vunpack.c.l.b16 %v894
      %v915 = vunpack.c.l.b16 %v895
      %v916 = vpack.c.b16 %v909, %v908
      %v917 = vpack.c.b16 %v911, %v910
      %v918 = vpack.c.b16 %v913, %v912
      %v919 = vpack.c.b16 %v915, %v914
      %vm924 = vcmask 523264
      %v926 = vsel %vm924, %v887, 0
      %928 = vmatpush.bf16.msra.mxu0 0
      %929 = vmatpush.bf16.msra.mxu0 0
      %930 = vmatpush.bf16.msra.mxu0 0
      %931 = vmatpush.bf16.msra.mxu0 0
      %932 = vmatpush.bf16.msra.mxu0 %v919
      %933 = vmatpush.bf16.msra.mxu0 %v918
      %934 = vmatpush.bf16.msra.mxu0 %v917
      %935 = vmatpush.bf16.msra.mxu0 %v916
      %936 = vmatmul.bf16.gmra.mxu0 %v926
      %v937 = vpop.f32.mrf.mxu0
      %v938 = vadd.f32 %v898, %v937
      %v939 = vpop.f32.mrf.mxu0
      %940 = vdwg.mxu0
      %v941 = vadd.f32 %v938, %v848
      %v942 = vld [vmem:[%s11] sm:$0x1]
      %v943 = vld [vmem:[%s12] sm:$0x1]
      %v944 = vsel %vm470, %v941, 0.0
      %945 = vadd.xlane.f32.xlu0 %v944
      %v946 = vpop.xlane.xlu0 %945
      %v947 = vmul.f32 %v946, %v821
      %v948 = vsub.f32 %v941, %v947
      %v949 = vmul.f32 %v948, %v948
      %v950 = vsel %vm470, %v949, 0.0
      %951 = vadd.xlane.f32.xlu0 %v950
      %v952 = vpop.xlane.xlu0 %951
      %v953 = vmul.f32 %v952, %v821
      %v954 = vadd.f32 %v953, 1e-05
      %v955 = vrsqrt.pop %v954
      %v956 = vmul.f32 %v955, %v954
      %v957 = vmul.f32 %v956, %v955
      %v958 = vmul.f32 0.5, %v957
      %v959 = vsub.f32 1.5, %v958
      %v960 = vmul.f32 %v955, %v959
      %vm961 = vweird.f32 %v954
      %vm962 = vweird.f32 %v955
      %vm963 = vmor %vm961, %vm962
      %v964 = vsel %vm963, %v955, %v960
      %v965 = vmul.f32 %v948, %v964
      %v967 = vperm.slane %v942, 0
      %v969 = vmul.f32 %v965, %v967
      %v971 = vperm.slane %v943, 0
      %v973 = vadd.f32 %v969, %v971
      %v974 = vpack.c.bf16 %v973, %v973
      %s975 = scalar_lea.vmem %s2, 16
      %v976 = vld [vmem:[%s975] sm:$0xf]
      %v977 = vld [vmem:[%s975 + $0x4] sm:$0xf]
      %v978 = vld [vmem:[%s975 + $0x8] sm:$0xf]
      %v979 = vld [vmem:[%s975 + $0xc] sm:$0xf]
      %v984 = vunpack.c.l.b16 %v976
      %v985 = vunpack.c.l.b16 %v977
      %v986 = vunpack.c.l.b16 %v978
      %v987 = vunpack.c.l.b16 %v979
      %v988 = vpack.c.b16 %v985, %v984
      %v989 = vpack.c.b16 %v987, %v986
      %v993 = vsel %vm470, %v974, 0
      %995 = vmatpush.bf16.msra.mxu0 0
      %996 = vmatpush.bf16.msra.mxu0 0
      %997 = vmatpush.bf16.msra.mxu0 0
      %998 = vmatpush.bf16.msra.mxu0 0
      %999 = vmatpush.bf16.msra.mxu0 0
      %1000 = vmatpush.bf16.msra.mxu0 0
      %1001 = vmatpush.bf16.msra.mxu0 %v989
      %1002 = vmatpush.bf16.msra.mxu0 %v988
      %1003 = vmatmul.bf16.gmra.mxu0 %v993
      %v1004 = vpop.f32.mrf.mxu0
      %v1005 = vadd.f32 0.0, %v1004
      %v1006 = vpop.f32.mrf.mxu0
      %1007 = vdwg.mxu0
      %s1008 = scalar_lea.vmem %s3, 16
      %v1009 = vld [vmem:[%s1008] sm:$0xf]
      %v1010 = vld [vmem:[%s1008 + $0x4] sm:$0xf]
      %v1011 = vld [vmem:[%s1008 + $0x8] sm:$0xf]
      %v1012 = vld [vmem:[%s1008 + $0xc] sm:$0xf]
      %s1013 = scalar_lea.vmem %s4, 1
      %v1014 = vld [vmem:[%s1013] sm:$0x1]
      %v1015 = vpack.c.bf16 %v1005, %v1005
      %v1017 = vunpack.c.l.b16 %v1015
      %v1018 = vpack.c.b16 %v1017, %v1017
      %1019 = vrot.lane.b32.xlu0 %v1018, 96
      %v1020 = vpop.permute.xlu0 %1019
      %v1022 = vsel %vm501, %v1015, 0
      %v1025 = vsel %vm501, %v1020, 0
      %1027 = vmatpush.bf16.xpose.msra.mxu0 0
      %1028 = vmatpush.bf16.xpose.msra.mxu0 0
      %1029 = vmatpush.bf16.xpose.msra.mxu0 0
      %1030 = vmatpush.bf16.xpose.msra.mxu0 0
      %1031 = vmatpush.bf16.xpose.msra.mxu0 0
      %1032 = vmatpush.bf16.xpose.msra.mxu0 0
      %1033 = vmatpush.bf16.xpose.msra.mxu0 0
      %1034 = vmatpush.bf16.xpose.msra.mxu0 %v1025
      %1035 = vmatmul.bf16.gmra.mxu0 %v1022
      %v1036 = vpop.f32.mrf.mxu0
      %v1037 = vadd.f32 %v494, %v1036
      %v1038 = vpop.f32.mrf.mxu0
      %1039 = vdwg.mxu0
      %v1040 = vsel %vm501, %v1037, -inf
      %1041 = vmax.xlane.f32.xlu0 %v1040
      %v1042 = vpop.xlane.xlu0 %1041
      %v1043 = vsub.f32 %v1037, %v1042
      %v1044 = vmul.f32 %v1043, 1.442695
      %v1045 = vpow.pop %v1044
      %v1046 = vsel %vm501, %v1045, 0.0
      %1047 = vadd.xlane.f32.xlu0 %v1046
      %v1048 = vpop.xlane.xlu0 %1047
      %v1049 = vrcp.pop %v1048
      %v1050 = vmul.f32 %v1045, %v1049
      %v1051 = vpack.c.bf16 %v1050, %v1050
      %1052 = vrot.lane.b32.xlu0 %v1018, 64
      %v1053 = vpop.permute.xlu0 %1052
      %v1055 = vsel %vm501, %v1051, 0
      %v1058 = vsel %vm538, %v1053, 0
      %1060 = vmatpush.bf16.msra.mxu0 0
      %1061 = vmatpush.bf16.msra.mxu0 0
      %1062 = vmatpush.bf16.msra.mxu0 0
      %1063 = vmatpush.bf16.msra.mxu0 0
      %1064 = vmatpush.bf16.msra.mxu0 0
      %1065 = vmatpush.bf16.msra.mxu0 0
      %1066 = vmatpush.bf16.msra.mxu0 0
      %1067 = vmatpush.bf16.msra.mxu0 %v1058
      %1068 = vmatmul.bf16.gmra.mxu0 %v1055
      %v1069 = vpop.f32.mrf.mxu0
      %v1070 = vadd.f32 0.0, %v1069
      %v1071 = vpop.f32.mrf.mxu0
      %1072 = vdwg.mxu0
      %v1073 = vpack.c.bf16 %v1070, %v1070
      %1074 = vrot.lane.b32.xlu0 %v1018, 120
      %v1075 = vpop.permute.xlu0 %1074
      %1076 = vrot.lane.b32.xlu0 %v1018, 88
      %v1077 = vpop.permute.xlu0 %1076
      %v1079 = vsel %vm501, %v1075, 0
      %v1082 = vsel %vm501, %v1077, 0
      %1084 = vmatpush.bf16.xpose.msra.mxu0 0
      %1085 = vmatpush.bf16.xpose.msra.mxu0 0
      %1086 = vmatpush.bf16.xpose.msra.mxu0 0
      %1087 = vmatpush.bf16.xpose.msra.mxu0 0
      %1088 = vmatpush.bf16.xpose.msra.mxu0 0
      %1089 = vmatpush.bf16.xpose.msra.mxu0 0
      %1090 = vmatpush.bf16.xpose.msra.mxu0 0
      %1091 = vmatpush.bf16.xpose.msra.mxu0 %v1082
      %1092 = vmatmul.bf16.gmra.mxu0 %v1079
      %v1093 = vpop.f32.mrf.mxu0
      %v1094 = vadd.f32 %v494, %v1093
      %v1095 = vpop.f32.mrf.mxu0
      %1096 = vdwg.mxu0
      %v1097 = vsel %vm501, %v1094, -inf
      %1098 = vmax.xlane.f32.xlu0 %v1097
      %v1099 = vpop.xlane.xlu0 %1098
      %v1100 = vsub.f32 %v1094, %v1099
      %v1101 = vmul.f32 %v1100, 1.442695
      %v1102 = vpow.pop %v1101
      %v1103 = vsel %vm501, %v1102, 0.0
      %1104 = vadd.xlane.f32.xlu0 %v1103
      %v1105 = vpop.xlane.xlu0 %1104
      %v1106 = vrcp.pop %v1105
      %v1107 = vmul.f32 %v1102, %v1106
      %v1108 = vpack.c.bf16 %v1107, %v1107
      %1109 = vrot.lane.b32.xlu0 %v1018, 56
      %v1110 = vpop.permute.xlu0 %1109
      %v1112 = vsel %vm501, %v1108, 0
      %v1115 = vsel %vm538, %v1110, 0
      %1117 = vmatpush.bf16.msra.mxu0 0
      %1118 = vmatpush.bf16.msra.mxu0 0
      %1119 = vmatpush.bf16.msra.mxu0 0
      %1120 = vmatpush.bf16.msra.mxu0 0
      %1121 = vmatpush.bf16.msra.mxu0 0
      %1122 = vmatpush.bf16.msra.mxu0 0
      %1123 = vmatpush.bf16.msra.mxu0 0
      %1124 = vmatpush.bf16.msra.mxu0 %v1115
      %1125 = vmatmul.bf16.gmra.mxu0 %v1112
      %v1126 = vpop.f32.mrf.mxu0
      %v1127 = vadd.f32 0.0, %v1126
      %v1128 = vpop.f32.mrf.mxu0
      %1129 = vdwg.mxu0
      %v1130 = vpack.c.bf16 %v1127, %v1127
      %v1132 = vsel %vm501, %v1130, 0
      %v1135 = vsel %vm538, %v1010, 0
      %1137 = vmatpush.bf16.msra.mxu0 0
      %1138 = vmatpush.bf16.msra.mxu0 0
      %1139 = vmatpush.bf16.msra.mxu0 0
      %1140 = vmatpush.bf16.msra.mxu0 0
      %1141 = vmatpush.bf16.msra.mxu0 0
      %1142 = vmatpush.bf16.msra.mxu0 0
      %1143 = vmatpush.bf16.msra.mxu0 0
      %1144 = vmatpush.bf16.msra.mxu0 %v1135
      %1145 = vmatmul.bf16.gmra.mxu0 %v1132
      %v1146 = vpop.f32.mrf.mxu0
      %v1147 = vadd.f32 0.0, %v1146
      %v1148 = vpop.f32.mrf.mxu0
      %1149 = vdwg.mxu0
      %v1151 = vsel %vm501, %v1073, 0
      %v1154 = vsel %vm538, %v1009, 0
      %1156 = vmatpush.bf16.msra.mxu0 0
      %1157 = vmatpush.bf16.msra.mxu0 0
      %1158 = vmatpush.bf16.msra.mxu0 0
      %1159 = vmatpush.bf16.msra.mxu0 0
      %1160 = vmatpush.bf16.msra.mxu0 0
      %1161 = vmatpush.bf16.msra.mxu0 0
      %1162 = vmatpush.bf16.msra.mxu0 0
      %1163 = vmatpush.bf16.msra.mxu0 %v1154
      %1164 = vmatmul.bf16.gmra.mxu0 %v1151
      %v1165 = vpop.f32.mrf.mxu0
      %v1166 = vadd.f32 %v1147, %v1165
      %v1167 = vpop.f32.mrf.mxu0
      %1168 = vdwg.mxu0
      %1169 = vrot.lane.b32.xlu0 %v1018, 112
      %v1170 = vpop.permute.xlu0 %1169
      %1171 = vrot.lane.b32.xlu0 %v1018, 80
      %v1172 = vpop.permute.xlu0 %1171
      %v1174 = vsel %vm501, %v1170, 0
      %v1177 = vsel %vm501, %v1172, 0
      %1179 = vmatpush.bf16.xpose.msra.mxu0 0
      %1180 = vmatpush.bf16.xpose.msra.mxu0 0
      %1181 = vmatpush.bf16.xpose.msra.mxu0 0
      %1182 = vmatpush.bf16.xpose.msra.mxu0 0
      %1183 = vmatpush.bf16.xpose.msra.mxu0 0
      %1184 = vmatpush.bf16.xpose.msra.mxu0 0
      %1185 = vmatpush.bf16.xpose.msra.mxu0 0
      %1186 = vmatpush.bf16.xpose.msra.mxu0 %v1177
      %1187 = vmatmul.bf16.gmra.mxu0 %v1174
      %v1188 = vpop.f32.mrf.mxu0
      %v1189 = vadd.f32 %v494, %v1188
      %v1190 = vpop.f32.mrf.mxu0
      %1191 = vdwg.mxu0
      %v1192 = vsel %vm501, %v1189, -inf
      %1193 = vmax.xlane.f32.xlu0 %v1192
      %v1194 = vpop.xlane.xlu0 %1193
      %v1195 = vsub.f32 %v1189, %v1194
      %v1196 = vmul.f32 %v1195, 1.442695
      %v1197 = vpow.pop %v1196
      %v1198 = vsel %vm501, %v1197, 0.0
      %1199 = vadd.xlane.f32.xlu0 %v1198
      %v1200 = vpop.xlane.xlu0 %1199
      %v1201 = vrcp.pop %v1200
      %v1202 = vmul.f32 %v1197, %v1201
      %v1203 = vpack.c.bf16 %v1202, %v1202
      %1204 = vrot.lane.b32.xlu0 %v1018, 48
      %v1205 = vpop.permute.xlu0 %1204
      %v1207 = vsel %vm501, %v1203, 0
      %v1210 = vsel %vm538, %v1205, 0
      %1212 = vmatpush.bf16.msra.mxu0 0
      %1213 = vmatpush.bf16.msra.mxu0 0
      %1214 = vmatpush.bf16.msra.mxu0 0
      %1215 = vmatpush.bf16.msra.mxu0 0
      %1216 = vmatpush.bf16.msra.mxu0 0
      %1217 = vmatpush.bf16.msra.mxu0 0
      %1218 = vmatpush.bf16.msra.mxu0 0
      %1219 = vmatpush.bf16.msra.mxu0 %v1210
      %1220 = vmatmul.bf16.gmra.mxu0 %v1207
      %v1221 = vpop.f32.mrf.mxu0
      %v1222 = vadd.f32 0.0, %v1221
      %v1223 = vpop.f32.mrf.mxu0
      %1224 = vdwg.mxu0
      %v1225 = vpack.c.bf16 %v1222, %v1222
      %v1227 = vsel %vm501, %v1225, 0
      %v1230 = vsel %vm538, %v1011, 0
      %1232 = vmatpush.bf16.msra.mxu0 0
      %1233 = vmatpush.bf16.msra.mxu0 0
      %1234 = vmatpush.bf16.msra.mxu0 0
      %1235 = vmatpush.bf16.msra.mxu0 0
      %1236 = vmatpush.bf16.msra.mxu0 0
      %1237 = vmatpush.bf16.msra.mxu0 0
      %1238 = vmatpush.bf16.msra.mxu0 0
      %1239 = vmatpush.bf16.msra.mxu0 %v1230
      %1240 = vmatmul.bf16.gmra.mxu0 %v1227
      %v1241 = vpop.f32.mrf.mxu0
      %v1242 = vadd.f32 0.0, %v1241
      %v1243 = vpop.f32.mrf.mxu0
      %1244 = vdwg.mxu0
      %v1245 = vadd.f32 %v1166, %v1242
      %1246 = vrot.lane.b32.xlu0 %v1018, 104
      %v1247 = vpop.permute.xlu0 %1246
      %1248 = vrot.lane.b32.xlu0 %v1018, 72
      %v1249 = vpop.permute.xlu0 %1248
      %v1251 = vsel %vm501, %v1247, 0
      %v1254 = vsel %vm501, %v1249, 0
      %1256 = vmatpush.bf16.xpose.msra.mxu0 0
      %1257 = vmatpush.bf16.xpose.msra.mxu0 0
      %1258 = vmatpush.bf16.xpose.msra.mxu0 0
      %1259 = vmatpush.bf16.xpose.msra.mxu0 0
      %1260 = vmatpush.bf16.xpose.msra.mxu0 0
      %1261 = vmatpush.bf16.xpose.msra.mxu0 0
      %1262 = vmatpush.bf16.xpose.msra.mxu0 0
      %1263 = vmatpush.bf16.xpose.msra.mxu0 %v1254
      %1264 = vmatmul.bf16.gmra.mxu0 %v1251
      %v1265 = vpop.f32.mrf.mxu0
      %v1266 = vadd.f32 %v494, %v1265
      %v1267 = vpop.f32.mrf.mxu0
      %1268 = vdwg.mxu0
      %v1269 = vsel %vm501, %v1266, -inf
      %1270 = vmax.xlane.f32.xlu0 %v1269
      %v1271 = vpop.xlane.xlu0 %1270
      %v1272 = vsub.f32 %v1266, %v1271
      %v1273 = vmul.f32 %v1272, 1.442695
      %v1274 = vpow.pop %v1273
      %v1275 = vsel %vm501, %v1274, 0.0
      %1276 = vadd.xlane.f32.xlu0 %v1275
      %v1277 = vpop.xlane.xlu0 %1276
      %v1278 = vrcp.pop %v1277
      %v1279 = vmul.f32 %v1274, %v1278
      %v1280 = vpack.c.bf16 %v1279, %v1279
      %1281 = vrot.lane.b32.xlu0 %v1018, 40
      %v1282 = vpop.permute.xlu0 %1281
      %v1284 = vsel %vm501, %v1280, 0
      %v1287 = vsel %vm538, %v1282, 0
      %1289 = vmatpush.bf16.msra.mxu0 0
      %1290 = vmatpush.bf16.msra.mxu0 0
      %1291 = vmatpush.bf16.msra.mxu0 0
      %1292 = vmatpush.bf16.msra.mxu0 0
      %1293 = vmatpush.bf16.msra.mxu0 0
      %1294 = vmatpush.bf16.msra.mxu0 0
      %1295 = vmatpush.bf16.msra.mxu0 0
      %1296 = vmatpush.bf16.msra.mxu0 %v1287
      %1297 = vmatmul.bf16.gmra.mxu0 %v1284
      %v1298 = vpop.f32.mrf.mxu0
      %v1299 = vadd.f32 0.0, %v1298
      %v1300 = vpop.f32.mrf.mxu0
      %1301 = vdwg.mxu0
      %v1302 = vpack.c.bf16 %v1299, %v1299
      %v1304 = vsel %vm501, %v1302, 0
      %v1307 = vsel %vm538, %v1012, 0
      %1309 = vmatpush.bf16.msra.mxu0 0
      %1310 = vmatpush.bf16.msra.mxu0 0
      %1311 = vmatpush.bf16.msra.mxu0 0
      %1312 = vmatpush.bf16.msra.mxu0 0
      %1313 = vmatpush.bf16.msra.mxu0 0
      %1314 = vmatpush.bf16.msra.mxu0 0
      %1315 = vmatpush.bf16.msra.mxu0 0
      %1316 = vmatpush.bf16.msra.mxu0 %v1307
      %1317 = vmatmul.bf16.gmra.mxu0 %v1304
      %v1318 = vpop.f32.mrf.mxu0
      %v1319 = vadd.f32 0.0, %v1318
      %v1320 = vpop.f32.mrf.mxu0
      %1321 = vdwg.mxu0
      %v1322 = vadd.f32 %v1245, %v1319
      %v1324 = vperm.slane %v1014, 0
      %v1326 = vadd.f32 %v1322, %v1324
      %v1327 = vadd.f32 %v1326, %v973
      %s1328 = scalar_lea.vmem %s5, 1
      %v1329 = vld [vmem:[%s1328] sm:$0x1]
      %s1330 = scalar_lea.vmem %s6, 1
      %v1331 = vld [vmem:[%s1330] sm:$0x1]
      %v1332 = vsel %vm470, %v1327, 0.0
      %1333 = vadd.xlane.f32.xlu0 %v1332
      %v1334 = vpop.xlane.xlu0 %1333
      %v1335 = vmul.f32 %v1334, %v821
      %v1336 = vsub.f32 %v1327, %v1335
      %v1337 = vmul.f32 %v1336, %v1336
      %v1338 = vsel %vm470, %v1337, 0.0
      %1339 = vadd.xlane.f32.xlu0 %v1338
      %v1340 = vpop.xlane.xlu0 %1339
      %v1341 = vmul.f32 %v1340, %v821
      %v1342 = vadd.f32 %v1341, 1e-05
      %v1343 = vrsqrt.pop %v1342
      %v1344 = vmul.f32 %v1343, %v1342
      %v1345 = vmul.f32 %v1344, %v1343
      %v1346 = vmul.f32 0.5, %v1345
      %v1347 = vsub.f32 1.5, %v1346
      %v1348 = vmul.f32 %v1343, %v1347
      %vm1349 = vweird.f32 %v1342
      %vm1350 = vweird.f32 %v1343
      %vm1351 = vmor %vm1349, %vm1350
      %v1352 = vsel %vm1351, %v1343, %v1348
      %v1353 = vmul.f32 %v1336, %v1352
      %v1355 = vperm.slane %v1329, 0
      %v1357 = vmul.f32 %v1353, %v1355
      %v1359 = vperm.slane %v1331, 0
      %v1361 = vadd.f32 %v1357, %v1359
      %v1362 = vpack.c.bf16 %v1361, %v1361
      %s1363 = scalar_lea.vmem %s7, 16
      %v1364 = vld [vmem:[%s1363] sm:$0xf]
      %v1365 = vld [vmem:[%s1363 + $0x4] sm:$0xf]
      %v1366 = vld [vmem:[%s1363 + $0x8] sm:$0xf]
      %v1367 = vld [vmem:[%s1363 + $0xc] sm:$0xf]
      %s1368 = scalar_lea.vmem %s8, 1
      %v1369 = vld [vmem:[%s1368] sm:$0x1]
      %v1371 = vperm.slane %v1369, 0
      %v1377 = vunpack.c.l.b16 %v1364
      %v1378 = vunpack.c.l.b16 %v1365
      %v1379 = vunpack.c.l.b16 %v1366
      %v1380 = vunpack.c.l.b16 %v1367
      %v1381 = vpack.c.b16 %v1378, %v1377
      %v1382 = vpack.c.b16 %v1380, %v1379
      %v1386 = vsel %vm470, %v1362, 0
      %1388 = vmatpush.bf16.msra.mxu0 0
      %1389 = vmatpush.bf16.msra.mxu0 0
      %1390 = vmatpush.bf16.msra.mxu0 0
      %1391 = vmatpush.bf16.msra.mxu0 0
      %1392 = vmatpush.bf16.msra.mxu0 0
      %1393 = vmatpush.bf16.msra.mxu0 0
      %1394 = vmatpush.bf16.msra.mxu0 %v1382
      %1395 = vmatpush.bf16.msra.mxu0 %v1381
      %1396 = vmatmul.bf16.gmra.mxu0 %v1386
      %v1397 = vpop.f32.mrf.mxu0
      %v1398 = vadd.f32 %v1371, %v1397
      %v1399 = vpop.f32.mrf.mxu0
      %1400 = vdwg.mxu0
      %v1401 = vmax.f32 %v1398, 0.0
      %v1402 = vpack.c.bf16 %v1401, %v1401
      %s1403 = scalar_lea.vmem %s9, 32
      %v1404 = vld [vmem:[%s1403] sm:$0xf]
      %v1405 = vld [vmem:[%s1403 + $0x4] sm:$0xf]
      %v1406 = vld [vmem:[%s1403 + $0x8] sm:$0xf]
      %v1407 = vld [vmem:[%s1403 + $0xc] sm:$0xf]
      %v1408 = vld [vmem:[%s1403 + $0x10] sm:$0xf]
      %v1409 = vld [vmem:[%s1403 + $0x14] sm:$0xf]
      %v1410 = vld [vmem:[%s1403 + $0x18] sm:$0xf]
      %v1411 = vld [vmem:[%s1403 + $0x1c] sm:$0xf]
      %s1412 = scalar_lea.vmem %s10, 1
      %v1413 = vld [vmem:[%s1412] sm:$0x1]
      %v1415 = vperm.slane %v1413, 0
      %v1425 = vunpack.c.l.b16 %v1404
      %v1426 = vunpack.c.l.b16 %v1405
      %v1427 = vunpack.c.l.b16 %v1406
      %v1428 = vunpack.c.l.b16 %v1407
      %v1429 = vunpack.c.l.b16 %v1408
      %v1430 = vunpack.c.l.b16 %v1409
      %v1431 = vunpack.c.l.b16 %v1410
      %v1432 = vunpack.c.l.b16 %v1411
      %v1433 = vpack.c.b16 %v1426, %v1425
      %v1434 = vpack.c.b16 %v1428, %v1427
      %v1435 = vpack.c.b16 %v1430, %v1429
      %v1436 = vpack.c.b16 %v1432, %v1431
      %v1442 = vsel %vm924, %v1402, 0
      %1444 = vmatpush.bf16.msra.mxu0 0
      %1445 = vmatpush.bf16.msra.mxu0 0
      %1446 = vmatpush.bf16.msra.mxu0 0
      %1447 = vmatpush.bf16.msra.mxu0 0
      %1448 = vmatpush.bf16.msra.mxu0 %v1436
      %1449 = vmatpush.bf16.msra.mxu0 %v1435
      %1450 = vmatpush.bf16.msra.mxu0 %v1434
      %1451 = vmatpush.bf16.msra.mxu0 %v1433
      %1452 = vmatmul.bf16.gmra.mxu0 %v1442
      %v1453 = vpop.f32.mrf.mxu0
      %v1454 = vadd.f32 %v1415, %v1453
      %v1455 = vpop.f32.mrf.mxu0
      %1456 = vdwg.mxu0
      %v1457 = vadd.f32 %v1454, %v1361
      %s1458 = scalar_lea.vmem %s11, 1
      %v1459 = vld [vmem:[%s1458] sm:$0x1]
      %s1460 = scalar_lea.vmem %s12, 1
      %v1461 = vld [vmem:[%s1460] sm:$0x1]
      %v1462 = vsel %vm470, %v1457, 0.0
      %1463 = vadd.xlane.f32.xlu0 %v1462
      %v1464 = vpop.xlane.xlu0 %1463
      %v1465 = vmul.f32 %v1464, %v821
      %v1466 = vsub.f32 %v1457, %v1465
      %v1467 = vmul.f32 %v1466, %v1466
      %v1468 = vsel %vm470, %v1467, 0.0
      %1469 = vadd.xlane.f32.xlu0 %v1468
      %v1470 = vpop.xlane.xlu0 %1469
      %v1471 = vmul.f32 %v1470, %v821
      %v1472 = vadd.f32 %v1471, 1e-05
      %v1473 = vrsqrt.pop %v1472
      %v1474 = vmul.f32 %v1473, %v1472
      %v1475 = vmul.f32 %v1474, %v1473
      %v1476 = vmul.f32 0.5, %v1475
      %v1477 = vsub.f32 1.5, %v1476
      %v1478 = vmul.f32 %v1473, %v1477
      %vm1479 = vweird.f32 %v1472
      %vm1480 = vweird.f32 %v1473
      %vm1481 = vmor %vm1479, %vm1480
      %v1482 = vsel %vm1481, %v1473, %v1478
      %v1483 = vmul.f32 %v1466, %v1482
      %v1485 = vperm.slane %v1459, 0
      %v1487 = vmul.f32 %v1483, %v1485
      %v1489 = vperm.slane %v1461, 0
      %v1491 = vadd.f32 %v1487, %v1489
      %1492 = vst.msk [vmem:[%s449] sm:$0xff] %vm470, %v1491
      %p1493 = scmp.lt.s32.totalorder %s24, 1
      %s1494 = scalar_select %p1493, %s24, 1
      %s1495 = smul.addr %s1494, 8
      %s1496 = scalar_lea.vmem %s13, %s1495
      // Predicated region
      $region73: #{bumblebee_forward.2} parent=71 // pred_check
        %p1497 = pneg %p325
      $region74: #{bumblebee_forward.2} parent=71 // pred_check_branch
        %1499 = sbr.rel (%p1497) target = $region76
      $region75: #{bumblebee_forward.2} parent=71 // pred_region
        _
      $region76: #{bumblebee_forward.2} parent=71 // pred_fallthru
        _
    $region72: #{bumblebee_forward.2} parent=5 // pred_fallthru
      _
    %p1500 = scmp.le.s32.totalorder 2, %s19
    // Predicated region
    $region77: #{bumblebee_forward.2} parent=5 // pred_check
      %p1501 = pneg %p1500
    $region78: #{bumblebee_forward.2} parent=5 // pred_check_branch
      %1503 = sbr.rel (%p1501) target = $region80
    $region79: #{bumblebee_forward.2} parent=5 // pred_region
      %s1504 = ssub.s32 %s19, 2
      // Predicated region
      $region81: #{bumblebee_forward.2} parent=79 // pred_check
        %p1505 = pneg %p331
      $region82: #{bumblebee_forward.2} parent=79 // pred_check_branch
        %1507 = sbr.rel (%p1505) target = $region84
      $region83: #{bumblebee_forward.2} parent=79 // pred_region
        %p1508 = scmp.lt.s32.totalorder %s25, 1
        %s1509 = scalar_select %p1508, %s25, 1
        %s1510 = smul.addr %s1509, 8
        %s1511 = scalar_lea.vmem %s13, %s1510
      $region84: #{bumblebee_forward.2} parent=79 // pred_fallthru
        _
    $region80: #{bumblebee_forward.2} parent=5 // pred_fallthru
      _
  $region6: #{bumblebee_forward.2} parent=0 // loop_footer
    %s23 = sadd.s32 1, %s19
  $region7: #{bumblebee_forward.2} parent=0 // loop_footer_branch
    %18 = sbr.rel target = $region3
  $region8: #{bumblebee_forward.2} parent=0 // loop_exit
    _

// kernel: bumblebee_forward.3
$region0: #{bumblebee_forward.3}
  #allocation0 [shape = 'u32[]', space=smem, size = 0x4, offset = 0x4, fixed_abs, tag = 'smem constant byte address 0x4 - core index']
  #allocation1 [shape = 'u32[72,128]{1,0:T(1,128)}', space=vmem, size = 0x9000, scoped, tag = 'internal scratch']
  %s0 = inlined_call_operand.vmem [shape: f32[2,8,32], index: 0, kind: input, shape index: {}]
  %s1 = inlined_call_operand.vmem [shape: f32[2,8,32], index: 1, kind: input, shape index: {}]
  %s2 = inlined_call_operand.vmem [shape: f32[8,8], index: 2, kind: input, shape index: {}]
  %s3 = inlined_call_operand.vmem [shape: f32[2,1,8], index: 3, kind: input, shape index: {}]
  %s4 = inlined_call_operand.vmem [shape: bf16[2,32,96], index: 4, kind: input, shape index: {}]
  %s5 = inlined_call_operand.vmem [shape: bf16[2,4,8,32], index: 5, kind: input, shape index: {}]
  %s6 = inlined_call_operand.vmem [shape: f32[2,1,32], index: 6, kind: input, shape index: {}]
  %s7 = inlined_call_operand.vmem [shape: f32[2,1,32], index: 7, kind: input, shape index: {}]
  %s8 = inlined_call_operand.vmem [shape: f32[2,1,32], index: 8, kind: input, shape index: {}]
  %s9 = inlined_call_operand.vmem [shape: bf16[2,32,32], index: 9, kind: input, shape index: {}]
  %s10 = inlined_call_operand.vmem [shape: bf16[2,32,64], index: 10, kind: input, shape index: {}]
  %s11 = inlined_call_operand.vmem [shape: bf16[2,4,8,32], index: 11, kind: input, shape index: {}]
  %s12 = inlined_call_operand.vmem [shape: f32[2,1,32], index: 12, kind: input, shape index: {}]
  %s13 = inlined_call_operand.vmem [shape: f32[2,1,32], index: 13, kind: input, shape index: {}]
  %s14 = inlined_call_operand.vmem [shape: f32[2,1,32], index: 14, kind: input, shape index: {}]
  %s15 = inlined_call_operand.vmem [shape: bf16[2,32,64], index: 15, kind: input, shape index: {}]
  %s16 = inlined_call_operand.vmem [shape: f32[2,1,64], index: 16, kind: input, shape index: {}]
  %s17 = inlined_call_operand.vmem [shape: bf16[2,64,32], index: 17, kind: input, shape index: {}]
  %s18 = inlined_call_operand.vmem [shape: f32[2,1,32], index: 18, kind: input, shape index: {}]
  %s19 = inlined_call_operand.vmem [shape: f32[2,1,32], index: 19, kind: input, shape index: {}]
  %s20 = inlined_call_operand.vmem [shape: f32[2,1,32], index: 20, kind: input, shape index: {}]
  %s21 = inlined_call_operand.vmem [shape: bf16[32,16], index: 21, kind: input, shape index: {}]
  %s22 = inlined_call_operand.vmem [shape: f32[1,16], index: 22, kind: input, shape index: {}]
  %s23 = inlined_call_operand.hbm [shape: f32[2,8,16], index: 23, kind: output, shape index: {}]
  %s24 = sld [smem:[#allocation0]]
  $region125: #{bumblebee_forward.3} parent=0
    _
  %s26 = ssub.s32 1, %s24
  %s27 = scalar_select 0, %s26, %s24
  $region1: #{bumblebee_forward.3} parent=0
    #allocation2 [shape = 'u8[8192]{0}', space=vmem, size = 0x2000, scoped, tag = 'output window, operand 0']
    #allocation3 [shape = 's32[2]{0}', space=sflag, size = 0x8, scoped, tag = 'scoped memory for bumblebee_forward.3']
    %28 = vsyncpa [#allocation3], 0
    %s29 = scalar_lea.sflag [#allocation3], 1
    %30 = vsyncpa %s29, 0
    loop: start=0, step=1, limit=4
    $region2: #{bumblebee_forward.3} parent=1 // loop_pre_header
      _
    $region3: #{bumblebee_forward.3} parent=1 // loop_header
      %s32 = sphi 0, %s36
      %p33 = scmp.ge.s32.totalorder %s32, 4
      %s42 = sphi 0, %s44
      %s45 = sphi 0, %s42
      %s46 = sphi 0, %s45
      %s62 = sphi 0, %s46
      %s68 = sphi 0, %s70
      %s71 = sphi 0, %s68
      %s72 = sphi 0, %s71
      %s88 = sphi 0, %s72
      %s92 = sphi 0, %s92
      %s94 = sphi 0, %s92
      %s95 = sphi 0, %s94
      %s109 = sphi 0, %s95
      %s115 = sphi 0, %s117
      %s118 = sphi 0, %s115
      %s119 = sphi 0, %s118
      %s135 = sphi 0, %s119
      %s139 = sphi 0, %s139
      %s141 = sphi 0, %s139
      %s142 = sphi 0, %s141
      %s156 = sphi 0, %s142
      %s160 = sphi 0, %s160
      %s162 = sphi 0, %s160
      %s163 = sphi 0, %s162
      %s177 = sphi 0, %s163
      %s181 = sphi 0, %s181
      %s183 = sphi 0, %s181
      %s184 = sphi 0, %s183
      %s198 = sphi 0, %s184
      %s202 = sphi 0, %s202
      %s204 = sphi 0, %s202
      %s205 = sphi 0, %s204
      %s219 = sphi 0, %s205
      %s223 = sphi 0, %s223
      %s225 = sphi 0, %s223
      %s226 = sphi 0, %s225
      %s240 = sphi 0, %s226
      %s244 = sphi 0, %s244
      %s246 = sphi 0, %s244
      %s247 = sphi 0, %s246
      %s261 = sphi 0, %s247
      %s265 = sphi 0, %s265
      %s267 = sphi 0, %s265
      %s268 = sphi 0, %s267
      %s282 = sphi 0, %s268
      %s286 = sphi 0, %s286
      %s288 = sphi 0, %s286
      %s289 = sphi 0, %s288
      %s303 = sphi 0, %s289
      %s307 = sphi 0, %s307
      %s309 = sphi 0, %s307
      %s310 = sphi 0, %s309
      %s324 = sphi 0, %s310
      %s328 = sphi 0, %s328
      %s330 = sphi 0, %s328
      %s331 = sphi 0, %s330
      %s345 = sphi 0, %s331
      %s349 = sphi 0, %s349
      %s351 = sphi 0, %s349
      %s352 = sphi 0, %s351
      %s366 = sphi 0, %s352
      %s370 = sphi 0, %s370
      %s372 = sphi 0, %s370
      %s373 = sphi 0, %s372
      %s387 = sphi 0, %s373
      %s391 = sphi 0, %s391
      %s393 = sphi 0, %s391
      %s394 = sphi 0, %s393
      %s408 = sphi 0, %s394
      %s412 = sphi 0, %s412
      %s414 = sphi 0, %s412
      %s415 = sphi 0, %s414
      %s429 = sphi 0, %s415
      %s433 = sphi 0, %s433
      %s435 = sphi 0, %s433
      %s436 = sphi 0, %s435
      %s450 = sphi 0, %s436
      %s454 = sphi 0, %s454
      %s456 = sphi 0, %s454
      %s457 = sphi 0, %s456
      %s471 = sphi 0, %s457
      %s475 = sphi 0, %s475
      %s477 = sphi 0, %s475
      %s478 = sphi 0, %s477
      %s492 = sphi 0, %s478
      %s496 = sphi 0, %s496
      %s498 = sphi 0, %s496
      %s499 = sphi 0, %s498
      %s513 = sphi 0, %s499
      %s517 = sphi 0, %s517
      %s519 = sphi 0, %s517
      %s520 = sphi 0, %s519
      %s534 = sphi 0, %s520
      %s540 = sphi 0, %s542
      %s543 = sphi 0, %s540
      %s544 = sphi 0, %s543
      %s560 = sphi 0, %s544
    $region4: #{bumblebee_forward.3} parent=1 // loop_header_branch
      %35 = sbr.rel (%p33) target = $region8
    $region5: #{bumblebee_forward.3} parent=1 // loop_body
      %s37 = ssub.s32 %s32, 1
      %s38 = ssub.s32 %s32, 2
      %s39 = sadd.s32 %s32, 1
      %s40 = ssub.s32 %s32, %s39
      %p41 = scmp.eq.s32.totalorder %s40, 0
      %s43 = sadd.s32 %s42, 1
      %s44 = scalar_select %p41, %s42, %s43
      %p47 = pneg %p41
      %p48 = scmp.eq.s32.totalorder %s32, 1
      %p49 = por %p47, %p48
      %p50 = scmp.ne.s32.totalorder %s42, %s45
      %p51 = scmp.eq.s32.totalorder %s32, 0
      %p52 = por %p50, %p51
      %p53 = scmp.ne.s32.totalorder %s42, %s45
      %p54 = scmp.eq.s32.totalorder %s37, 1
      %p55 = por %p53, %p54
      %p56 = scmp.ne.s32.totalorder %s45, %s46
      %p57 = scmp.eq.s32.totalorder %s37, 0
      %p58 = por %p56, %p57
      %p59 = scmp.ne.s32.totalorder %s45, %s46
      %p60 = scmp.eq.s32.totalorder %s38, 1
      %p61 = por %p59, %p60
      %p63 = scmp.ne.s32.totalorder %s46, %s62
      %p64 = scmp.eq.s32.totalorder %s38, 0
      %p65 = por %p63, %p64
      %s66 = ssub.s32 %s32, %s39
      %p67 = scmp.eq.s32.totalorder %s66, 0
      %s69 = sadd.s32 %s68, 1
      %s70 = scalar_select %p67, %s68, %s69
      %p73 = pneg %p67
      %p74 = scmp.eq.s32.totalorder %s32, 1
      %p75 = por %p73, %p74
      %p76 = scmp.ne.s32.totalorder %s68, %s71
      %p77 = scmp.eq.s32.totalorder %s32, 0
      %p78 = por %p76, %p77
      %p79 = scmp.ne.s32.totalorder %s68, %s71
      %p80 = scmp.eq.s32.totalorder %s37, 1
      %p81 = por %p79, %p80
      %p82 = scmp.ne.s32.totalorder %s71, %s72
      %p83 = scmp.eq.s32.totalorder %s37, 0
      %p84 = por %p82, %p83
      %p85 = scmp.ne.s32.totalorder %s71, %s72
      %p86 = scmp.eq.s32.totalorder %s38, 1
      %p87 = por %p85, %p86
      %p89 = scmp.ne.s32.totalorder %s72, %s88
      %p90 = scmp.eq.s32.totalorder %s38, 0
      %p91 = por %p89, %p90
      %s93 = sadd.s32 %s92, 1
      %p96 = scmp.eq.s32.totalorder %s32, 1
      %p97 = scmp.ne.s32.totalorder %s92, %s94
      %p98 = scmp.eq.s32.totalorder %s32, 0
      %p99 = por %p97, %p98
      %p100 = scmp.ne.s32.totalorder %s92, %s94
      %p101 = scmp.eq.s32.totalorder %s37, 1
      %p102 = por %p100, %p101
      %p103 = scmp.ne.s32.totalorder %s94, %s95
      %p104 = scmp.eq.s32.totalorder %s37, 0
      %p105 = por %p103, %p104
      %p106 = scmp.ne.s32.totalorder %s94, %s95
      %p107 = scmp.eq.s32.totalorder %s38, 1
      %p108 = por %p106, %p107
      %p110 = scmp.ne.s32.totalorder %s95, %s109
      %p111 = scmp.eq.s32.totalorder %s38, 0
      %p112 = por %p110, %p111
      %s113 = ssub.s32 %s32, %s39
      %p114 = scmp.eq.s32.totalorder %s113, 0
      %s116 = sadd.s32 %s115, 1
      %s117 = scalar_select %p114, %s115, %s116
      %p120 = pneg %p114
      %p121 = scmp.eq.s32.totalorder %s32, 1
      %p122 = por %p120, %p121
      %p123 = scmp.ne.s32.totalorder %s115, %s118
      %p124 = scmp.eq.s32.totalorder %s32, 0
      %p125 = por %p123, %p124
      %p126 = scmp.ne.s32.totalorder %s115, %s118
      %p127 = scmp.eq.s32.totalorder %s37, 1
      %p128 = por %p126, %p127
      %p129 = scmp.ne.s32.totalorder %s118, %s119
      %p130 = scmp.eq.s32.totalorder %s37, 0
      %p131 = por %p129, %p130
      %p132 = scmp.ne.s32.totalorder %s118, %s119
      %p133 = scmp.eq.s32.totalorder %s38, 1
      %p134 = por %p132, %p133
      %p136 = scmp.ne.s32.totalorder %s119, %s135
      %p137 = scmp.eq.s32.totalorder %s38, 0
      %p138 = por %p136, %p137
      %s140 = sadd.s32 %s139, 1
      %p143 = scmp.eq.s32.totalorder %s32, 1
      %p144 = scmp.ne.s32.totalorder %s139, %s141
      %p145 = scmp.eq.s32.totalorder %s32, 0
      %p146 = por %p144, %p145
      %p147 = scmp.ne.s32.totalorder %s139, %s141
      %p148 = scmp.eq.s32.totalorder %s37, 1
      %p149 = por %p147, %p148
      %p150 = scmp.ne.s32.totalorder %s141, %s142
      %p151 = scmp.eq.s32.totalorder %s37, 0
      %p152 = por %p150, %p151
      %p153 = scmp.ne.s32.totalorder %s141, %s142
      %p154 = scmp.eq.s32.totalorder %s38, 1
      %p155 = por %p153, %p154
      %p157 = scmp.ne.s32.totalorder %s142, %s156
      %p158 = scmp.eq.s32.totalorder %s38, 0
      %p159 = por %p157, %p158
      %s161 = sadd.s32 %s160, 1
      %p164 = scmp.eq.s32.totalorder %s32, 1
      %p165 = scmp.ne.s32.totalorder %s160, %s162
      %p166 = scmp.eq.s32.totalorder %s32, 0
      %p167 = por %p165, %p166
      %p168 = scmp.ne.s32.totalorder %s160, %s162
      %p169 = scmp.eq.s32.totalorder %s37, 1
      %p170 = por %p168, %p169
      %p171 = scmp.ne.s32.totalorder %s162, %s163
      %p172 = scmp.eq.s32.totalorder %s37, 0
      %p173 = por %p171, %p172
      %p174 = scmp.ne.s32.totalorder %s162, %s163
      %p175 = scmp.eq.s32.totalorder %s38, 1
      %p176 = por %p174, %p175
      %p178 = scmp.ne.s32.totalorder %s163, %s177
      %p179 = scmp.eq.s32.totalorder %s38, 0
      %p180 = por %p178, %p179
      %s182 = sadd.s32 %s181, 1
      %p185 = scmp.eq.s32.totalorder %s32, 1
      %p186 = scmp.ne.s32.totalorder %s181, %s183
      %p187 = scmp.eq.s32.totalorder %s32, 0
      %p188 = por %p186, %p187
      %p189 = scmp.ne.s32.totalorder %s181, %s183
      %p190 = scmp.eq.s32.totalorder %s37, 1
      %p191 = por %p189, %p190
      %p192 = scmp.ne.s32.totalorder %s183, %s184
      %p193 = scmp.eq.s32.totalorder %s37, 0
      %p194 = por %p192, %p193
      %p195 = scmp.ne.s32.totalorder %s183, %s184
      %p196 = scmp.eq.s32.totalorder %s38, 1
      %p197 = por %p195, %p196
      %p199 = scmp.ne.s32.totalorder %s184, %s198
      %p200 = scmp.eq.s32.totalorder %s38, 0
      %p201 = por %p199, %p200
      %s203 = sadd.s32 %s202, 1
      %p206 = scmp.eq.s32.totalorder %s32, 1
      %p207 = scmp.ne.s32.totalorder %s202, %s204
      %p208 = scmp.eq.s32.totalorder %s32, 0
      %p209 = por %p207, %p208
      %p210 = scmp.ne.s32.totalorder %s202, %s204
      %p211 = scmp.eq.s32.totalorder %s37, 1
      %p212 = por %p210, %p211
      %p213 = scmp.ne.s32.totalorder %s204, %s205
      %p214 = scmp.eq.s32.totalorder %s37, 0
      %p215 = por %p213, %p214
      %p216 = scmp.ne.s32.totalorder %s204, %s205
      %p217 = scmp.eq.s32.totalorder %s38, 1
      %p218 = por %p216, %p217
      %p220 = scmp.ne.s32.totalorder %s205, %s219
      %p221 = scmp.eq.s32.totalorder %s38, 0
      %p222 = por %p220, %p221
      %s224 = sadd.s32 %s223, 1
      %p227 = scmp.eq.s32.totalorder %s32, 1
      %p228 = scmp.ne.s32.totalorder %s223, %s225
      %p229 = scmp.eq.s32.totalorder %s32, 0
      %p230 = por %p228, %p229
      %p231 = scmp.ne.s32.totalorder %s223, %s225
      %p232 = scmp.eq.s32.totalorder %s37, 1
      %p233 = por %p231, %p232
      %p234 = scmp.ne.s32.totalorder %s225, %s226
      %p235 = scmp.eq.s32.totalorder %s37, 0
      %p236 = por %p234, %p235
      %p237 = scmp.ne.s32.totalorder %s225, %s226
      %p238 = scmp.eq.s32.totalorder %s38, 1
      %p239 = por %p237, %p238
      %p241 = scmp.ne.s32.totalorder %s226, %s240
      %p242 = scmp.eq.s32.totalorder %s38, 0
      %p243 = por %p241, %p242
      %s245 = sadd.s32 %s244, 1
      %p248 = scmp.eq.s32.totalorder %s32, 1
      %p249 = scmp.ne.s32.totalorder %s244, %s246
      %p250 = scmp.eq.s32.totalorder %s32, 0
      %p251 = por %p249, %p250
      %p252 = scmp.ne.s32.totalorder %s244, %s246
      %p253 = scmp.eq.s32.totalorder %s37, 1
      %p254 = por %p252, %p253
      %p255 = scmp.ne.s32.totalorder %s246, %s247
      %p256 = scmp.eq.s32.totalorder %s37, 0
      %p257 = por %p255, %p256
      %p258 = scmp.ne.s32.totalorder %s246, %s247
      %p259 = scmp.eq.s32.totalorder %s38, 1
      %p260 = por %p258, %p259
      %p262 = scmp.ne.s32.totalorder %s247, %s261
      %p263 = scmp.eq.s32.totalorder %s38, 0
      %p264 = por %p262, %p263
      %s266 = sadd.s32 %s265, 1
      %p269 = scmp.eq.s32.totalorder %s32, 1
      %p270 = scmp.ne.s32.totalorder %s265, %s267
      %p271 = scmp.eq.s32.totalorder %s32, 0
      %p272 = por %p270, %p271
      %p273 = scmp.ne.s32.totalorder %s265, %s267
      %p274 = scmp.eq.s32.totalorder %s37, 1
      %p275 = por %p273, %p274
      %p276 = scmp.ne.s32.totalorder %s267, %s268
      %p277 = scmp.eq.s32.totalorder %s37, 0
      %p278 = por %p276, %p277
      %p279 = scmp.ne.s32.totalorder %s267, %s268
      %p280 = scmp.eq.s32.totalorder %s38, 1
      %p281 = por %p279, %p280
      %p283 = scmp.ne.s32.totalorder %s268, %s282
      %p284 = scmp.eq.s32.totalorder %s38, 0
      %p285 = por %p283, %p284
      %s287 = sadd.s32 %s286, 1
      %p290 = scmp.eq.s32.totalorder %s32, 1
      %p291 = scmp.ne.s32.totalorder %s286, %s288
      %p292 = scmp.eq.s32.totalorder %s32, 0
      %p293 = por %p291, %p292
      %p294 = scmp.ne.s32.totalorder %s286, %s288
      %p295 = scmp.eq.s32.totalorder %s37, 1
      %p296 = por %p294, %p295
      %p297 = scmp.ne.s32.totalorder %s288, %s289
      %p298 = scmp.eq.s32.totalorder %s37, 0
      %p299 = por %p297, %p298
      %p300 = scmp.ne.s32.totalorder %s288, %s289
      %p301 = scmp.eq.s32.totalorder %s38, 1
      %p302 = por %p300, %p301
      %p304 = scmp.ne.s32.totalorder %s289, %s303
      %p305 = scmp.eq.s32.totalorder %s38, 0
      %p306 = por %p304, %p305
      %s308 = sadd.s32 %s307, 1
      %p311 = scmp.eq.s32.totalorder %s32, 1
      %p312 = scmp.ne.s32.totalorder %s307, %s309
      %p313 = scmp.eq.s32.totalorder %s32, 0
      %p314 = por %p312, %p313
      %p315 = scmp.ne.s32.totalorder %s307, %s309
      %p316 = scmp.eq.s32.totalorder %s37, 1
      %p317 = por %p315, %p316
      %p318 = scmp.ne.s32.totalorder %s309, %s310
      %p319 = scmp.eq.s32.totalorder %s37, 0
      %p320 = por %p318, %p319
      %p321 = scmp.ne.s32.totalorder %s309, %s310
      %p322 = scmp.eq.s32.totalorder %s38, 1
      %p323 = por %p321, %p322
      %p325 = scmp.ne.s32.totalorder %s310, %s324
      %p326 = scmp.eq.s32.totalorder %s38, 0
      %p327 = por %p325, %p326
      %s329 = sadd.s32 %s328, 1
      %p332 = scmp.eq.s32.totalorder %s32, 1
      %p333 = scmp.ne.s32.totalorder %s328, %s330
      %p334 = scmp.eq.s32.totalorder %s32, 0
      %p335 = por %p333, %p334
      %p336 = scmp.ne.s32.totalorder %s328, %s330
      %p337 = scmp.eq.s32.totalorder %s37, 1
      %p338 = por %p336, %p337
      %p339 = scmp.ne.s32.totalorder %s330, %s331
      %p340 = scmp.eq.s32.totalorder %s37, 0
      %p341 = por %p339, %p340
      %p342 = scmp.ne.s32.totalorder %s330, %s331
      %p343 = scmp.eq.s32.totalorder %s38, 1
      %p344 = por %p342, %p343
      %p346 = scmp.ne.s32.totalorder %s331, %s345
      %p347 = scmp.eq.s32.totalorder %s38, 0
      %p348 = por %p346, %p347
      %s350 = sadd.s32 %s349, 1
      %p353 = scmp.eq.s32.totalorder %s32, 1
      %p354 = scmp.ne.s32.totalorder %s349, %s351
      %p355 = scmp.eq.s32.totalorder %s32, 0
      %p356 = por %p354, %p355
      %p357 = scmp.ne.s32.totalorder %s349, %s351
      %p358 = scmp.eq.s32.totalorder %s37, 1
      %p359 = por %p357, %p358
      %p360 = scmp.ne.s32.totalorder %s351, %s352
      %p361 = scmp.eq.s32.totalorder %s37, 0
      %p362 = por %p360, %p361
      %p363 = scmp.ne.s32.totalorder %s351, %s352
      %p364 = scmp.eq.s32.totalorder %s38, 1
      %p365 = por %p363, %p364
      %p367 = scmp.ne.s32.totalorder %s352, %s366
      %p368 = scmp.eq.s32.totalorder %s38, 0
      %p369 = por %p367, %p368
      %s371 = sadd.s32 %s370, 1
      %p374 = scmp.eq.s32.totalorder %s32, 1
      %p375 = scmp.ne.s32.totalorder %s370, %s372
      %p376 = scmp.eq.s32.totalorder %s32, 0
      %p377 = por %p375, %p376
      %p378 = scmp.ne.s32.totalorder %s370, %s372
      %p379 = scmp.eq.s32.totalorder %s37, 1
      %p380 = por %p378, %p379
      %p381 = scmp.ne.s32.totalorder %s372, %s373
      %p382 = scmp.eq.s32.totalorder %s37, 0
      %p383 = por %p381, %p382
      %p384 = scmp.ne.s32.totalorder %s372, %s373
      %p385 = scmp.eq.s32.totalorder %s38, 1
      %p386 = por %p384, %p385
      %p388 = scmp.ne.s32.totalorder %s373, %s387
      %p389 = scmp.eq.s32.totalorder %s38, 0
      %p390 = por %p388, %p389
      %s392 = sadd.s32 %s391, 1
      %p395 = scmp.eq.s32.totalorder %s32, 1
      %p396 = scmp.ne.s32.totalorder %s391, %s393
      %p397 = scmp.eq.s32.totalorder %s32, 0
      %p398 = por %p396, %p397
      %p399 = scmp.ne.s32.totalorder %s391, %s393
      %p400 = scmp.eq.s32.totalorder %s37, 1
      %p401 = por %p399, %p400
      %p402 = scmp.ne.s32.totalorder %s393, %s394
      %p403 = scmp.eq.s32.totalorder %s37, 0
      %p404 = por %p402, %p403
      %p405 = scmp.ne.s32.totalorder %s393, %s394
      %p406 = scmp.eq.s32.totalorder %s38, 1
      %p407 = por %p405, %p406
      %p409 = scmp.ne.s32.totalorder %s394, %s408
      %p410 = scmp.eq.s32.totalorder %s38, 0
      %p411 = por %p409, %p410
      %s413 = sadd.s32 %s412, 1
      %p416 = scmp.eq.s32.totalorder %s32, 1
      %p417 = scmp.ne.s32.totalorder %s412, %s414
      %p418 = scmp.eq.s32.totalorder %s32, 0
      %p419 = por %p417, %p418
      %p420 = scmp.ne.s32.totalorder %s412, %s414
      %p421 = scmp.eq.s32.totalorder %s37, 1
      %p422 = por %p420, %p421
      %p423 = scmp.ne.s32.totalorder %s414, %s415
      %p424 = scmp.eq.s32.totalorder %s37, 0
      %p425 = por %p423, %p424
      %p426 = scmp.ne.s32.totalorder %s414, %s415
      %p427 = scmp.eq.s32.totalorder %s38, 1
      %p428 = por %p426, %p427
      %p430 = scmp.ne.s32.totalorder %s415, %s429
      %p431 = scmp.eq.s32.totalorder %s38, 0
      %p432 = por %p430, %p431
      %s434 = sadd.s32 %s433, 1
      %p437 = scmp.eq.s32.totalorder %s32, 1
      %p438 = scmp.ne.s32.totalorder %s433, %s435
      %p439 = scmp.eq.s32.totalorder %s32, 0
      %p440 = por %p438, %p439
      %p441 = scmp.ne.s32.totalorder %s433, %s435
      %p442 = scmp.eq.s32.totalorder %s37, 1
      %p443 = por %p441, %p442
      %p444 = scmp.ne.s32.totalorder %s435, %s436
      %p445 = scmp.eq.s32.totalorder %s37, 0
      %p446 = por %p444, %p445
      %p447 = scmp.ne.s32.totalorder %s435, %s436
      %p448 = scmp.eq.s32.totalorder %s38, 1
      %p449 = por %p447, %p448
      %p451 = scmp.ne.s32.totalorder %s436, %s450
      %p452 = scmp.eq.s32.totalorder %s38, 0
      %p453 = por %p451, %p452
      %s455 = sadd.s32 %s454, 1
      %p458 = scmp.eq.s32.totalorder %s32, 1
      %p459 = scmp.ne.s32.totalorder %s454, %s456
      %p460 = scmp.eq.s32.totalorder %s32, 0
      %p461 = por %p459, %p460
      %p462 = scmp.ne.s32.totalorder %s454, %s456
      %p463 = scmp.eq.s32.totalorder %s37, 1
      %p464 = por %p462, %p463
      %p465 = scmp.ne.s32.totalorder %s456, %s457
      %p466 = scmp.eq.s32.totalorder %s37, 0
      %p467 = por %p465, %p466
      %p468 = scmp.ne.s32.totalorder %s456, %s457
      %p469 = scmp.eq.s32.totalorder %s38, 1
      %p470 = por %p468, %p469
      %p472 = scmp.ne.s32.totalorder %s457, %s471
      %p473 = scmp.eq.s32.totalorder %s38, 0
      %p474 = por %p472, %p473
      %s476 = sadd.s32 %s475, 1
      %p479 = scmp.eq.s32.totalorder %s32, 1
      %p480 = scmp.ne.s32.totalorder %s475, %s477
      %p481 = scmp.eq.s32.totalorder %s32, 0
      %p482 = por %p480, %p481
      %p483 = scmp.ne.s32.totalorder %s475, %s477
      %p484 = scmp.eq.s32.totalorder %s37, 1
      %p485 = por %p483, %p484
      %p486 = scmp.ne.s32.totalorder %s477, %s478
      %p487 = scmp.eq.s32.totalorder %s37, 0
      %p488 = por %p486, %p487
      %p489 = scmp.ne.s32.totalorder %s477, %s478
      %p490 = scmp.eq.s32.totalorder %s38, 1
      %p491 = por %p489, %p490
      %p493 = scmp.ne.s32.totalorder %s478, %s492
      %p494 = scmp.eq.s32.totalorder %s38, 0
      %p495 = por %p493, %p494
      %s497 = sadd.s32 %s496, 1
      %p500 = scmp.eq.s32.totalorder %s32, 1
      %p501 = scmp.ne.s32.totalorder %s496, %s498
      %p502 = scmp.eq.s32.totalorder %s32, 0
      %p503 = por %p501, %p502
      %p504 = scmp.ne.s32.totalorder %s496, %s498
      %p505 = scmp.eq.s32.totalorder %s37, 1
      %p506 = por %p504, %p505
      %p507 = scmp.ne.s32.totalorder %s498, %s499
      %p508 = scmp.eq.s32.totalorder %s37, 0
      %p509 = por %p507, %p508
      %p510 = scmp.ne.s32.totalorder %s498, %s499
      %p511 = scmp.eq.s32.totalorder %s38, 1
      %p512 = por %p510, %p511
      %p514 = scmp.ne.s32.totalorder %s499, %s513
      %p515 = scmp.eq.s32.totalorder %s38, 0
      %p516 = por %p514, %p515
      %s518 = sadd.s32 %s517, 1
      %p521 = scmp.eq.s32.totalorder %s32, 1
      %p522 = scmp.ne.s32.totalorder %s517, %s519
      %p523 = scmp.eq.s32.totalorder %s32, 0
      %p524 = por %p522, %p523
      %p525 = scmp.ne.s32.totalorder %s517, %s519
      %p526 = scmp.eq.s32.totalorder %s37, 1
      %p527 = por %p525, %p526
      %p528 = scmp.ne.s32.totalorder %s519, %s520
      %p529 = scmp.eq.s32.totalorder %s37, 0
      %p530 = por %p528, %p529
      %p531 = scmp.ne.s32.totalorder %s519, %s520
      %p532 = scmp.eq.s32.totalorder %s38, 1
      %p533 = por %p531, %p532
      %p535 = scmp.ne.s32.totalorder %s520, %s534
      %p536 = scmp.eq.s32.totalorder %s38, 0
      %p537 = por %p535, %p536
      %s538 = ssub.s32 %s32, %s39
      %p539 = scmp.eq.s32.totalorder %s538, 0
      %s541 = sadd.s32 %s540, 1
      %s542 = scalar_select %p539, %s540, %s541
      %p545 = pneg %p539
      %p546 = scmp.eq.s32.totalorder %s32, 1
      %p547 = por %p545, %p546
      %p548 = scmp.ne.s32.totalorder %s540, %s543
      %p549 = scmp.eq.s32.totalorder %s32, 0
      %p550 = por %p548, %p549
      %p551 = scmp.ne.s32.totalorder %s540, %s543
      %p552 = scmp.eq.s32.totalorder %s37, 1
      %p553 = por %p551, %p552
      %p554 = scmp.ne.s32.totalorder %s543, %s544
      %p555 = scmp.eq.s32.totalorder %s37, 0
      %p556 = por %p554, %p555
      %p557 = scmp.ne.s32.totalorder %s543, %s544
      %p558 = scmp.eq.s32.totalorder %s38, 1
      %p559 = por %p557, %p558
      %p561 = scmp.ne.s32.totalorder %s544, %s560
      %p562 = scmp.eq.s32.totalorder %s38, 0
      %p563 = por %p561, %p562
      %p564 = scmp.le.s32.totalorder 1, %s32
      %p565 = scmp.lt.s32.totalorder %s32, 3
      %p566 = pnand %p564, %p565
      %p567 = pneg %p566
      // Predicated region
      $region9: #{bumblebee_forward.3} parent=5 // pred_check
        _
      $region10: #{bumblebee_forward.3} parent=5 // pred_check_branch
        %569 = sbr.rel (%p566) target = $region12
      $region11: #{bumblebee_forward.3} parent=5 // pred_region
        %s570 = ssub.s32 %s32, 1
        // Predicated region
        $region13: #{bumblebee_forward.3} parent=11 // pred_check
          %p571 = pneg %p105
        $region14: #{bumblebee_forward.3} parent=11 // pred_check_branch
          %573 = sbr.rel (%p571) target = $region16
        $region15: #{bumblebee_forward.3} parent=11 // pred_region
          _
        $region16: #{bumblebee_forward.3} parent=11 // pred_fallthru
          _
        // Predicated region
        $region17: #{bumblebee_forward.3} parent=11 // pred_check
          %p574 = pneg %p152
        $region18: #{bumblebee_forward.3} parent=11 // pred_check_branch
          %576 = sbr.rel (%p574) target = $region20
        $region19: #{bumblebee_forward.3} parent=11 // pred_region
          _
        $region20: #{bumblebee_forward.3} parent=11 // pred_fallthru
          _
        // Predicated region
        $region21: #{bumblebee_forward.3} parent=11 // pred_check
          %p577 = pneg %p173
        $region22: #{bumblebee_forward.3} parent=11 // pred_check_branch
          %579 = sbr.rel (%p577) target = $region24
        $region23: #{bumblebee_forward.3} parent=11 // pred_region
          _
        $region24: #{bumblebee_forward.3} parent=11 // pred_fallthru
          _
        // Predicated region
        $region25: #{bumblebee_forward.3} parent=11 // pred_check
          %p580 = pneg %p194
        $region26: #{bumblebee_forward.3} parent=11 // pred_check_branch
          %582 = sbr.rel (%p580) target = $region28
        $region27: #{bumblebee_forward.3} parent=11 // pred_region
          _
        $region28: #{bumblebee_forward.3} parent=11 // pred_fallthru
          _
        // Predicated region
        $region29: #{bumblebee_forward.3} parent=11 // pred_check
          %p583 = pneg %p215
        $region30: #{bumblebee_forward.3} parent=11 // pred_check_branch
          %585 = sbr.rel (%p583) target = $region32
        $region31: #{bumblebee_forward.3} parent=11 // pred_region
          _
        $region32: #{bumblebee_forward.3} parent=11 // pred_fallthru
          _
        // Predicated region
        $region33: #{bumblebee_forward.3} parent=11 // pred_check
          %p586 = pneg %p236
        $region34: #{bumblebee_forward.3} parent=11 // pred_check_branch
          %588 = sbr.rel (%p586) target = $region36
        $region35: #{bumblebee_forward.3} parent=11 // pred_region
          _
        $region36: #{bumblebee_forward.3} parent=11 // pred_fallthru
          _
        // Predicated region
        $region37: #{bumblebee_forward.3} parent=11 // pred_check
          %p589 = pneg %p257
        $region38: #{bumblebee_forward.3} parent=11 // pred_check_branch
          %591 = sbr.rel (%p589) target = $region40
        $region39: #{bumblebee_forward.3} parent=11 // pred_region
          _
        $region40: #{bumblebee_forward.3} parent=11 // pred_fallthru
          _
        // Predicated region
        $region41: #{bumblebee_forward.3} parent=11 // pred_check
          %p592 = pneg %p278
        $region42: #{bumblebee_forward.3} parent=11 // pred_check_branch
          %594 = sbr.rel (%p592) target = $region44
        $region43: #{bumblebee_forward.3} parent=11 // pred_region
          _
        $region44: #{bumblebee_forward.3} parent=11 // pred_fallthru
          _
        // Predicated region
        $region45: #{bumblebee_forward.3} parent=11 // pred_check
          %p595 = pneg %p299
        $region46: #{bumblebee_forward.3} parent=11 // pred_check_branch
          %597 = sbr.rel (%p595) target = $region48
        $region47: #{bumblebee_forward.3} parent=11 // pred_region
          _
        $region48: #{bumblebee_forward.3} parent=11 // pred_fallthru
          _
        // Predicated region
        $region49: #{bumblebee_forward.3} parent=11 // pred_check
          %p598 = pneg %p320
        $region50: #{bumblebee_forward.3} parent=11 // pred_check_branch
          %600 = sbr.rel (%p598) target = $region52
        $region51: #{bumblebee_forward.3} parent=11 // pred_region
          _
        $region52: #{bumblebee_forward.3} parent=11 // pred_fallthru
          _
        // Predicated region
        $region53: #{bumblebee_forward.3} parent=11 // pred_check
          %p601 = pneg %p341
        $region54: #{bumblebee_forward.3} parent=11 // pred_check_branch
          %603 = sbr.rel (%p601) target = $region56
        $region55: #{bumblebee_forward.3} parent=11 // pred_region
          _
        $region56: #{bumblebee_forward.3} parent=11 // pred_fallthru
          _
        // Predicated region
        $region57: #{bumblebee_forward.3} parent=11 // pred_check
          %p604 = pneg %p362
        $region58: #{bumblebee_forward.3} parent=11 // pred_check_branch
          %606 = sbr.rel (%p604) target = $region60
        $region59: #{bumblebee_forward.3} parent=11 // pred_region
          _
        $region60: #{bumblebee_forward.3} parent=11 // pred_fallthru
          _
        // Predicated region
        $region61: #{bumblebee_forward.3} parent=11 // pred_check
          %p607 = pneg %p383
        $region62: #{bumblebee_forward.3} parent=11 // pred_check_branch
          %609 = sbr.rel (%p607) target = $region64
        $region63: #{bumblebee_forward.3} parent=11 // pred_region
          _
        $region64: #{bumblebee_forward.3} parent=11 // pred_fallthru
          _
        // Predicated region
        $region65: #{bumblebee_forward.3} parent=11 // pred_check
          %p610 = pneg %p404
        $region66: #{bumblebee_forward.3} parent=11 // pred_check_branch
          %612 = sbr.rel (%p610) target = $region68
        $region67: #{bumblebee_forward.3} parent=11 // pred_region
          _
        $region68: #{bumblebee_forward.3} parent=11 // pred_fallthru
          _
        // Predicated region
        $region69: #{bumblebee_forward.3} parent=11 // pred_check
          %p613 = pneg %p425
        $region70: #{bumblebee_forward.3} parent=11 // pred_check_branch
          %615 = sbr.rel (%p613) target = $region72
        $region71: #{bumblebee_forward.3} parent=11 // pred_region
          _
        $region72: #{bumblebee_forward.3} parent=11 // pred_fallthru
          _
        // Predicated region
        $region73: #{bumblebee_forward.3} parent=11 // pred_check
          %p616 = pneg %p446
        $region74: #{bumblebee_forward.3} parent=11 // pred_check_branch
          %618 = sbr.rel (%p616) target = $region76
        $region75: #{bumblebee_forward.3} parent=11 // pred_region
          _
        $region76: #{bumblebee_forward.3} parent=11 // pred_fallthru
          _
        // Predicated region
        $region77: #{bumblebee_forward.3} parent=11 // pred_check
          %p619 = pneg %p467
        $region78: #{bumblebee_forward.3} parent=11 // pred_check_branch
          %621 = sbr.rel (%p619) target = $region80
        $region79: #{bumblebee_forward.3} parent=11 // pred_region
          _
        $region80: #{bumblebee_forward.3} parent=11 // pred_fallthru
          _
        // Predicated region
        $region81: #{bumblebee_forward.3} parent=11 // pred_check
          %p622 = pneg %p488
        $region82: #{bumblebee_forward.3} parent=11 // pred_check_branch
          %624 = sbr.rel (%p622) target = $region84
        $region83: #{bumblebee_forward.3} parent=11 // pred_region
          _
        $region84: #{bumblebee_forward.3} parent=11 // pred_fallthru
          _
        // Predicated region
        $region85: #{bumblebee_forward.3} parent=11 // pred_check
          %p625 = pneg %p509
        $region86: #{bumblebee_forward.3} parent=11 // pred_check_branch
          %627 = sbr.rel (%p625) target = $region88
        $region87: #{bumblebee_forward.3} parent=11 // pred_region
          _
        $region88: #{bumblebee_forward.3} parent=11 // pred_fallthru
          _
        // Predicated region
        $region89: #{bumblebee_forward.3} parent=11 // pred_check
          %p628 = pneg %p530
        $region90: #{bumblebee_forward.3} parent=11 // pred_check_branch
          %630 = sbr.rel (%p628) target = $region92
        $region91: #{bumblebee_forward.3} parent=11 // pred_region
          _
        $region92: #{bumblebee_forward.3} parent=11 // pred_fallthru
          _
      $region12: #{bumblebee_forward.3} parent=5 // pred_fallthru
        _
      %p631 = scmp.lt.s32.totalorder %s32, 2
      // Predicated region
      $region93: #{bumblebee_forward.3} parent=5 // pred_check
        %p632 = pneg %p631
      $region94: #{bumblebee_forward.3} parent=5 // pred_check_branch
        %634 = sbr.rel (%p632) target = $region96
      $region95: #{bumblebee_forward.3} parent=5 // pred_region
        // Predicated region
        $region97: #{bumblebee_forward.3} parent=95 // pred_check
          %p635 = pneg %p52
        $region98: #{bumblebee_forward.3} parent=95 // pred_check_branch
          %637 = sbr.rel (%p635) target = $region100
        $region99: #{bumblebee_forward.3} parent=95 // pred_region
          %p638 = scmp.lt.s32.totalorder %s32, 1
          %s639 = scalar_select %p638, %s32, 1
          %s640 = smul.addr %s639, 8
          %s641 = scalar_lea.vmem %s0, %s640
        $region100: #{bumblebee_forward.3} parent=95 // pred_fallthru
          _
        // Predicated region
        $region101: #{bumblebee_forward.3} parent=95 // pred_check
          %p642 = pneg %p78
        $region102: #{bumblebee_forward.3} parent=95 // pred_check_branch
          %644 = sbr.rel (%p642) target = $region104
        $region103: #{bumblebee_forward.3} parent=95 // pred_region
          %p645 = scmp.lt.s32.totalorder %s32, 1
          %s646 = scalar_select %p645, %s32, 1
          %s647 = smul.addr %s646, 8
          %s648 = scalar_lea.vmem %s1, %s647
        $region104: #{bumblebee_forward.3} parent=95 // pred_fallthru
          _
        // Predicated region
        $region105: #{bumblebee_forward.3} parent=95 // pred_check
          %p649 = pneg %p125
        $region106: #{bumblebee_forward.3} parent=95 // pred_check_branch
          %651 = sbr.rel (%p649) target = $region108
        $region107: #{bumblebee_forward.3} parent=95 // pred_region
          %p652 = scmp.lt.s32.totalorder %s32, 1
          %s653 = scalar_select %p652, %s32, 1
          %s654 = scalar_lea.vmem %s3, %s653
        $region108: #{bumblebee_forward.3} parent=95 // pred_fallthru
          _
      $region96: #{bumblebee_forward.3} parent=5 // pred_fallthru
        _
      %p655 = scmp.le.s32.totalorder 1, %s32
      %p656 = scmp.lt.s32.totalorder %s32, 3
      %p657 = pnand %p655, %p656
      %p658 = pneg %p657
      // Predicated region
      $region109: #{bumblebee_forward.3} parent=5 // pred_check
        _
      $region110: #{bumblebee_forward.3} parent=5 // pred_check_branch
        %660 = sbr.rel (%p657) target = $region112
      $region111: #{bumblebee_forward.3} parent=5 // pred_region
        %s661 = ssub.s32 %s32, 1
        %p662 = scmp.lt.s32.totalorder %s37, 1
        %s663 = scalar_select %p662, %s37, 1
        %s664 = smul.addr %s663, 8
        %s665 = scalar_lea.vmem %s0, %s664
        %p666 = pneg %p58
        %p667 = pneg %p55
        %p668 = scmp.lt.s32.totalorder %s37, 1
        %s669 = scalar_select %p668, %s37, 1
        %s670 = smul.addr %s669, 8
        %s671 = scalar_lea.vmem %s1, %s670
        %p672 = pneg %p84
        %p673 = pneg %p81
        %p674 = pneg %p105
        %p675 = pneg %p102
        %p676 = scmp.lt.s32.totalorder %s37, 1
        %s677 = scalar_select %p676, %s37, 1
        %s678 = scalar_lea.vmem %s3, %s677
        %p679 = pneg %p131
        %p680 = pneg %p128
        %p681 = pneg %p152
        %p682 = pneg %p149
        %p683 = pneg %p173
        %p684 = pneg %p170
        %p685 = pneg %p194
        %p686 = pneg %p191
        %p687 = pneg %p215
        %p688 = pneg %p212
        %p689 = pneg %p236
        %p690 = pneg %p233
        %p691 = pneg %p257
        %p692 = pneg %p254
        %p693 = pneg %p278
        %p694 = pneg %p275
        %p695 = pneg %p299
        %p696 = pneg %p296
        %p697 = pneg %p320
        %p698 = pneg %p317
        %p699 = pneg %p341
        %p700 = pneg %p338
        %p701 = pneg %p362
        %p702 = pneg %p359
        %p703 = pneg %p383
        %p704 = pneg %p380
        %p705 = pneg %p404
        %p706 = pneg %p401
        %p707 = pneg %p425
        %p708 = pneg %p422
        %p709 = pneg %p446
        %p710 = pneg %p443
        %p711 = pneg %p467
        %p712 = pneg %p464
        %p713 = pneg %p488
        %p714 = pneg %p485
        %p715 = pneg %p509
        %p716 = pneg %p506
        %p717 = pneg %p530
        %p718 = pneg %p527
        %p719 = pneg %p556
        %p720 = pneg %p553
        %s721 = sand.u32 %s543, 1
        %s722 = scalar_lea.sflag [#allocation3], %s721
        %s723 = sand.u32 %s543, 1
        %s724 = smul.addr %s723, 8
        %s725 = scalar_lea.vmem [#allocation2], %s724
        %p726 = scmp.lt.s32.totalorder %s37, 1
        %s727 = scalar_select %p726, %s37, 1
        %s728 = smul.addr %s727, 8
        %s729 = scalar_lea.vmem %s0, %s728
        %p730 = scmp.lt.s32.totalorder %s37, 1
        %s731 = scalar_select %p730, %s37, 1
        %s732 = smul.addr %s731, 8
        %s733 = scalar_lea.vmem %s1, %s732
        %p734 = scmp.lt.s32.totalorder %s37, 1
        %s735 = scalar_select %p734, %s37, 1
        %s736 = scalar_lea.vmem %s3, %s735
        %v738 = vld [vmem:[%s729] sm:$0xff]
        %v739 = vld [vmem:[%s733] sm:$0xff]
        %v740 = vpack.c.bf16 %v739, %v739
        %v741 = vld [vmem:[%s2] sm:$0xff]
        %v742 = vld [vmem:[%s736] sm:$0x1]
        %v743 = vpack.c.bf16 %v738, %v738
        %v744 = vld [vmem:[%s4] sm:$0xf]
        %v745 = vld [vmem:[%s4 + $0x4] sm:$0xf]
        %v746 = vld [vmem:[%s4 + $0x8] sm:$0xf]
        %v747 = vld [vmem:[%s4 + $0xc] sm:$0xf]
        %v752 = vunpack.c.l.b16 %v744
        %v753 = vunpack.c.l.b16 %v745
        %v754 = vunpack.c.l.b16 %v746
        %v755 = vunpack.c.l.b16 %v747
        %v756 = vpack.c.b16 %v753, %v752
        %v757 = vpack.c.b16 %v755, %v754
        %vm760 = vcmask 261120
        %v762 = vsel %vm760, %v743, 0
        %764 = vmatpush.bf16.msra.mxu0 0
        %765 = vmatpush.bf16.msra.mxu0 0
        %766 = vmatpush.bf16.msra.mxu0 0
        %767 = vmatpush.bf16.msra.mxu0 0
        %768 = vmatpush.bf16.msra.mxu0 0
        %769 = vmatpush.bf16.msra.mxu0 0
        %770 = vmatpush.bf16.msra.mxu0 %v757
        %771 = vmatpush.bf16.msra.mxu0 %v756
        %772 = vmatmul.bf16.gmra.mxu0 %v762
        %v773 = vpop.f32.mrf.mxu0
        %v774 = vadd.f32 0.0, %v773
        %v775 = vpop.f32.mrf.mxu0
        %776 = vdwg.mxu0
        %v777 = vld [vmem:[%s5] sm:$0xf]
        %v778 = vld [vmem:[%s5 + $0x4] sm:$0xf]
        %v779 = vld [vmem:[%s5 + $0x8] sm:$0xf]
        %v780 = vld [vmem:[%s5 + $0xc] sm:$0xf]
        %v781 = vld [vmem:[%s6] sm:$0x1]
        %v782 = vpack.c.bf16 %v774, %v774
        %v784 = vunpack.c.l.b16 %v782
        %v785 = vpack.c.b16 %v784, %v784
        %786 = vrot.lane.b32.xlu0 %v785, 96
        %v787 = vpop.permute.xlu0 %786
        %vm788 = vcmask 64512
        %v790 = vsel %vm788, %v782, 0
        %v793 = vsel %vm788, %v787, 0
        %795 = vmatpush.bf16.xpose.msra.mxu0 0
        %796 = vmatpush.bf16.xpose.msra.mxu0 0
        %797 = vmatpush.bf16.xpose.msra.mxu0 0
        %798 = vmatpush.bf16.xpose.msra.mxu0 0
        %799 = vmatpush.bf16.xpose.msra.mxu0 0
        %800 = vmatpush.bf16.xpose.msra.mxu0 0
        %801 = vmatpush.bf16.xpose.msra.mxu0 0
        %802 = vmatpush.bf16.xpose.msra.mxu0 %v793
        %803 = vmatmul.bf16.gmra.mxu0 %v790
        %v804 = vpop.f32.mrf.mxu0
        %v805 = vadd.f32 %v741, %v804
        %v806 = vpop.f32.mrf.mxu0
        %807 = vdwg.mxu0
        %v808 = vsel %vm788, %v805, -inf
        %809 = vmax.xlane.f32.xlu0 %v808
        %v810 = vpop.xlane.xlu0 %809
        %v811 = vsub.f32 %v805, %v810
        %v812 = vmul.f32 %v811, 1.442695
        %v813 = vpow.pop %v812
        %v814 = vsel %vm788, %v813, 0.0
        %815 = vadd.xlane.f32.xlu0 %v814
        %v816 = vpop.xlane.xlu0 %815
        %v817 = vrcp.pop %v816
        %v818 = vmul.f32 %v813, %v817
        %v819 = vpack.c.bf16 %v818, %v818
        %820 = vrot.lane.b32.xlu0 %v785, 64
        %v821 = vpop.permute.xlu0 %820
        %v823 = vsel %vm788, %v819, 0
        %vm825 = vcmask 1043456
        %v827 = vsel %vm825, %v821, 0
        %829 = vmatpush.bf16.msra.mxu0 0
        %830 = vmatpush.bf16.msra.mxu0 0
        %831 = vmatpush.bf16.msra.mxu0 0
        %832 = vmatpush.bf16.msra.mxu0 0
        %833 = vmatpush.bf16.msra.mxu0 0
        %834 = vmatpush.bf16.msra.mxu0 0
        %835 = vmatpush.bf16.msra.mxu0 0
        %836 = vmatpush.bf16.msra.mxu0 %v827
        %837 = vmatmul.bf16.gmra.mxu0 %v823
        %v838 = vpop.f32.mrf.mxu0
        %v839 = vadd.f32 0.0, %v838
        %v840 = vpop.f32.mrf.mxu0
        %841 = vdwg.mxu0
        %v842 = vpack.c.bf16 %v839, %v839
        %843 = vrot.lane.b32.xlu0 %v785, 120
        %v844 = vpop.permute.xlu0 %843
        %845 = vrot.lane.b32.xlu0 %v785, 88
        %v846 = vpop.permute.xlu0 %845
        %v848 = vsel %vm788, %v844, 0
        %v851 = vsel %vm788, %v846, 0
        %853 = vmatpush.bf16.xpose.msra.mxu0 0
        %854 = vmatpush.bf16.xpose.msra.mxu0 0
        %855 = vmatpush.bf16.xpose.msra.mxu0 0
        %856 = vmatpush.bf16.xpose.msra.mxu0 0
        %857 = vmatpush.bf16.xpose.msra.mxu0 0
        %858 = vmatpush.bf16.xpose.msra.mxu0 0
        %859 = vmatpush.bf16.xpose.msra.mxu0 0
        %860 = vmatpush.bf16.xpose.msra.mxu0 %v851
        %861 = vmatmul.bf16.gmra.mxu0 %v848
        %v862 = vpop.f32.mrf.mxu0
        %v863 = vadd.f32 %v741, %v862
        %v864 = vpop.f32.mrf.mxu0
        %865 = vdwg.mxu0
        %v866 = vsel %vm788, %v863, -inf
        %867 = vmax.xlane.f32.xlu0 %v866
        %v868 = vpop.xlane.xlu0 %867
        %v869 = vsub.f32 %v863, %v868
        %v870 = vmul.f32 %v869, 1.442695
        %v871 = vpow.pop %v870
        %v872 = vsel %vm788, %v871, 0.0
        %873 = vadd.xlane.f32.xlu0 %v872
        %v874 = vpop.xlane.xlu0 %873
        %v875 = vrcp.pop %v874
        %v876 = vmul.f32 %v871, %v875
        %v877 = vpack.c.bf16 %v876, %v876
        %878 = vrot.lane.b32.xlu0 %v785, 56
        %v879 = vpop.permute.xlu0 %878
        %v881 = vsel %vm788, %v877, 0
        %v884 = vsel %vm825, %v879, 0
        %886 = vmatpush.bf16.msra.mxu0 0
        %887 = vmatpush.bf16.msra.mxu0 0
        %888 = vmatpush.bf16.msra.mxu0 0
        %889 = vmatpush.bf16.msra.mxu0 0
        %890 = vmatpush.bf16.msra.mxu0 0
        %891 = vmatpush.bf16.msra.mxu0 0
        %892 = vmatpush.bf16.msra.mxu0 0
        %893 = vmatpush.bf16.msra.mxu0 %v884
        %894 = vmatmul.bf16.gmra.mxu0 %v881
        %v895 = vpop.f32.mrf.mxu0
        %v896 = vadd.f32 0.0, %v895
        %v897 = vpop.f32.mrf.mxu0
        %898 = vdwg.mxu0
        %v899 = vpack.c.bf16 %v896, %v896
        %v901 = vsel %vm788, %v899, 0
        %v904 = vsel %vm825, %v778, 0
        %906 = vmatpush.bf16.msra.mxu0 0
        %907 = vmatpush.bf16.msra.mxu0 0
        %908 = vmatpush.bf16.msra.mxu0 0
        %909 = vmatpush.bf16.msra.mxu0 0
        %910 = vmatpush.bf16.msra.mxu0 0
        %911 = vmatpush.bf16.msra.mxu0 0
        %912 = vmatpush.bf16.msra.mxu0 0
        %913 = vmatpush.bf16.msra.mxu0 %v904
        %914 = vmatmul.bf16.gmra.mxu0 %v901
        %v915 = vpop.f32.mrf.mxu0
        %v916 = vadd.f32 0.0, %v915
        %v917 = vpop.f32.mrf.mxu0
        %918 = vdwg.mxu0
        %v920 = vsel %vm788, %v842, 0
        %v923 = vsel %vm825, %v777, 0
        %925 = vmatpush.bf16.msra.mxu0 0
        %926 = vmatpush.bf16.msra.mxu0 0
        %927 = vmatpush.bf16.msra.mxu0 0
        %928 = vmatpush.bf16.msra.mxu0 0
        %929 = vmatpush.bf16.msra.mxu0 0
        %930 = vmatpush.bf16.msra.mxu0 0
        %931 = vmatpush.bf16.msra.mxu0 0
        %932 = vmatpush.bf16.msra.mxu0 %v923
        %933 = vmatmul.bf16.gmra.mxu0 %v920
        %v934 = vpop.f32.mrf.mxu0
        %v935 = vadd.f32 %v916, %v934
        %v936 = vpop.f32.mrf.mxu0
        %937 = vdwg.mxu0
        %938 = vrot.lane.b32.xlu0 %v785, 112
        %v939 = vpop.permute.xlu0 %938
        %940 = vrot.lane.b32.xlu0 %v785, 80
        %v941 = vpop.permute.xlu0 %940
        %v943 = vsel %vm788, %v939, 0
        %v946 = vsel %vm788, %v941, 0
        %948 = vmatpush.bf16.xpose.msra.mxu0 0
        %949 = vmatpush.bf16.xpose.msra.mxu0 0
        %950 = vmatpush.bf16.xpose.msra.mxu0 0
        %951 = vmatpush.bf16.xpose.msra.mxu0 0
        %952 = vmatpush.bf16.xpose.msra.mxu0 0
        %953 = vmatpush.bf16.xpose.msra.mxu0 0
        %954 = vmatpush.bf16.xpose.msra.mxu0 0
        %955 = vmatpush.bf16.xpose.msra.mxu0 %v946
        %956 = vmatmul.bf16.gmra.mxu0 %v943
        %v957 = vpop.f32.mrf.mxu0
        %v958 = vadd.f32 %v741, %v957
        %v959 = vpop.f32.mrf.mxu0
        %960 = vdwg.mxu0
        %v961 = vsel %vm788, %v958, -inf
        %962 = vmax.xlane.f32.xlu0 %v961
        %v963 = vpop.xlane.xlu0 %962
        %v964 = vsub.f32 %v958, %v963
        %v965 = vmul.f32 %v964, 1.442695
        %v966 = vpow.pop %v965
        %v967 = vsel %vm788, %v966, 0.0
        %968 = vadd.xlane.f32.xlu0 %v967
        %v969 = vpop.xlane.xlu0 %968
        %v970 = vrcp.pop %v969
        %v971 = vmul.f32 %v966, %v970
        %v972 = vpack.c.bf16 %v971, %v971
        %973 = vrot.lane.b32.xlu0 %v785, 48
        %v974 = vpop.permute.xlu0 %973
        %v976 = vsel %vm788, %v972, 0
        %v979 = vsel %vm825, %v974, 0
        %981 = vmatpush.bf16.msra.mxu0 0
        %982 = vmatpush.bf16.msra.mxu0 0
        %983 = vmatpush.bf16.msra.mxu0 0
        %984 = vmatpush.bf16.msra.mxu0 0
        %985 = vmatpush.bf16.msra.mxu0 0
        %986 = vmatpush.bf16.msra.mxu0 0
        %987 = vmatpush.bf16.msra.mxu0 0
        %988 = vmatpush.bf16.msra.mxu0 %v979
        %989 = vmatmul.bf16.gmra.mxu0 %v976
        %v990 = vpop.f32.mrf.mxu0
        %v991 = vadd.f32 0.0, %v990
        %v992 = vpop.f32.mrf.mxu0
        %993 = vdwg.mxu0
        %v994 = vpack.c.bf16 %v991, %v991
        %v996 = vsel %vm788, %v994, 0
        %v999 = vsel %vm825, %v779, 0
        %1001 = vmatpush.bf16.msra.mxu0 0
        %1002 = vmatpush.bf16.msra.mxu0 0
        %1003 = vmatpush.bf16.msra.mxu0 0
        %1004 = vmatpush.bf16.msra.mxu0 0
        %1005 = vmatpush.bf16.msra.mxu0 0
        %1006 = vmatpush.bf16.msra.mxu0 0
        %1007 = vmatpush.bf16.msra.mxu0 0
        %1008 = vmatpush.bf16.msra.mxu0 %v999
        %1009 = vmatmul.bf16.gmra.mxu0 %v996
        %v1010 = vpop.f32.mrf.mxu0
        %v1011 = vadd.f32 0.0, %v1010
        %v1012 = vpop.f32.mrf.mxu0
        %1013 = vdwg.mxu0
        %v1014 = vadd.f32 %v935, %v1011
        %1015 = vrot.lane.b32.xlu0 %v785, 104
        %v1016 = vpop.permute.xlu0 %1015
        %1017 = vrot.lane.b32.xlu0 %v785, 72
        %v1018 = vpop.permute.xlu0 %1017
        %v1020 = vsel %vm788, %v1016, 0
        %v1023 = vsel %vm788, %v1018, 0
        %1025 = vmatpush.bf16.xpose.msra.mxu0 0
        %1026 = vmatpush.bf16.xpose.msra.mxu0 0
        %1027 = vmatpush.bf16.xpose.msra.mxu0 0
        %1028 = vmatpush.bf16.xpose.msra.mxu0 0
        %1029 = vmatpush.bf16.xpose.msra.mxu0 0
        %1030 = vmatpush.bf16.xpose.msra.mxu0 0
        %1031 = vmatpush.bf16.xpose.msra.mxu0 0
        %1032 = vmatpush.bf16.xpose.msra.mxu0 %v1023
        %1033 = vmatmul.bf16.gmra.mxu0 %v1020
        %v1034 = vpop.f32.mrf.mxu0
        %v1035 = vadd.f32 %v741, %v1034
        %v1036 = vpop.f32.mrf.mxu0
        %1037 = vdwg.mxu0
        %v1038 = vsel %vm788, %v1035, -inf
        %1039 = vmax.xlane.f32.xlu0 %v1038
        %v1040 = vpop.xlane.xlu0 %1039
        %v1041 = vsub.f32 %v1035, %v1040
        %v1042 = vmul.f32 %v1041, 1.442695
        %v1043 = vpow.pop %v1042
        %v1044 = vsel %vm788, %v1043, 0.0
        %1045 = vadd.xlane.f32.xlu0 %v1044
        %v1046 = vpop.xlane.xlu0 %1045
        %v1047 = vrcp.pop %v1046
        %v1048 = vmul.f32 %v1043, %v1047
        %v1049 = vpack.c.bf16 %v1048, %v1048
        %1050 = vrot.lane.b32.xlu0 %v785, 40
        %v1051 = vpop.permute.xlu0 %1050
        %v1053 = vsel %vm788, %v1049, 0
        %v1056 = vsel %vm825, %v1051, 0
        %1058 = vmatpush.bf16.msra.mxu0 0
        %1059 = vmatpush.bf16.msra.mxu0 0
        %1060 = vmatpush.bf16.msra.mxu0 0
        %1061 = vmatpush.bf16.msra.mxu0 0
        %1062 = vmatpush.bf16.msra.mxu0 0
        %1063 = vmatpush.bf16.msra.mxu0 0
        %1064 = vmatpush.bf16.msra.mxu0 0
        %1065 = vmatpush.bf16.msra.mxu0 %v1056
        %1066 = vmatmul.bf16.gmra.mxu0 %v1053
        %v1067 = vpop.f32.mrf.mxu0
        %v1068 = vadd.f32 0.0, %v1067
        %v1069 = vpop.f32.mrf.mxu0
        %1070 = vdwg.mxu0
        %v1071 = vpack.c.bf16 %v1068, %v1068
        %v1073 = vsel %vm788, %v1071, 0
        %v1076 = vsel %vm825, %v780, 0
        %1078 = vmatpush.bf16.msra.mxu0 0
        %1079 = vmatpush.bf16.msra.mxu0 0
        %1080 = vmatpush.bf16.msra.mxu0 0
        %1081 = vmatpush.bf16.msra.mxu0 0
        %1082 = vmatpush.bf16.msra.mxu0 0
        %1083 = vmatpush.bf16.msra.mxu0 0
        %1084 = vmatpush.bf16.msra.mxu0 0
        %1085 = vmatpush.bf16.msra.mxu0 %v1076
        %1086 = vmatmul.bf16.gmra.mxu0 %v1073
        %v1087 = vpop.f32.mrf.mxu0
        %v1088 = vadd.f32 0.0, %v1087
        %v1089 = vpop.f32.mrf.mxu0
        %1090 = vdwg.mxu0
        %v1091 = vadd.f32 %v1014, %v1088
        %v1093 = vperm.slane %v781, 0
        %v1095 = vadd.f32 %v1091, %v1093
        %v1096 = vadd.f32 %v1095, %v738
        %v1097 = vld [vmem:[%s7] sm:$0x1]
        %v1098 = vld [vmem:[%s8] sm:$0x1]
        %v1099 = vsel %vm760, %v1096, 0.0
        %1100 = vadd.xlane.f32.xlu0 %v1099
        %v1101 = vpop.xlane.xlu0 %1100
        %v1102 = vrcp.pop 32.0
        %v1103 = vmul.f32 32.0, %v1102
        %v1104 = vsub.f32 1.0, %v1103
        %v1105 = vmul.f32 %v1102, %v1104
        %v1106 = vadd.f32 %v1102, %v1105
        %vm1107 = vweird.f32 %v1102
        %v1108 = vsel %vm1107, %v1102, %v1106
        %v1109 = vmul.f32 %v1101, %v1108
        %v1110 = vsub.f32 %v1096, %v1109
        %v1111 = vmul.f32 %v1110, %v1110
        %v1112 = vsel %vm760, %v1111, 0.0
        %1113 = vadd.xlane.f32.xlu0 %v1112
        %v1114 = vpop.xlane.xlu0 %1113
        %v1115 = vmul.f32 %v1114, %v1108
        %v1116 = vadd.f32 %v1115, 1e-05
        %v1117 = vrsqrt.pop %v1116
        %v1118 = vmul.f32 %v1117, %v1116
        %v1119 = vmul.f32 %v1118, %v1117
        %v1120 = vmul.f32 0.5, %v1119
        %v1121 = vsub.f32 1.5, %v1120
        %v1122 = vmul.f32 %v1117, %v1121
        %vm1123 = vweird.f32 %v1116
        %vm1124 = vweird.f32 %v1117
        %vm1125 = vmor %vm1123, %vm1124
        %v1126 = vsel %vm1125, %v1117, %v1122
        %v1127 = vmul.f32 %v1110, %v1126
        %v1129 = vperm.slane %v1097, 0
        %v1131 = vmul.f32 %v1127, %v1129
        %v1133 = vperm.slane %v1098, 0
        %v1135 = vadd.f32 %v1131, %v1133
        %v1136 = vpack.c.bf16 %v1135, %v1135
        %v1137 = vld [vmem:[%s9] sm:$0xf]
        %v1138 = vld [vmem:[%s9 + $0x4] sm:$0xf]
        %v1139 = vld [vmem:[%s9 + $0x8] sm:$0xf]
        %v1140 = vld [vmem:[%s9 + $0xc] sm:$0xf]
        %v1145 = vunpack.c.l.b16 %v1137
        %v1146 = vunpack.c.l.b16 %v1138
        %v1147 = vunpack.c.l.b16 %v1139
        %v1148 = vunpack.c.l.b16 %v1140
        %v1149 = vpack.c.b16 %v1146, %v1145
        %v1150 = vpack.c.b16 %v1148, %v1147
        %v1154 = vsel %vm760, %v1136, 0
        %1156 = vmatpush.bf16.msra.mxu0 0
        %1157 = vmatpush.bf16.msra.mxu0 0
        %1158 = vmatpush.bf16.msra.mxu0 0
        %1159 = vmatpush.bf16.msra.mxu0 0
        %1160 = vmatpush.bf16.msra.mxu0 0
        %1161 = vmatpush.bf16.msra.mxu0 0
        %1162 = vmatpush.bf16.msra.mxu0 %v1150
        %1163 = vmatpush.bf16.msra.mxu0 %v1149
        %1164 = vmatmul.bf16.gmra.mxu0 %v1154
        %v1165 = vpop.f32.mrf.mxu0
        %v1166 = vadd.f32 0.0, %v1165
        %v1167 = vpop.f32.mrf.mxu0
        %1168 = vdwg.mxu0
        %v1169 = vld [vmem:[%s10] sm:$0xf]
        %v1170 = vld [vmem:[%s10 + $0x4] sm:$0xf]
        %v1171 = vld [vmem:[%s10 + $0x8] sm:$0xf]
        %v1172 = vld [vmem:[%s10 + $0xc] sm:$0xf]
        %v1177 = vunpack.c.l.b16 %v1169
        %v1178 = vunpack.c.l.b16 %v1170
        %v1179 = vunpack.c.l.b16 %v1171
        %v1180 = vunpack.c.l.b16 %v1172
        %v1181 = vpack.c.b16 %v1178, %v1177
        %v1182 = vpack.c.b16 %v1180, %v1179
        %v1186 = vsel %vm760, %v740, 0
        %1188 = vmatpush.bf16.msra.mxu0 0
        %1189 = vmatpush.bf16.msra.mxu0 0
        %1190 = vmatpush.bf16.msra.mxu0 0
        %1191 = vmatpush.bf16.msra.mxu0 0
        %1192 = vmatpush.bf16.msra.mxu0 0
        %1193 = vmatpush.bf16.msra.mxu0 0
        %1194 = vmatpush.bf16.msra.mxu0 %v1182
        %1195 = vmatpush.bf16.msra.mxu0 %v1181
        %1196 = vmatmul.bf16.gmra.mxu0 %v1186
        %v1197 = vpop.f32.mrf.mxu0
        %v1198 = vadd.f32 0.0, %v1197
        %v1199 = vpop.f32.mrf.mxu0
        %1200 = vdwg.mxu0
        %v1201 = vld [vmem:[%s11] sm:$0xf]
        %v1202 = vld [vmem:[%s11 + $0x4] sm:$0xf]
        %v1203 = vld [vmem:[%s11 + $0x8] sm:$0xf]
        %v1204 = vld [vmem:[%s11 + $0xc] sm:$0xf]
        %v1205 = vld [vmem:[%s12] sm:$0x1]
        %v1206 = vpack.c.bf16 %v1166, %v1166
        %v1207 = vpack.c.bf16 %v1198, %v1198
        %v1209 = vperm.slane %v742, 0
        %v1212 = vsel %vm788, %v1206, 0
        %v1215 = vsel %vm788, %v1207, 0
        %1217 = vmatpush.bf16.xpose.msra.mxu0 0
        %1218 = vmatpush.bf16.xpose.msra.mxu0 0
        %1219 = vmatpush.bf16.xpose.msra.mxu0 0
        %1220 = vmatpush.bf16.xpose.msra.mxu0 0
        %1221 = vmatpush.bf16.xpose.msra.mxu0 0
        %1222 = vmatpush.bf16.xpose.msra.mxu0 0
        %1223 = vmatpush.bf16.xpose.msra.mxu0 0
        %1224 = vmatpush.bf16.xpose.msra.mxu0 %v1215
        %1225 = vmatmul.bf16.gmra.mxu0 %v1212
        %v1226 = vpop.f32.mrf.mxu0
        %v1227 = vadd.f32 %v1209, %v1226
        %v1228 = vpop.f32.mrf.mxu0
        %1229 = vdwg.mxu0
        %v1230 = vsel %vm788, %v1227, -inf
        %1231 = vmax.xlane.f32.xlu0 %v1230
        %v1232 = vpop.xlane.xlu0 %1231
        %v1233 = vsub.f32 %v1227, %v1232
        %v1234 = vmul.f32 %v1233, 1.442695
        %v1235 = vpow.pop %v1234
        %v1236 = vsel %vm788, %v1235, 0.0
        %1237 = vadd.xlane.f32.xlu0 %v1236
        %v1238 = vpop.xlane.xlu0 %1237
        %v1239 = vrcp.pop %v1238
        %v1240 = vmul.f32 %v1235, %v1239
        %v1241 = vpack.c.bf16 %v1240, %v1240
        %v1243 = vunpack.c.l.b16 %v1207
        %v1244 = vpack.c.b16 %v1243, %v1243
        %1245 = vrot.lane.b32.xlu0 %v1244, 96
        %v1246 = vpop.permute.xlu0 %1245
        %v1248 = vsel %vm788, %v1241, 0
        %v1251 = vsel %vm825, %v1246, 0
        %1253 = vmatpush.bf16.msra.mxu0 0
        %1254 = vmatpush.bf16.msra.mxu0 0
        %1255 = vmatpush.bf16.msra.mxu0 0
        %1256 = vmatpush.bf16.msra.mxu0 0
        %1257 = vmatpush.bf16.msra.mxu0 0
        %1258 = vmatpush.bf16.msra.mxu0 0
        %1259 = vmatpush.bf16.msra.mxu0 0
        %1260 = vmatpush.bf16.msra.mxu0 %v1251
        %1261 = vmatmul.bf16.gmra.mxu0 %v1248
        %v1262 = vpop.f32.mrf.mxu0
        %v1263 = vadd.f32 0.0, %v1262
        %v1264 = vpop.f32.mrf.mxu0
        %1265 = vdwg.mxu0
        %v1266 = vpack.c.bf16 %v1263, %v1263
        %v1268 = vunpack.c.l.b16 %v1206
        %v1269 = vpack.c.b16 %v1268, %v1268
        %1270 = vrot.lane.b32.xlu0 %v1269, 120
        %v1271 = vpop.permute.xlu0 %1270
        %1272 = vrot.lane.b32.xlu0 %v1244, 120
        %v1273 = vpop.permute.xlu0 %1272
        %v1275 = vsel %vm788, %v1271, 0
        %v1278 = vsel %vm788, %v1273, 0
        %1280 = vmatpush.bf16.xpose.msra.mxu0 0
        %1281 = vmatpush.bf16.xpose.msra.mxu0 0
        %1282 = vmatpush.bf16.xpose.msra.mxu0 0
        %1283 = vmatpush.bf16.xpose.msra.mxu0 0
        %1284 = vmatpush.bf16.xpose.msra.mxu0 0
        %1285 = vmatpush.bf16.xpose.msra.mxu0 0
        %1286 = vmatpush.bf16.xpose.msra.mxu0 0
        %1287 = vmatpush.bf16.xpose.msra.mxu0 %v1278
        %1288 = vmatmul.bf16.gmra.mxu0 %v1275
        %v1289 = vpop.f32.mrf.mxu0
        %v1290 = vadd.f32 %v1209, %v1289
        %v1291 = vpop.f32.mrf.mxu0
        %1292 = vdwg.mxu0
        %v1293 = vsel %vm788, %v1290, -inf
        %1294 = vmax.xlane.f32.xlu0 %v1293
        %v1295 = vpop.xlane.xlu0 %1294
        %v1296 = vsub.f32 %v1290, %v1295
        %v1297 = vmul.f32 %v1296, 1.442695
        %v1298 = vpow.pop %v1297
        %v1299 = vsel %vm788, %v1298, 0.0
        %1300 = vadd.xlane.f32.xlu0 %v1299
        %v1301 = vpop.xlane.xlu0 %1300
        %v1302 = vrcp.pop %v1301
        %v1303 = vmul.f32 %v1298, %v1302
        %v1304 = vpack.c.bf16 %v1303, %v1303
        %1305 = vrot.lane.b32.xlu0 %v1244, 88
        %v1306 = vpop.permute.xlu0 %1305
        %v1308 = vsel %vm788, %v1304, 0
        %v1311 = vsel %vm825, %v1306, 0
        %1313 = vmatpush.bf16.msra.mxu0 0
        %1314 = vmatpush.bf16.msra.mxu0 0
        %1315 = vmatpush.bf16.msra.mxu0 0
        %1316 = vmatpush.bf16.msra.mxu0 0
        %1317 = vmatpush.bf16.msra.mxu0 0
        %1318 = vmatpush.bf16.msra.mxu0 0
        %1319 = vmatpush.bf16.msra.mxu0 0
        %1320 = vmatpush.bf16.msra.mxu0 %v1311
        %1321 = vmatmul.bf16.gmra.mxu0 %v1308
        %v1322 = vpop.f32.mrf.mxu0
        %v1323 = vadd.f32 0.0, %v1322
        %v1324 = vpop.f32.mrf.mxu0
        %1325 = vdwg.mxu0
        %v1326 = vpack.c.bf16 %v1323, %v1323
        %v1328 = vsel %vm788, %v1326, 0
        %v1331 = vsel %vm825, %v1202, 0
        %1333 = vmatpush.bf16.msra.mxu0 0
        %1334 = vmatpush.bf16.msra.mxu0 0
        %1335 = vmatpush.bf16.msra.mxu0 0
        %1336 = vmatpush.bf16.msra.mxu0 0
        %1337 = vmatpush.bf16.msra.mxu0 0
        %1338 = vmatpush.bf16.msra.mxu0 0
        %1339 = vmatpush.bf16.msra.mxu0 0
        %1340 = vmatpush.bf16.msra.mxu0 %v1331
        %1341 = vmatmul.bf16.gmra.mxu0 %v1328
        %v1342 = vpop.f32.mrf.mxu0
        %v1343 = vadd.f32 0.0, %v1342
        %v1344 = vpop.f32.mrf.mxu0
        %1345 = vdwg.mxu0
        %v1347 = vsel %vm788, %v1266, 0
        %v1350 = vsel %vm825, %v1201, 0
        %1352 = vmatpush.bf16.msra.mxu0 0
        %1353 = vmatpush.bf16.msra.mxu0 0
        %1354 = vmatpush.bf16.msra.mxu0 0
        %1355 = vmatpush.bf16.msra.mxu0 0
        %1356 = vmatpush.bf16.msra.mxu0 0
        %1357 = vmatpush.bf16.msra.mxu0 0
        %1358 = vmatpush.bf16.msra.mxu0 0
        %1359 = vmatpush.bf16.msra.mxu0 %v1350
        %1360 = vmatmul.bf16.gmra.mxu0 %v1347
        %v1361 = vpop.f32.mrf.mxu0
        %v1362 = vadd.f32 %v1343, %v1361
        %v1363 = vpop.f32.mrf.mxu0
        %1364 = vdwg.mxu0
        %1365 = vrot.lane.b32.xlu0 %v1269, 112
        %v1366 = vpop.permute.xlu0 %1365
        %1367 = vrot.lane.b32.xlu0 %v1244, 112
        %v1368 = vpop.permute.xlu0 %1367
        %v1370 = vsel %vm788, %v1366, 0
        %v1373 = vsel %vm788, %v1368, 0
        %1375 = vmatpush.bf16.xpose.msra.mxu0 0
        %1376 = vmatpush.bf16.xpose.msra.mxu0 0
        %1377 = vmatpush.bf16.xpose.msra.mxu0 0
        %1378 = vmatpush.bf16.xpose.msra.mxu0 0
        %1379 = vmatpush.bf16.xpose.msra.mxu0 0
        %1380 = vmatpush.bf16.xpose.msra.mxu0 0
        %1381 = vmatpush.bf16.xpose.msra.mxu0 0
        %1382 = vmatpush.bf16.xpose.msra.mxu0 %v1373
        %1383 = vmatmul.bf16.gmra.mxu0 %v1370
        %v1384 = vpop.f32.mrf.mxu0
        %v1385 = vadd.f32 %v1209, %v1384
        %v1386 = vpop.f32.mrf.mxu0
        %1387 = vdwg.mxu0
        %v1388 = vsel %vm788, %v1385, -inf
        %1389 = vmax.xlane.f32.xlu0 %v1388
        %v1390 = vpop.xlane.xlu0 %1389
        %v1391 = vsub.f32 %v1385, %v1390
        %v1392 = vmul.f32 %v1391, 1.442695
        %v1393 = vpow.pop %v1392
        %v1394 = vsel %vm788, %v1393, 0.0
        %1395 = vadd.xlane.f32.xlu0 %v1394
        %v1396 = vpop.xlane.xlu0 %1395
        %v1397 = vrcp.pop %v1396
        %v1398 = vmul.f32 %v1393, %v1397
        %v1399 = vpack.c.bf16 %v1398, %v1398
        %1400 = vrot.lane.b32.xlu0 %v1244, 80
        %v1401 = vpop.permute.xlu0 %1400
        %v1403 = vsel %vm788, %v1399, 0
        %v1406 = vsel %vm825, %v1401, 0
        %1408 = vmatpush.bf16.msra.mxu0 0
        %1409 = vmatpush.bf16.msra.mxu0 0
        %1410 = vmatpush.bf16.msra.mxu0 0
        %1411 = vmatpush.bf16.msra.mxu0 0
        %1412 = vmatpush.bf16.msra.mxu0 0
        %1413 = vmatpush.bf16.msra.mxu0 0
        %1414 = vmatpush.bf16.msra.mxu0 0
        %1415 = vmatpush.bf16.msra.mxu0 %v1406
        %1416 = vmatmul.bf16.gmra.mxu0 %v1403
        %v1417 = vpop.f32.mrf.mxu0
        %v1418 = vadd.f32 0.0, %v1417
        %v1419 = vpop.f32.mrf.mxu0
        %1420 = vdwg.mxu0
        %v1421 = vpack.c.bf16 %v1418, %v1418
        %v1423 = vsel %vm788, %v1421, 0
        %v1426 = vsel %vm825, %v1203, 0
        %1428 = vmatpush.bf16.msra.mxu0 0
        %1429 = vmatpush.bf16.msra.mxu0 0
        %1430 = vmatpush.bf16.msra.mxu0 0
        %1431 = vmatpush.bf16.msra.mxu0 0
        %1432 = vmatpush.bf16.msra.mxu0 0
        %1433 = vmatpush.bf16.msra.mxu0 0
        %1434 = vmatpush.bf16.msra.mxu0 0
        %1435 = vmatpush.bf16.msra.mxu0 %v1426
        %1436 = vmatmul.bf16.gmra.mxu0 %v1423
        %v1437 = vpop.f32.mrf.mxu0
        %v1438 = vadd.f32 0.0, %v1437
        %v1439 = vpop.f32.mrf.mxu0
        %1440 = vdwg.mxu0
        %v1441 = vadd.f32 %v1362, %v1438
        %1442 = vrot.lane.b32.xlu0 %v1269, 104
        %v1443 = vpop.permute.xlu0 %1442
        %1444 = vrot.lane.b32.xlu0 %v1244, 104
        %v1445 = vpop.permute.xlu0 %1444
        %v1447 = vsel %vm788, %v1443, 0
        %v1450 = vsel %vm788, %v1445, 0
        %1452 = vmatpush.bf16.xpose.msra.mxu0 0
        %1453 = vmatpush.bf16.xpose.msra.mxu0 0
        %1454 = vmatpush.bf16.xpose.msra.mxu0 0
        %1455 = vmatpush.bf16.xpose.msra.mxu0 0
        %1456 = vmatpush.bf16.xpose.msra.mxu0 0
        %1457 = vmatpush.bf16.xpose.msra.mxu0 0
        %1458 = vmatpush.bf16.xpose.msra.mxu0 0
        %1459 = vmatpush.bf16.xpose.msra.mxu0 %v1450
        %1460 = vmatmul.bf16.gmra.mxu0 %v1447
        %v1461 = vpop.f32.mrf.mxu0
        %v1462 = vadd.f32 %v1209, %v1461
        %v1463 = vpop.f32.mrf.mxu0
        %1464 = vdwg.mxu0
        %v1465 = vsel %vm788, %v1462, -inf
        %1466 = vmax.xlane.f32.xlu0 %v1465
        %v1467 = vpop.xlane.xlu0 %1466
        %v1468 = vsub.f32 %v1462, %v1467
        %v1469 = vmul.f32 %v1468, 1.442695
        %v1470 = vpow.pop %v1469
        %v1471 = vsel %vm788, %v1470, 0.0
        %1472 = vadd.xlane.f32.xlu0 %v1471
        %v1473 = vpop.xlane.xlu0 %1472
        %v1474 = vrcp.pop %v1473
        %v1475 = vmul.f32 %v1470, %v1474
        %v1476 = vpack.c.bf16 %v1475, %v1475
        %1477 = vrot.lane.b32.xlu0 %v1244, 72
        %v1478 = vpop.permute.xlu0 %1477
        %v1480 = vsel %vm788, %v1476, 0
        %v1483 = vsel %vm825, %v1478, 0
        %1485 = vmatpush.bf16.msra.mxu0 0
        %1486 = vmatpush.bf16.msra.mxu0 0
        %1487 = vmatpush.bf16.msra.mxu0 0
        %1488 = vmatpush.bf16.msra.mxu0 0
        %1489 = vmatpush.bf16.msra.mxu0 0
        %1490 = vmatpush.bf16.msra.mxu0 0
        %1491 = vmatpush.bf16.msra.mxu0 0
        %1492 = vmatpush.bf16.msra.mxu0 %v1483
        %1493 = vmatmul.bf16.gmra.mxu0 %v1480
        %v1494 = vpop.f32.mrf.mxu0
        %v1495 = vadd.f32 0.0, %v1494
        %v1496 = vpop.f32.mrf.mxu0
        %1497 = vdwg.mxu0
        %v1498 = vpack.c.bf16 %v1495, %v1495
        %v1500 = vsel %vm788, %v1498, 0
        %v1503 = vsel %vm825, %v1204, 0
        %1505 = vmatpush.bf16.msra.mxu0 0
        %1506 = vmatpush.bf16.msra.mxu0 0
        %1507 = vmatpush.bf16.msra.mxu0 0
        %1508 = vmatpush.bf16.msra.mxu0 0
        %1509 = vmatpush.bf16.msra.mxu0 0
        %1510 = vmatpush.bf16.msra.mxu0 0
        %1511 = vmatpush.bf16.msra.mxu0 0
        %1512 = vmatpush.bf16.msra.mxu0 %v1503
        %1513 = vmatmul.bf16.gmra.mxu0 %v1500
        %v1514 = vpop.f32.mrf.mxu0
        %v1515 = vadd.f32 0.0, %v1514
        %v1516 = vpop.f32.mrf.mxu0
        %1517 = vdwg.mxu0
        %v1518 = vadd.f32 %v1441, %v1515
        %v1520 = vperm.slane %v1205, 0
        %v1522 = vadd.f32 %v1518, %v1520
        %v1523 = vadd.f32 %v1522, %v1135
        %v1524 = vld [vmem:[%s13] sm:$0x1]
        %v1525 = vld [vmem:[%s14] sm:$0x1]
        %v1526 = vsel %vm760, %v1523, 0.0
        %1527 = vadd.xlane.f32.xlu0 %v1526
        %v1528 = vpop.xlane.xlu0 %1527
        %v1529 = vmul.f32 %v1528, %v1108
        %v1530 = vsub.f32 %v1523, %v1529
        %v1531 = vmul.f32 %v1530, %v1530
        %v1532 = vsel %vm760, %v1531, 0.0
        %1533 = vadd.xlane.f32.xlu0 %v1532
        %v1534 = vpop.xlane.xlu0 %1533
        %v1535 = vmul.f32 %v1534, %v1108
        %v1536 = vadd.f32 %v1535, 1e-05
        %v1537 = vrsqrt.pop %v1536
        %v1538 = vmul.f32 %v1537, %v1536
        %v1539 = vmul.f32 %v1538, %v1537
        %v1540 = vmul.f32 0.5, %v1539
        %v1541 = vsub.f32 1.5, %v1540
        %v1542 = vmul.f32 %v1537, %v1541
        %vm1543 = vweird.f32 %v1536
        %vm1544 = vweird.f32 %v1537
        %vm1545 = vmor %vm1543, %vm1544
        %v1546 = vsel %vm1545, %v1537, %v1542
        %v1547 = vmul.f32 %v1530, %v1546
        %v1549 = vperm.slane %v1524, 0
        %v1551 = vmul.f32 %v1547, %v1549
        %v1553 = vperm.slane %v1525, 0
        %v1555 = vadd.f32 %v1551, %v1553
        %v1556 = vpack.c.bf16 %v1555, %v1555
        %v1557 = vld [vmem:[%s15] sm:$0xf]
        %v1558 = vld [vmem:[%s15 + $0x4] sm:$0xf]
        %v1559 = vld [vmem:[%s15 + $0x8] sm:$0xf]
        %v1560 = vld [vmem:[%s15 + $0xc] sm:$0xf]
        %v1561 = vld [vmem:[%s16] sm:$0x1]
        %v1563 = vperm.slane %v1561, 0
        %v1569 = vunpack.c.l.b16 %v1557
        %v1570 = vunpack.c.l.b16 %v1558
        %v1571 = vunpack.c.l.b16 %v1559
        %v1572 = vunpack.c.l.b16 %v1560
        %v1573 = vpack.c.b16 %v1570, %v1569
        %v1574 = vpack.c.b16 %v1572, %v1571
        %v1578 = vsel %vm760, %v1556, 0
        %1580 = vmatpush.bf16.msra.mxu0 0
        %1581 = vmatpush.bf16.msra.mxu0 0
        %1582 = vmatpush.bf16.msra.mxu0 0
        %1583 = vmatpush.bf16.msra.mxu0 0
        %1584 = vmatpush.bf16.msra.mxu0 0
        %1585 = vmatpush.bf16.msra.mxu0 0
        %1586 = vmatpush.bf16.msra.mxu0 %v1574
        %1587 = vmatpush.bf16.msra.mxu0 %v1573
        %1588 = vmatmul.bf16.gmra.mxu0 %v1578
        %v1589 = vpop.f32.mrf.mxu0
        %v1590 = vadd.f32 %v1563, %v1589
        %v1591 = vpop.f32.mrf.mxu0
        %1592 = vdwg.mxu0
        %v1593 = vmax.f32 %v1590, 0.0
        %v1594 = vpack.c.bf16 %v1593, %v1593
        %v1595 = vld [vmem:[%s17] sm:$0xf]
        %v1596 = vld [vmem:[%s17 + $0x4] sm:$0xf]
        %v1597 = vld [vmem:[%s17 + $0x8] sm:$0xf]
        %v1598 = vld [vmem:[%s17 + $0xc] sm:$0xf]
        %v1599 = vld [vmem:[%s17 + $0x10] sm:$0xf]
        %v1600 = vld [vmem:[%s17 + $0x14] sm:$0xf]
        %v1601 = vld [vmem:[%s17 + $0x18] sm:$0xf]
        %v1602 = vld [vmem:[%s17 + $0x1c] sm:$0xf]
        %v1603 = vld [vmem:[%s18] sm:$0x1]
        %v1605 = vperm.slane %v1603, 0
        %v1615 = vunpack.c.l.b16 %v1595
        %v1616 = vunpack.c.l.b16 %v1596
        %v1617 = vunpack.c.l.b16 %v1597
        %v1618 = vunpack.c.l.b16 %v1598
        %v1619 = vunpack.c.l.b16 %v1599
        %v1620 = vunpack.c.l.b16 %v1600
        %v1621 = vunpack.c.l.b16 %v1601
        %v1622 = vunpack.c.l.b16 %v1602
        %v1623 = vpack.c.b16 %v1616, %v1615
        %v1624 = vpack.c.b16 %v1618, %v1617
        %v1625 = vpack.c.b16 %v1620, %v1619
        %v1626 = vpack.c.b16 %v1622, %v1621
        %vm1631 = vcmask 523264
        %v1633 = vsel %vm1631, %v1594, 0
        %1635 = vmatpush.bf16.msra.mxu0 0
        %1636 = vmatpush.bf16.msra.mxu0 0
        %1637 = vmatpush.bf16.msra.mxu0 0
        %1638 = vmatpush.bf16.msra.mxu0 0
        %1639 = vmatpush.bf16.msra.mxu0 %v1626
        %1640 = vmatpush.bf16.msra.mxu0 %v1625
        %1641 = vmatpush.bf16.msra.mxu0 %v1624
        %1642 = vmatpush.bf16.msra.mxu0 %v1623
        %1643 = vmatmul.bf16.gmra.mxu0 %v1633
        %v1644 = vpop.f32.mrf.mxu0
        %v1645 = vadd.f32 %v1605, %v1644
        %v1646 = vpop.f32.mrf.mxu0
        %1647 = vdwg.mxu0
        %v1648 = vadd.f32 %v1645, %v1555
        %v1649 = vld [vmem:[%s19] sm:$0x1]
        %v1650 = vld [vmem:[%s20] sm:$0x1]
        %v1651 = vsel %vm760, %v1648, 0.0
        %1652 = vadd.xlane.f32.xlu0 %v1651
        %v1653 = vpop.xlane.xlu0 %1652
        %v1654 = vmul.f32 %v1653, %v1108
        %v1655 = vsub.f32 %v1648, %v1654
        %v1656 = vmul.f32 %v1655, %v1655
        %v1657 = vsel %vm760, %v1656, 0.0
        %1658 = vadd.xlane.f32.xlu0 %v1657
        %v1659 = vpop.xlane.xlu0 %1658
        %v1660 = vmul.f32 %v1659, %v1108
        %v1661 = vadd.f32 %v1660, 1e-05
        %v1662 = vrsqrt.pop %v1661
        %v1663 = vmul.f32 %v1662, %v1661
        %v1664 = vmul.f32 %v1663, %v1662
        %v1665 = vmul.f32 0.5, %v1664
        %v1666 = vsub.f32 1.5, %v1665
        %v1667 = vmul.f32 %v1662, %v1666
        %vm1668 = vweird.f32 %v1661
        %vm1669 = vweird.f32 %v1662
        %vm1670 = vmor %vm1668, %vm1669
        %v1671 = vsel %vm1670, %v1662, %v1667
        %v1672 = vmul.f32 %v1655, %v1671
        %v1674 = vperm.slane %v1649, 0
        %v1676 = vmul.f32 %v1672, %v1674
        %v1678 = vperm.slane %v1650, 0
        %v1680 = vadd.f32 %v1676, %v1678
        %v1681 = vpack.c.bf16 %v1680, %v1680
        %s1682 = scalar_lea.vmem %s4, 16
        %v1683 = vld [vmem:[%s1682] sm:$0xf]
        %v1684 = vld [vmem:[%s1682 + $0x4] sm:$0xf]
        %v1685 = vld [vmem:[%s1682 + $0x8] sm:$0xf]
        %v1686 = vld [vmem:[%s1682 + $0xc] sm:$0xf]
        %v1691 = vunpack.c.l.b16 %v1683
        %v1692 = vunpack.c.l.b16 %v1684
        %v1693 = vunpack.c.l.b16 %v1685
        %v1694 = vunpack.c.l.b16 %v1686
        %v1695 = vpack.c.b16 %v1692, %v1691
        %v1696 = vpack.c.b16 %v1694, %v1693
        %v1700 = vsel %vm760, %v1681, 0
        %1702 = vmatpush.bf16.msra.mxu0 0
        %1703 = vmatpush.bf16.msra.mxu0 0
        %1704 = vmatpush.bf16.msra.mxu0 0
        %1705 = vmatpush.bf16.msra.mxu0 0
        %1706 = vmatpush.bf16.msra.mxu0 0
        %1707 = vmatpush.bf16.msra.mxu0 0
        %1708 = vmatpush.bf16.msra.mxu0 %v1696
        %1709 = vmatpush.bf16.msra.mxu0 %v1695
        %1710 = vmatmul.bf16.gmra.mxu0 %v1700
        %v1711 = vpop.f32.mrf.mxu0
        %v1712 = vadd.f32 0.0, %v1711
        %v1713 = vpop.f32.mrf.mxu0
        %1714 = vdwg.mxu0
        %s1715 = scalar_lea.vmem %s5, 16
        %v1716 = vld [vmem:[%s1715] sm:$0xf]
        %v1717 = vld [vmem:[%s1715 + $0x4] sm:$0xf]
        %v1718 = vld [vmem:[%s1715 + $0x8] sm:$0xf]
        %v1719 = vld [vmem:[%s1715 + $0xc] sm:$0xf]
        %s1720 = scalar_lea.vmem %s6, 1
        %v1721 = vld [vmem:[%s1720] sm:$0x1]
        %v1722 = vpack.c.bf16 %v1712, %v1712
        %v1724 = vunpack.c.l.b16 %v1722
        %v1725 = vpack.c.b16 %v1724, %v1724
        %1726 = vrot.lane.b32.xlu0 %v1725, 96
        %v1727 = vpop.permute.xlu0 %1726
        %v1729 = vsel %vm788, %v1722, 0
        %v1732 = vsel %vm788, %v1727, 0
        %1734 = vmatpush.bf16.xpose.msra.mxu0 0
        %1735 = vmatpush.bf16.xpose.msra.mxu0 0
        %1736 = vmatpush.bf16.xpose.msra.mxu0 0
        %1737 = vmatpush.bf16.xpose.msra.mxu0 0
        %1738 = vmatpush.bf16.xpose.msra.mxu0 0
        %1739 = vmatpush.bf16.xpose.msra.mxu0 0
        %1740 = vmatpush.bf16.xpose.msra.mxu0 0
        %1741 = vmatpush.bf16.xpose.msra.mxu0 %v1732
        %1742 = vmatmul.bf16.gmra.mxu0 %v1729
        %v1743 = vpop.f32.mrf.mxu0
        %v1744 = vadd.f32 %v741, %v1743
        %v1745 = vpop.f32.mrf.mxu0
        %1746 = vdwg.mxu0
        %v1747 = vsel %vm788, %v1744, -inf
        %1748 = vmax.xlane.f32.xlu0 %v1747
        %v1749 = vpop.xlane.xlu0 %1748
        %v1750 = vsub.f32 %v1744, %v1749
        %v1751 = vmul.f32 %v1750, 1.442695
        %v1752 = vpow.pop %v1751
        %v1753 = vsel %vm788, %v1752, 0.0
        %1754 = vadd.xlane.f32.xlu0 %v1753
        %v1755 = vpop.xlane.xlu0 %1754
        %v1756 = vrcp.pop %v1755
        %v1757 = vmul.f32 %v1752, %v1756
        %v1758 = vpack.c.bf16 %v1757, %v1757
        %1759 = vrot.lane.b32.xlu0 %v1725, 64
        %v1760 = vpop.permute.xlu0 %1759
        %v1762 = vsel %vm788, %v1758, 0
        %v1765 = vsel %vm825, %v1760, 0
        %1767 = vmatpush.bf16.msra.mxu0 0
        %1768 = vmatpush.bf16.msra.mxu0 0
        %1769 = vmatpush.bf16.msra.mxu0 0
        %1770 = vmatpush.bf16.msra.mxu0 0
        %1771 = vmatpush.bf16.msra.mxu0 0
        %1772 = vmatpush.bf16.msra.mxu0 0
        %1773 = vmatpush.bf16.msra.mxu0 0
        %1774 = vmatpush.bf16.msra.mxu0 %v1765
        %1775 = vmatmul.bf16.gmra.mxu0 %v1762
        %v1776 = vpop.f32.mrf.mxu0
        %v1777 = vadd.f32 0.0, %v1776
        %v1778 = vpop.f32.mrf.mxu0
        %1779 = vdwg.mxu0
        %v1780 = vpack.c.bf16 %v1777, %v1777
        %1781 = vrot.lane.b32.xlu0 %v1725, 120
        %v1782 = vpop.permute.xlu0 %1781
        %1783 = vrot.lane.b32.xlu0 %v1725, 88
        %v1784 = vpop.permute.xlu0 %1783
        %v1786 = vsel %vm788, %v1782, 0
        %v1789 = vsel %vm788, %v1784, 0
        %1791 = vmatpush.bf16.xpose.msra.mxu0 0
        %1792 = vmatpush.bf16.xpose.msra.mxu0 0
        %1793 = vmatpush.bf16.xpose.msra.mxu0 0
        %1794 = vmatpush.bf16.xpose.msra.mxu0 0
        %1795 = vmatpush.bf16.xpose.msra.mxu0 0
        %1796 = vmatpush.bf16.xpose.msra.mxu0 0
        %1797 = vmatpush.bf16.xpose.msra.mxu0 0
        %1798 = vmatpush.bf16.xpose.msra.mxu0 %v1789
        %1799 = vmatmul.bf16.gmra.mxu0 %v1786
        %v1800 = vpop.f32.mrf.mxu0
        %v1801 = vadd.f32 %v741, %v1800
        %v1802 = vpop.f32.mrf.mxu0
        %1803 = vdwg.mxu0
        %v1804 = vsel %vm788, %v1801, -inf
        %1805 = vmax.xlane.f32.xlu0 %v1804
        %v1806 = vpop.xlane.xlu0 %1805
        %v1807 = vsub.f32 %v1801, %v1806
        %v1808 = vmul.f32 %v1807, 1.442695
        %v1809 = vpow.pop %v1808
        %v1810 = vsel %vm788, %v1809, 0.0
        %1811 = vadd.xlane.f32.xlu0 %v1810
        %v1812 = vpop.xlane.xlu0 %1811
        %v1813 = vrcp.pop %v1812
        %v1814 = vmul.f32 %v1809, %v1813
        %v1815 = vpack.c.bf16 %v1814, %v1814
        %1816 = vrot.lane.b32.xlu0 %v1725, 56
        %v1817 = vpop.permute.xlu0 %1816
        %v1819 = vsel %vm788, %v1815, 0
        %v1822 = vsel %vm825, %v1817, 0
        %1824 = vmatpush.bf16.msra.mxu0 0
        %1825 = vmatpush.bf16.msra.mxu0 0
        %1826 = vmatpush.bf16.msra.mxu0 0
        %1827 = vmatpush.bf16.msra.mxu0 0
        %1828 = vmatpush.bf16.msra.mxu0 0
        %1829 = vmatpush.bf16.msra.mxu0 0
        %1830 = vmatpush.bf16.msra.mxu0 0
        %1831 = vmatpush.bf16.msra.mxu0 %v1822
        %1832 = vmatmul.bf16.gmra.mxu0 %v1819
        %v1833 = vpop.f32.mrf.mxu0
        %v1834 = vadd.f32 0.0, %v1833
        %v1835 = vpop.f32.mrf.mxu0
        %1836 = vdwg.mxu0
        %v1837 = vpack.c.bf16 %v1834, %v1834
        %v1839 = vsel %vm788, %v1837, 0
        %v1842 = vsel %vm825, %v1717, 0
        %1844 = vmatpush.bf16.msra.mxu0 0
        %1845 = vmatpush.bf16.msra.mxu0 0
        %1846 = vmatpush.bf16.msra.mxu0 0
        %1847 = vmatpush.bf16.msra.mxu0 0
        %1848 = vmatpush.bf16.msra.mxu0 0
        %1849 = vmatpush.bf16.msra.mxu0 0
        %1850 = vmatpush.bf16.msra.mxu0 0
        %1851 = vmatpush.bf16.msra.mxu0 %v1842
        %1852 = vmatmul.bf16.gmra.mxu0 %v1839
        %v1853 = vpop.f32.mrf.mxu0
        %v1854 = vadd.f32 0.0, %v1853
        %v1855 = vpop.f32.mrf.mxu0
        %1856 = vdwg.mxu0
        %v1858 = vsel %vm788, %v1780, 0
        %v1861 = vsel %vm825, %v1716, 0
        %1863 = vmatpush.bf16.msra.mxu0 0
        %1864 = vmatpush.bf16.msra.mxu0 0
        %1865 = vmatpush.bf16.msra.mxu0 0
        %1866 = vmatpush.bf16.msra.mxu0 0
        %1867 = vmatpush.bf16.msra.mxu0 0
        %1868 = vmatpush.bf16.msra.mxu0 0
        %1869 = vmatpush.bf16.msra.mxu0 0
        %1870 = vmatpush.bf16.msra.mxu0 %v1861
        %1871 = vmatmul.bf16.gmra.mxu0 %v1858
        %v1872 = vpop.f32.mrf.mxu0
        %v1873 = vadd.f32 %v1854, %v1872
        %v1874 = vpop.f32.mrf.mxu0
        %1875 = vdwg.mxu0
        %1876 = vrot.lane.b32.xlu0 %v1725, 112
        %v1877 = vpop.permute.xlu0 %1876
        %1878 = vrot.lane.b32.xlu0 %v1725, 80
        %v1879 = vpop.permute.xlu0 %1878
        %v1881 = vsel %vm788, %v1877, 0
        %v1884 = vsel %vm788, %v1879, 0
        %1886 = vmatpush.bf16.xpose.msra.mxu0 0
        %1887 = vmatpush.bf16.xpose.msra.mxu0 0
        %1888 = vmatpush.bf16.xpose.msra.mxu0 0
        %1889 = vmatpush.bf16.xpose.msra.mxu0 0
        %1890 = vmatpush.bf16.xpose.msra.mxu0 0
        %1891 = vmatpush.bf16.xpose.msra.mxu0 0
        %1892 = vmatpush.bf16.xpose.msra.mxu0 0
        %1893 = vmatpush.bf16.xpose.msra.mxu0 %v1884
        %1894 = vmatmul.bf16.gmra.mxu0 %v1881
        %v1895 = vpop.f32.mrf.mxu0
        %v1896 = vadd.f32 %v741, %v1895
        %v1897 = vpop.f32.mrf.mxu0
        %1898 = vdwg.mxu0
        %v1899 = vsel %vm788, %v1896, -inf
        %1900 = vmax.xlane.f32.xlu0 %v1899
        %v1901 = vpop.xlane.xlu0 %1900
        %v1902 = vsub.f32 %v1896, %v1901
        %v1903 = vmul.f32 %v1902, 1.442695
        %v1904 = vpow.pop %v1903
        %v1905 = vsel %vm788, %v1904, 0.0
        %1906 = vadd.xlane.f32.xlu0 %v1905
        %v1907 = vpop.xlane.xlu0 %1906
        %v1908 = vrcp.pop %v1907
        %v1909 = vmul.f32 %v1904, %v1908
        %v1910 = vpack.c.bf16 %v1909, %v1909
        %1911 = vrot.lane.b32.xlu0 %v1725, 48
        %v1912 = vpop.permute.xlu0 %1911
        %v1914 = vsel %vm788, %v1910, 0
        %v1917 = vsel %vm825, %v1912, 0
        %1919 = vmatpush.bf16.msra.mxu0 0
        %1920 = vmatpush.bf16.msra.mxu0 0
        %1921 = vmatpush.bf16.msra.mxu0 0
        %1922 = vmatpush.bf16.msra.mxu0 0
        %1923 = vmatpush.bf16.msra.mxu0 0
        %1924 = vmatpush.bf16.msra.mxu0 0
        %1925 = vmatpush.bf16.msra.mxu0 0
        %1926 = vmatpush.bf16.msra.mxu0 %v1917
        %1927 = vmatmul.bf16.gmra.mxu0 %v1914
        %v1928 = vpop.f32.mrf.mxu0
        %v1929 = vadd.f32 0.0, %v1928
        %v1930 = vpop.f32.mrf.mxu0
        %1931 = vdwg.mxu0
        %v1932 = vpack.c.bf16 %v1929, %v1929
        %v1934 = vsel %vm788, %v1932, 0
        %v1937 = vsel %vm825, %v1718, 0
        %1939 = vmatpush.bf16.msra.mxu0 0
        %1940 = vmatpush.bf16.msra.mxu0 0
        %1941 = vmatpush.bf16.msra.mxu0 0
        %1942 = vmatpush.bf16.msra.mxu0 0
        %1943 = vmatpush.bf16.msra.mxu0 0
        %1944 = vmatpush.bf16.msra.mxu0 0
        %1945 = vmatpush.bf16.msra.mxu0 0
        %1946 = vmatpush.bf16.msra.mxu0 %v1937
        %1947 = vmatmul.bf16.gmra.mxu0 %v1934
        %v1948 = vpop.f32.mrf.mxu0
        %v1949 = vadd.f32 0.0, %v1948
        %v1950 = vpop.f32.mrf.mxu0
        %1951 = vdwg.mxu0
        %v1952 = vadd.f32 %v1873, %v1949
        %1953 = vrot.lane.b32.xlu0 %v1725, 104
        %v1954 = vpop.permute.xlu0 %1953
        %1955 = vrot.lane.b32.xlu0 %v1725, 72
        %v1956 = vpop.permute.xlu0 %1955
        %v1958 = vsel %vm788, %v1954, 0
        %v1961 = vsel %vm788, %v1956, 0
        %1963 = vmatpush.bf16.xpose.msra.mxu0 0
        %1964 = vmatpush.bf16.xpose.msra.mxu0 0
        %1965 = vmatpush.bf16.xpose.msra.mxu0 0
        %1966 = vmatpush.bf16.xpose.msra.mxu0 0
        %1967 = vmatpush.bf16.xpose.msra.mxu0 0
        %1968 = vmatpush.bf16.xpose.msra.mxu0 0
        %1969 = vmatpush.bf16.xpose.msra.mxu0 0
        %1970 = vmatpush.bf16.xpose.msra.mxu0 %v1961
        %1971 = vmatmul.bf16.gmra.mxu0 %v1958
        %v1972 = vpop.f32.mrf.mxu0
        %v1973 = vadd.f32 %v741, %v1972
        %v1974 = vpop.f32.mrf.mxu0
        %1975 = vdwg.mxu0
        %v1976 = vsel %vm788, %v1973, -inf
        %1977 = vmax.xlane.f32.xlu0 %v1976
        %v1978 = vpop.xlane.xlu0 %1977
        %v1979 = vsub.f32 %v1973, %v1978
        %v1980 = vmul.f32 %v1979, 1.442695
        %v1981 = vpow.pop %v1980
        %v1982 = vsel %vm788, %v1981, 0.0
        %1983 = vadd.xlane.f32.xlu0 %v1982
        %v1984 = vpop.xlane.xlu0 %1983
        %v1985 = vrcp.pop %v1984
        %v1986 = vmul.f32 %v1981, %v1985
        %v1987 = vpack.c.bf16 %v1986, %v1986
        %1988 = vrot.lane.b32.xlu0 %v1725, 40
        %v1989 = vpop.permute.xlu0 %1988
        %v1991 = vsel %vm788, %v1987, 0
        %v1994 = vsel %vm825, %v1989, 0
        %1996 = vmatpush.bf16.msra.mxu0 0
        %1997 = vmatpush.bf16.msra.mxu0 0
        %1998 = vmatpush.bf16.msra.mxu0 0
        %1999 = vmatpush.bf16.msra.mxu0 0
        %2000 = vmatpush.bf16.msra.mxu0 0
        %2001 = vmatpush.bf16.msra.mxu0 0
        %2002 = vmatpush.bf16.msra.mxu0 0
        %2003 = vmatpush.bf16.msra.mxu0 %v1994
        %2004 = vmatmul.bf16.gmra.mxu0 %v1991
        %v2005 = vpop.f32.mrf.mxu0
        %v2006 = vadd.f32 0.0, %v2005
        %v2007 = vpop.f32.mrf.mxu0
        %2008 = vdwg.mxu0
        %v2009 = vpack.c.bf16 %v2006, %v2006
        %v2011 = vsel %vm788, %v2009, 0
        %v2014 = vsel %vm825, %v1719, 0
        %2016 = vmatpush.bf16.msra.mxu0 0
        %2017 = vmatpush.bf16.msra.mxu0 0
        %2018 = vmatpush.bf16.msra.mxu0 0
        %2019 = vmatpush.bf16.msra.mxu0 0
        %2020 = vmatpush.bf16.msra.mxu0 0
        %2021 = vmatpush.bf16.msra.mxu0 0
        %2022 = vmatpush.bf16.msra.mxu0 0
        %2023 = vmatpush.bf16.msra.mxu0 %v2014
        %2024 = vmatmul.bf16.gmra.mxu0 %v2011
        %v2025 = vpop.f32.mrf.mxu0
        %v2026 = vadd.f32 0.0, %v2025
        %v2027 = vpop.f32.mrf.mxu0
        %2028 = vdwg.mxu0
        %v2029 = vadd.f32 %v1952, %v2026
        %v2031 = vperm.slane %v1721, 0
        %v2033 = vadd.f32 %v2029, %v2031
        %v2034 = vadd.f32 %v2033, %v1680
        %s2035 = scalar_lea.vmem %s7, 1
        %v2036 = vld [vmem:[%s2035] sm:$0x1]
        %s2037 = scalar_lea.vmem %s8, 1
        %v2038 = vld [vmem:[%s2037] sm:$0x1]
        %v2039 = vsel %vm760, %v2034, 0.0
        %2040 = vadd.xlane.f32.xlu0 %v2039
        %v2041 = vpop.xlane.xlu0 %2040
        %v2042 = vmul.f32 %v2041, %v1108
        %v2043 = vsub.f32 %v2034, %v2042
        %v2044 = vmul.f32 %v2043, %v2043
        %v2045 = vsel %vm760, %v2044, 0.0
        %2046 = vadd.xlane.f32.xlu0 %v2045
        %v2047 = vpop.xlane.xlu0 %2046
        %v2048 = vmul.f32 %v2047, %v1108
        %v2049 = vadd.f32 %v2048, 1e-05
        %v2050 = vrsqrt.pop %v2049
        %v2051 = vmul.f32 %v2050, %v2049
        %v2052 = vmul.f32 %v2051, %v2050
        %v2053 = vmul.f32 0.5, %v2052
        %v2054 = vsub.f32 1.5, %v2053
        %v2055 = vmul.f32 %v2050, %v2054
        %vm2056 = vweird.f32 %v2049
        %vm2057 = vweird.f32 %v2050
        %vm2058 = vmor %vm2056, %vm2057
        %v2059 = vsel %vm2058, %v2050, %v2055
        %v2060 = vmul.f32 %v2043, %v2059
        %v2062 = vperm.slane %v2036, 0
        %v2064 = vmul.f32 %v2060, %v2062
        %v2066 = vperm.slane %v2038, 0
        %v2068 = vadd.f32 %v2064, %v2066
        %v2069 = vpack.c.bf16 %v2068, %v2068
        %s2070 = scalar_lea.vmem %s9, 16
        %v2071 = vld [vmem:[%s2070] sm:$0xf]
        %v2072 = vld [vmem:[%s2070 + $0x4] sm:$0xf]
        %v2073 = vld [vmem:[%s2070 + $0x8] sm:$0xf]
        %v2074 = vld [vmem:[%s2070 + $0xc] sm:$0xf]
        %v2079 = vunpack.c.l.b16 %v2071
        %v2080 = vunpack.c.l.b16 %v2072
        %v2081 = vunpack.c.l.b16 %v2073
        %v2082 = vunpack.c.l.b16 %v2074
        %v2083 = vpack.c.b16 %v2080, %v2079
        %v2084 = vpack.c.b16 %v2082, %v2081
        %v2088 = vsel %vm760, %v2069, 0
        %2090 = vmatpush.bf16.msra.mxu0 0
        %2091 = vmatpush.bf16.msra.mxu0 0
        %2092 = vmatpush.bf16.msra.mxu0 0
        %2093 = vmatpush.bf16.msra.mxu0 0
        %2094 = vmatpush.bf16.msra.mxu0 0
        %2095 = vmatpush.bf16.msra.mxu0 0
        %2096 = vmatpush.bf16.msra.mxu0 %v2084
        %2097 = vmatpush.bf16.msra.mxu0 %v2083
        %2098 = vmatmul.bf16.gmra.mxu0 %v2088
        %v2099 = vpop.f32.mrf.mxu0
        %v2100 = vadd.f32 0.0, %v2099
        %v2101 = vpop.f32.mrf.mxu0
        %2102 = vdwg.mxu0
        %s2103 = scalar_lea.vmem %s10, 16
        %v2104 = vld [vmem:[%s2103] sm:$0xf]
        %v2105 = vld [vmem:[%s2103 + $0x4] sm:$0xf]
        %v2106 = vld [vmem:[%s2103 + $0x8] sm:$0xf]
        %v2107 = vld [vmem:[%s2103 + $0xc] sm:$0xf]
        %v2112 = vunpack.c.l.b16 %v2104
        %v2113 = vunpack.c.l.b16 %v2105
        %v2114 = vunpack.c.l.b16 %v2106
        %v2115 = vunpack.c.l.b16 %v2107
        %v2116 = vpack.c.b16 %v2113, %v2112
        %v2117 = vpack.c.b16 %v2115, %v2114
        %2120 = vmatpush.bf16.msra.mxu0 0
        %2121 = vmatpush.bf16.msra.mxu0 0
        %2122 = vmatpush.bf16.msra.mxu0 0
        %2123 = vmatpush.bf16.msra.mxu0 0
        %2124 = vmatpush.bf16.msra.mxu0 0
        %2125 = vmatpush.bf16.msra.mxu0 0
        %2126 = vmatpush.bf16.msra.mxu0 %v2117
        %2127 = vmatpush.bf16.msra.mxu0 %v2116
        %2128 = vmatmul.bf16.gmra.mxu0 %v1186
        %v2129 = vpop.f32.mrf.mxu0
        %v2130 = vadd.f32 0.0, %v2129
        %v2131 = vpop.f32.mrf.mxu0
        %2132 = vdwg.mxu0
        %s2133 = scalar_lea.vmem %s11, 16
        %v2134 = vld [vmem:[%s2133] sm:$0xf]
        %v2135 = vld [vmem:[%s2133 + $0x4] sm:$0xf]
        %v2136 = vld [vmem:[%s2133 + $0x8] sm:$0xf]
        %v2137 = vld [vmem:[%s2133 + $0xc] sm:$0xf]
        %s2138 = scalar_lea.vmem %s12, 1
        %v2139 = vld [vmem:[%s2138] sm:$0x1]
        %v2140 = vpack.c.bf16 %v2100, %v2100
        %v2141 = vpack.c.bf16 %v2130, %v2130
        %v2143 = vsel %vm788, %v2140, 0
        %v2146 = vsel %vm788, %v2141, 0
        %2148 = vmatpush.bf16.xpose.msra.mxu0 0
        %2149 = vmatpush.bf16.xpose.msra.mxu0 0
        %2150 = vmatpush.bf16.xpose.msra.mxu0 0
        %2151 = vmatpush.bf16.xpose.msra.mxu0 0
        %2152 = vmatpush.bf16.xpose.msra.mxu0 0
        %2153 = vmatpush.bf16.xpose.msra.mxu0 0
        %2154 = vmatpush.bf16.xpose.msra.mxu0 0
        %2155 = vmatpush.bf16.xpose.msra.mxu0 %v2146
        %2156 = vmatmul.bf16.gmra.mxu0 %v2143
        %v2157 = vpop.f32.mrf.mxu0
        %v2158 = vadd.f32 %v1209, %v2157
        %v2159 = vpop.f32.mrf.mxu0
        %2160 = vdwg.mxu0
        %v2161 = vsel %vm788, %v2158, -inf
        %2162 = vmax.xlane.f32.xlu0 %v2161
        %v2163 = vpop.xlane.xlu0 %2162
        %v2164 = vsub.f32 %v2158, %v2163
        %v2165 = vmul.f32 %v2164, 1.442695
        %v2166 = vpow.pop %v2165
        %v2167 = vsel %vm788, %v2166, 0.0
        %2168 = vadd.xlane.f32.xlu0 %v2167
        %v2169 = vpop.xlane.xlu0 %2168
        %v2170 = vrcp.pop %v2169
        %v2171 = vmul.f32 %v2166, %v2170
        %v2172 = vpack.c.bf16 %v2171, %v2171
        %v2174 = vunpack.c.l.b16 %v2141
        %v2175 = vpack.c.b16 %v2174, %v2174
        %2176 = vrot.lane.b32.xlu0 %v2175, 96
        %v2177 = vpop.permute.xlu0 %2176
        %v2179 = vsel %vm788, %v2172, 0
        %v2182 = vsel %vm825, %v2177, 0
        %2184 = vmatpush.bf16.msra.mxu0 0
        %2185 = vmatpush.bf16.msra.mxu0 0
        %2186 = vmatpush.bf16.msra.mxu0 0
        %2187 = vmatpush.bf16.msra.mxu0 0
        %2188 = vmatpush.bf16.msra.mxu0 0
        %2189 = vmatpush.bf16.msra.mxu0 0
        %2190 = vmatpush.bf16.msra.mxu0 0
        %2191 = vmatpush.bf16.msra.mxu0 %v2182
        %2192 = vmatmul.bf16.gmra.mxu0 %v2179
        %v2193 = vpop.f32.mrf.mxu0
        %v2194 = vadd.f32 0.0, %v2193
        %v2195 = vpop.f32.mrf.mxu0
        %2196 = vdwg.mxu0
        %v2197 = vpack.c.bf16 %v2194, %v2194
        %v2199 = vunpack.c.l.b16 %v2140
        %v2200 = vpack.c.b16 %v2199, %v2199
        %2201 = vrot.lane.b32.xlu0 %v2200, 120
        %v2202 = vpop.permute.xlu0 %2201
        %2203 = vrot.lane.b32.xlu0 %v2175, 120
        %v2204 = vpop.permute.xlu0 %2203
        %v2206 = vsel %vm788, %v2202, 0
        %v2209 = vsel %vm788, %v2204, 0
        %2211 = vmatpush.bf16.xpose.msra.mxu0 0
        %2212 = vmatpush.bf16.xpose.msra.mxu0 0
        %2213 = vmatpush.bf16.xpose.msra.mxu0 0
        %2214 = vmatpush.bf16.xpose.msra.mxu0 0
        %2215 = vmatpush.bf16.xpose.msra.mxu0 0
        %2216 = vmatpush.bf16.xpose.msra.mxu0 0
        %2217 = vmatpush.bf16.xpose.msra.mxu0 0
        %2218 = vmatpush.bf16.xpose.msra.mxu0 %v2209
        %2219 = vmatmul.bf16.gmra.mxu0 %v2206
        %v2220 = vpop.f32.mrf.mxu0
        %v2221 = vadd.f32 %v1209, %v2220
        %v2222 = vpop.f32.mrf.mxu0
        %2223 = vdwg.mxu0
        %v2224 = vsel %vm788, %v2221, -inf
        %2225 = vmax.xlane.f32.xlu0 %v2224
        %v2226 = vpop.xlane.xlu0 %2225
        %v2227 = vsub.f32 %v2221, %v2226
        %v2228 = vmul.f32 %v2227, 1.442695
        %v2229 = vpow.pop %v2228
        %v2230 = vsel %vm788, %v2229, 0.0
        %2231 = vadd.xlane.f32.xlu0 %v2230
        %v2232 = vpop.xlane.xlu0 %2231
        %v2233 = vrcp.pop %v2232
        %v2234 = vmul.f32 %v2229, %v2233
        %v2235 = vpack.c.bf16 %v2234, %v2234
        %2236 = vrot.lane.b32.xlu0 %v2175, 88
        %v2237 = vpop.permute.xlu0 %2236
        %v2239 = vsel %vm788, %v2235, 0
        %v2242 = vsel %vm825, %v2237, 0
        %2244 = vmatpush.bf16.msra.mxu0 0
        %2245 = vmatpush.bf16.msra.mxu0 0
        %2246 = vmatpush.bf16.msra.mxu0 0
        %2247 = vmatpush.bf16.msra.mxu0 0
        %2248 = vmatpush.bf16.msra.mxu0 0
        %2249 = vmatpush.bf16.msra.mxu0 0
        %2250 = vmatpush.bf16.msra.mxu0 0
        %2251 = vmatpush.bf16.msra.mxu0 %v2242
        %2252 = vmatmul.bf16.gmra.mxu0 %v2239
        %v2253 = vpop.f32.mrf.mxu0
        %v2254 = vadd.f32 0.0, %v2253
        %v2255 = vpop.f32.mrf.mxu0
        %2256 = vdwg.mxu0
        %v2257 = vpack.c.bf16 %v2254, %v2254
        %v2259 = vsel %vm788, %v2257, 0
        %v2262 = vsel %vm825, %v2135, 0
        %2264 = vmatpush.bf16.msra.mxu0 0
        %2265 = vmatpush.bf16.msra.mxu0 0
        %2266 = vmatpush.bf16.msra.mxu0 0
        %2267 = vmatpush.bf16.msra.mxu0 0
        %2268 = vmatpush.bf16.msra.mxu0 0
        %2269 = vmatpush.bf16.msra.mxu0 0
        %2270 = vmatpush.bf16.msra.mxu0 0
        %2271 = vmatpush.bf16.msra.mxu0 %v2262
        %2272 = vmatmul.bf16.gmra.mxu0 %v2259
        %v2273 = vpop.f32.mrf.mxu0
        %v2274 = vadd.f32 0.0, %v2273
        %v2275 = vpop.f32.mrf.mxu0
        %2276 = vdwg.mxu0
        %v2278 = vsel %vm788, %v2197, 0
        %v2281 = vsel %vm825, %v2134, 0
        %2283 = vmatpush.bf16.msra.mxu0 0
        %2284 = vmatpush.bf16.msra.mxu0 0
        %2285 = vmatpush.bf16.msra.mxu0 0
        %2286 = vmatpush.bf16.msra.mxu0 0
        %2287 = vmatpush.bf16.msra.mxu0 0
        %2288 = vmatpush.bf16.msra.mxu0 0
        %2289 = vmatpush.bf16.msra.mxu0 0
        %2290 = vmatpush.bf16.msra.mxu0 %v2281
        %2291 = vmatmul.bf16.gmra.mxu0 %v2278
        %v2292 = vpop.f32.mrf.mxu0
        %v2293 = vadd.f32 %v2274, %v2292
        %v2294 = vpop.f32.mrf.mxu0
        %2295 = vdwg.mxu0
        %2296 = vrot.lane.b32.xlu0 %v2200, 112
        %v2297 = vpop.permute.xlu0 %2296
        %2298 = vrot.lane.b32.xlu0 %v2175, 112
        %v2299 = vpop.permute.xlu0 %2298
        %v2301 = vsel %vm788, %v2297, 0
        %v2304 = vsel %vm788, %v2299, 0
        %2306 = vmatpush.bf16.xpose.msra.mxu0 0
        %2307 = vmatpush.bf16.xpose.msra.mxu0 0
        %2308 = vmatpush.bf16.xpose.msra.mxu0 0
        %2309 = vmatpush.bf16.xpose.msra.mxu0 0
        %2310 = vmatpush.bf16.xpose.msra.mxu0 0
        %2311 = vmatpush.bf16.xpose.msra.mxu0 0
        %2312 = vmatpush.bf16.xpose.msra.mxu0 0
        %2313 = vmatpush.bf16.xpose.msra.mxu0 %v2304
        %2314 = vmatmul.bf16.gmra.mxu0 %v2301
        %v2315 = vpop.f32.mrf.mxu0
        %v2316 = vadd.f32 %v1209, %v2315
        %v2317 = vpop.f32.mrf.mxu0
        %2318 = vdwg.mxu0
        %v2319 = vsel %vm788, %v2316, -inf
        %2320 = vmax.xlane.f32.xlu0 %v2319
        %v2321 = vpop.xlane.xlu0 %2320
        %v2322 = vsub.f32 %v2316, %v2321
        %v2323 = vmul.f32 %v2322, 1.442695
        %v2324 = vpow.pop %v2323
        %v2325 = vsel %vm788, %v2324, 0.0
        %2326 = vadd.xlane.f32.xlu0 %v2325
        %v2327 = vpop.xlane.xlu0 %2326
        %v2328 = vrcp.pop %v2327
        %v2329 = vmul.f32 %v2324, %v2328
        %v2330 = vpack.c.bf16 %v2329, %v2329
        %2331 = vrot.lane.b32.xlu0 %v2175, 80
        %v2332 = vpop.permute.xlu0 %2331
        %v2334 = vsel %vm788, %v2330, 0
        %v2337 = vsel %vm825, %v2332, 0
        %2339 = vmatpush.bf16.msra.mxu0 0
        %2340 = vmatpush.bf16.msra.mxu0 0
        %2341 = vmatpush.bf16.msra.mxu0 0
        %2342 = vmatpush.bf16.msra.mxu0 0
        %2343 = vmatpush.bf16.msra.mxu0 0
        %2344 = vmatpush.bf16.msra.mxu0 0
        %2345 = vmatpush.bf16.msra.mxu0 0
        %2346 = vmatpush.bf16.msra.mxu0 %v2337
        %2347 = vmatmul.bf16.gmra.mxu0 %v2334
        %v2348 = vpop.f32.mrf.mxu0
        %v2349 = vadd.f32 0.0, %v2348
        %v2350 = vpop.f32.mrf.mxu0
        %2351 = vdwg.mxu0
        %v2352 = vpack.c.bf16 %v2349, %v2349
        %v2354 = vsel %vm788, %v2352, 0
        %v2357 = vsel %vm825, %v2136, 0
        %2359 = vmatpush.bf16.msra.mxu0 0
        %2360 = vmatpush.bf16.msra.mxu0 0
        %2361 = vmatpush.bf16.msra.mxu0 0
        %2362 = vmatpush.bf16.msra.mxu0 0
        %2363 = vmatpush.bf16.msra.mxu0 0
        %2364 = vmatpush.bf16.msra.mxu0 0
        %2365 = vmatpush.bf16.msra.mxu0 0
        %2366 = vmatpush.bf16.msra.mxu0 %v2357
        %2367 = vmatmul.bf16.gmra.mxu0 %v2354
        %v2368 = vpop.f32.mrf.mxu0
        %v2369 = vadd.f32 0.0, %v2368
        %v2370 = vpop.f32.mrf.mxu0
        %2371 = vdwg.mxu0
        %v2372 = vadd.f32 %v2293, %v2369
        %2373 = vrot.lane.b32.xlu0 %v2200, 104
        %v2374 = vpop.permute.xlu0 %2373
        %2375 = vrot.lane.b32.xlu0 %v2175, 104
        %v2376 = vpop.permute.xlu0 %2375
        %v2378 = vsel %vm788, %v2374, 0
        %v2381 = vsel %vm788, %v2376, 0
        %2383 = vmatpush.bf16.xpose.msra.mxu0 0
        %2384 = vmatpush.bf16.xpose.msra.mxu0 0
        %2385 = vmatpush.bf16.xpose.msra.mxu0 0
        %2386 = vmatpush.bf16.xpose.msra.mxu0 0
        %2387 = vmatpush.bf16.xpose.msra.mxu0 0
        %2388 = vmatpush.bf16.xpose.msra.mxu0 0
        %2389 = vmatpush.bf16.xpose.msra.mxu0 0
        %2390 = vmatpush.bf16.xpose.msra.mxu0 %v2381
        %2391 = vmatmul.bf16.gmra.mxu0 %v2378
        %v2392 = vpop.f32.mrf.mxu0
        %v2393 = vadd.f32 %v1209, %v2392
        %v2394 = vpop.f32.mrf.mxu0
        %2395 = vdwg.mxu0
        %v2396 = vsel %vm788, %v2393, -inf
        %2397 = vmax.xlane.f32.xlu0 %v2396
        %v2398 = vpop.xlane.xlu0 %2397
        %v2399 = vsub.f32 %v2393, %v2398
        %v2400 = vmul.f32 %v2399, 1.442695
        %v2401 = vpow.pop %v2400
        %v2402 = vsel %vm788, %v2401, 0.0
        %2403 = vadd.xlane.f32.xlu0 %v2402
        %v2404 = vpop.xlane.xlu0 %2403
        %v2405 = vrcp.pop %v2404
        %v2406 = vmul.f32 %v2401, %v2405
        %v2407 = vpack.c.bf16 %v2406, %v2406
        %2408 = vrot.lane.b32.xlu0 %v2175, 72
        %v2409 = vpop.permute.xlu0 %2408
        %v2411 = vsel %vm788, %v2407, 0
        %v2414 = vsel %vm825, %v2409, 0
        %2416 = vmatpush.bf16.msra.mxu0 0
        %2417 = vmatpush.bf16.msra.mxu0 0
        %2418 = vmatpush.bf16.msra.mxu0 0
        %2419 = vmatpush.bf16.msra.mxu0 0
        %2420 = vmatpush.bf16.msra.mxu0 0
        %2421 = vmatpush.bf16.msra.mxu0 0
        %2422 = vmatpush.bf16.msra.mxu0 0
        %2423 = vmatpush.bf16.msra.mxu0 %v2414
        %2424 = vmatmul.bf16.gmra.mxu0 %v2411
        %v2425 = vpop.f32.mrf.mxu0
        %v2426 = vadd.f32 0.0, %v2425
        %v2427 = vpop.f32.mrf.mxu0
        %2428 = vdwg.mxu0
        %v2429 = vpack.c.bf16 %v2426, %v2426
        %v2431 = vsel %vm788, %v2429, 0
        %v2434 = vsel %vm825, %v2137, 0
        %2436 = vmatpush.bf16.msra.mxu0 0
        %2437 = vmatpush.bf16.msra.mxu0 0
        %2438 = vmatpush.bf16.msra.mxu0 0
        %2439 = vmatpush.bf16.msra.mxu0 0
        %2440 = vmatpush.bf16.msra.mxu0 0
        %2441 = vmatpush.bf16.msra.mxu0 0
        %2442 = vmatpush.bf16.msra.mxu0 0
        %2443 = vmatpush.bf16.msra.mxu0 %v2434
        %2444 = vmatmul.bf16.gmra.mxu0 %v2431
        %v2445 = vpop.f32.mrf.mxu0
        %v2446 = vadd.f32 0.0, %v2445
        %v2447 = vpop.f32.mrf.mxu0
        %2448 = vdwg.mxu0
        %v2449 = vadd.f32 %v2372, %v2446
        %v2451 = vperm.slane %v2139, 0
        %v2453 = vadd.f32 %v2449, %v2451
        %v2454 = vadd.f32 %v2453, %v2068
        %s2455 = scalar_lea.vmem %s13, 1
        %v2456 = vld [vmem:[%s2455] sm:$0x1]
        %s2457 = scalar_lea.vmem %s14, 1
        %v2458 = vld [vmem:[%s2457] sm:$0x1]
        %v2459 = vsel %vm760, %v2454, 0.0
        %2460 = vadd.xlane.f32.xlu0 %v2459
        %v2461 = vpop.xlane.xlu0 %2460
        %v2462 = vmul.f32 %v2461, %v1108
        %v2463 = vsub.f32 %v2454, %v2462
        %v2464 = vmul.f32 %v2463, %v2463
        %v2465 = vsel %vm760, %v2464, 0.0
        %2466 = vadd.xlane.f32.xlu0 %v2465
        %v2467 = vpop.xlane.xlu0 %2466
        %v2468 = vmul.f32 %v2467, %v1108
        %v2469 = vadd.f32 %v2468, 1e-05
        %v2470 = vrsqrt.pop %v2469
        %v2471 = vmul.f32 %v2470, %v2469
        %v2472 = vmul.f32 %v2471, %v2470
        %v2473 = vmul.f32 0.5, %v2472
        %v2474 = vsub.f32 1.5, %v2473
        %v2475 = vmul.f32 %v2470, %v2474
        %vm2476 = vweird.f32 %v2469
        %vm2477 = vweird.f32 %v2470
        %vm2478 = vmor %vm2476, %vm2477
        %v2479 = vsel %vm2478, %v2470, %v2475
        %v2480 = vmul.f32 %v2463, %v2479
        %v2482 = vperm.slane %v2456, 0
        %v2484 = vmul.f32 %v2480, %v2482
        %v2486 = vperm.slane %v2458, 0
        %v2488 = vadd.f32 %v2484, %v2486
        %v2489 = vpack.c.bf16 %v2488, %v2488
        %s2490 = scalar_lea.vmem %s15, 16
        %v2491 = vld [vmem:[%s2490] sm:$0xf]
        %v2492 = vld [vmem:[%s2490 + $0x4] sm:$0xf]
        %v2493 = vld [vmem:[%s2490 + $0x8] sm:$0xf]
        %v2494 = vld [vmem:[%s2490 + $0xc] sm:$0xf]
        %s2495 = scalar_lea.vmem %s16, 1
        %v2496 = vld [vmem:[%s2495] sm:$0x1]
        %v2498 = vperm.slane %v2496, 0
        %v2504 = vunpack.c.l.b16 %v2491
        %v2505 = vunpack.c.l.b16 %v2492
        %v2506 = vunpack.c.l.b16 %v2493
        %v2507 = vunpack.c.l.b16 %v2494
        %v2508 = vpack.c.b16 %v2505, %v2504
        %v2509 = vpack.c.b16 %v2507, %v2506
        %v2513 = vsel %vm760, %v2489, 0
        %2515 = vmatpush.bf16.msra.mxu0 0
        %2516 = vmatpush.bf16.msra.mxu0 0
        %2517 = vmatpush.bf16.msra.mxu0 0
        %2518 = vmatpush.bf16.msra.mxu0 0
        %2519 = vmatpush.bf16.msra.mxu0 0
        %2520 = vmatpush.bf16.msra.mxu0 0
        %2521 = vmatpush.bf16.msra.mxu0 %v2509
        %2522 = vmatpush.bf16.msra.mxu0 %v2508
        %2523 = vmatmul.bf16.gmra.mxu0 %v2513
        %v2524 = vpop.f32.mrf.mxu0
        %v2525 = vadd.f32 %v2498, %v2524
        %v2526 = vpop.f32.mrf.mxu0
        %2527 = vdwg.mxu0
        %v2528 = vmax.f32 %v2525, 0.0
        %v2529 = vpack.c.bf16 %v2528, %v2528
        %s2530 = scalar_lea.vmem %s17, 32
        %v2531 = vld [vmem:[%s2530] sm:$0xf]
        %v2532 = vld [vmem:[%s2530 + $0x4] sm:$0xf]
        %v2533 = vld [vmem:[%s2530 + $0x8] sm:$0xf]
        %v2534 = vld [vmem:[%s2530 + $0xc] sm:$0xf]
        %v2535 = vld [vmem:[%s2530 + $0x10] sm:$0xf]
        %v2536 = vld [vmem:[%s2530 + $0x14] sm:$0xf]
        %v2537 = vld [vmem:[%s2530 + $0x18] sm:$0xf]
        %v2538 = vld [vmem:[%s2530 + $0x1c] sm:$0xf]
        %s2539 = scalar_lea.vmem %s18, 1
        %v2540 = vld [vmem:[%s2539] sm:$0x1]
        %v2542 = vperm.slane %v2540, 0
        %v2552 = vunpack.c.l.b16 %v2531
        %v2553 = vunpack.c.l.b16 %v2532
        %v2554 = vunpack.c.l.b16 %v2533
        %v2555 = vunpack.c.l.b16 %v2534
        %v2556 = vunpack.c.l.b16 %v2535
        %v2557 = vunpack.c.l.b16 %v2536
        %v2558 = vunpack.c.l.b16 %v2537
        %v2559 = vunpack.c.l.b16 %v2538
        %v2560 = vpack.c.b16 %v2553, %v2552
        %v2561 = vpack.c.b16 %v2555, %v2554
        %v2562 = vpack.c.b16 %v2557, %v2556
        %v2563 = vpack.c.b16 %v2559, %v2558
        %v2569 = vsel %vm1631, %v2529, 0
        %2571 = vmatpush.bf16.msra.mxu0 0
        %2572 = vmatpush.bf16.msra.mxu0 0
        %2573 = vmatpush.bf16.msra.mxu0 0
        %2574 = vmatpush.bf16.msra.mxu0 0
        %2575 = vmatpush.bf16.msra.mxu0 %v2563
        %2576 = vmatpush.bf16.msra.mxu0 %v2562
        %2577 = vmatpush.bf16.msra.mxu0 %v2561
        %2578 = vmatpush.bf16.msra.mxu0 %v2560
        %2579 = vmatmul.bf16.gmra.mxu0 %v2569
        %v2580 = vpop.f32.mrf.mxu0
        %v2581 = vadd.f32 %v2542, %v2580
        %v2582 = vpop.f32.mrf.mxu0
        %2583 = vdwg.mxu0
        %v2584 = vadd.f32 %v2581, %v2488
        %s2585 = scalar_lea.vmem %s19, 1
        %v2586 = vld [vmem:[%s2585] sm:$0x1]
        %s2587 = scalar_lea.vmem %s20, 1
        %v2588 = vld [vmem:[%s2587] sm:$0x1]
        %v2589 = vsel %vm760, %v2584, 0.0
        %2590 = vadd.xlane.f32.xlu0 %v2589
        %v2591 = vpop.xlane.xlu0 %2590
        %v2592 = vmul.f32 %v2591, %v1108
        %v2593 = vsub.f32 %v2584, %v2592
        %v2594 = vmul.f32 %v2593, %v2593
        %v2595 = vsel %vm760, %v2594, 0.0
        %2596 = vadd.xlane.f32.xlu0 %v2595
        %v2597 = vpop.xlane.xlu0 %2596
        %v2598 = vmul.f32 %v2597, %v1108
        %v2599 = vadd.f32 %v2598, 1e-05
        %v2600 = vrsqrt.pop %v2599
        %v2601 = vmul.f32 %v2600, %v2599
        %v2602 = vmul.f32 %v2601, %v2600
        %v2603 = vmul.f32 0.5, %v2602
        %v2604 = vsub.f32 1.5, %v2603
        %v2605 = vmul.f32 %v2600, %v2604
        %vm2606 = vweird.f32 %v2599
        %vm2607 = vweird.f32 %v2600
        %vm2608 = vmor %vm2606, %vm2607
        %v2609 = vsel %vm2608, %v2600, %v2605
        %v2610 = vmul.f32 %v2593, %v2609
        %v2612 = vperm.slane %v2586, 0
        %v2614 = vmul.f32 %v2610, %v2612
        %v2616 = vperm.slane %v2588, 0
        %v2618 = vadd.f32 %v2614, %v2616
        %v2619 = vpack.c.bf16 %v2618, %v2618
        %v2620 = vld [vmem:[%s21] sm:$0xf]
        %v2621 = vld [vmem:[%s21 + $0x4] sm:$0xf]
        %v2622 = vld [vmem:[%s21 + $0x8] sm:$0xf]
        %v2623 = vld [vmem:[%s21 + $0xc] sm:$0xf]
        %v2624 = vld [vmem:[%s22] sm:$0x1]
        %v2626 = vperm.slane %v2624, 0
        %v2632 = vunpack.c.l.b16 %v2620
        %v2633 = vunpack.c.l.b16 %v2621
        %v2634 = vunpack.c.l.b16 %v2622
        %v2635 = vunpack.c.l.b16 %v2623
        %v2636 = vpack.c.b16 %v2633, %v2632
        %v2637 = vpack.c.b16 %v2635, %v2634
        %v2641 = vsel %vm760, %v2619, 0
        %2643 = vmatpush.bf16.msra.mxu0 0
        %2644 = vmatpush.bf16.msra.mxu0 0
        %2645 = vmatpush.bf16.msra.mxu0 0
        %2646 = vmatpush.bf16.msra.mxu0 0
        %2647 = vmatpush.bf16.msra.mxu0 0
        %2648 = vmatpush.bf16.msra.mxu0 0
        %2649 = vmatpush.bf16.msra.mxu0 %v2637
        %2650 = vmatpush.bf16.msra.mxu0 %v2636
        %2651 = vmatmul.bf16.gmra.mxu0 %v2641
        %v2652 = vpop.f32.mrf.mxu0
        %v2653 = vadd.f32 %v2626, %v2652
        %v2654 = vpop.f32.mrf.mxu0
        %2655 = vdwg.mxu0
        %vm2656 = vcmask 130048
        %2657 = vst.msk [vmem:[%s725] sm:$0xff] %vm2656, %v2653
        %s2658 = sand.u32 %s543, 1
        %s2659 = scalar_lea.sflag [#allocation3], %s2658
        %s2660 = sand.u32 %s543, 1
        %s2661 = smul.addr %s2660, 8
        %s2662 = scalar_lea.vmem [#allocation2], %s2661
        // Predicated region
        $region113: #{bumblebee_forward.3} parent=111 // pred_check
          %p2663 = pneg %p553
        $region114: #{bumblebee_forward.3} parent=111 // pred_check_branch
          %2665 = sbr.rel (%p2663) target = $region116
        $region115: #{bumblebee_forward.3} parent=111 // pred_region
          %2667 = vsyncadd %s2659, 0
          %s2668 = smul.addr %s37, 8
          %s2669 = scalar_lea.hbm %s23, %s2668
          %s2671 = sshll.u32 %s2662, 4
          %s2672 = int_to_ptr.vmem [resolvable:$true] %s2671
          %s2673 = sshll.u32 %s2669, 4
          %s2674 = int_to_ptr.hbm [resolvable:$true] %s2673
          %2676 = dma.vmem_to_hbm [thread:$0]  %s2672, 128, %s2674, %s2659
        $region116: #{bumblebee_forward.3} parent=111 // pred_fallthru
          _
      $region112: #{bumblebee_forward.3} parent=5 // pred_fallthru
        _
      %p2677 = scmp.le.s32.totalorder 2, %s32
      // Predicated region
      $region117: #{bumblebee_forward.3} parent=5 // pred_check
        %p2678 = pneg %p2677
      $region118: #{bumblebee_forward.3} parent=5 // pred_check_branch
        %2680 = sbr.rel (%p2678) target = $region120
      $region119: #{bumblebee_forward.3} parent=5 // pred_region
        %s2681 = ssub.s32 %s32, 2
        // Predicated region
        $region121: #{bumblebee_forward.3} parent=119 // pred_check
          %p2682 = pneg %p559
        $region122: #{bumblebee_forward.3} parent=119 // pred_check_branch
          %2684 = sbr.rel (%p2682) target = $region124
        $region123: #{bumblebee_forward.3} parent=119 // pred_region
          %s2685 = sand.u32 %s544, 1
          %s2686 = scalar_lea.sflag [#allocation3], %s2685
          %s2687 = sand.u32 %s544, 1
          %s2688 = smul.addr %s2687, 8
          %s2689 = scalar_lea.vmem [#allocation2], %s2688
          %2691 = dma.done %s2686, 128
        $region124: #{bumblebee_forward.3} parent=119 // pred_fallthru
          _
      $region120: #{bumblebee_forward.3} parent=5 // pred_fallthru
        _
    $region6: #{bumblebee_forward.3} parent=1 // loop_footer
      %s36 = sadd.s32 1, %s32
    $region7: #{bumblebee_forward.3} parent=1 // loop_footer_branch
      %31 = sbr.rel target = $region3
    $region8: #{bumblebee_forward.3} parent=1 // loop_exit
      _
    %2692 = vsyncpa [#allocation3], 1
    %s2693 = scalar_lea.sflag [#allocation3], 1
    %2694 = vsyncpa %s2693, 1

</llo_original>
